<compile_context>
chip_gen: v7x
topology: tpu7x:2x2x1
jax: 0.10.0
libtpu: 0.0.40
codegen_flags: <defaults>
</compile_context>

<pallas_src>
import jax
import jax.numpy as jnp
from jax.experimental import pallas as pl
from jax.experimental.pallas import tpu as pltpu

LEAKY_SLOPE = 0.2
IN_EPS = 1e-5
NFC = 64          # ConvBlock width
K = 3             # all convs are 3x3, pad=1, stride=1


def _make_fused_kernel(H, W, Cin, n_blocks):
    HW = H * W

    def im2col(pad_ref):
        # (H+2, W+2, NFC) zero-padded activation -> (H*W, 9*NFC) patch matrix (f32).
        taps = []
        for ky in range(K):
            for kx in range(K):
                taps.append(pad_ref[ky:ky + H, kx:kx + W, :].reshape(HW, NFC))
        return jnp.concatenate(taps, axis=-1)

    def kernel(x_ref, w_ref, tw_ref, tb_ref, o_ref, pad_ref):
        # x_ref : (1, H, W, Cin)          input sample (f32)
        # w_ref : (n_blocks, 9*NFC, NFC)  stacked ConvBlock weights (bf16);
        #                                 head rows for channels >= Cin are zero
        # tw_ref: (1, 9*NFC)              tail conv weight (bf16)
        # tb_ref: (1, 1)                  tail conv bias (f32)
        # o_ref : (1, H*W, 1)             output map, spatially flattened (f32)
        # pad_ref: (H+2, W+2, NFC)        zero-padded activation scratch (f32, VMEM)

        # Zero the padded scratch once; the 1-pixel border stays zero for every layer.
        pad_ref[...] = jnp.zeros_like(pad_ref)
        # Head input occupies channels [0, Cin); channels [Cin, NFC) stay zero and the
        # zero-filled head weight rows make them contribute nothing.
        pad_ref[1:H + 1, 1:W + 1, 0:Cin] = x_ref[0]

        inv_n = 1.0 / HW
        for layer in range(n_blocks):
            # Conv2d 3x3 as a single im2col MXU matmul (bf16 in, f32 accumulate).
            patch = im2col(pad_ref).astype(jnp.bfloat16)                 # (HW, 9*NFC)
            acc = jnp.dot(patch, w_ref[layer],
                          preferred_element_type=jnp.float32)            # (HW, NFC)
            # Conv bias omitted: a per-channel constant is cancelled exactly by the
            # affine-free InstanceNorm mean subtraction.
            # InstanceNorm2d(affine=False), single-pass mean / E[x^2].
            mean = jnp.sum(acc, axis=0, keepdims=True) * inv_n
            msq = jnp.sum(acc * acc, axis=0, keepdims=True) * inv_n
            var = msq - mean * mean
            y = (acc - mean) * jax.lax.rsqrt(var + IN_EPS)
            # LeakyReLU(0.2)
            y = jnp.where(y >= 0, y, LEAKY_SLOPE * y)
            # Next layer's input: write back into the padded scratch interior.
            pad_ref[1:H + 1, 1:W + 1, :] = y.reshape(H, W, NFC)

        # tail: Conv2d(NFC -> 1, 3x3, pad=1) with bias. Cout=1, so compute it as a
        # VPU multiply + lane reduce instead of a 1-column MXU matmul.
        patch = im2col(pad_ref)                                           # (HW, 9*NFC) f32
        tw = tw_ref[...].astype(jnp.float32)                              # (1, 9*NFC)
        tail = jnp.sum(patch * tw, axis=1, keepdims=True) + tb_ref[...]   # (HW, 1)
        o_ref[0] = tail.astype(o_ref.dtype)

    return kernel


def texture_discriminator_forward(x_nchw, params):
    """Forward pass. x_nchw: (N, nc_im, H, W) float32 (PyTorch NCHW convention)."""
    N, Cin, H, W = x_nchw.shape
    assert Cin <= NFC
    x = jnp.transpose(x_nchw, (0, 2, 3, 1)).astype(jnp.float32)           # -> NHWC

    KK = K * K
    n_blocks = 1 + len(params['body'])                                    # head + body

    # Stack ConvBlock weights as (n_blocks, 9*NFC, NFC), bf16 for the MXU.
    head_w = jnp.zeros((K, K, NFC, NFC), jnp.float32)
    head_w = head_w.at[:, :, :Cin, :].set(params['head']['w'])
    ws = [head_w.reshape(KK * NFC, NFC)]
    for p in params['body']:
        ws.append(p['w'].reshape(KK * NFC, NFC))
    w_all = jnp.stack(ws, axis=0).astype(jnp.bfloat16)                    # (n_blocks, 576, 64)

    tail_w = params['tail']['w'].reshape(KK * NFC)[None, :].astype(jnp.bfloat16)  # (1, 576)
    tail_b = params['tail']['b'].reshape(1, 1).astype(jnp.float32)                # (1, 1)

    kern = _make_fused_kernel(H, W, Cin, n_blocks)
    out = pl.pallas_call(
        kern,
        out_shape=jax.ShapeDtypeStruct((N, H * W, 1), jnp.float32),
        grid_spec=pltpu.PrefetchScalarGridSpec(
            num_scalar_prefetch=0,
            grid=(N,),
            in_specs=[
                pl.BlockSpec((1, H, W, Cin), lambda n: (n, 0, 0, 0)),
                pl.BlockSpec((n_blocks, KK * NFC, NFC), lambda n: (0, 0, 0)),
                pl.BlockSpec((1, KK * NFC), lambda n: (0, 0)),
                pl.BlockSpec((1, 1), lambda n: (0, 0)),
            ],
            out_specs=pl.BlockSpec((1, H * W, 1), lambda n: (n, 0, 0)),
            scratch_shapes=[pltpu.VMEM((H + 2, W + 2, NFC), jnp.float32)],
        ),
        compiler_params=pltpu.CompilerParams(dimension_semantics=("parallel",)),
    )(x, w_all, tail_w, tail_b)

    return out.reshape(N, H, W)[:, None, :, :]                            # NCHW (N, 1, H, W)


def init_params(key, nc_im=3, num_layer=5):
    """Deterministic synthetic parameters with PyTorch-equivalent shapes (HWIO)."""
    def conv_w(k_, cin, cout):
        fan_in = cin * K * K
        return jax.random.normal(k_, (K, K, cin, cout), jnp.float32) / jnp.sqrt(fan_in)

    n_body = num_layer - 2
    keys = iter(jax.random.split(key, 2 * (2 + n_body)))
    params = {
        'head': {'w': conv_w(next(keys), nc_im, NFC),
                 # NOTE: head/body conv biases are mathematically no-ops under
                 # affine-free InstanceNorm; kept only for parameter-shape parity.
                 'b': 0.01 * jax.random.normal(next(keys), (NFC,), jnp.float32)},
        'body': [],
    }
    for _ in range(n_body):
        params['body'].append({'w': conv_w(next(keys), NFC, NFC),
                               'b': 0.01 * jax.random.normal(next(keys), (NFC,), jnp.float32)})
    params['tail'] = {'w': conv_w(next(keys), NFC, 1),
                      'b': 0.01 * jax.random.normal(next(keys), (1,), jnp.float32)}
    return params


if __name__ == "__main__":
    key = jax.random.PRNGKey(0)
    pkey, xkey = jax.random.split(key)
    nc_im, num_layer = 3, 5          # opt.nc_im, opt.num_layer (SinGAN defaults)
    params = init_params(pkey, nc_im=nc_im, num_layer=num_layer)

    # NCHW input like the PyTorch module; padding=1 everywhere keeps spatial size.
    x = jax.random.normal(xkey, (2, nc_im, 16, 16), jnp.float32)

    fwd = jax.jit(texture_discriminator_forward)
    y = fwd(x, params)
    jax.block_until_ready(y)
    assert y.shape == (2, 1, 16, 16), y.shape
    assert bool(jnp.all(jnp.isfinite(y)))
    print("KERNEL_OK")
</pallas_src>

<mosaic_0001>
module attributes {stable_mosaic.version = 11 : i64} {
  func.func @kernel(%arg0: i32, %arg1: memref<1x16x16x3xf32, #tpu.memory_space<vmem>>, %arg2: memref<4x576x64xbf16, #tpu.memory_space<vmem>>, %arg3: memref<1x576xbf16, #tpu.memory_space<vmem>>, %arg4: memref<1x1xf32, #tpu.memory_space<vmem>>, %arg5: memref<1x256x1xf32, #tpu.memory_space<vmem>>, %arg6: memref<18x18x64xf32, #tpu.memory_space<vmem>>) attributes {dimension_semantics = [#tpu.dimension_semantics<parallel>], iteration_bounds = array<i64: 2>, scalar_prefetch = 0 : i64, scratch_operands = 1 : i64, tpu.core_type = #tpu.core_type<tc>, window_params = [{transform_indices = @transform_0, window_bounds = array<i64: 1, 16, 16, 3>}, {pipeline_mode = #tpu.pipeline_mode<synchronous>, transform_indices = @transform_1, window_bounds = array<i64: 4, 576, 64>}, {pipeline_mode = #tpu.pipeline_mode<synchronous>, transform_indices = @transform_2, window_bounds = array<i64: 1, 576>}, {pipeline_mode = #tpu.pipeline_mode<synchronous>, transform_indices = @transform_3, window_bounds = array<i64: 1, 1>}, {transform_indices = @transform_4, window_bounds = array<i64: 1, 256, 1>}]} {
    %cst = arith.constant 0.000000e+00 : f32
    %0 = vector.broadcast %cst : f32 to vector<18x18x64xf32>
    %c0 = arith.constant 0 : index
    %c0_0 = arith.constant 0 : index
    %c0_1 = arith.constant 0 : index
    %1 = vector.load %arg6[%c0, %c0_0, %c0_1] : memref<18x18x64xf32, #tpu.memory_space<vmem>>, vector<18x18x64xf32>
    tpu.vector_store %arg6[%c0, %c0_0, %c0_1], %0 {strides = array<i32>} : memref<18x18x64xf32, #tpu.memory_space<vmem>>, vector<18x18x64xf32>,
    %c0_2 = arith.constant 0 : index
    %c0_3 = arith.constant 0 : index
    %c0_4 = arith.constant 0 : index
    %c0_5 = arith.constant 0 : index
    %2 = vector.load %arg1[%c0_2, %c0_3, %c0_4, %c0_5] : memref<1x16x16x3xf32, #tpu.memory_space<vmem>>, vector<1x16x16x3xf32>
    %3 = vector.shape_cast %2 : vector<1x16x16x3xf32> to vector<16x16x3xf32>
    %c1 = arith.constant 1 : index
    %c1_6 = arith.constant 1 : index
    %c0_7 = arith.constant 0 : index
    %4 = vector.load %arg6[%c1, %c1_6, %c0_7] : memref<18x18x64xf32, #tpu.memory_space<vmem>>, vector<16x16x3xf32>
    tpu.vector_store %arg6[%c1, %c1_6, %c0_7], %3 {strides = array<i32>} : memref<18x18x64xf32, #tpu.memory_space<vmem>>, vector<16x16x3xf32>,
    %c0_8 = arith.constant 0 : index
    %c0_9 = arith.constant 0 : index
    %c0_10 = arith.constant 0 : index
    %5 = vector.load %arg6[%c0_8, %c0_9, %c0_10] : memref<18x18x64xf32, #tpu.memory_space<vmem>>, vector<16x16x64xf32>
    %6 = vector.shape_cast %5 : vector<16x16x64xf32> to vector<256x64xf32>
    %c0_11 = arith.constant 0 : index
    %c1_12 = arith.constant 1 : index
    %c0_13 = arith.constant 0 : index
    %7 = vector.load %arg6[%c0_11, %c1_12, %c0_13] : memref<18x18x64xf32, #tpu.memory_space<vmem>>, vector<16x16x64xf32>
    %8 = vector.shape_cast %7 : vector<16x16x64xf32> to vector<256x64xf32>
    %c0_14 = arith.constant 0 : index
    %c2 = arith.constant 2 : index
    %c0_15 = arith.constant 0 : index
    %9 = vector.load %arg6[%c0_14, %c2, %c0_15] : memref<18x18x64xf32, #tpu.memory_space<vmem>>, vector<16x16x64xf32>
    %10 = vector.shape_cast %9 : vector<16x16x64xf32> to vector<256x64xf32>
    %c1_16 = arith.constant 1 : index
    %c0_17 = arith.constant 0 : index
    %c0_18 = arith.constant 0 : index
    %11 = vector.load %arg6[%c1_16, %c0_17, %c0_18] : memref<18x18x64xf32, #tpu.memory_space<vmem>>, vector<16x16x64xf32>
    %12 = vector.shape_cast %11 : vector<16x16x64xf32> to vector<256x64xf32>
    %c1_19 = arith.constant 1 : index
    %c1_20 = arith.constant 1 : index
    %c0_21 = arith.constant 0 : index
    %13 = vector.load %arg6[%c1_19, %c1_20, %c0_21] : memref<18x18x64xf32, #tpu.memory_space<vmem>>, vector<16x16x64xf32>
    %14 = vector.shape_cast %13 : vector<16x16x64xf32> to vector<256x64xf32>
    %c1_22 = arith.constant 1 : index
    %c2_23 = arith.constant 2 : index
    %c0_24 = arith.constant 0 : index
    %15 = vector.load %arg6[%c1_22, %c2_23, %c0_24] : memref<18x18x64xf32, #tpu.memory_space<vmem>>, vector<16x16x64xf32>
    %16 = vector.shape_cast %15 : vector<16x16x64xf32> to vector<256x64xf32>
    %c2_25 = arith.constant 2 : index
    %c0_26 = arith.constant 0 : index
    %c0_27 = arith.constant 0 : index
    %17 = vector.load %arg6[%c2_25, %c0_26, %c0_27] : memref<18x18x64xf32, #tpu.memory_space<vmem>>, vector<16x16x64xf32>
    %18 = vector.shape_cast %17 : vector<16x16x64xf32> to vector<256x64xf32>
    %c2_28 = arith.constant 2 : index
    %c1_29 = arith.constant 1 : index
    %c0_30 = arith.constant 0 : index
    %19 = vector.load %arg6[%c2_28, %c1_29, %c0_30] : memref<18x18x64xf32, #tpu.memory_space<vmem>>, vector<16x16x64xf32>
    %20 = vector.shape_cast %19 : vector<16x16x64xf32> to vector<256x64xf32>
    %c2_31 = arith.constant 2 : index
    %c2_32 = arith.constant 2 : index
    %c0_33 = arith.constant 0 : index
    %21 = vector.load %arg6[%c2_31, %c2_32, %c0_33] : memref<18x18x64xf32, #tpu.memory_space<vmem>>, vector<16x16x64xf32>
    %22 = vector.shape_cast %21 : vector<16x16x64xf32> to vector<256x64xf32>
    %23 = tpu.concatenate %6, %8, %10, %12, %14, %16, %18, %20, %22 in 1 : vector<256x64xf32>, vector<256x64xf32>, vector<256x64xf32>, vector<256x64xf32>, vector<256x64xf32>, vector<256x64xf32>, vector<256x64xf32>, vector<256x64xf32>, vector<256x64xf32> -> vector<256x576xf32>
    %24 = arith.truncf %23 : vector<256x576xf32> to vector<256x576xbf16>
    %c0_34 = arith.constant 0 : index
    %c0_35 = arith.constant 0 : index
    %c0_36 = arith.constant 0 : index
    %25 = vector.load %arg2[%c0_34, %c0_35, %c0_36] : memref<4x576x64xbf16, #tpu.memory_space<vmem>>, vector<1x576x64xbf16>
    %26 = vector.shape_cast %25 : vector<1x576x64xbf16> to vector<576x64xbf16>
    %cst_37 = arith.constant dense<0.000000e+00> : vector<256x64xf32>
    %27 = tpu.matmul %24, %26, %cst_37 {dimension_numbers = #tpu.dot_dimension_numbers<[1], [0], [0], [1], [0, 0, 1, 1], [], []>} : vector<256x576xbf16>, vector<576x64xbf16>, vector<256x64xf32> -> vector<256x64xf32>
    %cst_38 = arith.constant dense<0.000000e+00> : vector<64xf32>
    %28 = vector.multi_reduction <add>, %27, %cst_38 [0] : vector<256x64xf32> to vector<64xf32>
    %29 = vector.shape_cast %28 : vector<64xf32> to vector<1x64xf32>
    %cst_39 = arith.constant 3.906250e-03 : f32
    %30 = vector.broadcast %cst_39 : f32 to vector<1x64xf32>
    %31 = arith.mulf %29, %30 : vector<1x64xf32>
    %32 = arith.mulf %27, %27 : vector<256x64xf32>
    %cst_40 = arith.constant dense<0.000000e+00> : vector<64xf32>
    %33 = vector.multi_reduction <add>, %32, %cst_40 [0] : vector<256x64xf32> to vector<64xf32>
    %34 = vector.shape_cast %33 : vector<64xf32> to vector<1x64xf32>
    %cst_41 = arith.constant 3.906250e-03 : f32
    %35 = vector.broadcast %cst_41 : f32 to vector<1x64xf32>
    %36 = arith.mulf %34, %35 : vector<1x64xf32>
    %37 = arith.mulf %31, %31 : vector<1x64xf32>
    %38 = arith.subf %36, %37 : vector<1x64xf32>
    %39 = vector.broadcast %31 : vector<1x64xf32> to vector<256x64xf32>
    %40 = arith.subf %27, %39 : vector<256x64xf32>
    %cst_42 = arith.constant 9.99999974E-6 : f32
    %41 = vector.broadcast %cst_42 : f32 to vector<1x64xf32>
    %42 = arith.addf %38, %41 : vector<1x64xf32>
    %43 = math.rsqrt %42 : vector<1x64xf32>
    %44 = vector.broadcast %43 : vector<1x64xf32> to vector<256x64xf32>
    %45 = arith.mulf %40, %44 : vector<256x64xf32>
    %cst_43 = arith.constant 0.000000e+00 : f32
    %46 = vector.broadcast %cst_43 : f32 to vector<256x64xf32>
    %47 = arith.cmpf oge, %45, %46 : vector<256x64xf32>
    %cst_44 = arith.constant 2.000000e-01 : f32
    %48 = vector.broadcast %cst_44 : f32 to vector<256x64xf32>
    %49 = arith.mulf %48, %45 : vector<256x64xf32>
    %50 = arith.select %47, %45, %49 : vector<256x64xi1>, vector<256x64xf32>
    %51 = vector.shape_cast %50 : vector<256x64xf32> to vector<16x16x64xf32>
    %c1_45 = arith.constant 1 : index
    %c1_46 = arith.constant 1 : index
    %c0_47 = arith.constant 0 : index
    %52 = vector.load %arg6[%c1_45, %c1_46, %c0_47] : memref<18x18x64xf32, #tpu.memory_space<vmem>>, vector<16x16x64xf32>
    tpu.vector_store %arg6[%c1_45, %c1_46, %c0_47], %51 {strides = array<i32>} : memref<18x18x64xf32, #tpu.memory_space<vmem>>, vector<16x16x64xf32>,
    %c0_48 = arith.constant 0 : index
    %c0_49 = arith.constant 0 : index
    %c0_50 = arith.constant 0 : index
    %53 = vector.load %arg6[%c0_48, %c0_49, %c0_50] : memref<18x18x64xf32, #tpu.memory_space<vmem>>, vector<16x16x64xf32>
    %54 = vector.shape_cast %53 : vector<16x16x64xf32> to vector<256x64xf32>
    %c0_51 = arith.constant 0 : index
    %c1_52 = arith.constant 1 : index
    %c0_53 = arith.constant 0 : index
    %55 = vector.load %arg6[%c0_51, %c1_52, %c0_53] : memref<18x18x64xf32, #tpu.memory_space<vmem>>, vector<16x16x64xf32>
    %56 = vector.shape_cast %55 : vector<16x16x64xf32> to vector<256x64xf32>
    %c0_54 = arith.constant 0 : index
    %c2_55 = arith.constant 2 : index
    %c0_56 = arith.constant 0 : index
    %57 = vector.load %arg6[%c0_54, %c2_55, %c0_56] : memref<18x18x64xf32, #tpu.memory_space<vmem>>, vector<16x16x64xf32>
    %58 = vector.shape_cast %57 : vector<16x16x64xf32> to vector<256x64xf32>
    %c1_57 = arith.constant 1 : index
    %c0_58 = arith.constant 0 : index
    %c0_59 = arith.constant 0 : index
    %59 = vector.load %arg6[%c1_57, %c0_58, %c0_59] : memref<18x18x64xf32, #tpu.memory_space<vmem>>, vector<16x16x64xf32>
    %60 = vector.shape_cast %59 : vector<16x16x64xf32> to vector<256x64xf32>
    %c1_60 = arith.constant 1 : index
    %c1_61 = arith.constant 1 : index
    %c0_62 = arith.constant 0 : index
    %61 = vector.load %arg6[%c1_60, %c1_61, %c0_62] : memref<18x18x64xf32, #tpu.memory_space<vmem>>, vector<16x16x64xf32>
    %62 = vector.shape_cast %61 : vector<16x16x64xf32> to vector<256x64xf32>
    %c1_63 = arith.constant 1 : index
    %c2_64 = arith.constant 2 : index
    %c0_65 = arith.constant 0 : index
    %63 = vector.load %arg6[%c1_63, %c2_64, %c0_65] : memref<18x18x64xf32, #tpu.memory_space<vmem>>, vector<16x16x64xf32>
    %64 = vector.shape_cast %63 : vector<16x16x64xf32> to vector<256x64xf32>
    %c2_66 = arith.constant 2 : index
    %c0_67 = arith.constant 0 : index
    %c0_68 = arith.constant 0 : index
    %65 = vector.load %arg6[%c2_66, %c0_67, %c0_68] : memref<18x18x64xf32, #tpu.memory_space<vmem>>, vector<16x16x64xf32>
    %66 = vector.shape_cast %65 : vector<16x16x64xf32> to vector<256x64xf32>
    %c2_69 = arith.constant 2 : index
    %c1_70 = arith.constant 1 : index
    %c0_71 = arith.constant 0 : index
    %67 = vector.load %arg6[%c2_69, %c1_70, %c0_71] : memref<18x18x64xf32, #tpu.memory_space<vmem>>, vector<16x16x64xf32>
    %68 = vector.shape_cast %67 : vector<16x16x64xf32> to vector<256x64xf32>
    %c2_72 = arith.constant 2 : index
    %c2_73 = arith.constant 2 : index
    %c0_74 = arith.constant 0 : index
    %69 = vector.load %arg6[%c2_72, %c2_73, %c0_74] : memref<18x18x64xf32, #tpu.memory_space<vmem>>, vector<16x16x64xf32>
    %70 = vector.shape_cast %69 : vector<16x16x64xf32> to vector<256x64xf32>
    %71 = tpu.concatenate %54, %56, %58, %60, %62, %64, %66, %68, %70 in 1 : vector<256x64xf32>, vector<256x64xf32>, vector<256x64xf32>, vector<256x64xf32>, vector<256x64xf32>, vector<256x64xf32>, vector<256x64xf32>, vector<256x64xf32>, vector<256x64xf32> -> vector<256x576xf32>
    %72 = arith.truncf %71 : vector<256x576xf32> to vector<256x576xbf16>
    %c1_75 = arith.constant 1 : index
    %c0_76 = arith.constant 0 : index
    %c0_77 = arith.constant 0 : index
    %73 = vector.load %arg2[%c1_75, %c0_76, %c0_77] : memref<4x576x64xbf16, #tpu.memory_space<vmem>>, vector<1x576x64xbf16>
    %74 = vector.shape_cast %73 : vector<1x576x64xbf16> to vector<576x64xbf16>
    %cst_78 = arith.constant dense<0.000000e+00> : vector<256x64xf32>
    %75 = tpu.matmul %72, %74, %cst_78 {dimension_numbers = #tpu.dot_dimension_numbers<[1], [0], [0], [1], [0, 0, 1, 1], [], []>} : vector<256x576xbf16>, vector<576x64xbf16>, vector<256x64xf32> -> vector<256x64xf32>
    %cst_79 = arith.constant dense<0.000000e+00> : vector<64xf32>
    %76 = vector.multi_reduction <add>, %75, %cst_79 [0] : vector<256x64xf32> to vector<64xf32>
    %77 = vector.shape_cast %76 : vector<64xf32> to vector<1x64xf32>
    %cst_80 = arith.constant 3.906250e-03 : f32
    %78 = vector.broadcast %cst_80 : f32 to vector<1x64xf32>
    %79 = arith.mulf %77, %78 : vector<1x64xf32>
    %80 = arith.mulf %75, %75 : vector<256x64xf32>
    %cst_81 = arith.constant dense<0.000000e+00> : vector<64xf32>
    %81 = vector.multi_reduction <add>, %80, %cst_81 [0] : vector<256x64xf32> to vector<64xf32>
    %82 = vector.shape_cast %81 : vector<64xf32> to vector<1x64xf32>
    %cst_82 = arith.constant 3.906250e-03 : f32
    %83 = vector.broadcast %cst_82 : f32 to vector<1x64xf32>
    %84 = arith.mulf %82, %83 : vector<1x64xf32>
    %85 = arith.mulf %79, %79 : vector<1x64xf32>
    %86 = arith.subf %84, %85 : vector<1x64xf32>
    %87 = vector.broadcast %79 : vector<1x64xf32> to vector<256x64xf32>
    %88 = arith.subf %75, %87 : vector<256x64xf32>
    %cst_83 = arith.constant 9.99999974E-6 : f32
    %89 = vector.broadcast %cst_83 : f32 to vector<1x64xf32>
    %90 = arith.addf %86, %89 : vector<1x64xf32>
    %91 = math.rsqrt %90 : vector<1x64xf32>
    %92 = vector.broadcast %91 : vector<1x64xf32> to vector<256x64xf32>
    %93 = arith.mulf %88, %92 : vector<256x64xf32>
    %cst_84 = arith.constant 0.000000e+00 : f32
    %94 = vector.broadcast %cst_84 : f32 to vector<256x64xf32>
    %95 = arith.cmpf oge, %93, %94 : vector<256x64xf32>
    %cst_85 = arith.constant 2.000000e-01 : f32
    %96 = vector.broadcast %cst_85 : f32 to vector<256x64xf32>
    %97 = arith.mulf %96, %93 : vector<256x64xf32>
    %98 = arith.select %95, %93, %97 : vector<256x64xi1>, vector<256x64xf32>
    %99 = vector.shape_cast %98 : vector<256x64xf32> to vector<16x16x64xf32>
    %c1_86 = arith.constant 1 : index
    %c1_87 = arith.constant 1 : index
    %c0_88 = arith.constant 0 : index
    %100 = vector.load %arg6[%c1_86, %c1_87, %c0_88] : memref<18x18x64xf32, #tpu.memory_space<vmem>>, vector<16x16x64xf32>
    tpu.vector_store %arg6[%c1_86, %c1_87, %c0_88], %99 {strides = array<i32>} : memref<18x18x64xf32, #tpu.memory_space<vmem>>, vector<16x16x64xf32>,
    %c0_89 = arith.constant 0 : index
    %c0_90 = arith.constant 0 : index
    %c0_91 = arith.constant 0 : index
    %101 = vector.load %arg6[%c0_89, %c0_90, %c0_91] : memref<18x18x64xf32, #tpu.memory_space<vmem>>, vector<16x16x64xf32>
    %102 = vector.shape_cast %101 : vector<16x16x64xf32> to vector<256x64xf32>
    %c0_92 = arith.constant 0 : index
    %c1_93 = arith.constant 1 : index
    %c0_94 = arith.constant 0 : index
    %103 = vector.load %arg6[%c0_92, %c1_93, %c0_94] : memref<18x18x64xf32, #tpu.memory_space<vmem>>, vector<16x16x64xf32>
    %104 = vector.shape_cast %103 : vector<16x16x64xf32> to vector<256x64xf32>
    %c0_95 = arith.constant 0 : index
    %c2_96 = arith.constant 2 : index
    %c0_97 = arith.constant 0 : index
    %105 = vector.load %arg6[%c0_95, %c2_96, %c0_97] : memref<18x18x64xf32, #tpu.memory_space<vmem>>, vector<16x16x64xf32>
    %106 = vector.shape_cast %105 : vector<16x16x64xf32> to vector<256x64xf32>
    %c1_98 = arith.constant 1 : index
    %c0_99 = arith.constant 0 : index
    %c0_100 = arith.constant 0 : index
    %107 = vector.load %arg6[%c1_98, %c0_99, %c0_100] : memref<18x18x64xf32, #tpu.memory_space<vmem>>, vector<16x16x64xf32>
    %108 = vector.shape_cast %107 : vector<16x16x64xf32> to vector<256x64xf32>
    %c1_101 = arith.constant 1 : index
    %c1_102 = arith.constant 1 : index
    %c0_103 = arith.constant 0 : index
    %109 = vector.load %arg6[%c1_101, %c1_102, %c0_103] : memref<18x18x64xf32, #tpu.memory_space<vmem>>, vector<16x16x64xf32>
    %110 = vector.shape_cast %109 : vector<16x16x64xf32> to vector<256x64xf32>
    %c1_104 = arith.constant 1 : index
    %c2_105 = arith.constant 2 : index
    %c0_106 = arith.constant 0 : index
    %111 = vector.load %arg6[%c1_104, %c2_105, %c0_106] : memref<18x18x64xf32, #tpu.memory_space<vmem>>, vector<16x16x64xf32>
    %112 = vector.shape_cast %111 : vector<16x16x64xf32> to vector<256x64xf32>
    %c2_107 = arith.constant 2 : index
    %c0_108 = arith.constant 0 : index
    %c0_109 = arith.constant 0 : index
    %113 = vector.load %arg6[%c2_107, %c0_108, %c0_109] : memref<18x18x64xf32, #tpu.memory_space<vmem>>, vector<16x16x64xf32>
    %114 = vector.shape_cast %113 : vector<16x16x64xf32> to vector<256x64xf32>
    %c2_110 = arith.constant 2 : index
    %c1_111 = arith.constant 1 : index
    %c0_112 = arith.constant 0 : index
    %115 = vector.load %arg6[%c2_110, %c1_111, %c0_112] : memref<18x18x64xf32, #tpu.memory_space<vmem>>, vector<16x16x64xf32>
    %116 = vector.shape_cast %115 : vector<16x16x64xf32> to vector<256x64xf32>
    %c2_113 = arith.constant 2 : index
    %c2_114 = arith.constant 2 : index
    %c0_115 = arith.constant 0 : index
    %117 = vector.load %arg6[%c2_113, %c2_114, %c0_115] : memref<18x18x64xf32, #tpu.memory_space<vmem>>, vector<16x16x64xf32>
    %118 = vector.shape_cast %117 : vector<16x16x64xf32> to vector<256x64xf32>
    %119 = tpu.concatenate %102, %104, %106, %108, %110, %112, %114, %116, %118 in 1 : vector<256x64xf32>, vector<256x64xf32>, vector<256x64xf32>, vector<256x64xf32>, vector<256x64xf32>, vector<256x64xf32>, vector<256x64xf32>, vector<256x64xf32>, vector<256x64xf32> -> vector<256x576xf32>
    %120 = arith.truncf %119 : vector<256x576xf32> to vector<256x576xbf16>
    %c2_116 = arith.constant 2 : index
    %c0_117 = arith.constant 0 : index
    %c0_118 = arith.constant 0 : index
    %121 = vector.load %arg2[%c2_116, %c0_117, %c0_118] : memref<4x576x64xbf16, #tpu.memory_space<vmem>>, vector<1x576x64xbf16>
    %122 = vector.shape_cast %121 : vector<1x576x64xbf16> to vector<576x64xbf16>
    %cst_119 = arith.constant dense<0.000000e+00> : vector<256x64xf32>
    %123 = tpu.matmul %120, %122, %cst_119 {dimension_numbers = #tpu.dot_dimension_numbers<[1], [0], [0], [1], [0, 0, 1, 1], [], []>} : vector<256x576xbf16>, vector<576x64xbf16>, vector<256x64xf32> -> vector<256x64xf32>
    %cst_120 = arith.constant dense<0.000000e+00> : vector<64xf32>
    %124 = vector.multi_reduction <add>, %123, %cst_120 [0] : vector<256x64xf32> to vector<64xf32>
    %125 = vector.shape_cast %124 : vector<64xf32> to vector<1x64xf32>
    %cst_121 = arith.constant 3.906250e-03 : f32
    %126 = vector.broadcast %cst_121 : f32 to vector<1x64xf32>
    %127 = arith.mulf %125, %126 : vector<1x64xf32>
    %128 = arith.mulf %123, %123 : vector<256x64xf32>
    %cst_122 = arith.constant dense<0.000000e+00> : vector<64xf32>
    %129 = vector.multi_reduction <add>, %128, %cst_122 [0] : vector<256x64xf32> to vector<64xf32>
    %130 = vector.shape_cast %129 : vector<64xf32> to vector<1x64xf32>
    %cst_123 = arith.constant 3.906250e-03 : f32
    %131 = vector.broadcast %cst_123 : f32 to vector<1x64xf32>
    %132 = arith.mulf %130, %131 : vector<1x64xf32>
    %133 = arith.mulf %127, %127 : vector<1x64xf32>
    %134 = arith.subf %132, %133 : vector<1x64xf32>
    %135 = vector.broadcast %127 : vector<1x64xf32> to vector<256x64xf32>
    %136 = arith.subf %123, %135 : vector<256x64xf32>
    %cst_124 = arith.constant 9.99999974E-6 : f32
    %137 = vector.broadcast %cst_124 : f32 to vector<1x64xf32>
    %138 = arith.addf %134, %137 : vector<1x64xf32>
    %139 = math.rsqrt %138 : vector<1x64xf32>
    %140 = vector.broadcast %139 : vector<1x64xf32> to vector<256x64xf32>
    %141 = arith.mulf %136, %140 : vector<256x64xf32>
    %cst_125 = arith.constant 0.000000e+00 : f32
    %142 = vector.broadcast %cst_125 : f32 to vector<256x64xf32>
    %143 = arith.cmpf oge, %141, %142 : vector<256x64xf32>
    %cst_126 = arith.constant 2.000000e-01 : f32
    %144 = vector.broadcast %cst_126 : f32 to vector<256x64xf32>
    %145 = arith.mulf %144, %141 : vector<256x64xf32>
    %146 = arith.select %143, %141, %145 : vector<256x64xi1>, vector<256x64xf32>
    %147 = vector.shape_cast %146 : vector<256x64xf32> to vector<16x16x64xf32>
    %c1_127 = arith.constant 1 : index
    %c1_128 = arith.constant 1 : index
    %c0_129 = arith.constant 0 : index
    %148 = vector.load %arg6[%c1_127, %c1_128, %c0_129] : memref<18x18x64xf32, #tpu.memory_space<vmem>>, vector<16x16x64xf32>
    tpu.vector_store %arg6[%c1_127, %c1_128, %c0_129], %147 {strides = array<i32>} : memref<18x18x64xf32, #tpu.memory_space<vmem>>, vector<16x16x64xf32>,
    %c0_130 = arith.constant 0 : index
    %c0_131 = arith.constant 0 : index
    %c0_132 = arith.constant 0 : index
    %149 = vector.load %arg6[%c0_130, %c0_131, %c0_132] : memref<18x18x64xf32, #tpu.memory_space<vmem>>, vector<16x16x64xf32>
    %150 = vector.shape_cast %149 : vector<16x16x64xf32> to vector<256x64xf32>
    %c0_133 = arith.constant 0 : index
    %c1_134 = arith.constant 1 : index
    %c0_135 = arith.constant 0 : index
    %151 = vector.load %arg6[%c0_133, %c1_134, %c0_135] : memref<18x18x64xf32, #tpu.memory_space<vmem>>, vector<16x16x64xf32>
    %152 = vector.shape_cast %151 : vector<16x16x64xf32> to vector<256x64xf32>
    %c0_136 = arith.constant 0 : index
    %c2_137 = arith.constant 2 : index
    %c0_138 = arith.constant 0 : index
    %153 = vector.load %arg6[%c0_136, %c2_137, %c0_138] : memref<18x18x64xf32, #tpu.memory_space<vmem>>, vector<16x16x64xf32>
    %154 = vector.shape_cast %153 : vector<16x16x64xf32> to vector<256x64xf32>
    %c1_139 = arith.constant 1 : index
    %c0_140 = arith.constant 0 : index
    %c0_141 = arith.constant 0 : index
    %155 = vector.load %arg6[%c1_139, %c0_140, %c0_141] : memref<18x18x64xf32, #tpu.memory_space<vmem>>, vector<16x16x64xf32>
    %156 = vector.shape_cast %155 : vector<16x16x64xf32> to vector<256x64xf32>
    %c1_142 = arith.constant 1 : index
    %c1_143 = arith.constant 1 : index
    %c0_144 = arith.constant 0 : index
    %157 = vector.load %arg6[%c1_142, %c1_143, %c0_144] : memref<18x18x64xf32, #tpu.memory_space<vmem>>, vector<16x16x64xf32>
    %158 = vector.shape_cast %157 : vector<16x16x64xf32> to vector<256x64xf32>
    %c1_145 = arith.constant 1 : index
    %c2_146 = arith.constant 2 : index
    %c0_147 = arith.constant 0 : index
    %159 = vector.load %arg6[%c1_145, %c2_146, %c0_147] : memref<18x18x64xf32, #tpu.memory_space<vmem>>, vector<16x16x64xf32>
    %160 = vector.shape_cast %159 : vector<16x16x64xf32> to vector<256x64xf32>
    %c2_148 = arith.constant 2 : index
    %c0_149 = arith.constant 0 : index
    %c0_150 = arith.constant 0 : index
    %161 = vector.load %arg6[%c2_148, %c0_149, %c0_150] : memref<18x18x64xf32, #tpu.memory_space<vmem>>, vector<16x16x64xf32>
    %162 = vector.shape_cast %161 : vector<16x16x64xf32> to vector<256x64xf32>
    %c2_151 = arith.constant 2 : index
    %c1_152 = arith.constant 1 : index
    %c0_153 = arith.constant 0 : index
    %163 = vector.load %arg6[%c2_151, %c1_152, %c0_153] : memref<18x18x64xf32, #tpu.memory_space<vmem>>, vector<16x16x64xf32>
    %164 = vector.shape_cast %163 : vector<16x16x64xf32> to vector<256x64xf32>
    %c2_154 = arith.constant 2 : index
    %c2_155 = arith.constant 2 : index
    %c0_156 = arith.constant 0 : index
    %165 = vector.load %arg6[%c2_154, %c2_155, %c0_156] : memref<18x18x64xf32, #tpu.memory_space<vmem>>, vector<16x16x64xf32>
    %166 = vector.shape_cast %165 : vector<16x16x64xf32> to vector<256x64xf32>
    %167 = tpu.concatenate %150, %152, %154, %156, %158, %160, %162, %164, %166 in 1 : vector<256x64xf32>, vector<256x64xf32>, vector<256x64xf32>, vector<256x64xf32>, vector<256x64xf32>, vector<256x64xf32>, vector<256x64xf32>, vector<256x64xf32>, vector<256x64xf32> -> vector<256x576xf32>
    %168 = arith.truncf %167 : vector<256x576xf32> to vector<256x576xbf16>
    %c3 = arith.constant 3 : index
    %c0_157 = arith.constant 0 : index
    %c0_158 = arith.constant 0 : index
    %169 = vector.load %arg2[%c3, %c0_157, %c0_158] : memref<4x576x64xbf16, #tpu.memory_space<vmem>>, vector<1x576x64xbf16>
    %170 = vector.shape_cast %169 : vector<1x576x64xbf16> to vector<576x64xbf16>
    %cst_159 = arith.constant dense<0.000000e+00> : vector<256x64xf32>
    %171 = tpu.matmul %168, %170, %cst_159 {dimension_numbers = #tpu.dot_dimension_numbers<[1], [0], [0], [1], [0, 0, 1, 1], [], []>} : vector<256x576xbf16>, vector<576x64xbf16>, vector<256x64xf32> -> vector<256x64xf32>
    %cst_160 = arith.constant dense<0.000000e+00> : vector<64xf32>
    %172 = vector.multi_reduction <add>, %171, %cst_160 [0] : vector<256x64xf32> to vector<64xf32>
    %173 = vector.shape_cast %172 : vector<64xf32> to vector<1x64xf32>
    %cst_161 = arith.constant 3.906250e-03 : f32
    %174 = vector.broadcast %cst_161 : f32 to vector<1x64xf32>
    %175 = arith.mulf %173, %174 : vector<1x64xf32>
    %176 = arith.mulf %171, %171 : vector<256x64xf32>
    %cst_162 = arith.constant dense<0.000000e+00> : vector<64xf32>
    %177 = vector.multi_reduction <add>, %176, %cst_162 [0] : vector<256x64xf32> to vector<64xf32>
    %178 = vector.shape_cast %177 : vector<64xf32> to vector<1x64xf32>
    %cst_163 = arith.constant 3.906250e-03 : f32
    %179 = vector.broadcast %cst_163 : f32 to vector<1x64xf32>
    %180 = arith.mulf %178, %179 : vector<1x64xf32>
    %181 = arith.mulf %175, %175 : vector<1x64xf32>
    %182 = arith.subf %180, %181 : vector<1x64xf32>
    %183 = vector.broadcast %175 : vector<1x64xf32> to vector<256x64xf32>
    %184 = arith.subf %171, %183 : vector<256x64xf32>
    %cst_164 = arith.constant 9.99999974E-6 : f32
    %185 = vector.broadcast %cst_164 : f32 to vector<1x64xf32>
    %186 = arith.addf %182, %185 : vector<1x64xf32>
    %187 = math.rsqrt %186 : vector<1x64xf32>
    %188 = vector.broadcast %187 : vector<1x64xf32> to vector<256x64xf32>
    %189 = arith.mulf %184, %188 : vector<256x64xf32>
    %cst_165 = arith.constant 0.000000e+00 : f32
    %190 = vector.broadcast %cst_165 : f32 to vector<256x64xf32>
    %191 = arith.cmpf oge, %189, %190 : vector<256x64xf32>
    %cst_166 = arith.constant 2.000000e-01 : f32
    %192 = vector.broadcast %cst_166 : f32 to vector<256x64xf32>
    %193 = arith.mulf %192, %189 : vector<256x64xf32>
    %194 = arith.select %191, %189, %193 : vector<256x64xi1>, vector<256x64xf32>
    %195 = vector.shape_cast %194 : vector<256x64xf32> to vector<16x16x64xf32>
    %c1_167 = arith.constant 1 : index
    %c1_168 = arith.constant 1 : index
    %c0_169 = arith.constant 0 : index
    %196 = vector.load %arg6[%c1_167, %c1_168, %c0_169] : memref<18x18x64xf32, #tpu.memory_space<vmem>>, vector<16x16x64xf32>
    tpu.vector_store %arg6[%c1_167, %c1_168, %c0_169], %195 {strides = array<i32>} : memref<18x18x64xf32, #tpu.memory_space<vmem>>, vector<16x16x64xf32>,
    %c0_170 = arith.constant 0 : index
    %c0_171 = arith.constant 0 : index
    %c0_172 = arith.constant 0 : index
    %197 = vector.load %arg6[%c0_170, %c0_171, %c0_172] : memref<18x18x64xf32, #tpu.memory_space<vmem>>, vector<16x16x64xf32>
    %198 = vector.shape_cast %197 : vector<16x16x64xf32> to vector<256x64xf32>
    %c0_173 = arith.constant 0 : index
    %c1_174 = arith.constant 1 : index
    %c0_175 = arith.constant 0 : index
    %199 = vector.load %arg6[%c0_173, %c1_174, %c0_175] : memref<18x18x64xf32, #tpu.memory_space<vmem>>, vector<16x16x64xf32>
    %200 = vector.shape_cast %199 : vector<16x16x64xf32> to vector<256x64xf32>
    %c0_176 = arith.constant 0 : index
    %c2_177 = arith.constant 2 : index
    %c0_178 = arith.constant 0 : index
    %201 = vector.load %arg6[%c0_176, %c2_177, %c0_178] : memref<18x18x64xf32, #tpu.memory_space<vmem>>, vector<16x16x64xf32>
    %202 = vector.shape_cast %201 : vector<16x16x64xf32> to vector<256x64xf32>
    %c1_179 = arith.constant 1 : index
    %c0_180 = arith.constant 0 : index
    %c0_181 = arith.constant 0 : index
    %203 = vector.load %arg6[%c1_179, %c0_180, %c0_181] : memref<18x18x64xf32, #tpu.memory_space<vmem>>, vector<16x16x64xf32>
    %204 = vector.shape_cast %203 : vector<16x16x64xf32> to vector<256x64xf32>
    %c1_182 = arith.constant 1 : index
    %c1_183 = arith.constant 1 : index
    %c0_184 = arith.constant 0 : index
    %205 = vector.load %arg6[%c1_182, %c1_183, %c0_184] : memref<18x18x64xf32, #tpu.memory_space<vmem>>, vector<16x16x64xf32>
    %206 = vector.shape_cast %205 : vector<16x16x64xf32> to vector<256x64xf32>
    %c1_185 = arith.constant 1 : index
    %c2_186 = arith.constant 2 : index
    %c0_187 = arith.constant 0 : index
    %207 = vector.load %arg6[%c1_185, %c2_186, %c0_187] : memref<18x18x64xf32, #tpu.memory_space<vmem>>, vector<16x16x64xf32>
    %208 = vector.shape_cast %207 : vector<16x16x64xf32> to vector<256x64xf32>
    %c2_188 = arith.constant 2 : index
    %c0_189 = arith.constant 0 : index
    %c0_190 = arith.constant 0 : index
    %209 = vector.load %arg6[%c2_188, %c0_189, %c0_190] : memref<18x18x64xf32, #tpu.memory_space<vmem>>, vector<16x16x64xf32>
    %210 = vector.shape_cast %209 : vector<16x16x64xf32> to vector<256x64xf32>
    %c2_191 = arith.constant 2 : index
    %c1_192 = arith.constant 1 : index
    %c0_193 = arith.constant 0 : index
    %211 = vector.load %arg6[%c2_191, %c1_192, %c0_193] : memref<18x18x64xf32, #tpu.memory_space<vmem>>, vector<16x16x64xf32>
    %212 = vector.shape_cast %211 : vector<16x16x64xf32> to vector<256x64xf32>
    %c2_194 = arith.constant 2 : index
    %c2_195 = arith.constant 2 : index
    %c0_196 = arith.constant 0 : index
    %213 = vector.load %arg6[%c2_194, %c2_195, %c0_196] : memref<18x18x64xf32, #tpu.memory_space<vmem>>, vector<16x16x64xf32>
    %214 = vector.shape_cast %213 : vector<16x16x64xf32> to vector<256x64xf32>
    %215 = tpu.concatenate %198, %200, %202, %204, %206, %208, %210, %212, %214 in 1 : vector<256x64xf32>, vector<256x64xf32>, vector<256x64xf32>, vector<256x64xf32>, vector<256x64xf32>, vector<256x64xf32>, vector<256x64xf32>, vector<256x64xf32>, vector<256x64xf32> -> vector<256x576xf32>
    %c0_197 = arith.constant 0 : index
    %c0_198 = arith.constant 0 : index
    %216 = vector.load %arg3[%c0_197, %c0_198] : memref<1x576xbf16, #tpu.memory_space<vmem>>, vector<1x576xbf16>
    %217 = arith.extf %216 : vector<1x576xbf16> to vector<1x576xf32>
    %218 = vector.broadcast %217 : vector<1x576xf32> to vector<256x576xf32>
    %219 = arith.mulf %215, %218 : vector<256x576xf32>
    %cst_199 = arith.constant dense<0.000000e+00> : vector<256xf32>
    %220 = vector.multi_reduction <add>, %219, %cst_199 [1] : vector<256x576xf32> to vector<256xf32>
    %221 = vector.shape_cast %220 : vector<256xf32> to vector<256x1xf32>
    %c0_200 = arith.constant 0 : index
    %c0_201 = arith.constant 0 : index
    %222 = vector.load %arg4[%c0_200, %c0_201] : memref<1x1xf32, #tpu.memory_space<vmem>>, vector<1x1xf32>
    %223 = vector.broadcast %222 : vector<1x1xf32> to vector<256x1xf32>
    %224 = arith.addf %221, %223 : vector<256x1xf32>
    %c0_202 = arith.constant 0 : index
    %c0_203 = arith.constant 0 : index
    %c0_204 = arith.constant 0 : index
    %225 = vector.load %arg5[%c0_202, %c0_203, %c0_204] : memref<1x256x1xf32, #tpu.memory_space<vmem>>, vector<1x256x1xf32>
    %226 = vector.shape_cast %225 : vector<1x256x1xf32> to vector<256x1xf32>
    %227 = vector.shape_cast %224 : vector<256x1xf32> to vector<1x256x1xf32>
    tpu.vector_store %arg5[%c0_202, %c0_203, %c0_204], %227 {strides = array<i32>} : memref<1x256x1xf32, #tpu.memory_space<vmem>>, vector<1x256x1xf32>,
    return
  }
  func.func @transform_0(%arg0: i32) -> (i32, i32, i32, i32) {
    %c0_i32 = arith.constant 0 : i32
    %c0_i32_0 = arith.constant 0 : i32
    %c0_i32_1 = arith.constant 0 : i32
    %c0_i32_2 = arith.constant 0 : i32
    return %arg0, %c0_i32, %c0_i32_0, %c0_i32_1 : i32, i32, i32, i32
  }
  func.func @transform_1(%arg0: i32) -> (i32, i32, i32) {
    %c0_i32 = arith.constant 0 : i32
    %c0_i32_0 = arith.constant 0 : i32
    %c0_i32_1 = arith.constant 0 : i32
    %c0_i32_2 = arith.constant 0 : i32
    return %c0_i32, %c0_i32_0, %c0_i32_1 : i32, i32, i32
  }
  func.func @transform_2(%arg0: i32) -> (i32, i32) {
    %c0_i32 = arith.constant 0 : i32
    %c0_i32_0 = arith.constant 0 : i32
    %c0_i32_1 = arith.constant 0 : i32
    return %c0_i32, %c0_i32_0 : i32, i32
  }
  func.func @transform_3(%arg0: i32) -> (i32, i32) {
    %c0_i32 = arith.constant 0 : i32
    %c0_i32_0 = arith.constant 0 : i32
    %c0_i32_1 = arith.constant 0 : i32
    return %c0_i32, %c0_i32_0 : i32, i32
  }
  func.func @transform_4(%arg0: i32) -> (i32, i32, i32) {
    %c0_i32 = arith.constant 0 : i32
    %c0_i32_0 = arith.constant 0 : i32
    %c0_i32_1 = arith.constant 0 : i32
    return %arg0, %c0_i32, %c0_i32_0 : i32, i32, i32
  }
}

</mosaic_0001>

<llo_original>
// kernel: texture_discriminator_forward.1
$region0: #{texture_discriminator_forward.1}
  #allocation0 [shape = 'u32[]', space=smem, size = 0x4, offset = 0x4, fixed_abs, tag = 'smem constant byte address 0x4 - core index']
  #allocation1 [shape = 'u32[144,128]{1,0:T(1,128)}', space=vmem, size = 0x12000, scoped, tag = 'internal scratch']
  #allocation2 [shape = 'f32[18,18,64]{2,1,0:T(8,128)}', space=vmem, size = 0x36000, scoped, tag = 'scratch operand']
  #allocation3 [shape = 'f32[1,1]{1,0:T(1,128)S(1)}', space=vmem, size = 0x200, scoped, tag = 'scoped memory for texture_discriminator_forward.1']
  %s0 = inlined_call_operand.vmem [shape: f32[2,16,16,3], index: 0, kind: input, shape index: {}]
  %s1 = inlined_call_operand.vmem [shape: bf16[4,576,64], index: 1, kind: input, shape index: {}]
  %s2 = inlined_call_operand.vmem [shape: bf16[1,576], index: 2, kind: input, shape index: {}]
  %s3 = inlined_call_operand.<no memory space> [shape: f32[1,1], index: 3, kind: input, shape index: {}]
  %s4 = inlined_call_operand.vmem [shape: f32[2,256,1], index: 4, kind: output, shape index: {}]
  %s5 = sld [smem:[#allocation0]]
  $region49: #{texture_discriminator_forward.1} parent=0
    _
  %s7 = ssub.s32 1, %s5
  %s8 = scalar_select 0, %s7, %s5
  %v9 = vstv %s3
  %10 = vst [vmem:[#allocation3] sm:$0x1] %v9
  loop: start=0, step=1, limit=4
  $region2: #{texture_discriminator_forward.1} parent=0 // loop_pre_header
    _
  $region3: #{texture_discriminator_forward.1} parent=0 // loop_header
    %s12 = sphi 0, %s16
    %p13 = scmp.ge.s32.totalorder %s12, 4
    %s22 = sphi 0, %s24
    %s25 = sphi 0, %s22
    %s26 = sphi 0, %s25
    %s42 = sphi 0, %s26
    %s46 = sphi 0, %s46
    %s48 = sphi 0, %s46
    %s49 = sphi 0, %s48
    %s63 = sphi 0, %s49
    %s67 = sphi 0, %s67
    %s69 = sphi 0, %s67
    %s70 = sphi 0, %s69
    %s84 = sphi 0, %s70
    %s88 = sphi 0, %s88
    %s90 = sphi 0, %s88
    %s91 = sphi 0, %s90
    %s105 = sphi 0, %s91
    %s111 = sphi 0, %s113
    %s114 = sphi 0, %s111
    %s115 = sphi 0, %s114
    %s131 = sphi 0, %s115
  $region4: #{texture_discriminator_forward.1} parent=0 // loop_header_branch
    %15 = sbr.rel (%p13) target = $region8
  $region5: #{texture_discriminator_forward.1} parent=0 // loop_body
    %s17 = ssub.s32 %s12, 1
    %s18 = ssub.s32 %s12, 2
    %s19 = sadd.s32 %s12, 1
    %s20 = ssub.s32 %s12, %s19
    %p21 = scmp.eq.s32.totalorder %s20, 0
    %s23 = sadd.s32 %s22, 1
    %s24 = scalar_select %p21, %s22, %s23
    %p27 = pneg %p21
    %p28 = scmp.eq.s32.totalorder %s12, 1
    %p29 = por %p27, %p28
    %p30 = scmp.ne.s32.totalorder %s22, %s25
    %p31 = scmp.eq.s32.totalorder %s12, 0
    %p32 = por %p30, %p31
    %p33 = scmp.ne.s32.totalorder %s22, %s25
    %p34 = scmp.eq.s32.totalorder %s17, 1
    %p35 = por %p33, %p34
    %p36 = scmp.ne.s32.totalorder %s25, %s26
    %p37 = scmp.eq.s32.totalorder %s17, 0
    %p38 = por %p36, %p37
    %p39 = scmp.ne.s32.totalorder %s25, %s26
    %p40 = scmp.eq.s32.totalorder %s18, 1
    %p41 = por %p39, %p40
    %p43 = scmp.ne.s32.totalorder %s26, %s42
    %p44 = scmp.eq.s32.totalorder %s18, 0
    %p45 = por %p43, %p44
    %s47 = sadd.s32 %s46, 1
    %p50 = scmp.eq.s32.totalorder %s12, 1
    %p51 = scmp.ne.s32.totalorder %s46, %s48
    %p52 = scmp.eq.s32.totalorder %s12, 0
    %p53 = por %p51, %p52
    %p54 = scmp.ne.s32.totalorder %s46, %s48
    %p55 = scmp.eq.s32.totalorder %s17, 1
    %p56 = por %p54, %p55
    %p57 = scmp.ne.s32.totalorder %s48, %s49
    %p58 = scmp.eq.s32.totalorder %s17, 0
    %p59 = por %p57, %p58
    %p60 = scmp.ne.s32.totalorder %s48, %s49
    %p61 = scmp.eq.s32.totalorder %s18, 1
    %p62 = por %p60, %p61
    %p64 = scmp.ne.s32.totalorder %s49, %s63
    %p65 = scmp.eq.s32.totalorder %s18, 0
    %p66 = por %p64, %p65
    %s68 = sadd.s32 %s67, 1
    %p71 = scmp.eq.s32.totalorder %s12, 1
    %p72 = scmp.ne.s32.totalorder %s67, %s69
    %p73 = scmp.eq.s32.totalorder %s12, 0
    %p74 = por %p72, %p73
    %p75 = scmp.ne.s32.totalorder %s67, %s69
    %p76 = scmp.eq.s32.totalorder %s17, 1
    %p77 = por %p75, %p76
    %p78 = scmp.ne.s32.totalorder %s69, %s70
    %p79 = scmp.eq.s32.totalorder %s17, 0
    %p80 = por %p78, %p79
    %p81 = scmp.ne.s32.totalorder %s69, %s70
    %p82 = scmp.eq.s32.totalorder %s18, 1
    %p83 = por %p81, %p82
    %p85 = scmp.ne.s32.totalorder %s70, %s84
    %p86 = scmp.eq.s32.totalorder %s18, 0
    %p87 = por %p85, %p86
    %s89 = sadd.s32 %s88, 1
    %p92 = scmp.eq.s32.totalorder %s12, 1
    %p93 = scmp.ne.s32.totalorder %s88, %s90
    %p94 = scmp.eq.s32.totalorder %s12, 0
    %p95 = por %p93, %p94
    %p96 = scmp.ne.s32.totalorder %s88, %s90
    %p97 = scmp.eq.s32.totalorder %s17, 1
    %p98 = por %p96, %p97
    %p99 = scmp.ne.s32.totalorder %s90, %s91
    %p100 = scmp.eq.s32.totalorder %s17, 0
    %p101 = por %p99, %p100
    %p102 = scmp.ne.s32.totalorder %s90, %s91
    %p103 = scmp.eq.s32.totalorder %s18, 1
    %p104 = por %p102, %p103
    %p106 = scmp.ne.s32.totalorder %s91, %s105
    %p107 = scmp.eq.s32.totalorder %s18, 0
    %p108 = por %p106, %p107
    %s109 = ssub.s32 %s12, %s19
    %p110 = scmp.eq.s32.totalorder %s109, 0
    %s112 = sadd.s32 %s111, 1
    %s113 = scalar_select %p110, %s111, %s112
    %p116 = pneg %p110
    %p117 = scmp.eq.s32.totalorder %s12, 1
    %p118 = por %p116, %p117
    %p119 = scmp.ne.s32.totalorder %s111, %s114
    %p120 = scmp.eq.s32.totalorder %s12, 0
    %p121 = por %p119, %p120
    %p122 = scmp.ne.s32.totalorder %s111, %s114
    %p123 = scmp.eq.s32.totalorder %s17, 1
    %p124 = por %p122, %p123
    %p125 = scmp.ne.s32.totalorder %s114, %s115
    %p126 = scmp.eq.s32.totalorder %s17, 0
    %p127 = por %p125, %p126
    %p128 = scmp.ne.s32.totalorder %s114, %s115
    %p129 = scmp.eq.s32.totalorder %s18, 1
    %p130 = por %p128, %p129
    %p132 = scmp.ne.s32.totalorder %s115, %s131
    %p133 = scmp.eq.s32.totalorder %s18, 0
    %p134 = por %p132, %p133
    %p135 = scmp.le.s32.totalorder 1, %s12
    %p136 = scmp.lt.s32.totalorder %s12, 3
    %p137 = pnand %p135, %p136
    %p138 = pneg %p137
    // Predicated region
    $region9: #{texture_discriminator_forward.1} parent=5 // pred_check
      _
    $region10: #{texture_discriminator_forward.1} parent=5 // pred_check_branch
      %140 = sbr.rel (%p137) target = $region12
    $region11: #{texture_discriminator_forward.1} parent=5 // pred_region
      %s141 = ssub.s32 %s12, 1
      // Predicated region
      $region13: #{texture_discriminator_forward.1} parent=11 // pred_check
        %p142 = pneg %p59
      $region14: #{texture_discriminator_forward.1} parent=11 // pred_check_branch
        %144 = sbr.rel (%p142) target = $region16
      $region15: #{texture_discriminator_forward.1} parent=11 // pred_region
        _
      $region16: #{texture_discriminator_forward.1} parent=11 // pred_fallthru
        _
      // Predicated region
      $region17: #{texture_discriminator_forward.1} parent=11 // pred_check
        %p145 = pneg %p80
      $region18: #{texture_discriminator_forward.1} parent=11 // pred_check_branch
        %147 = sbr.rel (%p145) target = $region20
      $region19: #{texture_discriminator_forward.1} parent=11 // pred_region
        _
      $region20: #{texture_discriminator_forward.1} parent=11 // pred_fallthru
        _
      // Predicated region
      $region21: #{texture_discriminator_forward.1} parent=11 // pred_check
        %p148 = pneg %p101
      $region22: #{texture_discriminator_forward.1} parent=11 // pred_check_branch
        %150 = sbr.rel (%p148) target = $region24
      $region23: #{texture_discriminator_forward.1} parent=11 // pred_region
        _
      $region24: #{texture_discriminator_forward.1} parent=11 // pred_fallthru
        _
    $region12: #{texture_discriminator_forward.1} parent=5 // pred_fallthru
      _
    %p151 = scmp.lt.s32.totalorder %s12, 2
    // Predicated region
    $region25: #{texture_discriminator_forward.1} parent=5 // pred_check
      %p152 = pneg %p151
    $region26: #{texture_discriminator_forward.1} parent=5 // pred_check_branch
      %154 = sbr.rel (%p152) target = $region28
    $region27: #{texture_discriminator_forward.1} parent=5 // pred_region
      // Predicated region
      $region29: #{texture_discriminator_forward.1} parent=27 // pred_check
        %p155 = pneg %p32
      $region30: #{texture_discriminator_forward.1} parent=27 // pred_check_branch
        %157 = sbr.rel (%p155) target = $region32
      $region31: #{texture_discriminator_forward.1} parent=27 // pred_region
        %p158 = scmp.lt.s32.totalorder %s12, 1
        %s159 = scalar_select %p158, %s12, 1
        %s160 = smul.addr %s159, 32
        %s161 = smul.addr %s160, 8
        %s162 = scalar_lea.vmem %s0, %s161
      $region32: #{texture_discriminator_forward.1} parent=27 // pred_fallthru
        _
    $region28: #{texture_discriminator_forward.1} parent=5 // pred_fallthru
      _
    %p163 = scmp.le.s32.totalorder 1, %s12
    %p164 = scmp.lt.s32.totalorder %s12, 3
    %p165 = pnand %p163, %p164
    %p166 = pneg %p165
    // Predicated region
    $region33: #{texture_discriminator_forward.1} parent=5 // pred_check
      _
    $region34: #{texture_discriminator_forward.1} parent=5 // pred_check_branch
      %168 = sbr.rel (%p165) target = $region36
    $region35: #{texture_discriminator_forward.1} parent=5 // pred_region
      %s169 = ssub.s32 %s12, 1
      %p170 = scmp.lt.s32.totalorder %s17, 1
      %s171 = scalar_select %p170, %s17, 1
      %s172 = smul.addr %s171, 32
      %s173 = smul.addr %s172, 8
      %s174 = scalar_lea.vmem %s0, %s173
      %p175 = pneg %p38
      %p176 = pneg %p35
      %p177 = pneg %p59
      %p178 = pneg %p56
      %p179 = pneg %p80
      %p180 = pneg %p77
      %p181 = pneg %p101
      %p182 = pneg %p98
      %p183 = pneg %p127
      %p184 = pneg %p124
      %p185 = scmp.lt.s32.totalorder %s17, 1
      %s186 = scalar_select %p185, %s17, 1
      %s187 = smul.addr %s186, 32
      %s188 = smul.addr %s187, 8
      %s189 = scalar_lea.vmem %s4, %s188
      %p190 = scmp.lt.s32.totalorder %s17, 1
      %s191 = scalar_select %p190, %s17, 1
      %s192 = smul.addr %s191, 32
      %s193 = smul.addr %s192, 8
      %s194 = scalar_lea.vmem %s0, %s193
      %p195 = scmp.lt.s32.totalorder %s17, 1
      %s196 = scalar_select %p195, %s17, 1
      %s197 = smul.addr %s196, 32
      %s198 = smul.addr %s197, 8
      %s199 = scalar_lea.vmem %s4, %s198
      %vm201 = vcmask 523264
      %202 = vst.msk [vmem:[#allocation2] sm:$0xff] %vm201, 0.0
      %203 = vst.msk [vmem:[#allocation2 + $0x8] sm:$0xff] %vm201, 0.0
      %vm204 = vcmask 517120
      %205 = vst.msk [vmem:[#allocation2 + $0x10] sm:$0x3] %vm204, 0.0
      %206 = vst.msk [vmem:[#allocation2 + $0x18] sm:$0xff] %vm201, 0.0
      %207 = vst.msk [vmem:[#allocation2 + $0x20] sm:$0xff] %vm201, 0.0
      %208 = vst.msk [vmem:[#allocation2 + $0x28] sm:$0x3] %vm204, 0.0
      %209 = vst.msk [vmem:[#allocation2 + $0x30] sm:$0xff] %vm201, 0.0
      %210 = vst.msk [vmem:[#allocation2 + $0x38] sm:$0xff] %vm201, 0.0
      %211 = vst.msk [vmem:[#allocation2 + $0x40] sm:$0x3] %vm204, 0.0
      %212 = vst.msk [vmem:[#allocation2 + $0x48] sm:$0xff] %vm201, 0.0
      %213 = vst.msk [vmem:[#allocation2 + $0x50] sm:$0xff] %vm201, 0.0
      %214 = vst.msk [vmem:[#allocation2 + $0x58] sm:$0x3] %vm204, 0.0
      %215 = vst.msk [vmem:[#allocation2 + $0x60] sm:$0xff] %vm201, 0.0
      %216 = vst.msk [vmem:[#allocation2 + $0x68] sm:$0xff] %vm201, 0.0
      %217 = vst.msk [vmem:[#allocation2 + $0x70] sm:$0x3] %vm204, 0.0
      %218 = vst.msk [vmem:[#allocation2 + $0x78] sm:$0xff] %vm201, 0.0
      %219 = vst.msk [vmem:[#allocation2 + $0x80] sm:$0xff] %vm201, 0.0
      %220 = vst.msk [vmem:[#allocation2 + $0x88] sm:$0x3] %vm204, 0.0
      %221 = vst.msk [vmem:[#allocation2 + $0x90] sm:$0xff] %vm201, 0.0
      %222 = vst.msk [vmem:[#allocation2 + $0x98] sm:$0xff] %vm201, 0.0
      %223 = vst.msk [vmem:[#allocation2 + $0xa0] sm:$0x3] %vm204, 0.0
      %224 = vst.msk [vmem:[#allocation2 + $0xa8] sm:$0xff] %vm201, 0.0
      %225 = vst.msk [vmem:[#allocation2 + $0xb0] sm:$0xff] %vm201, 0.0
      %226 = vst.msk [vmem:[#allocation2 + $0xb8] sm:$0x3] %vm204, 0.0
      %227 = vst.msk [vmem:[#allocation2 + $0xc0] sm:$0xff] %vm201, 0.0
      %228 = vst.msk [vmem:[#allocation2 + $0xc8] sm:$0xff] %vm201, 0.0
      %229 = vst.msk [vmem:[#allocation2 + $0xd0] sm:$0x3] %vm204, 0.0
      %230 = vst.msk [vmem:[#allocation2 + $0xd8] sm:$0xff] %vm201, 0.0
      %231 = vst.msk [vmem:[#allocation2 + $0xe0] sm:$0xff] %vm201, 0.0
      %232 = vst.msk [vmem:[#allocation2 + $0xe8] sm:$0x3] %vm204, 0.0
      %233 = vst.msk [vmem:[#allocation2 + $0xf0] sm:$0xff] %vm201, 0.0
      %234 = vst.msk [vmem:[#allocation2 + $0xf8] sm:$0xff] %vm201, 0.0
      %235 = vst.msk [vmem:[#allocation2 + $0x100] sm:$0x3] %vm204, 0.0
      %236 = vst.msk [vmem:[#allocation2 + $0x108] sm:$0xff] %vm201, 0.0
      %237 = vst.msk [vmem:[#allocation2 + $0x110] sm:$0xff] %vm201, 0.0
      %238 = vst.msk [vmem:[#allocation2 + $0x118] sm:$0x3] %vm204, 0.0
      %239 = vst.msk [vmem:[#allocation2 + $0x120] sm:$0xff] %vm201, 0.0
      %240 = vst.msk [vmem:[#allocation2 + $0x128] sm:$0xff] %vm201, 0.0
      %241 = vst.msk [vmem:[#allocation2 + $0x130] sm:$0x3] %vm204, 0.0
      %242 = vst.msk [vmem:[#allocation2 + $0x138] sm:$0xff] %vm201, 0.0
      %243 = vst.msk [vmem:[#allocation2 + $0x140] sm:$0xff] %vm201, 0.0
      %244 = vst.msk [vmem:[#allocation2 + $0x148] sm:$0x3] %vm204, 0.0
      %245 = vst.msk [vmem:[#allocation2 + $0x150] sm:$0xff] %vm201, 0.0
      %246 = vst.msk [vmem:[#allocation2 + $0x158] sm:$0xff] %vm201, 0.0
      %247 = vst.msk [vmem:[#allocation2 + $0x160] sm:$0x3] %vm204, 0.0
      %248 = vst.msk [vmem:[#allocation2 + $0x168] sm:$0xff] %vm201, 0.0
      %249 = vst.msk [vmem:[#allocation2 + $0x170] sm:$0xff] %vm201, 0.0
      %250 = vst.msk [vmem:[#allocation2 + $0x178] sm:$0x3] %vm204, 0.0
      %251 = vst.msk [vmem:[#allocation2 + $0x180] sm:$0xff] %vm201, 0.0
      %252 = vst.msk [vmem:[#allocation2 + $0x188] sm:$0xff] %vm201, 0.0
      %253 = vst.msk [vmem:[#allocation2 + $0x190] sm:$0x3] %vm204, 0.0
      %254 = vst.msk [vmem:[#allocation2 + $0x198] sm:$0xff] %vm201, 0.0
      %255 = vst.msk [vmem:[#allocation2 + $0x1a0] sm:$0xff] %vm201, 0.0
      %256 = vst.msk [vmem:[#allocation2 + $0x1a8] sm:$0x3] %vm204, 0.0
      %v257 = vld [vmem:[%s194] sm:$0xff]
      %v258 = vld [vmem:[%s194 + $0x8] sm:$0xff]
      %v259 = vld [vmem:[%s194 + $0x10] sm:$0xff]
      %v260 = vld [vmem:[%s194 + $0x18] sm:$0xff]
      %v261 = vld [vmem:[%s194 + $0x20] sm:$0xff]
      %v262 = vld [vmem:[%s194 + $0x28] sm:$0xff]
      %v263 = vld [vmem:[%s194 + $0x30] sm:$0xff]
      %v264 = vld [vmem:[%s194 + $0x38] sm:$0xff]
      %v265 = vld [vmem:[%s194 + $0x40] sm:$0xff]
      %v266 = vld [vmem:[%s194 + $0x48] sm:$0xff]
      %v267 = vld [vmem:[%s194 + $0x50] sm:$0xff]
      %v268 = vld [vmem:[%s194 + $0x58] sm:$0xff]
      %v269 = vld [vmem:[%s194 + $0x60] sm:$0xff]
      %v270 = vld [vmem:[%s194 + $0x68] sm:$0xff]
      %v271 = vld [vmem:[%s194 + $0x70] sm:$0xff]
      %v272 = vld [vmem:[%s194 + $0x78] sm:$0xff]
      %v273 = vld [vmem:[%s194 + $0x80] sm:$0xff]
      %v274 = vld [vmem:[%s194 + $0x88] sm:$0xff]
      %v275 = vld [vmem:[%s194 + $0x90] sm:$0xff]
      %v276 = vld [vmem:[%s194 + $0x98] sm:$0xff]
      %v277 = vld [vmem:[%s194 + $0xa0] sm:$0xff]
      %v278 = vld [vmem:[%s194 + $0xa8] sm:$0xff]
      %v279 = vld [vmem:[%s194 + $0xb0] sm:$0xff]
      %v280 = vld [vmem:[%s194 + $0xb8] sm:$0xff]
      %v281 = vld [vmem:[%s194 + $0xc0] sm:$0xff]
      %v282 = vld [vmem:[%s194 + $0xc8] sm:$0xff]
      %v283 = vld [vmem:[%s194 + $0xd0] sm:$0xff]
      %v284 = vld [vmem:[%s194 + $0xd8] sm:$0xff]
      %v285 = vld [vmem:[%s194 + $0xe0] sm:$0xff]
      %v286 = vld [vmem:[%s194 + $0xe8] sm:$0xff]
      %v287 = vld [vmem:[%s194 + $0xf0] sm:$0xff]
      %v288 = vld [vmem:[%s194 + $0xf8] sm:$0xff]
      %s289 = scalar_lea.vmem [#allocation2], 24
      %vm290 = vcmask 23552
      %291 = vst.msk [vmem:[%s289 + $0x1] sm:$0xff] %vm290, %v257
      %292 = vst.msk [vmem:[%s289 + $0x9] sm:$0xff] %vm290, %v258
      %293 = vst.msk [vmem:[%s289 + $0x19] sm:$0xff] %vm290, %v259
      %294 = vst.msk [vmem:[%s289 + $0x21] sm:$0xff] %vm290, %v260
      %295 = vst.msk [vmem:[%s289 + $0x31] sm:$0xff] %vm290, %v261
      %296 = vst.msk [vmem:[%s289 + $0x39] sm:$0xff] %vm290, %v262
      %297 = vst.msk [vmem:[%s289 + $0x49] sm:$0xff] %vm290, %v263
      %298 = vst.msk [vmem:[%s289 + $0x51] sm:$0xff] %vm290, %v264
      %299 = vst.msk [vmem:[%s289 + $0x61] sm:$0xff] %vm290, %v265
      %300 = vst.msk [vmem:[%s289 + $0x69] sm:$0xff] %vm290, %v266
      %301 = vst.msk [vmem:[%s289 + $0x79] sm:$0xff] %vm290, %v267
      %302 = vst.msk [vmem:[%s289 + $0x81] sm:$0xff] %vm290, %v268
      %303 = vst.msk [vmem:[%s289 + $0x91] sm:$0xff] %vm290, %v269
      %304 = vst.msk [vmem:[%s289 + $0x99] sm:$0xff] %vm290, %v270
      %305 = vst.msk [vmem:[%s289 + $0xa9] sm:$0xff] %vm290, %v271
      %306 = vst.msk [vmem:[%s289 + $0xb1] sm:$0xff] %vm290, %v272
      %307 = vst.msk [vmem:[%s289 + $0xc1] sm:$0xff] %vm290, %v273
      %308 = vst.msk [vmem:[%s289 + $0xc9] sm:$0xff] %vm290, %v274
      %309 = vst.msk [vmem:[%s289 + $0xd9] sm:$0xff] %vm290, %v275
      %310 = vst.msk [vmem:[%s289 + $0xe1] sm:$0xff] %vm290, %v276
      %311 = vst.msk [vmem:[%s289 + $0xf1] sm:$0xff] %vm290, %v277
      %312 = vst.msk [vmem:[%s289 + $0xf9] sm:$0xff] %vm290, %v278
      %313 = vst.msk [vmem:[%s289 + $0x109] sm:$0xff] %vm290, %v279
      %314 = vst.msk [vmem:[%s289 + $0x111] sm:$0xff] %vm290, %v280
      %315 = vst.msk [vmem:[%s289 + $0x121] sm:$0xff] %vm290, %v281
      %316 = vst.msk [vmem:[%s289 + $0x129] sm:$0xff] %vm290, %v282
      %317 = vst.msk [vmem:[%s289 + $0x139] sm:$0xff] %vm290, %v283
      %318 = vst.msk [vmem:[%s289 + $0x141] sm:$0xff] %vm290, %v284
      %319 = vst.msk [vmem:[%s289 + $0x151] sm:$0xff] %vm290, %v285
      %320 = vst.msk [vmem:[%s289 + $0x159] sm:$0xff] %vm290, %v286
      %321 = vst.msk [vmem:[%s289 + $0x169] sm:$0xff] %vm290, %v287
      %322 = vst.msk [vmem:[%s289 + $0x171] sm:$0xff] %vm290, %v288
      %v323 = vld [vmem:[#allocation2] sm:$0xff]
      %v324 = vld [vmem:[#allocation2 + $0x8] sm:$0xff]
      %v325 = vld [vmem:[#allocation2 + $0x18] sm:$0xff]
      %v326 = vld [vmem:[#allocation2 + $0x20] sm:$0xff]
      %v327 = vld [vmem:[#allocation2 + $0x30] sm:$0xff]
      %v328 = vld [vmem:[#allocation2 + $0x38] sm:$0xff]
      %v329 = vld [vmem:[#allocation2 + $0x48] sm:$0xff]
      %v330 = vld [vmem:[#allocation2 + $0x50] sm:$0xff]
      %v331 = vld [vmem:[#allocation2 + $0x60] sm:$0xff]
      %v332 = vld [vmem:[#allocation2 + $0x68] sm:$0xff]
      %v333 = vld [vmem:[#allocation2 + $0x78] sm:$0xff]
      %v334 = vld [vmem:[#allocation2 + $0x80] sm:$0xff]
      %v335 = vld [vmem:[#allocation2 + $0x90] sm:$0xff]
      %v336 = vld [vmem:[#allocation2 + $0x98] sm:$0xff]
      %v337 = vld [vmem:[#allocation2 + $0xa8] sm:$0xff]
      %v338 = vld [vmem:[#allocation2 + $0xb0] sm:$0xff]
      %v339 = vld [vmem:[#allocation2 + $0xc0] sm:$0xff]
      %v340 = vld [vmem:[#allocation2 + $0xc8] sm:$0xff]
      %v341 = vld [vmem:[#allocation2 + $0xd8] sm:$0xff]
      %v342 = vld [vmem:[#allocation2 + $0xe0] sm:$0xff]
      %v343 = vld [vmem:[#allocation2 + $0xf0] sm:$0xff]
      %v344 = vld [vmem:[#allocation2 + $0xf8] sm:$0xff]
      %v345 = vld [vmem:[#allocation2 + $0x108] sm:$0xff]
      %v346 = vld [vmem:[#allocation2 + $0x110] sm:$0xff]
      %v347 = vld [vmem:[#allocation2 + $0x120] sm:$0xff]
      %v348 = vld [vmem:[#allocation2 + $0x128] sm:$0xff]
      %v349 = vld [vmem:[#allocation2 + $0x138] sm:$0xff]
      %v350 = vld [vmem:[#allocation2 + $0x140] sm:$0xff]
      %v351 = vld [vmem:[#allocation2 + $0x150] sm:$0xff]
      %v352 = vld [vmem:[#allocation2 + $0x158] sm:$0xff]
      %v353 = vld [vmem:[#allocation2 + $0x168] sm:$0xff]
      %v354 = vld [vmem:[#allocation2 + $0x170] sm:$0xff]
      %v355 = vld [vmem:[#allocation2 + $0x1] sm:$0xff]
      %v356 = vld [vmem:[#allocation2 + $0x9] sm:$0xff]
      %v357 = vld [vmem:[#allocation2 + $0x19] sm:$0xff]
      %v358 = vld [vmem:[#allocation2 + $0x21] sm:$0xff]
      %v359 = vld [vmem:[#allocation2 + $0x31] sm:$0xff]
      %v360 = vld [vmem:[#allocation2 + $0x39] sm:$0xff]
      %v361 = vld [vmem:[#allocation2 + $0x49] sm:$0xff]
      %v362 = vld [vmem:[#allocation2 + $0x51] sm:$0xff]
      %v363 = vld [vmem:[#allocation2 + $0x61] sm:$0xff]
      %v364 = vld [vmem:[#allocation2 + $0x69] sm:$0xff]
      %v365 = vld [vmem:[#allocation2 + $0x79] sm:$0xff]
      %v366 = vld [vmem:[#allocation2 + $0x81] sm:$0xff]
      %v367 = vld [vmem:[#allocation2 + $0x91] sm:$0xff]
      %v368 = vld [vmem:[#allocation2 + $0x99] sm:$0xff]
      %v369 = vld [vmem:[#allocation2 + $0xa9] sm:$0xff]
      %v370 = vld [vmem:[#allocation2 + $0xb1] sm:$0xff]
      %v371 = vld [vmem:[#allocation2 + $0xc1] sm:$0xff]
      %v372 = vld [vmem:[#allocation2 + $0xc9] sm:$0xff]
      %v373 = vld [vmem:[#allocation2 + $0xd9] sm:$0xff]
      %v374 = vld [vmem:[#allocation2 + $0xe1] sm:$0xff]
      %v375 = vld [vmem:[#allocation2 + $0xf1] sm:$0xff]
      %v376 = vld [vmem:[#allocation2 + $0xf9] sm:$0xff]
      %v377 = vld [vmem:[#allocation2 + $0x109] sm:$0xff]
      %v378 = vld [vmem:[#allocation2 + $0x111] sm:$0xff]
      %v379 = vld [vmem:[#allocation2 + $0x121] sm:$0xff]
      %v380 = vld [vmem:[#allocation2 + $0x129] sm:$0xff]
      %v381 = vld [vmem:[#allocation2 + $0x139] sm:$0xff]
      %v382 = vld [vmem:[#allocation2 + $0x141] sm:$0xff]
      %v383 = vld [vmem:[#allocation2 + $0x151] sm:$0xff]
      %v384 = vld [vmem:[#allocation2 + $0x159] sm:$0xff]
      %v385 = vld [vmem:[#allocation2 + $0x169] sm:$0xff]
      %v386 = vld [vmem:[#allocation2 + $0x171] sm:$0xff]
      %v387 = vld [vmem:[#allocation2 + $0x2] sm:$0xff]
      %v388 = vld [vmem:[#allocation2 + $0xa] sm:$0xff]
      %v389 = vld [vmem:[#allocation2 + $0x1a] sm:$0xff]
      %v390 = vld [vmem:[#allocation2 + $0x22] sm:$0xff]
      %v391 = vld [vmem:[#allocation2 + $0x32] sm:$0xff]
      %v392 = vld [vmem:[#allocation2 + $0x3a] sm:$0xff]
      %v393 = vld [vmem:[#allocation2 + $0x4a] sm:$0xff]
      %v394 = vld [vmem:[#allocation2 + $0x52] sm:$0xff]
      %v395 = vld [vmem:[#allocation2 + $0x62] sm:$0xff]
      %v396 = vld [vmem:[#allocation2 + $0x6a] sm:$0xff]
      %v397 = vld [vmem:[#allocation2 + $0x7a] sm:$0xff]
      %v398 = vld [vmem:[#allocation2 + $0x82] sm:$0xff]
      %v399 = vld [vmem:[#allocation2 + $0x92] sm:$0xff]
      %v400 = vld [vmem:[#allocation2 + $0x9a] sm:$0xff]
      %v401 = vld [vmem:[#allocation2 + $0xaa] sm:$0xff]
      %v402 = vld [vmem:[#allocation2 + $0xb2] sm:$0xff]
      %v403 = vld [vmem:[#allocation2 + $0xc2] sm:$0xff]
      %v404 = vld [vmem:[#allocation2 + $0xca] sm:$0xff]
      %v405 = vld [vmem:[#allocation2 + $0xda] sm:$0xff]
      %v406 = vld [vmem:[#allocation2 + $0xe2] sm:$0xff]
      %v407 = vld [vmem:[#allocation2 + $0xf2] sm:$0xff]
      %v408 = vld [vmem:[#allocation2 + $0xfa] sm:$0xff]
      %v409 = vld [vmem:[#allocation2 + $0x10a] sm:$0xff]
      %v410 = vld [vmem:[#allocation2 + $0x112] sm:$0xff]
      %v411 = vld [vmem:[#allocation2 + $0x122] sm:$0xff]
      %v412 = vld [vmem:[#allocation2 + $0x12a] sm:$0xff]
      %v413 = vld [vmem:[#allocation2 + $0x13a] sm:$0xff]
      %v414 = vld [vmem:[#allocation2 + $0x142] sm:$0xff]
      %v415 = vld [vmem:[#allocation2 + $0x152] sm:$0xff]
      %v416 = vld [vmem:[#allocation2 + $0x15a] sm:$0xff]
      %v417 = vld [vmem:[#allocation2 + $0x16a] sm:$0xff]
      %v418 = vld [vmem:[#allocation2 + $0x172] sm:$0xff]
      %v419 = vld [vmem:[%s289] sm:$0xff]
      %v420 = vld [vmem:[%s289 + $0x8] sm:$0xff]
      %v421 = vld [vmem:[%s289 + $0x18] sm:$0xff]
      %v422 = vld [vmem:[%s289 + $0x20] sm:$0xff]
      %v423 = vld [vmem:[%s289 + $0x30] sm:$0xff]
      %v424 = vld [vmem:[%s289 + $0x38] sm:$0xff]
      %v425 = vld [vmem:[%s289 + $0x48] sm:$0xff]
      %v426 = vld [vmem:[%s289 + $0x50] sm:$0xff]
      %v427 = vld [vmem:[%s289 + $0x60] sm:$0xff]
      %v428 = vld [vmem:[%s289 + $0x68] sm:$0xff]
      %v429 = vld [vmem:[%s289 + $0x78] sm:$0xff]
      %v430 = vld [vmem:[%s289 + $0x80] sm:$0xff]
      %v431 = vld [vmem:[%s289 + $0x90] sm:$0xff]
      %v432 = vld [vmem:[%s289 + $0x98] sm:$0xff]
      %v433 = vld [vmem:[%s289 + $0xa8] sm:$0xff]
      %v434 = vld [vmem:[%s289 + $0xb0] sm:$0xff]
      %v435 = vld [vmem:[%s289 + $0xc0] sm:$0xff]
      %v436 = vld [vmem:[%s289 + $0xc8] sm:$0xff]
      %v437 = vld [vmem:[%s289 + $0xd8] sm:$0xff]
      %v438 = vld [vmem:[%s289 + $0xe0] sm:$0xff]
      %v439 = vld [vmem:[%s289 + $0xf0] sm:$0xff]
      %v440 = vld [vmem:[%s289 + $0xf8] sm:$0xff]
      %v441 = vld [vmem:[%s289 + $0x108] sm:$0xff]
      %v442 = vld [vmem:[%s289 + $0x110] sm:$0xff]
      %v443 = vld [vmem:[%s289 + $0x120] sm:$0xff]
      %v444 = vld [vmem:[%s289 + $0x128] sm:$0xff]
      %v445 = vld [vmem:[%s289 + $0x138] sm:$0xff]
      %v446 = vld [vmem:[%s289 + $0x140] sm:$0xff]
      %v447 = vld [vmem:[%s289 + $0x150] sm:$0xff]
      %v448 = vld [vmem:[%s289 + $0x158] sm:$0xff]
      %v449 = vld [vmem:[%s289 + $0x168] sm:$0xff]
      %v450 = vld [vmem:[%s289 + $0x170] sm:$0xff]
      %v451 = vld [vmem:[%s289 + $0x1] sm:$0xff]
      %v452 = vld [vmem:[%s289 + $0x9] sm:$0xff]
      %v453 = vld [vmem:[%s289 + $0x19] sm:$0xff]
      %v454 = vld [vmem:[%s289 + $0x21] sm:$0xff]
      %v455 = vld [vmem:[%s289 + $0x31] sm:$0xff]
      %v456 = vld [vmem:[%s289 + $0x39] sm:$0xff]
      %v457 = vld [vmem:[%s289 + $0x49] sm:$0xff]
      %v458 = vld [vmem:[%s289 + $0x51] sm:$0xff]
      %v459 = vld [vmem:[%s289 + $0x61] sm:$0xff]
      %v460 = vld [vmem:[%s289 + $0x69] sm:$0xff]
      %v461 = vld [vmem:[%s289 + $0x79] sm:$0xff]
      %v462 = vld [vmem:[%s289 + $0x81] sm:$0xff]
      %v463 = vld [vmem:[%s289 + $0x91] sm:$0xff]
      %v464 = vld [vmem:[%s289 + $0x99] sm:$0xff]
      %v465 = vld [vmem:[%s289 + $0xa9] sm:$0xff]
      %v466 = vld [vmem:[%s289 + $0xb1] sm:$0xff]
      %v467 = vld [vmem:[%s289 + $0xc1] sm:$0xff]
      %v468 = vld [vmem:[%s289 + $0xc9] sm:$0xff]
      %v469 = vld [vmem:[%s289 + $0xd9] sm:$0xff]
      %v470 = vld [vmem:[%s289 + $0xe1] sm:$0xff]
      %v471 = vld [vmem:[%s289 + $0xf1] sm:$0xff]
      %v472 = vld [vmem:[%s289 + $0xf9] sm:$0xff]
      %v473 = vld [vmem:[%s289 + $0x109] sm:$0xff]
      %v474 = vld [vmem:[%s289 + $0x111] sm:$0xff]
      %v475 = vld [vmem:[%s289 + $0x121] sm:$0xff]
      %v476 = vld [vmem:[%s289 + $0x129] sm:$0xff]
      %v477 = vld [vmem:[%s289 + $0x139] sm:$0xff]
      %v478 = vld [vmem:[%s289 + $0x141] sm:$0xff]
      %v479 = vld [vmem:[%s289 + $0x151] sm:$0xff]
      %v480 = vld [vmem:[%s289 + $0x159] sm:$0xff]
      %v481 = vld [vmem:[%s289 + $0x169] sm:$0xff]
      %v482 = vld [vmem:[%s289 + $0x171] sm:$0xff]
      %v483 = vld [vmem:[%s289 + $0x2] sm:$0xff]
      %v484 = vld [vmem:[%s289 + $0xa] sm:$0xff]
      %v485 = vld [vmem:[%s289 + $0x1a] sm:$0xff]
      %v486 = vld [vmem:[%s289 + $0x22] sm:$0xff]
      %v487 = vld [vmem:[%s289 + $0x32] sm:$0xff]
      %v488 = vld [vmem:[%s289 + $0x3a] sm:$0xff]
      %v489 = vld [vmem:[%s289 + $0x4a] sm:$0xff]
      %v490 = vld [vmem:[%s289 + $0x52] sm:$0xff]
      %v491 = vld [vmem:[%s289 + $0x62] sm:$0xff]
      %v492 = vld [vmem:[%s289 + $0x6a] sm:$0xff]
      %v493 = vld [vmem:[%s289 + $0x7a] sm:$0xff]
      %v494 = vld [vmem:[%s289 + $0x82] sm:$0xff]
      %v495 = vld [vmem:[%s289 + $0x92] sm:$0xff]
      %v496 = vld [vmem:[%s289 + $0x9a] sm:$0xff]
      %v497 = vld [vmem:[%s289 + $0xaa] sm:$0xff]
      %v498 = vld [vmem:[%s289 + $0xb2] sm:$0xff]
      %v499 = vld [vmem:[%s289 + $0xc2] sm:$0xff]
      %v500 = vld [vmem:[%s289 + $0xca] sm:$0xff]
      %v501 = vld [vmem:[%s289 + $0xda] sm:$0xff]
      %v502 = vld [vmem:[%s289 + $0xe2] sm:$0xff]
      %v503 = vld [vmem:[%s289 + $0xf2] sm:$0xff]
      %v504 = vld [vmem:[%s289 + $0xfa] sm:$0xff]
      %v505 = vld [vmem:[%s289 + $0x10a] sm:$0xff]
      %v506 = vld [vmem:[%s289 + $0x112] sm:$0xff]
      %v507 = vld [vmem:[%s289 + $0x122] sm:$0xff]
      %v508 = vld [vmem:[%s289 + $0x12a] sm:$0xff]
      %v509 = vld [vmem:[%s289 + $0x13a] sm:$0xff]
      %v510 = vld [vmem:[%s289 + $0x142] sm:$0xff]
      %v511 = vld [vmem:[%s289 + $0x152] sm:$0xff]
      %v512 = vld [vmem:[%s289 + $0x15a] sm:$0xff]
      %v513 = vld [vmem:[%s289 + $0x16a] sm:$0xff]
      %v514 = vld [vmem:[%s289 + $0x172] sm:$0xff]
      %s515 = scalar_lea.vmem [#allocation2], 48
      %v516 = vld [vmem:[%s515] sm:$0xff]
      %v517 = vld [vmem:[%s515 + $0x8] sm:$0xff]
      %v518 = vld [vmem:[%s515 + $0x18] sm:$0xff]
      %v519 = vld [vmem:[%s515 + $0x20] sm:$0xff]
      %v520 = vld [vmem:[%s515 + $0x30] sm:$0xff]
      %v521 = vld [vmem:[%s515 + $0x38] sm:$0xff]
      %v522 = vld [vmem:[%s515 + $0x48] sm:$0xff]
      %v523 = vld [vmem:[%s515 + $0x50] sm:$0xff]
      %v524 = vld [vmem:[%s515 + $0x60] sm:$0xff]
      %v525 = vld [vmem:[%s515 + $0x68] sm:$0xff]
      %v526 = vld [vmem:[%s515 + $0x78] sm:$0xff]
      %v527 = vld [vmem:[%s515 + $0x80] sm:$0xff]
      %v528 = vld [vmem:[%s515 + $0x90] sm:$0xff]
      %v529 = vld [vmem:[%s515 + $0x98] sm:$0xff]
      %v530 = vld [vmem:[%s515 + $0xa8] sm:$0xff]
      %v531 = vld [vmem:[%s515 + $0xb0] sm:$0xff]
      %v532 = vld [vmem:[%s515 + $0xc0] sm:$0xff]
      %v533 = vld [vmem:[%s515 + $0xc8] sm:$0xff]
      %v534 = vld [vmem:[%s515 + $0xd8] sm:$0xff]
      %v535 = vld [vmem:[%s515 + $0xe0] sm:$0xff]
      %v536 = vld [vmem:[%s515 + $0xf0] sm:$0xff]
      %v537 = vld [vmem:[%s515 + $0xf8] sm:$0xff]
      %v538 = vld [vmem:[%s515 + $0x108] sm:$0xff]
      %v539 = vld [vmem:[%s515 + $0x110] sm:$0xff]
      %v540 = vld [vmem:[%s515 + $0x120] sm:$0xff]
      %v541 = vld [vmem:[%s515 + $0x128] sm:$0xff]
      %v542 = vld [vmem:[%s515 + $0x138] sm:$0xff]
      %v543 = vld [vmem:[%s515 + $0x140] sm:$0xff]
      %v544 = vld [vmem:[%s515 + $0x150] sm:$0xff]
      %v545 = vld [vmem:[%s515 + $0x158] sm:$0xff]
      %v546 = vld [vmem:[%s515 + $0x168] sm:$0xff]
      %v547 = vld [vmem:[%s515 + $0x170] sm:$0xff]
      %v548 = vld [vmem:[%s515 + $0x1] sm:$0xff]
      %v549 = vld [vmem:[%s515 + $0x9] sm:$0xff]
      %v550 = vld [vmem:[%s515 + $0x19] sm:$0xff]
      %v551 = vld [vmem:[%s515 + $0x21] sm:$0xff]
      %v552 = vld [vmem:[%s515 + $0x31] sm:$0xff]
      %v553 = vld [vmem:[%s515 + $0x39] sm:$0xff]
      %v554 = vld [vmem:[%s515 + $0x49] sm:$0xff]
      %v555 = vld [vmem:[%s515 + $0x51] sm:$0xff]
      %v556 = vld [vmem:[%s515 + $0x61] sm:$0xff]
      %v557 = vld [vmem:[%s515 + $0x69] sm:$0xff]
      %v558 = vld [vmem:[%s515 + $0x79] sm:$0xff]
      %v559 = vld [vmem:[%s515 + $0x81] sm:$0xff]
      %v560 = vld [vmem:[%s515 + $0x91] sm:$0xff]
      %v561 = vld [vmem:[%s515 + $0x99] sm:$0xff]
      %v562 = vld [vmem:[%s515 + $0xa9] sm:$0xff]
      %v563 = vld [vmem:[%s515 + $0xb1] sm:$0xff]
      %v564 = vld [vmem:[%s515 + $0xc1] sm:$0xff]
      %v565 = vld [vmem:[%s515 + $0xc9] sm:$0xff]
      %v566 = vld [vmem:[%s515 + $0xd9] sm:$0xff]
      %v567 = vld [vmem:[%s515 + $0xe1] sm:$0xff]
      %v568 = vld [vmem:[%s515 + $0xf1] sm:$0xff]
      %v569 = vld [vmem:[%s515 + $0xf9] sm:$0xff]
      %v570 = vld [vmem:[%s515 + $0x109] sm:$0xff]
      %v571 = vld [vmem:[%s515 + $0x111] sm:$0xff]
      %v572 = vld [vmem:[%s515 + $0x121] sm:$0xff]
      %v573 = vld [vmem:[%s515 + $0x129] sm:$0xff]
      %v574 = vld [vmem:[%s515 + $0x139] sm:$0xff]
      %v575 = vld [vmem:[%s515 + $0x141] sm:$0xff]
      %v576 = vld [vmem:[%s515 + $0x151] sm:$0xff]
      %v577 = vld [vmem:[%s515 + $0x159] sm:$0xff]
      %v578 = vld [vmem:[%s515 + $0x169] sm:$0xff]
      %v579 = vld [vmem:[%s515 + $0x171] sm:$0xff]
      %v580 = vld [vmem:[%s515 + $0x2] sm:$0xff]
      %v581 = vld [vmem:[%s515 + $0xa] sm:$0xff]
      %v582 = vld [vmem:[%s515 + $0x1a] sm:$0xff]
      %v583 = vld [vmem:[%s515 + $0x22] sm:$0xff]
      %v584 = vld [vmem:[%s515 + $0x32] sm:$0xff]
      %v585 = vld [vmem:[%s515 + $0x3a] sm:$0xff]
      %v586 = vld [vmem:[%s515 + $0x4a] sm:$0xff]
      %v587 = vld [vmem:[%s515 + $0x52] sm:$0xff]
      %v588 = vld [vmem:[%s515 + $0x62] sm:$0xff]
      %v589 = vld [vmem:[%s515 + $0x6a] sm:$0xff]
      %v590 = vld [vmem:[%s515 + $0x7a] sm:$0xff]
      %v591 = vld [vmem:[%s515 + $0x82] sm:$0xff]
      %v592 = vld [vmem:[%s515 + $0x92] sm:$0xff]
      %v593 = vld [vmem:[%s515 + $0x9a] sm:$0xff]
      %v594 = vld [vmem:[%s515 + $0xaa] sm:$0xff]
      %v595 = vld [vmem:[%s515 + $0xb2] sm:$0xff]
      %v596 = vld [vmem:[%s515 + $0xc2] sm:$0xff]
      %v597 = vld [vmem:[%s515 + $0xca] sm:$0xff]
      %v598 = vld [vmem:[%s515 + $0xda] sm:$0xff]
      %v599 = vld [vmem:[%s515 + $0xe2] sm:$0xff]
      %v600 = vld [vmem:[%s515 + $0xf2] sm:$0xff]
      %v601 = vld [vmem:[%s515 + $0xfa] sm:$0xff]
      %v602 = vld [vmem:[%s515 + $0x10a] sm:$0xff]
      %v603 = vld [vmem:[%s515 + $0x112] sm:$0xff]
      %v604 = vld [vmem:[%s515 + $0x122] sm:$0xff]
      %v605 = vld [vmem:[%s515 + $0x12a] sm:$0xff]
      %v606 = vld [vmem:[%s515 + $0x13a] sm:$0xff]
      %v607 = vld [vmem:[%s515 + $0x142] sm:$0xff]
      %v608 = vld [vmem:[%s515 + $0x152] sm:$0xff]
      %v609 = vld [vmem:[%s515 + $0x15a] sm:$0xff]
      %v610 = vld [vmem:[%s515 + $0x16a] sm:$0xff]
      %v611 = vld [vmem:[%s515 + $0x172] sm:$0xff]
      %644 = vrot.lane.b32.xlu0 %v355, 64
      %v645 = vpop.permute.xlu0 %644
      %646 = vrot.lane.b32.xlu0 %v356, 64
      %v647 = vpop.permute.xlu0 %646
      %648 = vrot.lane.b32.xlu0 %v357, 64
      %v649 = vpop.permute.xlu0 %648
      %650 = vrot.lane.b32.xlu0 %v358, 64
      %v651 = vpop.permute.xlu0 %650
      %652 = vrot.lane.b32.xlu0 %v359, 64
      %v653 = vpop.permute.xlu0 %652
      %654 = vrot.lane.b32.xlu0 %v360, 64
      %v655 = vpop.permute.xlu0 %654
      %656 = vrot.lane.b32.xlu0 %v361, 64
      %v657 = vpop.permute.xlu0 %656
      %658 = vrot.lane.b32.xlu0 %v362, 64
      %v659 = vpop.permute.xlu0 %658
      %660 = vrot.lane.b32.xlu0 %v363, 64
      %v661 = vpop.permute.xlu0 %660
      %662 = vrot.lane.b32.xlu0 %v364, 64
      %v663 = vpop.permute.xlu0 %662
      %664 = vrot.lane.b32.xlu0 %v365, 64
      %v665 = vpop.permute.xlu0 %664
      %666 = vrot.lane.b32.xlu0 %v366, 64
      %v667 = vpop.permute.xlu0 %666
      %668 = vrot.lane.b32.xlu0 %v367, 64
      %v669 = vpop.permute.xlu0 %668
      %670 = vrot.lane.b32.xlu0 %v368, 64
      %v671 = vpop.permute.xlu0 %670
      %672 = vrot.lane.b32.xlu0 %v369, 64
      %v673 = vpop.permute.xlu0 %672
      %674 = vrot.lane.b32.xlu0 %v370, 64
      %v675 = vpop.permute.xlu0 %674
      %676 = vrot.lane.b32.xlu0 %v371, 64
      %v677 = vpop.permute.xlu0 %676
      %678 = vrot.lane.b32.xlu0 %v372, 64
      %v679 = vpop.permute.xlu0 %678
      %680 = vrot.lane.b32.xlu0 %v373, 64
      %v681 = vpop.permute.xlu0 %680
      %682 = vrot.lane.b32.xlu0 %v374, 64
      %v683 = vpop.permute.xlu0 %682
      %684 = vrot.lane.b32.xlu0 %v375, 64
      %v685 = vpop.permute.xlu0 %684
      %686 = vrot.lane.b32.xlu0 %v376, 64
      %v687 = vpop.permute.xlu0 %686
      %688 = vrot.lane.b32.xlu0 %v377, 64
      %v689 = vpop.permute.xlu0 %688
      %690 = vrot.lane.b32.xlu0 %v378, 64
      %v691 = vpop.permute.xlu0 %690
      %692 = vrot.lane.b32.xlu0 %v379, 64
      %v693 = vpop.permute.xlu0 %692
      %694 = vrot.lane.b32.xlu0 %v380, 64
      %v695 = vpop.permute.xlu0 %694
      %696 = vrot.lane.b32.xlu0 %v381, 64
      %v697 = vpop.permute.xlu0 %696
      %698 = vrot.lane.b32.xlu0 %v382, 64
      %v699 = vpop.permute.xlu0 %698
      %700 = vrot.lane.b32.xlu0 %v383, 64
      %v701 = vpop.permute.xlu0 %700
      %702 = vrot.lane.b32.xlu0 %v384, 64
      %v703 = vpop.permute.xlu0 %702
      %704 = vrot.lane.b32.xlu0 %v385, 64
      %v705 = vpop.permute.xlu0 %704
      %706 = vrot.lane.b32.xlu0 %v386, 64
      %v707 = vpop.permute.xlu0 %706
      %772 = vrot.lane.b32.xlu0 %v419, 64
      %v773 = vpop.permute.xlu0 %772
      %774 = vrot.lane.b32.xlu0 %v420, 64
      %v775 = vpop.permute.xlu0 %774
      %776 = vrot.lane.b32.xlu0 %v421, 64
      %v777 = vpop.permute.xlu0 %776
      %778 = vrot.lane.b32.xlu0 %v422, 64
      %v779 = vpop.permute.xlu0 %778
      %780 = vrot.lane.b32.xlu0 %v423, 64
      %v781 = vpop.permute.xlu0 %780
      %782 = vrot.lane.b32.xlu0 %v424, 64
      %v783 = vpop.permute.xlu0 %782
      %784 = vrot.lane.b32.xlu0 %v425, 64
      %v785 = vpop.permute.xlu0 %784
      %786 = vrot.lane.b32.xlu0 %v426, 64
      %v787 = vpop.permute.xlu0 %786
      %788 = vrot.lane.b32.xlu0 %v427, 64
      %v789 = vpop.permute.xlu0 %788
      %790 = vrot.lane.b32.xlu0 %v428, 64
      %v791 = vpop.permute.xlu0 %790
      %792 = vrot.lane.b32.xlu0 %v429, 64
      %v793 = vpop.permute.xlu0 %792
      %794 = vrot.lane.b32.xlu0 %v430, 64
      %v795 = vpop.permute.xlu0 %794
      %796 = vrot.lane.b32.xlu0 %v431, 64
      %v797 = vpop.permute.xlu0 %796
      %798 = vrot.lane.b32.xlu0 %v432, 64
      %v799 = vpop.permute.xlu0 %798
      %800 = vrot.lane.b32.xlu0 %v433, 64
      %v801 = vpop.permute.xlu0 %800
      %802 = vrot.lane.b32.xlu0 %v434, 64
      %v803 = vpop.permute.xlu0 %802
      %804 = vrot.lane.b32.xlu0 %v435, 64
      %v805 = vpop.permute.xlu0 %804
      %806 = vrot.lane.b32.xlu0 %v436, 64
      %v807 = vpop.permute.xlu0 %806
      %808 = vrot.lane.b32.xlu0 %v437, 64
      %v809 = vpop.permute.xlu0 %808
      %810 = vrot.lane.b32.xlu0 %v438, 64
      %v811 = vpop.permute.xlu0 %810
      %812 = vrot.lane.b32.xlu0 %v439, 64
      %v813 = vpop.permute.xlu0 %812
      %814 = vrot.lane.b32.xlu0 %v440, 64
      %v815 = vpop.permute.xlu0 %814
      %816 = vrot.lane.b32.xlu0 %v441, 64
      %v817 = vpop.permute.xlu0 %816
      %818 = vrot.lane.b32.xlu0 %v442, 64
      %v819 = vpop.permute.xlu0 %818
      %820 = vrot.lane.b32.xlu0 %v443, 64
      %v821 = vpop.permute.xlu0 %820
      %822 = vrot.lane.b32.xlu0 %v444, 64
      %v823 = vpop.permute.xlu0 %822
      %824 = vrot.lane.b32.xlu0 %v445, 64
      %v825 = vpop.permute.xlu0 %824
      %826 = vrot.lane.b32.xlu0 %v446, 64
      %v827 = vpop.permute.xlu0 %826
      %828 = vrot.lane.b32.xlu0 %v447, 64
      %v829 = vpop.permute.xlu0 %828
      %830 = vrot.lane.b32.xlu0 %v448, 64
      %v831 = vpop.permute.xlu0 %830
      %832 = vrot.lane.b32.xlu0 %v449, 64
      %v833 = vpop.permute.xlu0 %832
      %834 = vrot.lane.b32.xlu0 %v450, 64
      %v835 = vpop.permute.xlu0 %834
      %900 = vrot.lane.b32.xlu0 %v483, 64
      %v901 = vpop.permute.xlu0 %900
      %902 = vrot.lane.b32.xlu0 %v484, 64
      %v903 = vpop.permute.xlu0 %902
      %904 = vrot.lane.b32.xlu0 %v485, 64
      %v905 = vpop.permute.xlu0 %904
      %906 = vrot.lane.b32.xlu0 %v486, 64
      %v907 = vpop.permute.xlu0 %906
      %908 = vrot.lane.b32.xlu0 %v487, 64
      %v909 = vpop.permute.xlu0 %908
      %910 = vrot.lane.b32.xlu0 %v488, 64
      %v911 = vpop.permute.xlu0 %910
      %912 = vrot.lane.b32.xlu0 %v489, 64
      %v913 = vpop.permute.xlu0 %912
      %914 = vrot.lane.b32.xlu0 %v490, 64
      %v915 = vpop.permute.xlu0 %914
      %916 = vrot.lane.b32.xlu0 %v491, 64
      %v917 = vpop.permute.xlu0 %916
      %918 = vrot.lane.b32.xlu0 %v492, 64
      %v919 = vpop.permute.xlu0 %918
      %920 = vrot.lane.b32.xlu0 %v493, 64
      %v921 = vpop.permute.xlu0 %920
      %922 = vrot.lane.b32.xlu0 %v494, 64
      %v923 = vpop.permute.xlu0 %922
      %924 = vrot.lane.b32.xlu0 %v495, 64
      %v925 = vpop.permute.xlu0 %924
      %926 = vrot.lane.b32.xlu0 %v496, 64
      %v927 = vpop.permute.xlu0 %926
      %928 = vrot.lane.b32.xlu0 %v497, 64
      %v929 = vpop.permute.xlu0 %928
      %930 = vrot.lane.b32.xlu0 %v498, 64
      %v931 = vpop.permute.xlu0 %930
      %932 = vrot.lane.b32.xlu0 %v499, 64
      %v933 = vpop.permute.xlu0 %932
      %934 = vrot.lane.b32.xlu0 %v500, 64
      %v935 = vpop.permute.xlu0 %934
      %936 = vrot.lane.b32.xlu0 %v501, 64
      %v937 = vpop.permute.xlu0 %936
      %938 = vrot.lane.b32.xlu0 %v502, 64
      %v939 = vpop.permute.xlu0 %938
      %940 = vrot.lane.b32.xlu0 %v503, 64
      %v941 = vpop.permute.xlu0 %940
      %942 = vrot.lane.b32.xlu0 %v504, 64
      %v943 = vpop.permute.xlu0 %942
      %944 = vrot.lane.b32.xlu0 %v505, 64
      %v945 = vpop.permute.xlu0 %944
      %946 = vrot.lane.b32.xlu0 %v506, 64
      %v947 = vpop.permute.xlu0 %946
      %948 = vrot.lane.b32.xlu0 %v507, 64
      %v949 = vpop.permute.xlu0 %948
      %950 = vrot.lane.b32.xlu0 %v508, 64
      %v951 = vpop.permute.xlu0 %950
      %952 = vrot.lane.b32.xlu0 %v509, 64
      %v953 = vpop.permute.xlu0 %952
      %954 = vrot.lane.b32.xlu0 %v510, 64
      %v955 = vpop.permute.xlu0 %954
      %956 = vrot.lane.b32.xlu0 %v511, 64
      %v957 = vpop.permute.xlu0 %956
      %958 = vrot.lane.b32.xlu0 %v512, 64
      %v959 = vpop.permute.xlu0 %958
      %960 = vrot.lane.b32.xlu0 %v513, 64
      %v961 = vpop.permute.xlu0 %960
      %962 = vrot.lane.b32.xlu0 %v514, 64
      %v963 = vpop.permute.xlu0 %962
      %1028 = vrot.lane.b32.xlu0 %v548, 64
      %v1029 = vpop.permute.xlu0 %1028
      %1030 = vrot.lane.b32.xlu0 %v549, 64
      %v1031 = vpop.permute.xlu0 %1030
      %1032 = vrot.lane.b32.xlu0 %v550, 64
      %v1033 = vpop.permute.xlu0 %1032
      %1034 = vrot.lane.b32.xlu0 %v551, 64
      %v1035 = vpop.permute.xlu0 %1034
      %1036 = vrot.lane.b32.xlu0 %v552, 64
      %v1037 = vpop.permute.xlu0 %1036
      %1038 = vrot.lane.b32.xlu0 %v553, 64
      %v1039 = vpop.permute.xlu0 %1038
      %1040 = vrot.lane.b32.xlu0 %v554, 64
      %v1041 = vpop.permute.xlu0 %1040
      %1042 = vrot.lane.b32.xlu0 %v555, 64
      %v1043 = vpop.permute.xlu0 %1042
      %1044 = vrot.lane.b32.xlu0 %v556, 64
      %v1045 = vpop.permute.xlu0 %1044
      %1046 = vrot.lane.b32.xlu0 %v557, 64
      %v1047 = vpop.permute.xlu0 %1046
      %1048 = vrot.lane.b32.xlu0 %v558, 64
      %v1049 = vpop.permute.xlu0 %1048
      %1050 = vrot.lane.b32.xlu0 %v559, 64
      %v1051 = vpop.permute.xlu0 %1050
      %1052 = vrot.lane.b32.xlu0 %v560, 64
      %v1053 = vpop.permute.xlu0 %1052
      %1054 = vrot.lane.b32.xlu0 %v561, 64
      %v1055 = vpop.permute.xlu0 %1054
      %1056 = vrot.lane.b32.xlu0 %v562, 64
      %v1057 = vpop.permute.xlu0 %1056
      %1058 = vrot.lane.b32.xlu0 %v563, 64
      %v1059 = vpop.permute.xlu0 %1058
      %1060 = vrot.lane.b32.xlu0 %v564, 64
      %v1061 = vpop.permute.xlu0 %1060
      %1062 = vrot.lane.b32.xlu0 %v565, 64
      %v1063 = vpop.permute.xlu0 %1062
      %1064 = vrot.lane.b32.xlu0 %v566, 64
      %v1065 = vpop.permute.xlu0 %1064
      %1066 = vrot.lane.b32.xlu0 %v567, 64
      %v1067 = vpop.permute.xlu0 %1066
      %1068 = vrot.lane.b32.xlu0 %v568, 64
      %v1069 = vpop.permute.xlu0 %1068
      %1070 = vrot.lane.b32.xlu0 %v569, 64
      %v1071 = vpop.permute.xlu0 %1070
      %1072 = vrot.lane.b32.xlu0 %v570, 64
      %v1073 = vpop.permute.xlu0 %1072
      %1074 = vrot.lane.b32.xlu0 %v571, 64
      %v1075 = vpop.permute.xlu0 %1074
      %1076 = vrot.lane.b32.xlu0 %v572, 64
      %v1077 = vpop.permute.xlu0 %1076
      %1078 = vrot.lane.b32.xlu0 %v573, 64
      %v1079 = vpop.permute.xlu0 %1078
      %1080 = vrot.lane.b32.xlu0 %v574, 64
      %v1081 = vpop.permute.xlu0 %1080
      %1082 = vrot.lane.b32.xlu0 %v575, 64
      %v1083 = vpop.permute.xlu0 %1082
      %1084 = vrot.lane.b32.xlu0 %v576, 64
      %v1085 = vpop.permute.xlu0 %1084
      %1086 = vrot.lane.b32.xlu0 %v577, 64
      %v1087 = vpop.permute.xlu0 %1086
      %1088 = vrot.lane.b32.xlu0 %v578, 64
      %v1089 = vpop.permute.xlu0 %1088
      %1090 = vrot.lane.b32.xlu0 %v579, 64
      %v1091 = vpop.permute.xlu0 %1090
      %v1124 = vsel %vm201, %v323, %v645
      %v1125 = vsel %vm201, %v324, %v647
      %v1126 = vsel %vm201, %v325, %v649
      %v1127 = vsel %vm201, %v326, %v651
      %v1128 = vsel %vm201, %v327, %v653
      %v1129 = vsel %vm201, %v328, %v655
      %v1130 = vsel %vm201, %v329, %v657
      %v1131 = vsel %vm201, %v330, %v659
      %v1132 = vsel %vm201, %v331, %v661
      %v1133 = vsel %vm201, %v332, %v663
      %v1134 = vsel %vm201, %v333, %v665
      %v1135 = vsel %vm201, %v334, %v667
      %v1136 = vsel %vm201, %v335, %v669
      %v1137 = vsel %vm201, %v336, %v671
      %v1138 = vsel %vm201, %v337, %v673
      %v1139 = vsel %vm201, %v338, %v675
      %v1140 = vsel %vm201, %v339, %v677
      %v1141 = vsel %vm201, %v340, %v679
      %v1142 = vsel %vm201, %v341, %v681
      %v1143 = vsel %vm201, %v342, %v683
      %v1144 = vsel %vm201, %v343, %v685
      %v1145 = vsel %vm201, %v344, %v687
      %v1146 = vsel %vm201, %v345, %v689
      %v1147 = vsel %vm201, %v346, %v691
      %v1148 = vsel %vm201, %v347, %v693
      %v1149 = vsel %vm201, %v348, %v695
      %v1150 = vsel %vm201, %v349, %v697
      %v1151 = vsel %vm201, %v350, %v699
      %v1152 = vsel %vm201, %v351, %v701
      %v1153 = vsel %vm201, %v352, %v703
      %v1154 = vsel %vm201, %v353, %v705
      %v1155 = vsel %vm201, %v354, %v707
      %v1156 = vsel %vm201, %v387, %v773
      %v1157 = vsel %vm201, %v388, %v775
      %v1158 = vsel %vm201, %v389, %v777
      %v1159 = vsel %vm201, %v390, %v779
      %v1160 = vsel %vm201, %v391, %v781
      %v1161 = vsel %vm201, %v392, %v783
      %v1162 = vsel %vm201, %v393, %v785
      %v1163 = vsel %vm201, %v394, %v787
      %v1164 = vsel %vm201, %v395, %v789
      %v1165 = vsel %vm201, %v396, %v791
      %v1166 = vsel %vm201, %v397, %v793
      %v1167 = vsel %vm201, %v398, %v795
      %v1168 = vsel %vm201, %v399, %v797
      %v1169 = vsel %vm201, %v400, %v799
      %v1170 = vsel %vm201, %v401, %v801
      %v1171 = vsel %vm201, %v402, %v803
      %v1172 = vsel %vm201, %v403, %v805
      %v1173 = vsel %vm201, %v404, %v807
      %v1174 = vsel %vm201, %v405, %v809
      %v1175 = vsel %vm201, %v406, %v811
      %v1176 = vsel %vm201, %v407, %v813
      %v1177 = vsel %vm201, %v408, %v815
      %v1178 = vsel %vm201, %v409, %v817
      %v1179 = vsel %vm201, %v410, %v819
      %v1180 = vsel %vm201, %v411, %v821
      %v1181 = vsel %vm201, %v412, %v823
      %v1182 = vsel %vm201, %v413, %v825
      %v1183 = vsel %vm201, %v414, %v827
      %v1184 = vsel %vm201, %v415, %v829
      %v1185 = vsel %vm201, %v416, %v831
      %v1186 = vsel %vm201, %v417, %v833
      %v1187 = vsel %vm201, %v418, %v835
      %v1188 = vsel %vm201, %v451, %v901
      %v1189 = vsel %vm201, %v452, %v903
      %v1190 = vsel %vm201, %v453, %v905
      %v1191 = vsel %vm201, %v454, %v907
      %v1192 = vsel %vm201, %v455, %v909
      %v1193 = vsel %vm201, %v456, %v911
      %v1194 = vsel %vm201, %v457, %v913
      %v1195 = vsel %vm201, %v458, %v915
      %v1196 = vsel %vm201, %v459, %v917
      %v1197 = vsel %vm201, %v460, %v919
      %v1198 = vsel %vm201, %v461, %v921
      %v1199 = vsel %vm201, %v462, %v923
      %v1200 = vsel %vm201, %v463, %v925
      %v1201 = vsel %vm201, %v464, %v927
      %v1202 = vsel %vm201, %v465, %v929
      %v1203 = vsel %vm201, %v466, %v931
      %v1204 = vsel %vm201, %v467, %v933
      %v1205 = vsel %vm201, %v468, %v935
      %v1206 = vsel %vm201, %v469, %v937
      %v1207 = vsel %vm201, %v470, %v939
      %v1208 = vsel %vm201, %v471, %v941
      %v1209 = vsel %vm201, %v472, %v943
      %v1210 = vsel %vm201, %v473, %v945
      %v1211 = vsel %vm201, %v474, %v947
      %v1212 = vsel %vm201, %v475, %v949
      %v1213 = vsel %vm201, %v476, %v951
      %v1214 = vsel %vm201, %v477, %v953
      %v1215 = vsel %vm201, %v478, %v955
      %v1216 = vsel %vm201, %v479, %v957
      %v1217 = vsel %vm201, %v480, %v959
      %v1218 = vsel %vm201, %v481, %v961
      %v1219 = vsel %vm201, %v482, %v963
      %v1220 = vsel %vm201, %v516, %v1029
      %v1221 = vsel %vm201, %v517, %v1031
      %v1222 = vsel %vm201, %v518, %v1033
      %v1223 = vsel %vm201, %v519, %v1035
      %v1224 = vsel %vm201, %v520, %v1037
      %v1225 = vsel %vm201, %v521, %v1039
      %v1226 = vsel %vm201, %v522, %v1041
      %v1227 = vsel %vm201, %v523, %v1043
      %v1228 = vsel %vm201, %v524, %v1045
      %v1229 = vsel %vm201, %v525, %v1047
      %v1230 = vsel %vm201, %v526, %v1049
      %v1231 = vsel %vm201, %v527, %v1051
      %v1232 = vsel %vm201, %v528, %v1053
      %v1233 = vsel %vm201, %v529, %v1055
      %v1234 = vsel %vm201, %v530, %v1057
      %v1235 = vsel %vm201, %v531, %v1059
      %v1236 = vsel %vm201, %v532, %v1061
      %v1237 = vsel %vm201, %v533, %v1063
      %v1238 = vsel %vm201, %v534, %v1065
      %v1239 = vsel %vm201, %v535, %v1067
      %v1240 = vsel %vm201, %v536, %v1069
      %v1241 = vsel %vm201, %v537, %v1071
      %v1242 = vsel %vm201, %v538, %v1073
      %v1243 = vsel %vm201, %v539, %v1075
      %v1244 = vsel %vm201, %v540, %v1077
      %v1245 = vsel %vm201, %v541, %v1079
      %v1246 = vsel %vm201, %v542, %v1081
      %v1247 = vsel %vm201, %v543, %v1083
      %v1248 = vsel %vm201, %v544, %v1085
      %v1249 = vsel %vm201, %v545, %v1087
      %v1250 = vsel %vm201, %v546, %v1089
      %v1251 = vsel %vm201, %v547, %v1091
      %v1252 = vpack.c.bf16 %v1125, %v1124
      %v1253 = vpack.c.bf16 %v1157, %v1156
      %v1254 = vpack.c.bf16 %v1189, %v1188
      %v1255 = vpack.c.bf16 %v1221, %v1220
      %v1256 = vpack.c.bf16 %v581, %v580
      %v1257 = vpack.c.bf16 %v1127, %v1126
      %v1258 = vpack.c.bf16 %v1159, %v1158
      %v1259 = vpack.c.bf16 %v1191, %v1190
      %v1260 = vpack.c.bf16 %v1223, %v1222
      %v1261 = vpack.c.bf16 %v583, %v582
      %v1262 = vpack.c.bf16 %v1129, %v1128
      %v1263 = vpack.c.bf16 %v1161, %v1160
      %v1264 = vpack.c.bf16 %v1193, %v1192
      %v1265 = vpack.c.bf16 %v1225, %v1224
      %v1266 = vpack.c.bf16 %v585, %v584
      %v1267 = vpack.c.bf16 %v1131, %v1130
      %v1268 = vpack.c.bf16 %v1163, %v1162
      %v1269 = vpack.c.bf16 %v1195, %v1194
      %v1270 = vpack.c.bf16 %v1227, %v1226
      %v1271 = vpack.c.bf16 %v587, %v586
      %v1272 = vpack.c.bf16 %v1133, %v1132
      %v1273 = vpack.c.bf16 %v1165, %v1164
      %v1274 = vpack.c.bf16 %v1197, %v1196
      %v1275 = vpack.c.bf16 %v1229, %v1228
      %v1276 = vpack.c.bf16 %v589, %v588
      %v1277 = vpack.c.bf16 %v1135, %v1134
      %v1278 = vpack.c.bf16 %v1167, %v1166
      %v1279 = vpack.c.bf16 %v1199, %v1198
      %v1280 = vpack.c.bf16 %v1231, %v1230
      %v1281 = vpack.c.bf16 %v591, %v590
      %v1282 = vpack.c.bf16 %v1137, %v1136
      %v1283 = vpack.c.bf16 %v1169, %v1168
      %v1284 = vpack.c.bf16 %v1201, %v1200
      %v1285 = vpack.c.bf16 %v1233, %v1232
      %v1286 = vpack.c.bf16 %v593, %v592
      %v1287 = vpack.c.bf16 %v1139, %v1138
      %v1288 = vpack.c.bf16 %v1171, %v1170
      %v1289 = vpack.c.bf16 %v1203, %v1202
      %v1290 = vpack.c.bf16 %v1235, %v1234
      %v1291 = vpack.c.bf16 %v595, %v594
      %v1292 = vpack.c.bf16 %v1141, %v1140
      %v1293 = vpack.c.bf16 %v1173, %v1172
      %v1294 = vpack.c.bf16 %v1205, %v1204
      %v1295 = vpack.c.bf16 %v1237, %v1236
      %v1296 = vpack.c.bf16 %v597, %v596
      %v1297 = vpack.c.bf16 %v1143, %v1142
      %v1298 = vpack.c.bf16 %v1175, %v1174
      %v1299 = vpack.c.bf16 %v1207, %v1206
      %v1300 = vpack.c.bf16 %v1239, %v1238
      %v1301 = vpack.c.bf16 %v599, %v598
      %v1302 = vpack.c.bf16 %v1145, %v1144
      %v1303 = vpack.c.bf16 %v1177, %v1176
      %v1304 = vpack.c.bf16 %v1209, %v1208
      %v1305 = vpack.c.bf16 %v1241, %v1240
      %v1306 = vpack.c.bf16 %v601, %v600
      %v1307 = vpack.c.bf16 %v1147, %v1146
      %v1308 = vpack.c.bf16 %v1179, %v1178
      %v1309 = vpack.c.bf16 %v1211, %v1210
      %v1310 = vpack.c.bf16 %v1243, %v1242
      %v1311 = vpack.c.bf16 %v603, %v602
      %v1312 = vpack.c.bf16 %v1149, %v1148
      %v1313 = vpack.c.bf16 %v1181, %v1180
      %v1314 = vpack.c.bf16 %v1213, %v1212
      %v1315 = vpack.c.bf16 %v1245, %v1244
      %v1316 = vpack.c.bf16 %v605, %v604
      %v1317 = vpack.c.bf16 %v1151, %v1150
      %v1318 = vpack.c.bf16 %v1183, %v1182
      %v1319 = vpack.c.bf16 %v1215, %v1214
      %v1320 = vpack.c.bf16 %v1247, %v1246
      %v1321 = vpack.c.bf16 %v607, %v606
      %v1322 = vpack.c.bf16 %v1153, %v1152
      %v1323 = vpack.c.bf16 %v1185, %v1184
      %v1324 = vpack.c.bf16 %v1217, %v1216
      %v1325 = vpack.c.bf16 %v1249, %v1248
      %v1326 = vpack.c.bf16 %v609, %v608
      %v1327 = vpack.c.bf16 %v1155, %v1154
      %v1328 = vpack.c.bf16 %v1187, %v1186
      %v1329 = vpack.c.bf16 %v1219, %v1218
      %v1330 = vpack.c.bf16 %v1251, %v1250
      %v1331 = vpack.c.bf16 %v611, %v610
      %v1332 = vld [vmem:[%s1] sm:$0xf]
      %v1333 = vld [vmem:[%s1 + $0x4] sm:$0xf]
      %v1334 = vld [vmem:[%s1 + $0x8] sm:$0xf]
      %v1335 = vld [vmem:[%s1 + $0xc] sm:$0xf]
      %v1336 = vld [vmem:[%s1 + $0x10] sm:$0xf]
      %v1337 = vld [vmem:[%s1 + $0x14] sm:$0xf]
      %v1338 = vld [vmem:[%s1 + $0x18] sm:$0xf]
      %v1339 = vld [vmem:[%s1 + $0x1c] sm:$0xf]
      %v1340 = vld [vmem:[%s1 + $0x20] sm:$0xf]
      %v1341 = vld [vmem:[%s1 + $0x24] sm:$0xf]
      %v1342 = vld [vmem:[%s1 + $0x28] sm:$0xf]
      %v1343 = vld [vmem:[%s1 + $0x2c] sm:$0xf]
      %v1344 = vld [vmem:[%s1 + $0x30] sm:$0xf]
      %v1345 = vld [vmem:[%s1 + $0x34] sm:$0xf]
      %v1346 = vld [vmem:[%s1 + $0x38] sm:$0xf]
      %v1347 = vld [vmem:[%s1 + $0x3c] sm:$0xf]
      %v1348 = vld [vmem:[%s1 + $0x40] sm:$0xf]
      %v1349 = vld [vmem:[%s1 + $0x44] sm:$0xf]
      %v1350 = vld [vmem:[%s1 + $0x48] sm:$0xf]
      %v1351 = vld [vmem:[%s1 + $0x4c] sm:$0xf]
      %v1352 = vld [vmem:[%s1 + $0x50] sm:$0xf]
      %v1353 = vld [vmem:[%s1 + $0x54] sm:$0xf]
      %v1354 = vld [vmem:[%s1 + $0x58] sm:$0xf]
      %v1355 = vld [vmem:[%s1 + $0x5c] sm:$0xf]
      %v1356 = vld [vmem:[%s1 + $0x60] sm:$0xf]
      %v1357 = vld [vmem:[%s1 + $0x64] sm:$0xf]
      %v1358 = vld [vmem:[%s1 + $0x68] sm:$0xf]
      %v1359 = vld [vmem:[%s1 + $0x6c] sm:$0xf]
      %v1360 = vld [vmem:[%s1 + $0x70] sm:$0xf]
      %v1361 = vld [vmem:[%s1 + $0x74] sm:$0xf]
      %v1362 = vld [vmem:[%s1 + $0x78] sm:$0xf]
      %v1363 = vld [vmem:[%s1 + $0x7c] sm:$0xf]
      %v1364 = vld [vmem:[%s1 + $0x80] sm:$0xf]
      %v1365 = vld [vmem:[%s1 + $0x84] sm:$0xf]
      %v1366 = vld [vmem:[%s1 + $0x88] sm:$0xf]
      %v1367 = vld [vmem:[%s1 + $0x8c] sm:$0xf]
      %v1368 = vld [vmem:[%s1 + $0x90] sm:$0xf]
      %v1369 = vld [vmem:[%s1 + $0x94] sm:$0xf]
      %v1370 = vld [vmem:[%s1 + $0x98] sm:$0xf]
      %v1371 = vld [vmem:[%s1 + $0x9c] sm:$0xf]
      %v1372 = vld [vmem:[%s1 + $0xa0] sm:$0xf]
      %v1373 = vld [vmem:[%s1 + $0xa4] sm:$0xf]
      %v1374 = vld [vmem:[%s1 + $0xa8] sm:$0xf]
      %v1375 = vld [vmem:[%s1 + $0xac] sm:$0xf]
      %v1376 = vld [vmem:[%s1 + $0xb0] sm:$0xf]
      %v1377 = vld [vmem:[%s1 + $0xb4] sm:$0xf]
      %v1378 = vld [vmem:[%s1 + $0xb8] sm:$0xf]
      %v1379 = vld [vmem:[%s1 + $0xbc] sm:$0xf]
      %v1380 = vld [vmem:[%s1 + $0xc0] sm:$0xf]
      %v1381 = vld [vmem:[%s1 + $0xc4] sm:$0xf]
      %v1382 = vld [vmem:[%s1 + $0xc8] sm:$0xf]
      %v1383 = vld [vmem:[%s1 + $0xcc] sm:$0xf]
      %v1384 = vld [vmem:[%s1 + $0xd0] sm:$0xf]
      %v1385 = vld [vmem:[%s1 + $0xd4] sm:$0xf]
      %v1386 = vld [vmem:[%s1 + $0xd8] sm:$0xf]
      %v1387 = vld [vmem:[%s1 + $0xdc] sm:$0xf]
      %v1388 = vld [vmem:[%s1 + $0xe0] sm:$0xf]
      %v1389 = vld [vmem:[%s1 + $0xe4] sm:$0xf]
      %v1390 = vld [vmem:[%s1 + $0xe8] sm:$0xf]
      %v1391 = vld [vmem:[%s1 + $0xec] sm:$0xf]
      %v1392 = vld [vmem:[%s1 + $0xf0] sm:$0xf]
      %v1393 = vld [vmem:[%s1 + $0xf4] sm:$0xf]
      %v1394 = vld [vmem:[%s1 + $0xf8] sm:$0xf]
      %v1395 = vld [vmem:[%s1 + $0xfc] sm:$0xf]
      %v1396 = vld [vmem:[%s1 + $0x100] sm:$0xf]
      %v1397 = vld [vmem:[%s1 + $0x104] sm:$0xf]
      %v1398 = vld [vmem:[%s1 + $0x108] sm:$0xf]
      %v1399 = vld [vmem:[%s1 + $0x10c] sm:$0xf]
      %v1400 = vld [vmem:[%s1 + $0x110] sm:$0xf]
      %v1401 = vld [vmem:[%s1 + $0x114] sm:$0xf]
      %v1402 = vld [vmem:[%s1 + $0x118] sm:$0xf]
      %v1403 = vld [vmem:[%s1 + $0x11c] sm:$0xf]
      %v1476 = vunpack.c.l.b16 %v1332
      %v1477 = vunpack.c.l.b16 %v1333
      %v1478 = vunpack.c.l.b16 %v1334
      %v1479 = vunpack.c.l.b16 %v1335
      %v1480 = vunpack.c.l.b16 %v1336
      %v1481 = vunpack.c.l.b16 %v1337
      %v1482 = vunpack.c.l.b16 %v1338
      %v1483 = vunpack.c.l.b16 %v1339
      %v1484 = vunpack.c.l.b16 %v1340
      %v1485 = vunpack.c.l.b16 %v1341
      %v1486 = vunpack.c.l.b16 %v1342
      %v1487 = vunpack.c.l.b16 %v1343
      %v1488 = vunpack.c.l.b16 %v1344
      %v1489 = vunpack.c.l.b16 %v1345
      %v1490 = vunpack.c.l.b16 %v1346
      %v1491 = vunpack.c.l.b16 %v1347
      %v1492 = vunpack.c.l.b16 %v1348
      %v1493 = vunpack.c.l.b16 %v1349
      %v1494 = vunpack.c.l.b16 %v1350
      %v1495 = vunpack.c.l.b16 %v1351
      %v1496 = vunpack.c.l.b16 %v1352
      %v1497 = vunpack.c.l.b16 %v1353
      %v1498 = vunpack.c.l.b16 %v1354
      %v1499 = vunpack.c.l.b16 %v1355
      %v1500 = vunpack.c.l.b16 %v1356
      %v1501 = vunpack.c.l.b16 %v1357
      %v1502 = vunpack.c.l.b16 %v1358
      %v1503 = vunpack.c.l.b16 %v1359
      %v1504 = vunpack.c.l.b16 %v1360
      %v1505 = vunpack.c.l.b16 %v1361
      %v1506 = vunpack.c.l.b16 %v1362
      %v1507 = vunpack.c.l.b16 %v1363
      %v1508 = vunpack.c.l.b16 %v1364
      %v1509 = vunpack.c.l.b16 %v1365
      %v1510 = vunpack.c.l.b16 %v1366
      %v1511 = vunpack.c.l.b16 %v1367
      %v1512 = vunpack.c.l.b16 %v1368
      %v1513 = vunpack.c.l.b16 %v1369
      %v1514 = vunpack.c.l.b16 %v1370
      %v1515 = vunpack.c.l.b16 %v1371
      %v1516 = vunpack.c.l.b16 %v1372
      %v1517 = vunpack.c.l.b16 %v1373
      %v1518 = vunpack.c.l.b16 %v1374
      %v1519 = vunpack.c.l.b16 %v1375
      %v1520 = vunpack.c.l.b16 %v1376
      %v1521 = vunpack.c.l.b16 %v1377
      %v1522 = vunpack.c.l.b16 %v1378
      %v1523 = vunpack.c.l.b16 %v1379
      %v1524 = vunpack.c.l.b16 %v1380
      %v1525 = vunpack.c.l.b16 %v1381
      %v1526 = vunpack.c.l.b16 %v1382
      %v1527 = vunpack.c.l.b16 %v1383
      %v1528 = vunpack.c.l.b16 %v1384
      %v1529 = vunpack.c.l.b16 %v1385
      %v1530 = vunpack.c.l.b16 %v1386
      %v1531 = vunpack.c.l.b16 %v1387
      %v1532 = vunpack.c.l.b16 %v1388
      %v1533 = vunpack.c.l.b16 %v1389
      %v1534 = vunpack.c.l.b16 %v1390
      %v1535 = vunpack.c.l.b16 %v1391
      %v1536 = vunpack.c.l.b16 %v1392
      %v1537 = vunpack.c.l.b16 %v1393
      %v1538 = vunpack.c.l.b16 %v1394
      %v1539 = vunpack.c.l.b16 %v1395
      %v1540 = vunpack.c.l.b16 %v1396
      %v1541 = vunpack.c.l.b16 %v1397
      %v1542 = vunpack.c.l.b16 %v1398
      %v1543 = vunpack.c.l.b16 %v1399
      %v1544 = vunpack.c.l.b16 %v1400
      %v1545 = vunpack.c.l.b16 %v1401
      %v1546 = vunpack.c.l.b16 %v1402
      %v1547 = vunpack.c.l.b16 %v1403
      %v1548 = vpack.c.b16 %v1477, %v1476
      %v1549 = vpack.c.b16 %v1479, %v1478
      %v1550 = vpack.c.b16 %v1481, %v1480
      %v1551 = vpack.c.b16 %v1483, %v1482
      %v1552 = vpack.c.b16 %v1485, %v1484
      %v1553 = vpack.c.b16 %v1487, %v1486
      %v1554 = vpack.c.b16 %v1489, %v1488
      %v1555 = vpack.c.b16 %v1491, %v1490
      %v1556 = vpack.c.b16 %v1493, %v1492
      %v1557 = vpack.c.b16 %v1495, %v1494
      %v1558 = vpack.c.b16 %v1497, %v1496
      %v1559 = vpack.c.b16 %v1499, %v1498
      %v1560 = vpack.c.b16 %v1501, %v1500
      %v1561 = vpack.c.b16 %v1503, %v1502
      %v1562 = vpack.c.b16 %v1505, %v1504
      %v1563 = vpack.c.b16 %v1507, %v1506
      %v1564 = vpack.c.b16 %v1509, %v1508
      %v1565 = vpack.c.b16 %v1511, %v1510
      %v1566 = vpack.c.b16 %v1513, %v1512
      %v1567 = vpack.c.b16 %v1515, %v1514
      %v1568 = vpack.c.b16 %v1517, %v1516
      %v1569 = vpack.c.b16 %v1519, %v1518
      %v1570 = vpack.c.b16 %v1521, %v1520
      %v1571 = vpack.c.b16 %v1523, %v1522
      %v1572 = vpack.c.b16 %v1525, %v1524
      %v1573 = vpack.c.b16 %v1527, %v1526
      %v1574 = vpack.c.b16 %v1529, %v1528
      %v1575 = vpack.c.b16 %v1531, %v1530
      %v1576 = vpack.c.b16 %v1533, %v1532
      %v1577 = vpack.c.b16 %v1535, %v1534
      %v1578 = vpack.c.b16 %v1537, %v1536
      %v1579 = vpack.c.b16 %v1539, %v1538
      %v1580 = vpack.c.b16 %v1541, %v1540
      %v1581 = vpack.c.b16 %v1543, %v1542
      %v1582 = vpack.c.b16 %v1545, %v1544
      %v1583 = vpack.c.b16 %v1547, %v1546
      %v1621 = vsel %vm201, %v1256, 0
      %v1624 = vsel %vm201, %v1261, 0
      %v1627 = vsel %vm201, %v1266, 0
      %v1630 = vsel %vm201, %v1271, 0
      %v1633 = vsel %vm201, %v1276, 0
      %v1636 = vsel %vm201, %v1281, 0
      %v1639 = vsel %vm201, %v1286, 0
      %v1642 = vsel %vm201, %v1291, 0
      %v1645 = vsel %vm201, %v1296, 0
      %v1648 = vsel %vm201, %v1301, 0
      %v1651 = vsel %vm201, %v1306, 0
      %v1654 = vsel %vm201, %v1311, 0
      %v1657 = vsel %vm201, %v1316, 0
      %v1660 = vsel %vm201, %v1321, 0
      %v1663 = vsel %vm201, %v1326, 0
      %v1666 = vsel %vm201, %v1331, 0
      %1668 = vmatprep.subr.bf16.mxu0 0
      %1669 = vmatpush1.bf16.msra.mxu0 %v1548
      %1670 = vmatprep.subr.bf16.mxu0 0
      %1671 = vmatpush1.bf16.msra.mxu0 %v1549
      %1672 = vmatprep.subr.bf16.mxu0 0
      %1673 = vmatpush1.bf16.msra.mxu0 %v1550
      %1674 = vmatprep.subr.bf16.mxu0 0
      %1675 = vmatpush1.bf16.msra.mxu0 %v1551
      %1676 = vmatprep.subr.bf16.mxu0 0
      %1677 = vmatpush1.bf16.msra.mxu0 %v1552
      %1678 = vmatprep.subr.bf16.mxu0 0
      %1679 = vmatpush1.bf16.msra.mxu0 %v1553
      %1680 = vmatprep.subr.bf16.mxu0 0
      %1681 = vmatpush1.bf16.msra.mxu0 %v1554
      %1682 = vmatprep.subr.bf16.mxu0 0
      %1683 = vmatpush1.bf16.msra.mxu0 %v1555
      %1684 = vmatprep.subr.bf16.mxu0 0
      %1685 = vmatpush1.bf16.msra.mxu0 %v1556
      %1686 = vmatprep.subr.bf16.mxu0 0
      %1687 = vmatpush1.bf16.msra.mxu0 %v1557
      %1688 = vmatprep.subr.bf16.mxu0 0
      %1689 = vmatpush1.bf16.msra.mxu0 %v1558
      %1690 = vmatprep.subr.bf16.mxu0 0
      %1691 = vmatpush1.bf16.msra.mxu0 %v1559
      %1692 = vmatprep.subr.bf16.mxu0 0
      %1693 = vmatpush1.bf16.msra.mxu0 %v1560
      %1694 = vmatprep.subr.bf16.mxu0 0
      %1695 = vmatpush1.bf16.msra.mxu0 %v1561
      %1696 = vmatprep.subr.bf16.mxu0 0
      %1697 = vmatpush1.bf16.msra.mxu0 %v1562
      %1698 = vmatprep.subr.bf16.mxu0 0
      %1699 = vmatpush1.bf16.msra.mxu0 %v1563
      %1700 = vmatprep.mubr.bf16.mxu0 %v1253
      %1701 = vmatmul.mubr.bf16.gmra.mrb[0].mxu0 %v1252
      %v1702 = vpop.f32.mrb[0].mxu0
      %v1703 = vadd.f32 0.0, %v1702
      %v1704 = vpop.f32.mrb[0].mxu0
      %v1705 = vpop.f32.mrb[0].mxu0
      %v1706 = vadd.f32 0.0, %v1705
      %v1707 = vpop.f32.mrb[0].mxu0
      %1708 = vmatprep.mubr.bf16.mxu0 %v1258
      %1709 = vmatmul.mubr.bf16.gmra.mrb[0].mxu0 %v1257
      %v1710 = vpop.f32.mrb[0].mxu0
      %v1711 = vadd.f32 0.0, %v1710
      %v1712 = vpop.f32.mrb[0].mxu0
      %v1713 = vpop.f32.mrb[0].mxu0
      %v1714 = vadd.f32 0.0, %v1713
      %v1715 = vpop.f32.mrb[0].mxu0
      %1716 = vmatprep.mubr.bf16.mxu0 %v1263
      %1717 = vmatmul.mubr.bf16.gmra.mrb[0].mxu0 %v1262
      %v1718 = vpop.f32.mrb[0].mxu0
      %v1719 = vadd.f32 0.0, %v1718
      %v1720 = vpop.f32.mrb[0].mxu0
      %v1721 = vpop.f32.mrb[0].mxu0
      %v1722 = vadd.f32 0.0, %v1721
      %v1723 = vpop.f32.mrb[0].mxu0
      %1724 = vmatprep.mubr.bf16.mxu0 %v1268
      %1725 = vmatmul.mubr.bf16.gmra.mrb[0].mxu0 %v1267
      %v1726 = vpop.f32.mrb[0].mxu0
      %v1727 = vadd.f32 0.0, %v1726
      %v1728 = vpop.f32.mrb[0].mxu0
      %v1729 = vpop.f32.mrb[0].mxu0
      %v1730 = vadd.f32 0.0, %v1729
      %v1731 = vpop.f32.mrb[0].mxu0
      %1732 = vmatprep.mubr.bf16.mxu0 %v1273
      %1733 = vmatmul.mubr.bf16.gmra.mrb[0].mxu0 %v1272
      %v1734 = vpop.f32.mrb[0].mxu0
      %v1735 = vadd.f32 0.0, %v1734
      %v1736 = vpop.f32.mrb[0].mxu0
      %v1737 = vpop.f32.mrb[0].mxu0
      %v1738 = vadd.f32 0.0, %v1737
      %v1739 = vpop.f32.mrb[0].mxu0
      %1740 = vmatprep.mubr.bf16.mxu0 %v1278
      %1741 = vmatmul.mubr.bf16.gmra.mrb[0].mxu0 %v1277
      %v1742 = vpop.f32.mrb[0].mxu0
      %v1743 = vadd.f32 0.0, %v1742
      %v1744 = vpop.f32.mrb[0].mxu0
      %v1745 = vpop.f32.mrb[0].mxu0
      %v1746 = vadd.f32 0.0, %v1745
      %v1747 = vpop.f32.mrb[0].mxu0
      %1748 = vmatprep.mubr.bf16.mxu0 %v1283
      %1749 = vmatmul.mubr.bf16.gmra.mrb[0].mxu0 %v1282
      %v1750 = vpop.f32.mrb[0].mxu0
      %v1751 = vadd.f32 0.0, %v1750
      %v1752 = vpop.f32.mrb[0].mxu0
      %v1753 = vpop.f32.mrb[0].mxu0
      %v1754 = vadd.f32 0.0, %v1753
      %v1755 = vpop.f32.mrb[0].mxu0
      %1756 = vmatprep.mubr.bf16.mxu0 %v1288
      %1757 = vmatmul.mubr.bf16.gmra.mrb[0].mxu0 %v1287
      %v1758 = vpop.f32.mrb[0].mxu0
      %v1759 = vadd.f32 0.0, %v1758
      %v1760 = vpop.f32.mrb[0].mxu0
      %v1761 = vpop.f32.mrb[0].mxu0
      %v1762 = vadd.f32 0.0, %v1761
      %v1763 = vpop.f32.mrb[0].mxu0
      %1764 = vmatprep.mubr.bf16.mxu0 %v1293
      %1765 = vmatmul.mubr.bf16.gmra.mrb[0].mxu0 %v1292
      %v1766 = vpop.f32.mrb[0].mxu0
      %v1767 = vadd.f32 0.0, %v1766
      %v1768 = vpop.f32.mrb[0].mxu0
      %v1769 = vpop.f32.mrb[0].mxu0
      %v1770 = vadd.f32 0.0, %v1769
      %v1771 = vpop.f32.mrb[0].mxu0
      %1772 = vmatprep.mubr.bf16.mxu0 %v1298
      %1773 = vmatmul.mubr.bf16.gmra.mrb[0].mxu0 %v1297
      %v1774 = vpop.f32.mrb[0].mxu0
      %v1775 = vadd.f32 0.0, %v1774
      %v1776 = vpop.f32.mrb[0].mxu0
      %v1777 = vpop.f32.mrb[0].mxu0
      %v1778 = vadd.f32 0.0, %v1777
      %v1779 = vpop.f32.mrb[0].mxu0
      %1780 = vmatprep.mubr.bf16.mxu0 %v1303
      %1781 = vmatmul.mubr.bf16.gmra.mrb[0].mxu0 %v1302
      %v1782 = vpop.f32.mrb[0].mxu0
      %v1783 = vadd.f32 0.0, %v1782
      %v1784 = vpop.f32.mrb[0].mxu0
      %v1785 = vpop.f32.mrb[0].mxu0
      %v1786 = vadd.f32 0.0, %v1785
      %v1787 = vpop.f32.mrb[0].mxu0
      %1788 = vmatprep.mubr.bf16.mxu0 %v1308
      %1789 = vmatmul.mubr.bf16.gmra.mrb[0].mxu0 %v1307
      %v1790 = vpop.f32.mrb[0].mxu0
      %v1791 = vadd.f32 0.0, %v1790
      %v1792 = vpop.f32.mrb[0].mxu0
      %v1793 = vpop.f32.mrb[0].mxu0
      %v1794 = vadd.f32 0.0, %v1793
      %v1795 = vpop.f32.mrb[0].mxu0
      %1796 = vmatprep.mubr.bf16.mxu0 %v1313
      %1797 = vmatmul.mubr.bf16.gmra.mrb[0].mxu0 %v1312
      %v1798 = vpop.f32.mrb[0].mxu0
      %v1799 = vadd.f32 0.0, %v1798
      %v1800 = vpop.f32.mrb[0].mxu0
      %v1801 = vpop.f32.mrb[0].mxu0
      %v1802 = vadd.f32 0.0, %v1801
      %v1803 = vpop.f32.mrb[0].mxu0
      %1804 = vmatprep.mubr.bf16.mxu0 %v1318
      %1805 = vmatmul.mubr.bf16.gmra.mrb[0].mxu0 %v1317
      %v1806 = vpop.f32.mrb[0].mxu0
      %v1807 = vadd.f32 0.0, %v1806
      %v1808 = vpop.f32.mrb[0].mxu0
      %v1809 = vpop.f32.mrb[0].mxu0
      %v1810 = vadd.f32 0.0, %v1809
      %v1811 = vpop.f32.mrb[0].mxu0
      %1812 = vmatprep.mubr.bf16.mxu0 %v1323
      %1813 = vmatmul.mubr.bf16.gmra.mrb[0].mxu0 %v1322
      %v1814 = vpop.f32.mrb[0].mxu0
      %v1815 = vadd.f32 0.0, %v1814
      %v1816 = vpop.f32.mrb[0].mxu0
      %v1817 = vpop.f32.mrb[0].mxu0
      %v1818 = vadd.f32 0.0, %v1817
      %v1819 = vpop.f32.mrb[0].mxu0
      %1820 = vmatprep.mubr.bf16.mxu0 %v1328
      %1821 = vmatmul.mubr.bf16.gmra.mrb[0].mxu0 %v1327
      %v1822 = vpop.f32.mrb[0].mxu0
      %v1823 = vadd.f32 0.0, %v1822
      %v1824 = vpop.f32.mrb[0].mxu0
      %v1825 = vpop.f32.mrb[0].mxu0
      %v1826 = vadd.f32 0.0, %v1825
      %v1827 = vpop.f32.mrb[0].mxu0
      %1828 = vdwg.mxu0
      %1829 = vmatprep.subr.bf16.mxu0 0
      %1830 = vmatpush1.bf16.msra.mxu0 %v1564
      %1831 = vmatprep.subr.bf16.mxu0 0
      %1832 = vmatpush1.bf16.msra.mxu0 %v1565
      %1833 = vmatprep.subr.bf16.mxu0 0
      %1834 = vmatpush1.bf16.msra.mxu0 %v1566
      %1835 = vmatprep.subr.bf16.mxu0 0
      %1836 = vmatpush1.bf16.msra.mxu0 %v1567
      %1837 = vmatprep.subr.bf16.mxu0 0
      %1838 = vmatpush1.bf16.msra.mxu0 %v1568
      %1839 = vmatprep.subr.bf16.mxu0 0
      %1840 = vmatpush1.bf16.msra.mxu0 %v1569
      %1841 = vmatprep.subr.bf16.mxu0 0
      %1842 = vmatpush1.bf16.msra.mxu0 %v1570
      %1843 = vmatprep.subr.bf16.mxu0 0
      %1844 = vmatpush1.bf16.msra.mxu0 %v1571
      %1845 = vmatprep.subr.bf16.mxu0 0
      %1846 = vmatpush1.bf16.msra.mxu0 %v1572
      %1847 = vmatprep.subr.bf16.mxu0 0
      %1848 = vmatpush1.bf16.msra.mxu0 %v1573
      %1849 = vmatprep.subr.bf16.mxu0 0
      %1850 = vmatpush1.bf16.msra.mxu0 %v1574
      %1851 = vmatprep.subr.bf16.mxu0 0
      %1852 = vmatpush1.bf16.msra.mxu0 %v1575
      %1853 = vmatprep.subr.bf16.mxu0 0
      %1854 = vmatpush1.bf16.msra.mxu0 %v1576
      %1855 = vmatprep.subr.bf16.mxu0 0
      %1856 = vmatpush1.bf16.msra.mxu0 %v1577
      %1857 = vmatprep.subr.bf16.mxu0 0
      %1858 = vmatpush1.bf16.msra.mxu0 %v1578
      %1859 = vmatprep.subr.bf16.mxu0 0
      %1860 = vmatpush1.bf16.msra.mxu0 %v1579
      %1861 = vmatprep.mubr.bf16.mxu0 %v1255
      %1862 = vmatmul.mubr.bf16.gmra.mrb[0].mxu0 %v1254
      %v1863 = vpop.f32.mrb[0].mxu0
      %v1864 = vadd.f32 %v1703, %v1863
      %v1865 = vpop.f32.mrb[0].mxu0
      %v1866 = vpop.f32.mrb[0].mxu0
      %v1867 = vadd.f32 %v1706, %v1866
      %v1868 = vpop.f32.mrb[0].mxu0
      %1869 = vmatprep.mubr.bf16.mxu0 %v1260
      %1870 = vmatmul.mubr.bf16.gmra.mrb[0].mxu0 %v1259
      %v1871 = vpop.f32.mrb[0].mxu0
      %v1872 = vadd.f32 %v1711, %v1871
      %v1873 = vpop.f32.mrb[0].mxu0
      %v1874 = vpop.f32.mrb[0].mxu0
      %v1875 = vadd.f32 %v1714, %v1874
      %v1876 = vpop.f32.mrb[0].mxu0
      %1877 = vmatprep.mubr.bf16.mxu0 %v1265
      %1878 = vmatmul.mubr.bf16.gmra.mrb[0].mxu0 %v1264
      %v1879 = vpop.f32.mrb[0].mxu0
      %v1880 = vadd.f32 %v1719, %v1879
      %v1881 = vpop.f32.mrb[0].mxu0
      %v1882 = vpop.f32.mrb[0].mxu0
      %v1883 = vadd.f32 %v1722, %v1882
      %v1884 = vpop.f32.mrb[0].mxu0
      %1885 = vmatprep.mubr.bf16.mxu0 %v1270
      %1886 = vmatmul.mubr.bf16.gmra.mrb[0].mxu0 %v1269
      %v1887 = vpop.f32.mrb[0].mxu0
      %v1888 = vadd.f32 %v1727, %v1887
      %v1889 = vpop.f32.mrb[0].mxu0
      %v1890 = vpop.f32.mrb[0].mxu0
      %v1891 = vadd.f32 %v1730, %v1890
      %v1892 = vpop.f32.mrb[0].mxu0
      %1893 = vmatprep.mubr.bf16.mxu0 %v1275
      %1894 = vmatmul.mubr.bf16.gmra.mrb[0].mxu0 %v1274
      %v1895 = vpop.f32.mrb[0].mxu0
      %v1896 = vadd.f32 %v1735, %v1895
      %v1897 = vpop.f32.mrb[0].mxu0
      %v1898 = vpop.f32.mrb[0].mxu0
      %v1899 = vadd.f32 %v1738, %v1898
      %v1900 = vpop.f32.mrb[0].mxu0
      %1901 = vmatprep.mubr.bf16.mxu0 %v1280
      %1902 = vmatmul.mubr.bf16.gmra.mrb[0].mxu0 %v1279
      %v1903 = vpop.f32.mrb[0].mxu0
      %v1904 = vadd.f32 %v1743, %v1903
      %v1905 = vpop.f32.mrb[0].mxu0
      %v1906 = vpop.f32.mrb[0].mxu0
      %v1907 = vadd.f32 %v1746, %v1906
      %v1908 = vpop.f32.mrb[0].mxu0
      %1909 = vmatprep.mubr.bf16.mxu0 %v1285
      %1910 = vmatmul.mubr.bf16.gmra.mrb[0].mxu0 %v1284
      %v1911 = vpop.f32.mrb[0].mxu0
      %v1912 = vadd.f32 %v1751, %v1911
      %v1913 = vpop.f32.mrb[0].mxu0
      %v1914 = vpop.f32.mrb[0].mxu0
      %v1915 = vadd.f32 %v1754, %v1914
      %v1916 = vpop.f32.mrb[0].mxu0
      %1917 = vmatprep.mubr.bf16.mxu0 %v1290
      %1918 = vmatmul.mubr.bf16.gmra.mrb[0].mxu0 %v1289
      %v1919 = vpop.f32.mrb[0].mxu0
      %v1920 = vadd.f32 %v1759, %v1919
      %v1921 = vpop.f32.mrb[0].mxu0
      %v1922 = vpop.f32.mrb[0].mxu0
      %v1923 = vadd.f32 %v1762, %v1922
      %v1924 = vpop.f32.mrb[0].mxu0
      %1925 = vmatprep.mubr.bf16.mxu0 %v1295
      %1926 = vmatmul.mubr.bf16.gmra.mrb[0].mxu0 %v1294
      %v1927 = vpop.f32.mrb[0].mxu0
      %v1928 = vadd.f32 %v1767, %v1927
      %v1929 = vpop.f32.mrb[0].mxu0
      %v1930 = vpop.f32.mrb[0].mxu0
      %v1931 = vadd.f32 %v1770, %v1930
      %v1932 = vpop.f32.mrb[0].mxu0
      %1933 = vmatprep.mubr.bf16.mxu0 %v1300
      %1934 = vmatmul.mubr.bf16.gmra.mrb[0].mxu0 %v1299
      %v1935 = vpop.f32.mrb[0].mxu0
      %v1936 = vadd.f32 %v1775, %v1935
      %v1937 = vpop.f32.mrb[0].mxu0
      %v1938 = vpop.f32.mrb[0].mxu0
      %v1939 = vadd.f32 %v1778, %v1938
      %v1940 = vpop.f32.mrb[0].mxu0
      %1941 = vmatprep.mubr.bf16.mxu0 %v1305
      %1942 = vmatmul.mubr.bf16.gmra.mrb[0].mxu0 %v1304
      %v1943 = vpop.f32.mrb[0].mxu0
      %v1944 = vadd.f32 %v1783, %v1943
      %v1945 = vpop.f32.mrb[0].mxu0
      %v1946 = vpop.f32.mrb[0].mxu0
      %v1947 = vadd.f32 %v1786, %v1946
      %v1948 = vpop.f32.mrb[0].mxu0
      %1949 = vmatprep.mubr.bf16.mxu0 %v1310
      %1950 = vmatmul.mubr.bf16.gmra.mrb[0].mxu0 %v1309
      %v1951 = vpop.f32.mrb[0].mxu0
      %v1952 = vadd.f32 %v1791, %v1951
      %v1953 = vpop.f32.mrb[0].mxu0
      %v1954 = vpop.f32.mrb[0].mxu0
      %v1955 = vadd.f32 %v1794, %v1954
      %v1956 = vpop.f32.mrb[0].mxu0
      %1957 = vmatprep.mubr.bf16.mxu0 %v1315
      %1958 = vmatmul.mubr.bf16.gmra.mrb[0].mxu0 %v1314
      %v1959 = vpop.f32.mrb[0].mxu0
      %v1960 = vadd.f32 %v1799, %v1959
      %v1961 = vpop.f32.mrb[0].mxu0
      %v1962 = vpop.f32.mrb[0].mxu0
      %v1963 = vadd.f32 %v1802, %v1962
      %v1964 = vpop.f32.mrb[0].mxu0
      %1965 = vmatprep.mubr.bf16.mxu0 %v1320
      %1966 = vmatmul.mubr.bf16.gmra.mrb[0].mxu0 %v1319
      %v1967 = vpop.f32.mrb[0].mxu0
      %v1968 = vadd.f32 %v1807, %v1967
      %v1969 = vpop.f32.mrb[0].mxu0
      %v1970 = vpop.f32.mrb[0].mxu0
      %v1971 = vadd.f32 %v1810, %v1970
      %v1972 = vpop.f32.mrb[0].mxu0
      %1973 = vmatprep.mubr.bf16.mxu0 %v1325
      %1974 = vmatmul.mubr.bf16.gmra.mrb[0].mxu0 %v1324
      %v1975 = vpop.f32.mrb[0].mxu0
      %v1976 = vadd.f32 %v1815, %v1975
      %v1977 = vpop.f32.mrb[0].mxu0
      %v1978 = vpop.f32.mrb[0].mxu0
      %v1979 = vadd.f32 %v1818, %v1978
      %v1980 = vpop.f32.mrb[0].mxu0
      %1981 = vmatprep.mubr.bf16.mxu0 %v1330
      %1982 = vmatmul.mubr.bf16.gmra.mrb[0].mxu0 %v1329
      %v1983 = vpop.f32.mrb[0].mxu0
      %v1984 = vadd.f32 %v1823, %v1983
      %v1985 = vpop.f32.mrb[0].mxu0
      %v1986 = vpop.f32.mrb[0].mxu0
      %v1987 = vadd.f32 %v1826, %v1986
      %v1988 = vpop.f32.mrb[0].mxu0
      %1989 = vdwg.mxu0
      %1990 = vmatprep.subr.bf16.mxu0 0
      %1991 = vmatpush1.bf16.msra.mxu0 %v1580
      %1992 = vmatprep.subr.bf16.mxu0 0
      %1993 = vmatpush1.bf16.msra.mxu0 %v1581
      %1994 = vmatprep.subr.bf16.mxu0 0
      %1995 = vmatpush1.bf16.msra.mxu0 %v1582
      %1996 = vmatprep.subr.bf16.mxu0 0
      %1997 = vmatpush1.bf16.msra.mxu0 %v1583
      %1998 = vmatprep.subr.bf16.mxu0 0
      %1999 = vmatpush1.bf16.msra.mxu0 0
      %2000 = vmatprep.subr.bf16.mxu0 0
      %2001 = vmatpush1.bf16.msra.mxu0 0
      %2002 = vmatprep.subr.bf16.mxu0 0
      %2003 = vmatpush1.bf16.msra.mxu0 0
      %2004 = vmatprep.subr.bf16.mxu0 0
      %2005 = vmatpush1.bf16.msra.mxu0 0
      %2006 = vmatprep.subr.bf16.mxu0 0
      %2007 = vmatpush1.bf16.msra.mxu0 0
      %2008 = vmatprep.subr.bf16.mxu0 0
      %2009 = vmatpush1.bf16.msra.mxu0 0
      %2010 = vmatprep.subr.bf16.mxu0 0
      %2011 = vmatpush1.bf16.msra.mxu0 0
      %2012 = vmatprep.subr.bf16.mxu0 0
      %2013 = vmatpush1.bf16.msra.mxu0 0
      %2014 = vmatprep.subr.bf16.mxu0 0
      %2015 = vmatpush1.bf16.msra.mxu0 0
      %2016 = vmatprep.subr.bf16.mxu0 0
      %2017 = vmatpush1.bf16.msra.mxu0 0
      %2018 = vmatprep.subr.bf16.mxu0 0
      %2019 = vmatpush1.bf16.msra.mxu0 0
      %2020 = vmatprep.subr.bf16.mxu0 0
      %2021 = vmatpush1.bf16.msra.mxu0 0
      %2022 = vmatprep.mubr.bf16.mxu0 0
      %2023 = vmatmul.mubr.bf16.gmra.mrb[0].mxu0 %v1621
      %v2024 = vpop.f32.mrb[0].mxu0
      %v2025 = vadd.f32 %v1864, %v2024
      %v2026 = vpop.f32.mrb[0].mxu0
      %v2027 = vpop.f32.mrb[0].mxu0
      %v2028 = vadd.f32 %v1867, %v2027
      %v2029 = vpop.f32.mrb[0].mxu0
      %2030 = vmatprep.mubr.bf16.mxu0 0
      %2031 = vmatmul.mubr.bf16.gmra.mrb[0].mxu0 %v1624
      %v2032 = vpop.f32.mrb[0].mxu0
      %v2033 = vadd.f32 %v1872, %v2032
      %v2034 = vpop.f32.mrb[0].mxu0
      %v2035 = vpop.f32.mrb[0].mxu0
      %v2036 = vadd.f32 %v1875, %v2035
      %v2037 = vpop.f32.mrb[0].mxu0
      %2038 = vmatprep.mubr.bf16.mxu0 0
      %2039 = vmatmul.mubr.bf16.gmra.mrb[0].mxu0 %v1627
      %v2040 = vpop.f32.mrb[0].mxu0
      %v2041 = vadd.f32 %v1880, %v2040
      %v2042 = vpop.f32.mrb[0].mxu0
      %v2043 = vpop.f32.mrb[0].mxu0
      %v2044 = vadd.f32 %v1883, %v2043
      %v2045 = vpop.f32.mrb[0].mxu0
      %2046 = vmatprep.mubr.bf16.mxu0 0
      %2047 = vmatmul.mubr.bf16.gmra.mrb[0].mxu0 %v1630
      %v2048 = vpop.f32.mrb[0].mxu0
      %v2049 = vadd.f32 %v1888, %v2048
      %v2050 = vpop.f32.mrb[0].mxu0
      %v2051 = vpop.f32.mrb[0].mxu0
      %v2052 = vadd.f32 %v1891, %v2051
      %v2053 = vpop.f32.mrb[0].mxu0
      %2054 = vmatprep.mubr.bf16.mxu0 0
      %2055 = vmatmul.mubr.bf16.gmra.mrb[0].mxu0 %v1633
      %v2056 = vpop.f32.mrb[0].mxu0
      %v2057 = vadd.f32 %v1896, %v2056
      %v2058 = vpop.f32.mrb[0].mxu0
      %v2059 = vpop.f32.mrb[0].mxu0
      %v2060 = vadd.f32 %v1899, %v2059
      %v2061 = vpop.f32.mrb[0].mxu0
      %2062 = vmatprep.mubr.bf16.mxu0 0
      %2063 = vmatmul.mubr.bf16.gmra.mrb[0].mxu0 %v1636
      %v2064 = vpop.f32.mrb[0].mxu0
      %v2065 = vadd.f32 %v1904, %v2064
      %v2066 = vpop.f32.mrb[0].mxu0
      %v2067 = vpop.f32.mrb[0].mxu0
      %v2068 = vadd.f32 %v1907, %v2067
      %v2069 = vpop.f32.mrb[0].mxu0
      %2070 = vmatprep.mubr.bf16.mxu0 0
      %2071 = vmatmul.mubr.bf16.gmra.mrb[0].mxu0 %v1639
      %v2072 = vpop.f32.mrb[0].mxu0
      %v2073 = vadd.f32 %v1912, %v2072
      %v2074 = vpop.f32.mrb[0].mxu0
      %v2075 = vpop.f32.mrb[0].mxu0
      %v2076 = vadd.f32 %v1915, %v2075
      %v2077 = vpop.f32.mrb[0].mxu0
      %2078 = vmatprep.mubr.bf16.mxu0 0
      %2079 = vmatmul.mubr.bf16.gmra.mrb[0].mxu0 %v1642
      %v2080 = vpop.f32.mrb[0].mxu0
      %v2081 = vadd.f32 %v1920, %v2080
      %v2082 = vpop.f32.mrb[0].mxu0
      %v2083 = vpop.f32.mrb[0].mxu0
      %v2084 = vadd.f32 %v1923, %v2083
      %v2085 = vpop.f32.mrb[0].mxu0
      %2086 = vmatprep.mubr.bf16.mxu0 0
      %2087 = vmatmul.mubr.bf16.gmra.mrb[0].mxu0 %v1645
      %v2088 = vpop.f32.mrb[0].mxu0
      %v2089 = vadd.f32 %v1928, %v2088
      %v2090 = vpop.f32.mrb[0].mxu0
      %v2091 = vpop.f32.mrb[0].mxu0
      %v2092 = vadd.f32 %v1931, %v2091
      %v2093 = vpop.f32.mrb[0].mxu0
      %2094 = vmatprep.mubr.bf16.mxu0 0
      %2095 = vmatmul.mubr.bf16.gmra.mrb[0].mxu0 %v1648
      %v2096 = vpop.f32.mrb[0].mxu0
      %v2097 = vadd.f32 %v1936, %v2096
      %v2098 = vpop.f32.mrb[0].mxu0
      %v2099 = vpop.f32.mrb[0].mxu0
      %v2100 = vadd.f32 %v1939, %v2099
      %v2101 = vpop.f32.mrb[0].mxu0
      %2102 = vmatprep.mubr.bf16.mxu0 0
      %2103 = vmatmul.mubr.bf16.gmra.mrb[0].mxu0 %v1651
      %v2104 = vpop.f32.mrb[0].mxu0
      %v2105 = vadd.f32 %v1944, %v2104
      %v2106 = vpop.f32.mrb[0].mxu0
      %v2107 = vpop.f32.mrb[0].mxu0
      %v2108 = vadd.f32 %v1947, %v2107
      %v2109 = vpop.f32.mrb[0].mxu0
      %2110 = vmatprep.mubr.bf16.mxu0 0
      %2111 = vmatmul.mubr.bf16.gmra.mrb[0].mxu0 %v1654
      %v2112 = vpop.f32.mrb[0].mxu0
      %v2113 = vadd.f32 %v1952, %v2112
      %v2114 = vpop.f32.mrb[0].mxu0
      %v2115 = vpop.f32.mrb[0].mxu0
      %v2116 = vadd.f32 %v1955, %v2115
      %v2117 = vpop.f32.mrb[0].mxu0
      %2118 = vmatprep.mubr.bf16.mxu0 0
      %2119 = vmatmul.mubr.bf16.gmra.mrb[0].mxu0 %v1657
      %v2120 = vpop.f32.mrb[0].mxu0
      %v2121 = vadd.f32 %v1960, %v2120
      %v2122 = vpop.f32.mrb[0].mxu0
      %v2123 = vpop.f32.mrb[0].mxu0
      %v2124 = vadd.f32 %v1963, %v2123
      %v2125 = vpop.f32.mrb[0].mxu0
      %2126 = vmatprep.mubr.bf16.mxu0 0
      %2127 = vmatmul.mubr.bf16.gmra.mrb[0].mxu0 %v1660
      %v2128 = vpop.f32.mrb[0].mxu0
      %v2129 = vadd.f32 %v1968, %v2128
      %v2130 = vpop.f32.mrb[0].mxu0
      %v2131 = vpop.f32.mrb[0].mxu0
      %v2132 = vadd.f32 %v1971, %v2131
      %v2133 = vpop.f32.mrb[0].mxu0
      %2134 = vmatprep.mubr.bf16.mxu0 0
      %2135 = vmatmul.mubr.bf16.gmra.mrb[0].mxu0 %v1663
      %v2136 = vpop.f32.mrb[0].mxu0
      %v2137 = vadd.f32 %v1976, %v2136
      %v2138 = vpop.f32.mrb[0].mxu0
      %v2139 = vpop.f32.mrb[0].mxu0
      %v2140 = vadd.f32 %v1979, %v2139
      %v2141 = vpop.f32.mrb[0].mxu0
      %2142 = vmatprep.mubr.bf16.mxu0 0
      %2143 = vmatmul.mubr.bf16.gmra.mrb[0].mxu0 %v1666
      %v2144 = vpop.f32.mrb[0].mxu0
      %v2145 = vadd.f32 %v1984, %v2144
      %v2146 = vpop.f32.mrb[0].mxu0
      %v2147 = vpop.f32.mrb[0].mxu0
      %v2148 = vadd.f32 %v1987, %v2147
      %v2149 = vpop.f32.mrb[0].mxu0
      %2150 = vdwg.mxu0
      %v2151 = vsel %vm201, %v2025, 0.0
      %v2152 = vsel %vm201, %v2028, 0.0
      %v2153 = vadd.f32 %v2151, %v2152
      %v2154 = vsel %vm201, %v2033, 0.0
      %v2155 = vadd.f32 %v2153, %v2154
      %v2156 = vsel %vm201, %v2036, 0.0
      %v2157 = vadd.f32 %v2155, %v2156
      %v2158 = vsel %vm201, %v2041, 0.0
      %v2159 = vadd.f32 %v2157, %v2158
      %v2160 = vsel %vm201, %v2044, 0.0
      %v2161 = vadd.f32 %v2159, %v2160
      %v2162 = vsel %vm201, %v2049, 0.0
      %v2163 = vadd.f32 %v2161, %v2162
      %v2164 = vsel %vm201, %v2052, 0.0
      %v2165 = vadd.f32 %v2163, %v2164
      %v2166 = vsel %vm201, %v2057, 0.0
      %v2167 = vadd.f32 %v2165, %v2166
      %v2168 = vsel %vm201, %v2060, 0.0
      %v2169 = vadd.f32 %v2167, %v2168
      %v2170 = vsel %vm201, %v2065, 0.0
      %v2171 = vadd.f32 %v2169, %v2170
      %v2172 = vsel %vm201, %v2068, 0.0
      %v2173 = vadd.f32 %v2171, %v2172
      %v2174 = vsel %vm201, %v2073, 0.0
      %v2175 = vadd.f32 %v2173, %v2174
      %v2176 = vsel %vm201, %v2076, 0.0
      %v2177 = vadd.f32 %v2175, %v2176
      %v2178 = vsel %vm201, %v2081, 0.0
      %v2179 = vadd.f32 %v2177, %v2178
      %v2180 = vsel %vm201, %v2084, 0.0
      %v2181 = vadd.f32 %v2179, %v2180
      %v2182 = vsel %vm201, %v2089, 0.0
      %v2183 = vadd.f32 %v2181, %v2182
      %v2184 = vsel %vm201, %v2092, 0.0
      %v2185 = vadd.f32 %v2183, %v2184
      %v2186 = vsel %vm201, %v2097, 0.0
      %v2187 = vadd.f32 %v2185, %v2186
      %v2188 = vsel %vm201, %v2100, 0.0
      %v2189 = vadd.f32 %v2187, %v2188
      %v2190 = vsel %vm201, %v2105, 0.0
      %v2191 = vadd.f32 %v2189, %v2190
      %v2192 = vsel %vm201, %v2108, 0.0
      %v2193 = vadd.f32 %v2191, %v2192
      %v2194 = vsel %vm201, %v2113, 0.0
      %v2195 = vadd.f32 %v2193, %v2194
      %v2196 = vsel %vm201, %v2116, 0.0
      %v2197 = vadd.f32 %v2195, %v2196
      %v2198 = vsel %vm201, %v2121, 0.0
      %v2199 = vadd.f32 %v2197, %v2198
      %v2200 = vsel %vm201, %v2124, 0.0
      %v2201 = vadd.f32 %v2199, %v2200
      %v2202 = vsel %vm201, %v2129, 0.0
      %v2203 = vadd.f32 %v2201, %v2202
      %v2204 = vsel %vm201, %v2132, 0.0
      %v2205 = vadd.f32 %v2203, %v2204
      %v2206 = vsel %vm201, %v2137, 0.0
      %v2207 = vadd.f32 %v2205, %v2206
      %v2208 = vsel %vm201, %v2140, 0.0
      %v2209 = vadd.f32 %v2207, %v2208
      %v2210 = vsel %vm201, %v2145, 0.0
      %v2211 = vadd.f32 %v2209, %v2210
      %v2212 = vsel %vm201, %v2148, 0.0
      %v2213 = vadd.f32 %v2211, %v2212
      %v2214 = vrot.slane %v2213, 4
      %v2215 = vadd.f32 %v2213, %v2214
      %v2216 = vrot.slane %v2215, 2
      %v2217 = vadd.f32 %v2215, %v2216
      %v2218 = vrot.slane %v2217, 1
      %v2219 = vadd.f32 %v2217, %v2218
      %v2220 = vmul.f32 %v2219, 0.00390625
      %v2221 = vmul.f32 %v2025, %v2025
      %v2222 = vmul.f32 %v2028, %v2028
      %v2223 = vmul.f32 %v2033, %v2033
      %v2224 = vmul.f32 %v2036, %v2036
      %v2225 = vmul.f32 %v2041, %v2041
      %v2226 = vmul.f32 %v2044, %v2044
      %v2227 = vmul.f32 %v2049, %v2049
      %v2228 = vmul.f32 %v2052, %v2052
      %v2229 = vmul.f32 %v2057, %v2057
      %v2230 = vmul.f32 %v2060, %v2060
      %v2231 = vmul.f32 %v2065, %v2065
      %v2232 = vmul.f32 %v2068, %v2068
      %v2233 = vmul.f32 %v2073, %v2073
      %v2234 = vmul.f32 %v2076, %v2076
      %v2235 = vmul.f32 %v2081, %v2081
      %v2236 = vmul.f32 %v2084, %v2084
      %v2237 = vmul.f32 %v2089, %v2089
      %v2238 = vmul.f32 %v2092, %v2092
      %v2239 = vmul.f32 %v2097, %v2097
      %v2240 = vmul.f32 %v2100, %v2100
      %v2241 = vmul.f32 %v2105, %v2105
      %v2242 = vmul.f32 %v2108, %v2108
      %v2243 = vmul.f32 %v2113, %v2113
      %v2244 = vmul.f32 %v2116, %v2116
      %v2245 = vmul.f32 %v2121, %v2121
      %v2246 = vmul.f32 %v2124, %v2124
      %v2247 = vmul.f32 %v2129, %v2129
      %v2248 = vmul.f32 %v2132, %v2132
      %v2249 = vmul.f32 %v2137, %v2137
      %v2250 = vmul.f32 %v2140, %v2140
      %v2251 = vmul.f32 %v2145, %v2145
      %v2252 = vmul.f32 %v2148, %v2148
      %v2253 = vsel %vm201, %v2221, 0.0
      %v2254 = vsel %vm201, %v2222, 0.0
      %v2255 = vadd.f32 %v2253, %v2254
      %v2256 = vsel %vm201, %v2223, 0.0
      %v2257 = vadd.f32 %v2255, %v2256
      %v2258 = vsel %vm201, %v2224, 0.0
      %v2259 = vadd.f32 %v2257, %v2258
      %v2260 = vsel %vm201, %v2225, 0.0
      %v2261 = vadd.f32 %v2259, %v2260
      %v2262 = vsel %vm201, %v2226, 0.0
      %v2263 = vadd.f32 %v2261, %v2262
      %v2264 = vsel %vm201, %v2227, 0.0
      %v2265 = vadd.f32 %v2263, %v2264
      %v2266 = vsel %vm201, %v2228, 0.0
      %v2267 = vadd.f32 %v2265, %v2266
      %v2268 = vsel %vm201, %v2229, 0.0
      %v2269 = vadd.f32 %v2267, %v2268
      %v2270 = vsel %vm201, %v2230, 0.0
      %v2271 = vadd.f32 %v2269, %v2270
      %v2272 = vsel %vm201, %v2231, 0.0
      %v2273 = vadd.f32 %v2271, %v2272
      %v2274 = vsel %vm201, %v2232, 0.0
      %v2275 = vadd.f32 %v2273, %v2274
      %v2276 = vsel %vm201, %v2233, 0.0
      %v2277 = vadd.f32 %v2275, %v2276
      %v2278 = vsel %vm201, %v2234, 0.0
      %v2279 = vadd.f32 %v2277, %v2278
      %v2280 = vsel %vm201, %v2235, 0.0
      %v2281 = vadd.f32 %v2279, %v2280
      %v2282 = vsel %vm201, %v2236, 0.0
      %v2283 = vadd.f32 %v2281, %v2282
      %v2284 = vsel %vm201, %v2237, 0.0
      %v2285 = vadd.f32 %v2283, %v2284
      %v2286 = vsel %vm201, %v2238, 0.0
      %v2287 = vadd.f32 %v2285, %v2286
      %v2288 = vsel %vm201, %v2239, 0.0
      %v2289 = vadd.f32 %v2287, %v2288
      %v2290 = vsel %vm201, %v2240, 0.0
      %v2291 = vadd.f32 %v2289, %v2290
      %v2292 = vsel %vm201, %v2241, 0.0
      %v2293 = vadd.f32 %v2291, %v2292
      %v2294 = vsel %vm201, %v2242, 0.0
      %v2295 = vadd.f32 %v2293, %v2294
      %v2296 = vsel %vm201, %v2243, 0.0
      %v2297 = vadd.f32 %v2295, %v2296
      %v2298 = vsel %vm201, %v2244, 0.0
      %v2299 = vadd.f32 %v2297, %v2298
      %v2300 = vsel %vm201, %v2245, 0.0
      %v2301 = vadd.f32 %v2299, %v2300
      %v2302 = vsel %vm201, %v2246, 0.0
      %v2303 = vadd.f32 %v2301, %v2302
      %v2304 = vsel %vm201, %v2247, 0.0
      %v2305 = vadd.f32 %v2303, %v2304
      %v2306 = vsel %vm201, %v2248, 0.0
      %v2307 = vadd.f32 %v2305, %v2306
      %v2308 = vsel %vm201, %v2249, 0.0
      %v2309 = vadd.f32 %v2307, %v2308
      %v2310 = vsel %vm201, %v2250, 0.0
      %v2311 = vadd.f32 %v2309, %v2310
      %v2312 = vsel %vm201, %v2251, 0.0
      %v2313 = vadd.f32 %v2311, %v2312
      %v2314 = vsel %vm201, %v2252, 0.0
      %v2315 = vadd.f32 %v2313, %v2314
      %v2316 = vrot.slane %v2315, 4
      %v2317 = vadd.f32 %v2315, %v2316
      %v2318 = vrot.slane %v2317, 2
      %v2319 = vadd.f32 %v2317, %v2318
      %v2320 = vrot.slane %v2319, 1
      %v2321 = vadd.f32 %v2319, %v2320
      %v2322 = vmul.f32 %v2321, 0.00390625
      %v2323 = vmul.f32 %v2220, %v2220
      %v2324 = vsub.f32 %v2322, %v2323
      %v2325 = vsub.f32 %v2025, %v2220
      %v2326 = vsub.f32 %v2028, %v2220
      %v2327 = vsub.f32 %v2033, %v2220
      %v2328 = vsub.f32 %v2036, %v2220
      %v2329 = vsub.f32 %v2041, %v2220
      %v2330 = vsub.f32 %v2044, %v2220
      %v2331 = vsub.f32 %v2049, %v2220
      %v2332 = vsub.f32 %v2052, %v2220
      %v2333 = vsub.f32 %v2057, %v2220
      %v2334 = vsub.f32 %v2060, %v2220
      %v2335 = vsub.f32 %v2065, %v2220
      %v2336 = vsub.f32 %v2068, %v2220
      %v2337 = vsub.f32 %v2073, %v2220
      %v2338 = vsub.f32 %v2076, %v2220
      %v2339 = vsub.f32 %v2081, %v2220
      %v2340 = vsub.f32 %v2084, %v2220
      %v2341 = vsub.f32 %v2089, %v2220
      %v2342 = vsub.f32 %v2092, %v2220
      %v2343 = vsub.f32 %v2097, %v2220
      %v2344 = vsub.f32 %v2100, %v2220
      %v2345 = vsub.f32 %v2105, %v2220
      %v2346 = vsub.f32 %v2108, %v2220
      %v2347 = vsub.f32 %v2113, %v2220
      %v2348 = vsub.f32 %v2116, %v2220
      %v2349 = vsub.f32 %v2121, %v2220
      %v2350 = vsub.f32 %v2124, %v2220
      %v2351 = vsub.f32 %v2129, %v2220
      %v2352 = vsub.f32 %v2132, %v2220
      %v2353 = vsub.f32 %v2137, %v2220
      %v2354 = vsub.f32 %v2140, %v2220
      %v2355 = vsub.f32 %v2145, %v2220
      %v2356 = vsub.f32 %v2148, %v2220
      %v2357 = vadd.f32 %v2324, 1e-05
      %v2358 = vrsqrt.pop %v2357
      %v2359 = vmul.f32 %v2325, %v2358
      %v2360 = vmul.f32 %v2326, %v2358
      %v2361 = vmul.f32 %v2327, %v2358
      %v2362 = vmul.f32 %v2328, %v2358
      %v2363 = vmul.f32 %v2329, %v2358
      %v2364 = vmul.f32 %v2330, %v2358
      %v2365 = vmul.f32 %v2331, %v2358
      %v2366 = vmul.f32 %v2332, %v2358
      %v2367 = vmul.f32 %v2333, %v2358
      %v2368 = vmul.f32 %v2334, %v2358
      %v2369 = vmul.f32 %v2335, %v2358
      %v2370 = vmul.f32 %v2336, %v2358
      %v2371 = vmul.f32 %v2337, %v2358
      %v2372 = vmul.f32 %v2338, %v2358
      %v2373 = vmul.f32 %v2339, %v2358
      %v2374 = vmul.f32 %v2340, %v2358
      %v2375 = vmul.f32 %v2341, %v2358
      %v2376 = vmul.f32 %v2342, %v2358
      %v2377 = vmul.f32 %v2343, %v2358
      %v2378 = vmul.f32 %v2344, %v2358
      %v2379 = vmul.f32 %v2345, %v2358
      %v2380 = vmul.f32 %v2346, %v2358
      %v2381 = vmul.f32 %v2347, %v2358
      %v2382 = vmul.f32 %v2348, %v2358
      %v2383 = vmul.f32 %v2349, %v2358
      %v2384 = vmul.f32 %v2350, %v2358
      %v2385 = vmul.f32 %v2351, %v2358
      %v2386 = vmul.f32 %v2352, %v2358
      %v2387 = vmul.f32 %v2353, %v2358
      %v2388 = vmul.f32 %v2354, %v2358
      %v2389 = vmul.f32 %v2355, %v2358
      %v2390 = vmul.f32 %v2356, %v2358
      %vm2391 = vcmp.ge.f32.partialorder %v2359, 0.0
      %vm2392 = vcmp.ge.f32.partialorder %v2360, 0.0
      %vm2393 = vcmp.ge.f32.partialorder %v2361, 0.0
      %vm2394 = vcmp.ge.f32.partialorder %v2362, 0.0
      %vm2395 = vcmp.ge.f32.partialorder %v2363, 0.0
      %vm2396 = vcmp.ge.f32.partialorder %v2364, 0.0
      %vm2397 = vcmp.ge.f32.partialorder %v2365, 0.0
      %vm2398 = vcmp.ge.f32.partialorder %v2366, 0.0
      %vm2399 = vcmp.ge.f32.partialorder %v2367, 0.0
      %vm2400 = vcmp.ge.f32.partialorder %v2368, 0.0
      %vm2401 = vcmp.ge.f32.partialorder %v2369, 0.0
      %vm2402 = vcmp.ge.f32.partialorder %v2370, 0.0
      %vm2403 = vcmp.ge.f32.partialorder %v2371, 0.0
      %vm2404 = vcmp.ge.f32.partialorder %v2372, 0.0
      %vm2405 = vcmp.ge.f32.partialorder %v2373, 0.0
      %vm2406 = vcmp.ge.f32.partialorder %v2374, 0.0
      %vm2407 = vcmp.ge.f32.partialorder %v2375, 0.0
      %vm2408 = vcmp.ge.f32.partialorder %v2376, 0.0
      %vm2409 = vcmp.ge.f32.partialorder %v2377, 0.0
      %vm2410 = vcmp.ge.f32.partialorder %v2378, 0.0
      %vm2411 = vcmp.ge.f32.partialorder %v2379, 0.0
      %vm2412 = vcmp.ge.f32.partialorder %v2380, 0.0
      %vm2413 = vcmp.ge.f32.partialorder %v2381, 0.0
      %vm2414 = vcmp.ge.f32.partialorder %v2382, 0.0
      %vm2415 = vcmp.ge.f32.partialorder %v2383, 0.0
      %vm2416 = vcmp.ge.f32.partialorder %v2384, 0.0
      %vm2417 = vcmp.ge.f32.partialorder %v2385, 0.0
      %vm2418 = vcmp.ge.f32.partialorder %v2386, 0.0
      %vm2419 = vcmp.ge.f32.partialorder %v2387, 0.0
      %vm2420 = vcmp.ge.f32.partialorder %v2388, 0.0
      %vm2421 = vcmp.ge.f32.partialorder %v2389, 0.0
      %vm2422 = vcmp.ge.f32.partialorder %v2390, 0.0
      %v2423 = vmul.f32 %v2359, 0.2
      %v2424 = vmul.f32 %v2360, 0.2
      %v2425 = vmul.f32 %v2361, 0.2
      %v2426 = vmul.f32 %v2362, 0.2
      %v2427 = vmul.f32 %v2363, 0.2
      %v2428 = vmul.f32 %v2364, 0.2
      %v2429 = vmul.f32 %v2365, 0.2
      %v2430 = vmul.f32 %v2366, 0.2
      %v2431 = vmul.f32 %v2367, 0.2
      %v2432 = vmul.f32 %v2368, 0.2
      %v2433 = vmul.f32 %v2369, 0.2
      %v2434 = vmul.f32 %v2370, 0.2
      %v2435 = vmul.f32 %v2371, 0.2
      %v2436 = vmul.f32 %v2372, 0.2
      %v2437 = vmul.f32 %v2373, 0.2
      %v2438 = vmul.f32 %v2374, 0.2
      %v2439 = vmul.f32 %v2375, 0.2
      %v2440 = vmul.f32 %v2376, 0.2
      %v2441 = vmul.f32 %v2377, 0.2
      %v2442 = vmul.f32 %v2378, 0.2
      %v2443 = vmul.f32 %v2379, 0.2
      %v2444 = vmul.f32 %v2380, 0.2
      %v2445 = vmul.f32 %v2381, 0.2
      %v2446 = vmul.f32 %v2382, 0.2
      %v2447 = vmul.f32 %v2383, 0.2
      %v2448 = vmul.f32 %v2384, 0.2
      %v2449 = vmul.f32 %v2385, 0.2
      %v2450 = vmul.f32 %v2386, 0.2
      %v2451 = vmul.f32 %v2387, 0.2
      %v2452 = vmul.f32 %v2388, 0.2
      %v2453 = vmul.f32 %v2389, 0.2
      %v2454 = vmul.f32 %v2390, 0.2
      %v2455 = vsel %vm2391, %v2359, %v2423
      %v2456 = vsel %vm2392, %v2360, %v2424
      %v2457 = vsel %vm2393, %v2361, %v2425
      %v2458 = vsel %vm2394, %v2362, %v2426
      %v2459 = vsel %vm2395, %v2363, %v2427
      %v2460 = vsel %vm2396, %v2364, %v2428
      %v2461 = vsel %vm2397, %v2365, %v2429
      %v2462 = vsel %vm2398, %v2366, %v2430
      %v2463 = vsel %vm2399, %v2367, %v2431
      %v2464 = vsel %vm2400, %v2368, %v2432
      %v2465 = vsel %vm2401, %v2369, %v2433
      %v2466 = vsel %vm2402, %v2370, %v2434
      %v2467 = vsel %vm2403, %v2371, %v2435
      %v2468 = vsel %vm2404, %v2372, %v2436
      %v2469 = vsel %vm2405, %v2373, %v2437
      %v2470 = vsel %vm2406, %v2374, %v2438
      %v2471 = vsel %vm2407, %v2375, %v2439
      %v2472 = vsel %vm2408, %v2376, %v2440
      %v2473 = vsel %vm2409, %v2377, %v2441
      %v2474 = vsel %vm2410, %v2378, %v2442
      %v2475 = vsel %vm2411, %v2379, %v2443
      %v2476 = vsel %vm2412, %v2380, %v2444
      %v2477 = vsel %vm2413, %v2381, %v2445
      %v2478 = vsel %vm2414, %v2382, %v2446
      %v2479 = vsel %vm2415, %v2383, %v2447
      %v2480 = vsel %vm2416, %v2384, %v2448
      %v2481 = vsel %vm2417, %v2385, %v2449
      %v2482 = vsel %vm2418, %v2386, %v2450
      %v2483 = vsel %vm2419, %v2387, %v2451
      %v2484 = vsel %vm2420, %v2388, %v2452
      %v2485 = vsel %vm2421, %v2389, %v2453
      %v2486 = vsel %vm2422, %v2390, %v2454
      %2487 = vst.msk [vmem:[%s289 + $0x1] sm:$0xff] %vm201, %v2455
      %2488 = vst.msk [vmem:[%s289 + $0x9] sm:$0xff] %vm201, %v2456
      %2489 = vst.msk [vmem:[%s289 + $0x19] sm:$0xff] %vm201, %v2457
      %2490 = vst.msk [vmem:[%s289 + $0x21] sm:$0xff] %vm201, %v2458
      %2491 = vst.msk [vmem:[%s289 + $0x31] sm:$0xff] %vm201, %v2459
      %2492 = vst.msk [vmem:[%s289 + $0x39] sm:$0xff] %vm201, %v2460
      %2493 = vst.msk [vmem:[%s289 + $0x49] sm:$0xff] %vm201, %v2461
      %2494 = vst.msk [vmem:[%s289 + $0x51] sm:$0xff] %vm201, %v2462
      %2495 = vst.msk [vmem:[%s289 + $0x61] sm:$0xff] %vm201, %v2463
      %2496 = vst.msk [vmem:[%s289 + $0x69] sm:$0xff] %vm201, %v2464
      %2497 = vst.msk [vmem:[%s289 + $0x79] sm:$0xff] %vm201, %v2465
      %2498 = vst.msk [vmem:[%s289 + $0x81] sm:$0xff] %vm201, %v2466
      %2499 = vst.msk [vmem:[%s289 + $0x91] sm:$0xff] %vm201, %v2467
      %2500 = vst.msk [vmem:[%s289 + $0x99] sm:$0xff] %vm201, %v2468
      %2501 = vst.msk [vmem:[%s289 + $0xa9] sm:$0xff] %vm201, %v2469
      %2502 = vst.msk [vmem:[%s289 + $0xb1] sm:$0xff] %vm201, %v2470
      %2503 = vst.msk [vmem:[%s289 + $0xc1] sm:$0xff] %vm201, %v2471
      %2504 = vst.msk [vmem:[%s289 + $0xc9] sm:$0xff] %vm201, %v2472
      %2505 = vst.msk [vmem:[%s289 + $0xd9] sm:$0xff] %vm201, %v2473
      %2506 = vst.msk [vmem:[%s289 + $0xe1] sm:$0xff] %vm201, %v2474
      %2507 = vst.msk [vmem:[%s289 + $0xf1] sm:$0xff] %vm201, %v2475
      %2508 = vst.msk [vmem:[%s289 + $0xf9] sm:$0xff] %vm201, %v2476
      %2509 = vst.msk [vmem:[%s289 + $0x109] sm:$0xff] %vm201, %v2477
      %2510 = vst.msk [vmem:[%s289 + $0x111] sm:$0xff] %vm201, %v2478
      %2511 = vst.msk [vmem:[%s289 + $0x121] sm:$0xff] %vm201, %v2479
      %2512 = vst.msk [vmem:[%s289 + $0x129] sm:$0xff] %vm201, %v2480
      %2513 = vst.msk [vmem:[%s289 + $0x139] sm:$0xff] %vm201, %v2481
      %2514 = vst.msk [vmem:[%s289 + $0x141] sm:$0xff] %vm201, %v2482
      %2515 = vst.msk [vmem:[%s289 + $0x151] sm:$0xff] %vm201, %v2483
      %2516 = vst.msk [vmem:[%s289 + $0x159] sm:$0xff] %vm201, %v2484
      %2517 = vst.msk [vmem:[%s289 + $0x169] sm:$0xff] %vm201, %v2485
      %2518 = vst.msk [vmem:[%s289 + $0x171] sm:$0xff] %vm201, %v2486
      %v2519 = vld [vmem:[#allocation2] sm:$0xff]
      %v2520 = vld [vmem:[#allocation2 + $0x8] sm:$0xff]
      %v2521 = vld [vmem:[#allocation2 + $0x18] sm:$0xff]
      %v2522 = vld [vmem:[#allocation2 + $0x20] sm:$0xff]
      %v2523 = vld [vmem:[#allocation2 + $0x30] sm:$0xff]
      %v2524 = vld [vmem:[#allocation2 + $0x38] sm:$0xff]
      %v2525 = vld [vmem:[#allocation2 + $0x48] sm:$0xff]
      %v2526 = vld [vmem:[#allocation2 + $0x50] sm:$0xff]
      %v2527 = vld [vmem:[#allocation2 + $0x60] sm:$0xff]
      %v2528 = vld [vmem:[#allocation2 + $0x68] sm:$0xff]
      %v2529 = vld [vmem:[#allocation2 + $0x78] sm:$0xff]
      %v2530 = vld [vmem:[#allocation2 + $0x80] sm:$0xff]
      %v2531 = vld [vmem:[#allocation2 + $0x90] sm:$0xff]
      %v2532 = vld [vmem:[#allocation2 + $0x98] sm:$0xff]
      %v2533 = vld [vmem:[#allocation2 + $0xa8] sm:$0xff]
      %v2534 = vld [vmem:[#allocation2 + $0xb0] sm:$0xff]
      %v2535 = vld [vmem:[#allocation2 + $0xc0] sm:$0xff]
      %v2536 = vld [vmem:[#allocation2 + $0xc8] sm:$0xff]
      %v2537 = vld [vmem:[#allocation2 + $0xd8] sm:$0xff]
      %v2538 = vld [vmem:[#allocation2 + $0xe0] sm:$0xff]
      %v2539 = vld [vmem:[#allocation2 + $0xf0] sm:$0xff]
      %v2540 = vld [vmem:[#allocation2 + $0xf8] sm:$0xff]
      %v2541 = vld [vmem:[#allocation2 + $0x108] sm:$0xff]
      %v2542 = vld [vmem:[#allocation2 + $0x110] sm:$0xff]
      %v2543 = vld [vmem:[#allocation2 + $0x120] sm:$0xff]
      %v2544 = vld [vmem:[#allocation2 + $0x128] sm:$0xff]
      %v2545 = vld [vmem:[#allocation2 + $0x138] sm:$0xff]
      %v2546 = vld [vmem:[#allocation2 + $0x140] sm:$0xff]
      %v2547 = vld [vmem:[#allocation2 + $0x150] sm:$0xff]
      %v2548 = vld [vmem:[#allocation2 + $0x158] sm:$0xff]
      %v2549 = vld [vmem:[#allocation2 + $0x168] sm:$0xff]
      %v2550 = vld [vmem:[#allocation2 + $0x170] sm:$0xff]
      %v2551 = vld [vmem:[#allocation2 + $0x1] sm:$0xff]
      %v2552 = vld [vmem:[#allocation2 + $0x9] sm:$0xff]
      %v2553 = vld [vmem:[#allocation2 + $0x19] sm:$0xff]
      %v2554 = vld [vmem:[#allocation2 + $0x21] sm:$0xff]
      %v2555 = vld [vmem:[#allocation2 + $0x31] sm:$0xff]
      %v2556 = vld [vmem:[#allocation2 + $0x39] sm:$0xff]
      %v2557 = vld [vmem:[#allocation2 + $0x49] sm:$0xff]
      %v2558 = vld [vmem:[#allocation2 + $0x51] sm:$0xff]
      %v2559 = vld [vmem:[#allocation2 + $0x61] sm:$0xff]
      %v2560 = vld [vmem:[#allocation2 + $0x69] sm:$0xff]
      %v2561 = vld [vmem:[#allocation2 + $0x79] sm:$0xff]
      %v2562 = vld [vmem:[#allocation2 + $0x81] sm:$0xff]
      %v2563 = vld [vmem:[#allocation2 + $0x91] sm:$0xff]
      %v2564 = vld [vmem:[#allocation2 + $0x99] sm:$0xff]
      %v2565 = vld [vmem:[#allocation2 + $0xa9] sm:$0xff]
      %v2566 = vld [vmem:[#allocation2 + $0xb1] sm:$0xff]
      %v2567 = vld [vmem:[#allocation2 + $0xc1] sm:$0xff]
      %v2568 = vld [vmem:[#allocation2 + $0xc9] sm:$0xff]
      %v2569 = vld [vmem:[#allocation2 + $0xd9] sm:$0xff]
      %v2570 = vld [vmem:[#allocation2 + $0xe1] sm:$0xff]
      %v2571 = vld [vmem:[#allocation2 + $0xf1] sm:$0xff]
      %v2572 = vld [vmem:[#allocation2 + $0xf9] sm:$0xff]
      %v2573 = vld [vmem:[#allocation2 + $0x109] sm:$0xff]
      %v2574 = vld [vmem:[#allocation2 + $0x111] sm:$0xff]
      %v2575 = vld [vmem:[#allocation2 + $0x121] sm:$0xff]
      %v2576 = vld [vmem:[#allocation2 + $0x129] sm:$0xff]
      %v2577 = vld [vmem:[#allocation2 + $0x139] sm:$0xff]
      %v2578 = vld [vmem:[#allocation2 + $0x141] sm:$0xff]
      %v2579 = vld [vmem:[#allocation2 + $0x151] sm:$0xff]
      %v2580 = vld [vmem:[#allocation2 + $0x159] sm:$0xff]
      %v2581 = vld [vmem:[#allocation2 + $0x169] sm:$0xff]
      %v2582 = vld [vmem:[#allocation2 + $0x171] sm:$0xff]
      %v2583 = vld [vmem:[#allocation2 + $0x2] sm:$0xff]
      %v2584 = vld [vmem:[#allocation2 + $0xa] sm:$0xff]
      %v2585 = vld [vmem:[#allocation2 + $0x1a] sm:$0xff]
      %v2586 = vld [vmem:[#allocation2 + $0x22] sm:$0xff]
      %v2587 = vld [vmem:[#allocation2 + $0x32] sm:$0xff]
      %v2588 = vld [vmem:[#allocation2 + $0x3a] sm:$0xff]
      %v2589 = vld [vmem:[#allocation2 + $0x4a] sm:$0xff]
      %v2590 = vld [vmem:[#allocation2 + $0x52] sm:$0xff]
      %v2591 = vld [vmem:[#allocation2 + $0x62] sm:$0xff]
      %v2592 = vld [vmem:[#allocation2 + $0x6a] sm:$0xff]
      %v2593 = vld [vmem:[#allocation2 + $0x7a] sm:$0xff]
      %v2594 = vld [vmem:[#allocation2 + $0x82] sm:$0xff]
      %v2595 = vld [vmem:[#allocation2 + $0x92] sm:$0xff]
      %v2596 = vld [vmem:[#allocation2 + $0x9a] sm:$0xff]
      %v2597 = vld [vmem:[#allocation2 + $0xaa] sm:$0xff]
      %v2598 = vld [vmem:[#allocation2 + $0xb2] sm:$0xff]
      %v2599 = vld [vmem:[#allocation2 + $0xc2] sm:$0xff]
      %v2600 = vld [vmem:[#allocation2 + $0xca] sm:$0xff]
      %v2601 = vld [vmem:[#allocation2 + $0xda] sm:$0xff]
      %v2602 = vld [vmem:[#allocation2 + $0xe2] sm:$0xff]
      %v2603 = vld [vmem:[#allocation2 + $0xf2] sm:$0xff]
      %v2604 = vld [vmem:[#allocation2 + $0xfa] sm:$0xff]
      %v2605 = vld [vmem:[#allocation2 + $0x10a] sm:$0xff]
      %v2606 = vld [vmem:[#allocation2 + $0x112] sm:$0xff]
      %v2607 = vld [vmem:[#allocation2 + $0x122] sm:$0xff]
      %v2608 = vld [vmem:[#allocation2 + $0x12a] sm:$0xff]
      %v2609 = vld [vmem:[#allocation2 + $0x13a] sm:$0xff]
      %v2610 = vld [vmem:[#allocation2 + $0x142] sm:$0xff]
      %v2611 = vld [vmem:[#allocation2 + $0x152] sm:$0xff]
      %v2612 = vld [vmem:[#allocation2 + $0x15a] sm:$0xff]
      %v2613 = vld [vmem:[#allocation2 + $0x16a] sm:$0xff]
      %v2614 = vld [vmem:[#allocation2 + $0x172] sm:$0xff]
      %v2615 = vld [vmem:[%s289] sm:$0xff]
      %v2616 = vld [vmem:[%s289 + $0x8] sm:$0xff]
      %v2617 = vld [vmem:[%s289 + $0x18] sm:$0xff]
      %v2618 = vld [vmem:[%s289 + $0x20] sm:$0xff]
      %v2619 = vld [vmem:[%s289 + $0x30] sm:$0xff]
      %v2620 = vld [vmem:[%s289 + $0x38] sm:$0xff]
      %v2621 = vld [vmem:[%s289 + $0x48] sm:$0xff]
      %v2622 = vld [vmem:[%s289 + $0x50] sm:$0xff]
      %v2623 = vld [vmem:[%s289 + $0x60] sm:$0xff]
      %v2624 = vld [vmem:[%s289 + $0x68] sm:$0xff]
      %v2625 = vld [vmem:[%s289 + $0x78] sm:$0xff]
      %v2626 = vld [vmem:[%s289 + $0x80] sm:$0xff]
      %v2627 = vld [vmem:[%s289 + $0x90] sm:$0xff]
      %v2628 = vld [vmem:[%s289 + $0x98] sm:$0xff]
      %v2629 = vld [vmem:[%s289 + $0xa8] sm:$0xff]
      %v2630 = vld [vmem:[%s289 + $0xb0] sm:$0xff]
      %v2631 = vld [vmem:[%s289 + $0xc0] sm:$0xff]
      %v2632 = vld [vmem:[%s289 + $0xc8] sm:$0xff]
      %v2633 = vld [vmem:[%s289 + $0xd8] sm:$0xff]
      %v2634 = vld [vmem:[%s289 + $0xe0] sm:$0xff]
      %v2635 = vld [vmem:[%s289 + $0xf0] sm:$0xff]
      %v2636 = vld [vmem:[%s289 + $0xf8] sm:$0xff]
      %v2637 = vld [vmem:[%s289 + $0x108] sm:$0xff]
      %v2638 = vld [vmem:[%s289 + $0x110] sm:$0xff]
      %v2639 = vld [vmem:[%s289 + $0x120] sm:$0xff]
      %v2640 = vld [vmem:[%s289 + $0x128] sm:$0xff]
      %v2641 = vld [vmem:[%s289 + $0x138] sm:$0xff]
      %v2642 = vld [vmem:[%s289 + $0x140] sm:$0xff]
      %v2643 = vld [vmem:[%s289 + $0x150] sm:$0xff]
      %v2644 = vld [vmem:[%s289 + $0x158] sm:$0xff]
      %v2645 = vld [vmem:[%s289 + $0x168] sm:$0xff]
      %v2646 = vld [vmem:[%s289 + $0x170] sm:$0xff]
      %v2647 = vld [vmem:[%s289 + $0x1] sm:$0xff]
      %v2648 = vld [vmem:[%s289 + $0x9] sm:$0xff]
      %v2649 = vld [vmem:[%s289 + $0x19] sm:$0xff]
      %v2650 = vld [vmem:[%s289 + $0x21] sm:$0xff]
      %v2651 = vld [vmem:[%s289 + $0x31] sm:$0xff]
      %v2652 = vld [vmem:[%s289 + $0x39] sm:$0xff]
      %v2653 = vld [vmem:[%s289 + $0x49] sm:$0xff]
      %v2654 = vld [vmem:[%s289 + $0x51] sm:$0xff]
      %v2655 = vld [vmem:[%s289 + $0x61] sm:$0xff]
      %v2656 = vld [vmem:[%s289 + $0x69] sm:$0xff]
      %v2657 = vld [vmem:[%s289 + $0x79] sm:$0xff]
      %v2658 = vld [vmem:[%s289 + $0x81] sm:$0xff]
      %v2659 = vld [vmem:[%s289 + $0x91] sm:$0xff]
      %v2660 = vld [vmem:[%s289 + $0x99] sm:$0xff]
      %v2661 = vld [vmem:[%s289 + $0xa9] sm:$0xff]
      %v2662 = vld [vmem:[%s289 + $0xb1] sm:$0xff]
      %v2663 = vld [vmem:[%s289 + $0xc1] sm:$0xff]
      %v2664 = vld [vmem:[%s289 + $0xc9] sm:$0xff]
      %v2665 = vld [vmem:[%s289 + $0xd9] sm:$0xff]
      %v2666 = vld [vmem:[%s289 + $0xe1] sm:$0xff]
      %v2667 = vld [vmem:[%s289 + $0xf1] sm:$0xff]
      %v2668 = vld [vmem:[%s289 + $0xf9] sm:$0xff]
      %v2669 = vld [vmem:[%s289 + $0x109] sm:$0xff]
      %v2670 = vld [vmem:[%s289 + $0x111] sm:$0xff]
      %v2671 = vld [vmem:[%s289 + $0x121] sm:$0xff]
      %v2672 = vld [vmem:[%s289 + $0x129] sm:$0xff]
      %v2673 = vld [vmem:[%s289 + $0x139] sm:$0xff]
      %v2674 = vld [vmem:[%s289 + $0x141] sm:$0xff]
      %v2675 = vld [vmem:[%s289 + $0x151] sm:$0xff]
      %v2676 = vld [vmem:[%s289 + $0x159] sm:$0xff]
      %v2677 = vld [vmem:[%s289 + $0x169] sm:$0xff]
      %v2678 = vld [vmem:[%s289 + $0x171] sm:$0xff]
      %v2679 = vld [vmem:[%s289 + $0x2] sm:$0xff]
      %v2680 = vld [vmem:[%s289 + $0xa] sm:$0xff]
      %v2681 = vld [vmem:[%s289 + $0x1a] sm:$0xff]
      %v2682 = vld [vmem:[%s289 + $0x22] sm:$0xff]
      %v2683 = vld [vmem:[%s289 + $0x32] sm:$0xff]
      %v2684 = vld [vmem:[%s289 + $0x3a] sm:$0xff]
      %v2685 = vld [vmem:[%s289 + $0x4a] sm:$0xff]
      %v2686 = vld [vmem:[%s289 + $0x52] sm:$0xff]
      %v2687 = vld [vmem:[%s289 + $0x62] sm:$0xff]
      %v2688 = vld [vmem:[%s289 + $0x6a] sm:$0xff]
      %v2689 = vld [vmem:[%s289 + $0x7a] sm:$0xff]
      %v2690 = vld [vmem:[%s289 + $0x82] sm:$0xff]
      %v2691 = vld [vmem:[%s289 + $0x92] sm:$0xff]
      %v2692 = vld [vmem:[%s289 + $0x9a] sm:$0xff]
      %v2693 = vld [vmem:[%s289 + $0xaa] sm:$0xff]
      %v2694 = vld [vmem:[%s289 + $0xb2] sm:$0xff]
      %v2695 = vld [vmem:[%s289 + $0xc2] sm:$0xff]
      %v2696 = vld [vmem:[%s289 + $0xca] sm:$0xff]
      %v2697 = vld [vmem:[%s289 + $0xda] sm:$0xff]
      %v2698 = vld [vmem:[%s289 + $0xe2] sm:$0xff]
      %v2699 = vld [vmem:[%s289 + $0xf2] sm:$0xff]
      %v2700 = vld [vmem:[%s289 + $0xfa] sm:$0xff]
      %v2701 = vld [vmem:[%s289 + $0x10a] sm:$0xff]
      %v2702 = vld [vmem:[%s289 + $0x112] sm:$0xff]
      %v2703 = vld [vmem:[%s289 + $0x122] sm:$0xff]
      %v2704 = vld [vmem:[%s289 + $0x12a] sm:$0xff]
      %v2705 = vld [vmem:[%s289 + $0x13a] sm:$0xff]
      %v2706 = vld [vmem:[%s289 + $0x142] sm:$0xff]
      %v2707 = vld [vmem:[%s289 + $0x152] sm:$0xff]
      %v2708 = vld [vmem:[%s289 + $0x15a] sm:$0xff]
      %v2709 = vld [vmem:[%s289 + $0x16a] sm:$0xff]
      %v2710 = vld [vmem:[%s289 + $0x172] sm:$0xff]
      %v2711 = vld [vmem:[%s515] sm:$0xff]
      %v2712 = vld [vmem:[%s515 + $0x8] sm:$0xff]
      %v2713 = vld [vmem:[%s515 + $0x18] sm:$0xff]
      %v2714 = vld [vmem:[%s515 + $0x20] sm:$0xff]
      %v2715 = vld [vmem:[%s515 + $0x30] sm:$0xff]
      %v2716 = vld [vmem:[%s515 + $0x38] sm:$0xff]
      %v2717 = vld [vmem:[%s515 + $0x48] sm:$0xff]
      %v2718 = vld [vmem:[%s515 + $0x50] sm:$0xff]
      %v2719 = vld [vmem:[%s515 + $0x60] sm:$0xff]
      %v2720 = vld [vmem:[%s515 + $0x68] sm:$0xff]
      %v2721 = vld [vmem:[%s515 + $0x78] sm:$0xff]
      %v2722 = vld [vmem:[%s515 + $0x80] sm:$0xff]
      %v2723 = vld [vmem:[%s515 + $0x90] sm:$0xff]
      %v2724 = vld [vmem:[%s515 + $0x98] sm:$0xff]
      %v2725 = vld [vmem:[%s515 + $0xa8] sm:$0xff]
      %v2726 = vld [vmem:[%s515 + $0xb0] sm:$0xff]
      %v2727 = vld [vmem:[%s515 + $0xc0] sm:$0xff]
      %v2728 = vld [vmem:[%s515 + $0xc8] sm:$0xff]
      %v2729 = vld [vmem:[%s515 + $0xd8] sm:$0xff]
      %v2730 = vld [vmem:[%s515 + $0xe0] sm:$0xff]
      %v2731 = vld [vmem:[%s515 + $0xf0] sm:$0xff]
      %v2732 = vld [vmem:[%s515 + $0xf8] sm:$0xff]
      %v2733 = vld [vmem:[%s515 + $0x108] sm:$0xff]
      %v2734 = vld [vmem:[%s515 + $0x110] sm:$0xff]
      %v2735 = vld [vmem:[%s515 + $0x120] sm:$0xff]
      %v2736 = vld [vmem:[%s515 + $0x128] sm:$0xff]
      %v2737 = vld [vmem:[%s515 + $0x138] sm:$0xff]
      %v2738 = vld [vmem:[%s515 + $0x140] sm:$0xff]
      %v2739 = vld [vmem:[%s515 + $0x150] sm:$0xff]
      %v2740 = vld [vmem:[%s515 + $0x158] sm:$0xff]
      %v2741 = vld [vmem:[%s515 + $0x168] sm:$0xff]
      %v2742 = vld [vmem:[%s515 + $0x170] sm:$0xff]
      %v2743 = vld [vmem:[%s515 + $0x1] sm:$0xff]
      %v2744 = vld [vmem:[%s515 + $0x9] sm:$0xff]
      %v2745 = vld [vmem:[%s515 + $0x19] sm:$0xff]
      %v2746 = vld [vmem:[%s515 + $0x21] sm:$0xff]
      %v2747 = vld [vmem:[%s515 + $0x31] sm:$0xff]
      %v2748 = vld [vmem:[%s515 + $0x39] sm:$0xff]
      %v2749 = vld [vmem:[%s515 + $0x49] sm:$0xff]
      %v2750 = vld [vmem:[%s515 + $0x51] sm:$0xff]
      %v2751 = vld [vmem:[%s515 + $0x61] sm:$0xff]
      %v2752 = vld [vmem:[%s515 + $0x69] sm:$0xff]
      %v2753 = vld [vmem:[%s515 + $0x79] sm:$0xff]
      %v2754 = vld [vmem:[%s515 + $0x81] sm:$0xff]
      %v2755 = vld [vmem:[%s515 + $0x91] sm:$0xff]
      %v2756 = vld [vmem:[%s515 + $0x99] sm:$0xff]
      %v2757 = vld [vmem:[%s515 + $0xa9] sm:$0xff]
      %v2758 = vld [vmem:[%s515 + $0xb1] sm:$0xff]
      %v2759 = vld [vmem:[%s515 + $0xc1] sm:$0xff]
      %v2760 = vld [vmem:[%s515 + $0xc9] sm:$0xff]
      %v2761 = vld [vmem:[%s515 + $0xd9] sm:$0xff]
      %v2762 = vld [vmem:[%s515 + $0xe1] sm:$0xff]
      %v2763 = vld [vmem:[%s515 + $0xf1] sm:$0xff]
      %v2764 = vld [vmem:[%s515 + $0xf9] sm:$0xff]
      %v2765 = vld [vmem:[%s515 + $0x109] sm:$0xff]
      %v2766 = vld [vmem:[%s515 + $0x111] sm:$0xff]
      %v2767 = vld [vmem:[%s515 + $0x121] sm:$0xff]
      %v2768 = vld [vmem:[%s515 + $0x129] sm:$0xff]
      %v2769 = vld [vmem:[%s515 + $0x139] sm:$0xff]
      %v2770 = vld [vmem:[%s515 + $0x141] sm:$0xff]
      %v2771 = vld [vmem:[%s515 + $0x151] sm:$0xff]
      %v2772 = vld [vmem:[%s515 + $0x159] sm:$0xff]
      %v2773 = vld [vmem:[%s515 + $0x169] sm:$0xff]
      %v2774 = vld [vmem:[%s515 + $0x171] sm:$0xff]
      %v2775 = vld [vmem:[%s515 + $0x2] sm:$0xff]
      %v2776 = vld [vmem:[%s515 + $0xa] sm:$0xff]
      %v2777 = vld [vmem:[%s515 + $0x1a] sm:$0xff]
      %v2778 = vld [vmem:[%s515 + $0x22] sm:$0xff]
      %v2779 = vld [vmem:[%s515 + $0x32] sm:$0xff]
      %v2780 = vld [vmem:[%s515 + $0x3a] sm:$0xff]
      %v2781 = vld [vmem:[%s515 + $0x4a] sm:$0xff]
      %v2782 = vld [vmem:[%s515 + $0x52] sm:$0xff]
      %v2783 = vld [vmem:[%s515 + $0x62] sm:$0xff]
      %v2784 = vld [vmem:[%s515 + $0x6a] sm:$0xff]
      %v2785 = vld [vmem:[%s515 + $0x7a] sm:$0xff]
      %v2786 = vld [vmem:[%s515 + $0x82] sm:$0xff]
      %v2787 = vld [vmem:[%s515 + $0x92] sm:$0xff]
      %v2788 = vld [vmem:[%s515 + $0x9a] sm:$0xff]
      %v2789 = vld [vmem:[%s515 + $0xaa] sm:$0xff]
      %v2790 = vld [vmem:[%s515 + $0xb2] sm:$0xff]
      %v2791 = vld [vmem:[%s515 + $0xc2] sm:$0xff]
      %v2792 = vld [vmem:[%s515 + $0xca] sm:$0xff]
      %v2793 = vld [vmem:[%s515 + $0xda] sm:$0xff]
      %v2794 = vld [vmem:[%s515 + $0xe2] sm:$0xff]
      %v2795 = vld [vmem:[%s515 + $0xf2] sm:$0xff]
      %v2796 = vld [vmem:[%s515 + $0xfa] sm:$0xff]
      %v2797 = vld [vmem:[%s515 + $0x10a] sm:$0xff]
      %v2798 = vld [vmem:[%s515 + $0x112] sm:$0xff]
      %v2799 = vld [vmem:[%s515 + $0x122] sm:$0xff]
      %v2800 = vld [vmem:[%s515 + $0x12a] sm:$0xff]
      %v2801 = vld [vmem:[%s515 + $0x13a] sm:$0xff]
      %v2802 = vld [vmem:[%s515 + $0x142] sm:$0xff]
      %v2803 = vld [vmem:[%s515 + $0x152] sm:$0xff]
      %v2804 = vld [vmem:[%s515 + $0x15a] sm:$0xff]
      %v2805 = vld [vmem:[%s515 + $0x16a] sm:$0xff]
      %v2806 = vld [vmem:[%s515 + $0x172] sm:$0xff]
      %2839 = vrot.lane.b32.xlu0 %v2551, 64
      %v2840 = vpop.permute.xlu0 %2839
      %2841 = vrot.lane.b32.xlu0 %v2552, 64
      %v2842 = vpop.permute.xlu0 %2841
      %2843 = vrot.lane.b32.xlu0 %v2553, 64
      %v2844 = vpop.permute.xlu0 %2843
      %2845 = vrot.lane.b32.xlu0 %v2554, 64
      %v2846 = vpop.permute.xlu0 %2845
      %2847 = vrot.lane.b32.xlu0 %v2555, 64
      %v2848 = vpop.permute.xlu0 %2847
      %2849 = vrot.lane.b32.xlu0 %v2556, 64
      %v2850 = vpop.permute.xlu0 %2849
      %2851 = vrot.lane.b32.xlu0 %v2557, 64
      %v2852 = vpop.permute.xlu0 %2851
      %2853 = vrot.lane.b32.xlu0 %v2558, 64
      %v2854 = vpop.permute.xlu0 %2853
      %2855 = vrot.lane.b32.xlu0 %v2559, 64
      %v2856 = vpop.permute.xlu0 %2855
      %2857 = vrot.lane.b32.xlu0 %v2560, 64
      %v2858 = vpop.permute.xlu0 %2857
      %2859 = vrot.lane.b32.xlu0 %v2561, 64
      %v2860 = vpop.permute.xlu0 %2859
      %2861 = vrot.lane.b32.xlu0 %v2562, 64
      %v2862 = vpop.permute.xlu0 %2861
      %2863 = vrot.lane.b32.xlu0 %v2563, 64
      %v2864 = vpop.permute.xlu0 %2863
      %2865 = vrot.lane.b32.xlu0 %v2564, 64
      %v2866 = vpop.permute.xlu0 %2865
      %2867 = vrot.lane.b32.xlu0 %v2565, 64
      %v2868 = vpop.permute.xlu0 %2867
      %2869 = vrot.lane.b32.xlu0 %v2566, 64
      %v2870 = vpop.permute.xlu0 %2869
      %2871 = vrot.lane.b32.xlu0 %v2567, 64
      %v2872 = vpop.permute.xlu0 %2871
      %2873 = vrot.lane.b32.xlu0 %v2568, 64
      %v2874 = vpop.permute.xlu0 %2873
      %2875 = vrot.lane.b32.xlu0 %v2569, 64
      %v2876 = vpop.permute.xlu0 %2875
      %2877 = vrot.lane.b32.xlu0 %v2570, 64
      %v2878 = vpop.permute.xlu0 %2877
      %2879 = vrot.lane.b32.xlu0 %v2571, 64
      %v2880 = vpop.permute.xlu0 %2879
      %2881 = vrot.lane.b32.xlu0 %v2572, 64
      %v2882 = vpop.permute.xlu0 %2881
      %2883 = vrot.lane.b32.xlu0 %v2573, 64
      %v2884 = vpop.permute.xlu0 %2883
      %2885 = vrot.lane.b32.xlu0 %v2574, 64
      %v2886 = vpop.permute.xlu0 %2885
      %2887 = vrot.lane.b32.xlu0 %v2575, 64
      %v2888 = vpop.permute.xlu0 %2887
      %2889 = vrot.lane.b32.xlu0 %v2576, 64
      %v2890 = vpop.permute.xlu0 %2889
      %2891 = vrot.lane.b32.xlu0 %v2577, 64
      %v2892 = vpop.permute.xlu0 %2891
      %2893 = vrot.lane.b32.xlu0 %v2578, 64
      %v2894 = vpop.permute.xlu0 %2893
      %2895 = vrot.lane.b32.xlu0 %v2579, 64
      %v2896 = vpop.permute.xlu0 %2895
      %2897 = vrot.lane.b32.xlu0 %v2580, 64
      %v2898 = vpop.permute.xlu0 %2897
      %2899 = vrot.lane.b32.xlu0 %v2581, 64
      %v2900 = vpop.permute.xlu0 %2899
      %2901 = vrot.lane.b32.xlu0 %v2582, 64
      %v2902 = vpop.permute.xlu0 %2901
      %2967 = vrot.lane.b32.xlu0 %v2615, 64
      %v2968 = vpop.permute.xlu0 %2967
      %2969 = vrot.lane.b32.xlu0 %v2616, 64
      %v2970 = vpop.permute.xlu0 %2969
      %2971 = vrot.lane.b32.xlu0 %v2617, 64
      %v2972 = vpop.permute.xlu0 %2971
      %2973 = vrot.lane.b32.xlu0 %v2618, 64
      %v2974 = vpop.permute.xlu0 %2973
      %2975 = vrot.lane.b32.xlu0 %v2619, 64
      %v2976 = vpop.permute.xlu0 %2975
      %2977 = vrot.lane.b32.xlu0 %v2620, 64
      %v2978 = vpop.permute.xlu0 %2977
      %2979 = vrot.lane.b32.xlu0 %v2621, 64
      %v2980 = vpop.permute.xlu0 %2979
      %2981 = vrot.lane.b32.xlu0 %v2622, 64
      %v2982 = vpop.permute.xlu0 %2981
      %2983 = vrot.lane.b32.xlu0 %v2623, 64
      %v2984 = vpop.permute.xlu0 %2983
      %2985 = vrot.lane.b32.xlu0 %v2624, 64
      %v2986 = vpop.permute.xlu0 %2985
      %2987 = vrot.lane.b32.xlu0 %v2625, 64
      %v2988 = vpop.permute.xlu0 %2987
      %2989 = vrot.lane.b32.xlu0 %v2626, 64
      %v2990 = vpop.permute.xlu0 %2989
      %2991 = vrot.lane.b32.xlu0 %v2627, 64
      %v2992 = vpop.permute.xlu0 %2991
      %2993 = vrot.lane.b32.xlu0 %v2628, 64
      %v2994 = vpop.permute.xlu0 %2993
      %2995 = vrot.lane.b32.xlu0 %v2629, 64
      %v2996 = vpop.permute.xlu0 %2995
      %2997 = vrot.lane.b32.xlu0 %v2630, 64
      %v2998 = vpop.permute.xlu0 %2997
      %2999 = vrot.lane.b32.xlu0 %v2631, 64
      %v3000 = vpop.permute.xlu0 %2999
      %3001 = vrot.lane.b32.xlu0 %v2632, 64
      %v3002 = vpop.permute.xlu0 %3001
      %3003 = vrot.lane.b32.xlu0 %v2633, 64
      %v3004 = vpop.permute.xlu0 %3003
      %3005 = vrot.lane.b32.xlu0 %v2634, 64
      %v3006 = vpop.permute.xlu0 %3005
      %3007 = vrot.lane.b32.xlu0 %v2635, 64
      %v3008 = vpop.permute.xlu0 %3007
      %3009 = vrot.lane.b32.xlu0 %v2636, 64
      %v3010 = vpop.permute.xlu0 %3009
      %3011 = vrot.lane.b32.xlu0 %v2637, 64
      %v3012 = vpop.permute.xlu0 %3011
      %3013 = vrot.lane.b32.xlu0 %v2638, 64
      %v3014 = vpop.permute.xlu0 %3013
      %3015 = vrot.lane.b32.xlu0 %v2639, 64
      %v3016 = vpop.permute.xlu0 %3015
      %3017 = vrot.lane.b32.xlu0 %v2640, 64
      %v3018 = vpop.permute.xlu0 %3017
      %3019 = vrot.lane.b32.xlu0 %v2641, 64
      %v3020 = vpop.permute.xlu0 %3019
      %3021 = vrot.lane.b32.xlu0 %v2642, 64
      %v3022 = vpop.permute.xlu0 %3021
      %3023 = vrot.lane.b32.xlu0 %v2643, 64
      %v3024 = vpop.permute.xlu0 %3023
      %3025 = vrot.lane.b32.xlu0 %v2644, 64
      %v3026 = vpop.permute.xlu0 %3025
      %3027 = vrot.lane.b32.xlu0 %v2645, 64
      %v3028 = vpop.permute.xlu0 %3027
      %3029 = vrot.lane.b32.xlu0 %v2646, 64
      %v3030 = vpop.permute.xlu0 %3029
      %3095 = vrot.lane.b32.xlu0 %v2679, 64
      %v3096 = vpop.permute.xlu0 %3095
      %3097 = vrot.lane.b32.xlu0 %v2680, 64
      %v3098 = vpop.permute.xlu0 %3097
      %3099 = vrot.lane.b32.xlu0 %v2681, 64
      %v3100 = vpop.permute.xlu0 %3099
      %3101 = vrot.lane.b32.xlu0 %v2682, 64
      %v3102 = vpop.permute.xlu0 %3101
      %3103 = vrot.lane.b32.xlu0 %v2683, 64
      %v3104 = vpop.permute.xlu0 %3103
      %3105 = vrot.lane.b32.xlu0 %v2684, 64
      %v3106 = vpop.permute.xlu0 %3105
      %3107 = vrot.lane.b32.xlu0 %v2685, 64
      %v3108 = vpop.permute.xlu0 %3107
      %3109 = vrot.lane.b32.xlu0 %v2686, 64
      %v3110 = vpop.permute.xlu0 %3109
      %3111 = vrot.lane.b32.xlu0 %v2687, 64
      %v3112 = vpop.permute.xlu0 %3111
      %3113 = vrot.lane.b32.xlu0 %v2688, 64
      %v3114 = vpop.permute.xlu0 %3113
      %3115 = vrot.lane.b32.xlu0 %v2689, 64
      %v3116 = vpop.permute.xlu0 %3115
      %3117 = vrot.lane.b32.xlu0 %v2690, 64
      %v3118 = vpop.permute.xlu0 %3117
      %3119 = vrot.lane.b32.xlu0 %v2691, 64
      %v3120 = vpop.permute.xlu0 %3119
      %3121 = vrot.lane.b32.xlu0 %v2692, 64
      %v3122 = vpop.permute.xlu0 %3121
      %3123 = vrot.lane.b32.xlu0 %v2693, 64
      %v3124 = vpop.permute.xlu0 %3123
      %3125 = vrot.lane.b32.xlu0 %v2694, 64
      %v3126 = vpop.permute.xlu0 %3125
      %3127 = vrot.lane.b32.xlu0 %v2695, 64
      %v3128 = vpop.permute.xlu0 %3127
      %3129 = vrot.lane.b32.xlu0 %v2696, 64
      %v3130 = vpop.permute.xlu0 %3129
      %3131 = vrot.lane.b32.xlu0 %v2697, 64
      %v3132 = vpop.permute.xlu0 %3131
      %3133 = vrot.lane.b32.xlu0 %v2698, 64
      %v3134 = vpop.permute.xlu0 %3133
      %3135 = vrot.lane.b32.xlu0 %v2699, 64
      %v3136 = vpop.permute.xlu0 %3135
      %3137 = vrot.lane.b32.xlu0 %v2700, 64
      %v3138 = vpop.permute.xlu0 %3137
      %3139 = vrot.lane.b32.xlu0 %v2701, 64
      %v3140 = vpop.permute.xlu0 %3139
      %3141 = vrot.lane.b32.xlu0 %v2702, 64
      %v3142 = vpop.permute.xlu0 %3141
      %3143 = vrot.lane.b32.xlu0 %v2703, 64
      %v3144 = vpop.permute.xlu0 %3143
      %3145 = vrot.lane.b32.xlu0 %v2704, 64
      %v3146 = vpop.permute.xlu0 %3145
      %3147 = vrot.lane.b32.xlu0 %v2705, 64
      %v3148 = vpop.permute.xlu0 %3147
      %3149 = vrot.lane.b32.xlu0 %v2706, 64
      %v3150 = vpop.permute.xlu0 %3149
      %3151 = vrot.lane.b32.xlu0 %v2707, 64
      %v3152 = vpop.permute.xlu0 %3151
      %3153 = vrot.lane.b32.xlu0 %v2708, 64
      %v3154 = vpop.permute.xlu0 %3153
      %3155 = vrot.lane.b32.xlu0 %v2709, 64
      %v3156 = vpop.permute.xlu0 %3155
      %3157 = vrot.lane.b32.xlu0 %v2710, 64
      %v3158 = vpop.permute.xlu0 %3157
      %3223 = vrot.lane.b32.xlu0 %v2743, 64
      %v3224 = vpop.permute.xlu0 %3223
      %3225 = vrot.lane.b32.xlu0 %v2744, 64
      %v3226 = vpop.permute.xlu0 %3225
      %3227 = vrot.lane.b32.xlu0 %v2745, 64
      %v3228 = vpop.permute.xlu0 %3227
      %3229 = vrot.lane.b32.xlu0 %v2746, 64
      %v3230 = vpop.permute.xlu0 %3229
      %3231 = vrot.lane.b32.xlu0 %v2747, 64
      %v3232 = vpop.permute.xlu0 %3231
      %3233 = vrot.lane.b32.xlu0 %v2748, 64
      %v3234 = vpop.permute.xlu0 %3233
      %3235 = vrot.lane.b32.xlu0 %v2749, 64
      %v3236 = vpop.permute.xlu0 %3235
      %3237 = vrot.lane.b32.xlu0 %v2750, 64
      %v3238 = vpop.permute.xlu0 %3237
      %3239 = vrot.lane.b32.xlu0 %v2751, 64
      %v3240 = vpop.permute.xlu0 %3239
      %3241 = vrot.lane.b32.xlu0 %v2752, 64
      %v3242 = vpop.permute.xlu0 %3241
      %3243 = vrot.lane.b32.xlu0 %v2753, 64
      %v3244 = vpop.permute.xlu0 %3243
      %3245 = vrot.lane.b32.xlu0 %v2754, 64
      %v3246 = vpop.permute.xlu0 %3245
      %3247 = vrot.lane.b32.xlu0 %v2755, 64
      %v3248 = vpop.permute.xlu0 %3247
      %3249 = vrot.lane.b32.xlu0 %v2756, 64
      %v3250 = vpop.permute.xlu0 %3249
      %3251 = vrot.lane.b32.xlu0 %v2757, 64
      %v3252 = vpop.permute.xlu0 %3251
      %3253 = vrot.lane.b32.xlu0 %v2758, 64
      %v3254 = vpop.permute.xlu0 %3253
      %3255 = vrot.lane.b32.xlu0 %v2759, 64
      %v3256 = vpop.permute.xlu0 %3255
      %3257 = vrot.lane.b32.xlu0 %v2760, 64
      %v3258 = vpop.permute.xlu0 %3257
      %3259 = vrot.lane.b32.xlu0 %v2761, 64
      %v3260 = vpop.permute.xlu0 %3259
      %3261 = vrot.lane.b32.xlu0 %v2762, 64
      %v3262 = vpop.permute.xlu0 %3261
      %3263 = vrot.lane.b32.xlu0 %v2763, 64
      %v3264 = vpop.permute.xlu0 %3263
      %3265 = vrot.lane.b32.xlu0 %v2764, 64
      %v3266 = vpop.permute.xlu0 %3265
      %3267 = vrot.lane.b32.xlu0 %v2765, 64
      %v3268 = vpop.permute.xlu0 %3267
      %3269 = vrot.lane.b32.xlu0 %v2766, 64
      %v3270 = vpop.permute.xlu0 %3269
      %3271 = vrot.lane.b32.xlu0 %v2767, 64
      %v3272 = vpop.permute.xlu0 %3271
      %3273 = vrot.lane.b32.xlu0 %v2768, 64
      %v3274 = vpop.permute.xlu0 %3273
      %3275 = vrot.lane.b32.xlu0 %v2769, 64
      %v3276 = vpop.permute.xlu0 %3275
      %3277 = vrot.lane.b32.xlu0 %v2770, 64
      %v3278 = vpop.permute.xlu0 %3277
      %3279 = vrot.lane.b32.xlu0 %v2771, 64
      %v3280 = vpop.permute.xlu0 %3279
      %3281 = vrot.lane.b32.xlu0 %v2772, 64
      %v3282 = vpop.permute.xlu0 %3281
      %3283 = vrot.lane.b32.xlu0 %v2773, 64
      %v3284 = vpop.permute.xlu0 %3283
      %3285 = vrot.lane.b32.xlu0 %v2774, 64
      %v3286 = vpop.permute.xlu0 %3285
      %v3319 = vsel %vm201, %v2519, %v2840
      %v3320 = vsel %vm201, %v2520, %v2842
      %v3321 = vsel %vm201, %v2521, %v2844
      %v3322 = vsel %vm201, %v2522, %v2846
      %v3323 = vsel %vm201, %v2523, %v2848
      %v3324 = vsel %vm201, %v2524, %v2850
      %v3325 = vsel %vm201, %v2525, %v2852
      %v3326 = vsel %vm201, %v2526, %v2854
      %v3327 = vsel %vm201, %v2527, %v2856
      %v3328 = vsel %vm201, %v2528, %v2858
      %v3329 = vsel %vm201, %v2529, %v2860
      %v3330 = vsel %vm201, %v2530, %v2862
      %v3331 = vsel %vm201, %v2531, %v2864
      %v3332 = vsel %vm201, %v2532, %v2866
      %v3333 = vsel %vm201, %v2533, %v2868
      %v3334 = vsel %vm201, %v2534, %v2870
      %v3335 = vsel %vm201, %v2535, %v2872
      %v3336 = vsel %vm201, %v2536, %v2874
      %v3337 = vsel %vm201, %v2537, %v2876
      %v3338 = vsel %vm201, %v2538, %v2878
      %v3339 = vsel %vm201, %v2539, %v2880
      %v3340 = vsel %vm201, %v2540, %v2882
      %v3341 = vsel %vm201, %v2541, %v2884
      %v3342 = vsel %vm201, %v2542, %v2886
      %v3343 = vsel %vm201, %v2543, %v2888
      %v3344 = vsel %vm201, %v2544, %v2890
      %v3345 = vsel %vm201, %v2545, %v2892
      %v3346 = vsel %vm201, %v2546, %v2894
      %v3347 = vsel %vm201, %v2547, %v2896
      %v3348 = vsel %vm201, %v2548, %v2898
      %v3349 = vsel %vm201, %v2549, %v2900
      %v3350 = vsel %vm201, %v2550, %v2902
      %v3351 = vsel %vm201, %v2583, %v2968
      %v3352 = vsel %vm201, %v2584, %v2970
      %v3353 = vsel %vm201, %v2585, %v2972
      %v3354 = vsel %vm201, %v2586, %v2974
      %v3355 = vsel %vm201, %v2587, %v2976
      %v3356 = vsel %vm201, %v2588, %v2978
      %v3357 = vsel %vm201, %v2589, %v2980
      %v3358 = vsel %vm201, %v2590, %v2982
      %v3359 = vsel %vm201, %v2591, %v2984
      %v3360 = vsel %vm201, %v2592, %v2986
      %v3361 = vsel %vm201, %v2593, %v2988
      %v3362 = vsel %vm201, %v2594, %v2990
      %v3363 = vsel %vm201, %v2595, %v2992
      %v3364 = vsel %vm201, %v2596, %v2994
      %v3365 = vsel %vm201, %v2597, %v2996
      %v3366 = vsel %vm201, %v2598, %v2998
      %v3367 = vsel %vm201, %v2599, %v3000
      %v3368 = vsel %vm201, %v2600, %v3002
      %v3369 = vsel %vm201, %v2601, %v3004
      %v3370 = vsel %vm201, %v2602, %v3006
      %v3371 = vsel %vm201, %v2603, %v3008
      %v3372 = vsel %vm201, %v2604, %v3010
      %v3373 = vsel %vm201, %v2605, %v3012
      %v3374 = vsel %vm201, %v2606, %v3014
      %v3375 = vsel %vm201, %v2607, %v3016
      %v3376 = vsel %vm201, %v2608, %v3018
      %v3377 = vsel %vm201, %v2609, %v3020
      %v3378 = vsel %vm201, %v2610, %v3022
      %v3379 = vsel %vm201, %v2611, %v3024
      %v3380 = vsel %vm201, %v2612, %v3026
      %v3381 = vsel %vm201, %v2613, %v3028
      %v3382 = vsel %vm201, %v2614, %v3030
      %v3383 = vsel %vm201, %v2647, %v3096
      %v3384 = vsel %vm201, %v2648, %v3098
      %v3385 = vsel %vm201, %v2649, %v3100
      %v3386 = vsel %vm201, %v2650, %v3102
      %v3387 = vsel %vm201, %v2651, %v3104
      %v3388 = vsel %vm201, %v2652, %v3106
      %v3389 = vsel %vm201, %v2653, %v3108
      %v3390 = vsel %vm201, %v2654, %v3110
      %v3391 = vsel %vm201, %v2655, %v3112
      %v3392 = vsel %vm201, %v2656, %v3114
      %v3393 = vsel %vm201, %v2657, %v3116
      %v3394 = vsel %vm201, %v2658, %v3118
      %v3395 = vsel %vm201, %v2659, %v3120
      %v3396 = vsel %vm201, %v2660, %v3122
      %v3397 = vsel %vm201, %v2661, %v3124
      %v3398 = vsel %vm201, %v2662, %v3126
      %v3399 = vsel %vm201, %v2663, %v3128
      %v3400 = vsel %vm201, %v2664, %v3130
      %v3401 = vsel %vm201, %v2665, %v3132
      %v3402 = vsel %vm201, %v2666, %v3134
      %v3403 = vsel %vm201, %v2667, %v3136
      %v3404 = vsel %vm201, %v2668, %v3138
      %v3405 = vsel %vm201, %v2669, %v3140
      %v3406 = vsel %vm201, %v2670, %v3142
      %v3407 = vsel %vm201, %v2671, %v3144
      %v3408 = vsel %vm201, %v2672, %v3146
      %v3409 = vsel %vm201, %v2673, %v3148
      %v3410 = vsel %vm201, %v2674, %v3150
      %v3411 = vsel %vm201, %v2675, %v3152
      %v3412 = vsel %vm201, %v2676, %v3154
      %v3413 = vsel %vm201, %v2677, %v3156
      %v3414 = vsel %vm201, %v2678, %v3158
      %v3415 = vsel %vm201, %v2711, %v3224
      %v3416 = vsel %vm201, %v2712, %v3226
      %v3417 = vsel %vm201, %v2713, %v3228
      %v3418 = vsel %vm201, %v2714, %v3230
      %v3419 = vsel %vm201, %v2715, %v3232
      %v3420 = vsel %vm201, %v2716, %v3234
      %v3421 = vsel %vm201, %v2717, %v3236
      %v3422 = vsel %vm201, %v2718, %v3238
      %v3423 = vsel %vm201, %v2719, %v3240
      %v3424 = vsel %vm201, %v2720, %v3242
      %v3425 = vsel %vm201, %v2721, %v3244
      %v3426 = vsel %vm201, %v2722, %v3246
      %v3427 = vsel %vm201, %v2723, %v3248
      %v3428 = vsel %vm201, %v2724, %v3250
      %v3429 = vsel %vm201, %v2725, %v3252
      %v3430 = vsel %vm201, %v2726, %v3254
      %v3431 = vsel %vm201, %v2727, %v3256
      %v3432 = vsel %vm201, %v2728, %v3258
      %v3433 = vsel %vm201, %v2729, %v3260
      %v3434 = vsel %vm201, %v2730, %v3262
      %v3435 = vsel %vm201, %v2731, %v3264
      %v3436 = vsel %vm201, %v2732, %v3266
      %v3437 = vsel %vm201, %v2733, %v3268
      %v3438 = vsel %vm201, %v2734, %v3270
      %v3439 = vsel %vm201, %v2735, %v3272
      %v3440 = vsel %vm201, %v2736, %v3274
      %v3441 = vsel %vm201, %v2737, %v3276
      %v3442 = vsel %vm201, %v2738, %v3278
      %v3443 = vsel %vm201, %v2739, %v3280
      %v3444 = vsel %vm201, %v2740, %v3282
      %v3445 = vsel %vm201, %v2741, %v3284
      %v3446 = vsel %vm201, %v2742, %v3286
      %v3447 = vpack.c.bf16 %v3320, %v3319
      %v3448 = vpack.c.bf16 %v3352, %v3351
      %v3449 = vpack.c.bf16 %v3384, %v3383
      %v3450 = vpack.c.bf16 %v3416, %v3415
      %v3451 = vpack.c.bf16 %v2776, %v2775
      %v3452 = vpack.c.bf16 %v3322, %v3321
      %v3453 = vpack.c.bf16 %v3354, %v3353
      %v3454 = vpack.c.bf16 %v3386, %v3385
      %v3455 = vpack.c.bf16 %v3418, %v3417
      %v3456 = vpack.c.bf16 %v2778, %v2777
      %v3457 = vpack.c.bf16 %v3324, %v3323
      %v3458 = vpack.c.bf16 %v3356, %v3355
      %v3459 = vpack.c.bf16 %v3388, %v3387
      %v3460 = vpack.c.bf16 %v3420, %v3419
      %v3461 = vpack.c.bf16 %v2780, %v2779
      %v3462 = vpack.c.bf16 %v3326, %v3325
      %v3463 = vpack.c.bf16 %v3358, %v3357
      %v3464 = vpack.c.bf16 %v3390, %v3389
      %v3465 = vpack.c.bf16 %v3422, %v3421
      %v3466 = vpack.c.bf16 %v2782, %v2781
      %v3467 = vpack.c.bf16 %v3328, %v3327
      %v3468 = vpack.c.bf16 %v3360, %v3359
      %v3469 = vpack.c.bf16 %v3392, %v3391
      %v3470 = vpack.c.bf16 %v3424, %v3423
      %v3471 = vpack.c.bf16 %v2784, %v2783
      %v3472 = vpack.c.bf16 %v3330, %v3329
      %v3473 = vpack.c.bf16 %v3362, %v3361
      %v3474 = vpack.c.bf16 %v3394, %v3393
      %v3475 = vpack.c.bf16 %v3426, %v3425
      %v3476 = vpack.c.bf16 %v2786, %v2785
      %v3477 = vpack.c.bf16 %v3332, %v3331
      %v3478 = vpack.c.bf16 %v3364, %v3363
      %v3479 = vpack.c.bf16 %v3396, %v3395
      %v3480 = vpack.c.bf16 %v3428, %v3427
      %v3481 = vpack.c.bf16 %v2788, %v2787
      %v3482 = vpack.c.bf16 %v3334, %v3333
      %v3483 = vpack.c.bf16 %v3366, %v3365
      %v3484 = vpack.c.bf16 %v3398, %v3397
      %v3485 = vpack.c.bf16 %v3430, %v3429
      %v3486 = vpack.c.bf16 %v2790, %v2789
      %v3487 = vpack.c.bf16 %v3336, %v3335
      %v3488 = vpack.c.bf16 %v3368, %v3367
      %v3489 = vpack.c.bf16 %v3400, %v3399
      %v3490 = vpack.c.bf16 %v3432, %v3431
      %v3491 = vpack.c.bf16 %v2792, %v2791
      %v3492 = vpack.c.bf16 %v3338, %v3337
      %v3493 = vpack.c.bf16 %v3370, %v3369
      %v3494 = vpack.c.bf16 %v3402, %v3401
      %v3495 = vpack.c.bf16 %v3434, %v3433
      %v3496 = vpack.c.bf16 %v2794, %v2793
      %v3497 = vpack.c.bf16 %v3340, %v3339
      %v3498 = vpack.c.bf16 %v3372, %v3371
      %v3499 = vpack.c.bf16 %v3404, %v3403
      %v3500 = vpack.c.bf16 %v3436, %v3435
      %v3501 = vpack.c.bf16 %v2796, %v2795
      %v3502 = vpack.c.bf16 %v3342, %v3341
      %v3503 = vpack.c.bf16 %v3374, %v3373
      %v3504 = vpack.c.bf16 %v3406, %v3405
      %v3505 = vpack.c.bf16 %v3438, %v3437
      %v3506 = vpack.c.bf16 %v2798, %v2797
      %v3507 = vpack.c.bf16 %v3344, %v3343
      %v3508 = vpack.c.bf16 %v3376, %v3375
      %v3509 = vpack.c.bf16 %v3408, %v3407
      %v3510 = vpack.c.bf16 %v3440, %v3439
      %v3511 = vpack.c.bf16 %v2800, %v2799
      %v3512 = vpack.c.bf16 %v3346, %v3345
      %v3513 = vpack.c.bf16 %v3378, %v3377
      %v3514 = vpack.c.bf16 %v3410, %v3409
      %v3515 = vpack.c.bf16 %v3442, %v3441
      %v3516 = vpack.c.bf16 %v2802, %v2801
      %v3517 = vpack.c.bf16 %v3348, %v3347
      %v3518 = vpack.c.bf16 %v3380, %v3379
      %v3519 = vpack.c.bf16 %v3412, %v3411
      %v3520 = vpack.c.bf16 %v3444, %v3443
      %v3521 = vpack.c.bf16 %v2804, %v2803
      %v3522 = vpack.c.bf16 %v3350, %v3349
      %v3523 = vpack.c.bf16 %v3382, %v3381
      %v3524 = vpack.c.bf16 %v3414, %v3413
      %v3525 = vpack.c.bf16 %v3446, %v3445
      %v3526 = vpack.c.bf16 %v2806, %v2805
      %s3527 = scalar_lea.vmem %s1, 288
      %v3528 = vld [vmem:[%s3527] sm:$0xf]
      %v3529 = vld [vmem:[%s3527 + $0x4] sm:$0xf]
      %v3530 = vld [vmem:[%s3527 + $0x8] sm:$0xf]
      %v3531 = vld [vmem:[%s3527 + $0xc] sm:$0xf]
      %v3532 = vld [vmem:[%s3527 + $0x10] sm:$0xf]
      %v3533 = vld [vmem:[%s3527 + $0x14] sm:$0xf]
      %v3534 = vld [vmem:[%s3527 + $0x18] sm:$0xf]
      %v3535 = vld [vmem:[%s3527 + $0x1c] sm:$0xf]
      %v3536 = vld [vmem:[%s3527 + $0x20] sm:$0xf]
      %v3537 = vld [vmem:[%s3527 + $0x24] sm:$0xf]
      %v3538 = vld [vmem:[%s3527 + $0x28] sm:$0xf]
      %v3539 = vld [vmem:[%s3527 + $0x2c] sm:$0xf]
      %v3540 = vld [vmem:[%s3527 + $0x30] sm:$0xf]
      %v3541 = vld [vmem:[%s3527 + $0x34] sm:$0xf]
      %v3542 = vld [vmem:[%s3527 + $0x38] sm:$0xf]
      %v3543 = vld [vmem:[%s3527 + $0x3c] sm:$0xf]
      %v3544 = vld [vmem:[%s3527 + $0x40] sm:$0xf]
      %v3545 = vld [vmem:[%s3527 + $0x44] sm:$0xf]
      %v3546 = vld [vmem:[%s3527 + $0x48] sm:$0xf]
      %v3547 = vld [vmem:[%s3527 + $0x4c] sm:$0xf]
      %v3548 = vld [vmem:[%s3527 + $0x50] sm:$0xf]
      %v3549 = vld [vmem:[%s3527 + $0x54] sm:$0xf]
      %v3550 = vld [vmem:[%s3527 + $0x58] sm:$0xf]
      %v3551 = vld [vmem:[%s3527 + $0x5c] sm:$0xf]
      %v3552 = vld [vmem:[%s3527 + $0x60] sm:$0xf]
      %v3553 = vld [vmem:[%s3527 + $0x64] sm:$0xf]
      %v3554 = vld [vmem:[%s3527 + $0x68] sm:$0xf]
      %v3555 = vld [vmem:[%s3527 + $0x6c] sm:$0xf]
      %v3556 = vld [vmem:[%s3527 + $0x70] sm:$0xf]
      %v3557 = vld [vmem:[%s3527 + $0x74] sm:$0xf]
      %v3558 = vld [vmem:[%s3527 + $0x78] sm:$0xf]
      %v3559 = vld [vmem:[%s3527 + $0x7c] sm:$0xf]
      %v3560 = vld [vmem:[%s3527 + $0x80] sm:$0xf]
      %v3561 = vld [vmem:[%s3527 + $0x84] sm:$0xf]
      %v3562 = vld [vmem:[%s3527 + $0x88] sm:$0xf]
      %v3563 = vld [vmem:[%s3527 + $0x8c] sm:$0xf]
      %v3564 = vld [vmem:[%s3527 + $0x90] sm:$0xf]
      %v3565 = vld [vmem:[%s3527 + $0x94] sm:$0xf]
      %v3566 = vld [vmem:[%s3527 + $0x98] sm:$0xf]
      %v3567 = vld [vmem:[%s3527 + $0x9c] sm:$0xf]
      %v3568 = vld [vmem:[%s3527 + $0xa0] sm:$0xf]
      %v3569 = vld [vmem:[%s3527 + $0xa4] sm:$0xf]
      %v3570 = vld [vmem:[%s3527 + $0xa8] sm:$0xf]
      %v3571 = vld [vmem:[%s3527 + $0xac] sm:$0xf]
      %v3572 = vld [vmem:[%s3527 + $0xb0] sm:$0xf]
      %v3573 = vld [vmem:[%s3527 + $0xb4] sm:$0xf]
      %v3574 = vld [vmem:[%s3527 + $0xb8] sm:$0xf]
      %v3575 = vld [vmem:[%s3527 + $0xbc] sm:$0xf]
      %v3576 = vld [vmem:[%s3527 + $0xc0] sm:$0xf]
      %v3577 = vld [vmem:[%s3527 + $0xc4] sm:$0xf]
      %v3578 = vld [vmem:[%s3527 + $0xc8] sm:$0xf]
      %v3579 = vld [vmem:[%s3527 + $0xcc] sm:$0xf]
      %v3580 = vld [vmem:[%s3527 + $0xd0] sm:$0xf]
      %v3581 = vld [vmem:[%s3527 + $0xd4] sm:$0xf]
      %v3582 = vld [vmem:[%s3527 + $0xd8] sm:$0xf]
      %v3583 = vld [vmem:[%s3527 + $0xdc] sm:$0xf]
      %v3584 = vld [vmem:[%s3527 + $0xe0] sm:$0xf]
      %v3585 = vld [vmem:[%s3527 + $0xe4] sm:$0xf]
      %v3586 = vld [vmem:[%s3527 + $0xe8] sm:$0xf]
      %v3587 = vld [vmem:[%s3527 + $0xec] sm:$0xf]
      %v3588 = vld [vmem:[%s3527 + $0xf0] sm:$0xf]
      %v3589 = vld [vmem:[%s3527 + $0xf4] sm:$0xf]
      %v3590 = vld [vmem:[%s3527 + $0xf8] sm:$0xf]
      %v3591 = vld [vmem:[%s3527 + $0xfc] sm:$0xf]
      %v3592 = vld [vmem:[%s3527 + $0x100] sm:$0xf]
      %v3593 = vld [vmem:[%s3527 + $0x104] sm:$0xf]
      %v3594 = vld [vmem:[%s3527 + $0x108] sm:$0xf]
      %v3595 = vld [vmem:[%s3527 + $0x10c] sm:$0xf]
      %v3596 = vld [vmem:[%s3527 + $0x110] sm:$0xf]
      %v3597 = vld [vmem:[%s3527 + $0x114] sm:$0xf]
      %v3598 = vld [vmem:[%s3527 + $0x118] sm:$0xf]
      %v3599 = vld [vmem:[%s3527 + $0x11c] sm:$0xf]
      %v3672 = vunpack.c.l.b16 %v3528
      %v3673 = vunpack.c.l.b16 %v3529
      %v3674 = vunpack.c.l.b16 %v3530
      %v3675 = vunpack.c.l.b16 %v3531
      %v3676 = vunpack.c.l.b16 %v3532
      %v3677 = vunpack.c.l.b16 %v3533
      %v3678 = vunpack.c.l.b16 %v3534
      %v3679 = vunpack.c.l.b16 %v3535
      %v3680 = vunpack.c.l.b16 %v3536
      %v3681 = vunpack.c.l.b16 %v3537
      %v3682 = vunpack.c.l.b16 %v3538
      %v3683 = vunpack.c.l.b16 %v3539
      %v3684 = vunpack.c.l.b16 %v3540
      %v3685 = vunpack.c.l.b16 %v3541
      %v3686 = vunpack.c.l.b16 %v3542
      %v3687 = vunpack.c.l.b16 %v3543
      %v3688 = vunpack.c.l.b16 %v3544
      %v3689 = vunpack.c.l.b16 %v3545
      %v3690 = vunpack.c.l.b16 %v3546
      %v3691 = vunpack.c.l.b16 %v3547
      %v3692 = vunpack.c.l.b16 %v3548
      %v3693 = vunpack.c.l.b16 %v3549
      %v3694 = vunpack.c.l.b16 %v3550
      %v3695 = vunpack.c.l.b16 %v3551
      %v3696 = vunpack.c.l.b16 %v3552
      %v3697 = vunpack.c.l.b16 %v3553
      %v3698 = vunpack.c.l.b16 %v3554
      %v3699 = vunpack.c.l.b16 %v3555
      %v3700 = vunpack.c.l.b16 %v3556
      %v3701 = vunpack.c.l.b16 %v3557
      %v3702 = vunpack.c.l.b16 %v3558
      %v3703 = vunpack.c.l.b16 %v3559
      %v3704 = vunpack.c.l.b16 %v3560
      %v3705 = vunpack.c.l.b16 %v3561
      %v3706 = vunpack.c.l.b16 %v3562
      %v3707 = vunpack.c.l.b16 %v3563
      %v3708 = vunpack.c.l.b16 %v3564
      %v3709 = vunpack.c.l.b16 %v3565
      %v3710 = vunpack.c.l.b16 %v3566
      %v3711 = vunpack.c.l.b16 %v3567
      %v3712 = vunpack.c.l.b16 %v3568
      %v3713 = vunpack.c.l.b16 %v3569
      %v3714 = vunpack.c.l.b16 %v3570
      %v3715 = vunpack.c.l.b16 %v3571
      %v3716 = vunpack.c.l.b16 %v3572
      %v3717 = vunpack.c.l.b16 %v3573
      %v3718 = vunpack.c.l.b16 %v3574
      %v3719 = vunpack.c.l.b16 %v3575
      %v3720 = vunpack.c.l.b16 %v3576
      %v3721 = vunpack.c.l.b16 %v3577
      %v3722 = vunpack.c.l.b16 %v3578
      %v3723 = vunpack.c.l.b16 %v3579
      %v3724 = vunpack.c.l.b16 %v3580
      %v3725 = vunpack.c.l.b16 %v3581
      %v3726 = vunpack.c.l.b16 %v3582
      %v3727 = vunpack.c.l.b16 %v3583
      %v3728 = vunpack.c.l.b16 %v3584
      %v3729 = vunpack.c.l.b16 %v3585
      %v3730 = vunpack.c.l.b16 %v3586
      %v3731 = vunpack.c.l.b16 %v3587
      %v3732 = vunpack.c.l.b16 %v3588
      %v3733 = vunpack.c.l.b16 %v3589
      %v3734 = vunpack.c.l.b16 %v3590
      %v3735 = vunpack.c.l.b16 %v3591
      %v3736 = vunpack.c.l.b16 %v3592
      %v3737 = vunpack.c.l.b16 %v3593
      %v3738 = vunpack.c.l.b16 %v3594
      %v3739 = vunpack.c.l.b16 %v3595
      %v3740 = vunpack.c.l.b16 %v3596
      %v3741 = vunpack.c.l.b16 %v3597
      %v3742 = vunpack.c.l.b16 %v3598
      %v3743 = vunpack.c.l.b16 %v3599
      %v3744 = vpack.c.b16 %v3673, %v3672
      %v3745 = vpack.c.b16 %v3675, %v3674
      %v3746 = vpack.c.b16 %v3677, %v3676
      %v3747 = vpack.c.b16 %v3679, %v3678
      %v3748 = vpack.c.b16 %v3681, %v3680
      %v3749 = vpack.c.b16 %v3683, %v3682
      %v3750 = vpack.c.b16 %v3685, %v3684
      %v3751 = vpack.c.b16 %v3687, %v3686
      %v3752 = vpack.c.b16 %v3689, %v3688
      %v3753 = vpack.c.b16 %v3691, %v3690
      %v3754 = vpack.c.b16 %v3693, %v3692
      %v3755 = vpack.c.b16 %v3695, %v3694
      %v3756 = vpack.c.b16 %v3697, %v3696
      %v3757 = vpack.c.b16 %v3699, %v3698
      %v3758 = vpack.c.b16 %v3701, %v3700
      %v3759 = vpack.c.b16 %v3703, %v3702
      %v3760 = vpack.c.b16 %v3705, %v3704
      %v3761 = vpack.c.b16 %v3707, %v3706
      %v3762 = vpack.c.b16 %v3709, %v3708
      %v3763 = vpack.c.b16 %v3711, %v3710
      %v3764 = vpack.c.b16 %v3713, %v3712
      %v3765 = vpack.c.b16 %v3715, %v3714
      %v3766 = vpack.c.b16 %v3717, %v3716
      %v3767 = vpack.c.b16 %v3719, %v3718
      %v3768 = vpack.c.b16 %v3721, %v3720
      %v3769 = vpack.c.b16 %v3723, %v3722
      %v3770 = vpack.c.b16 %v3725, %v3724
      %v3771 = vpack.c.b16 %v3727, %v3726
      %v3772 = vpack.c.b16 %v3729, %v3728
      %v3773 = vpack.c.b16 %v3731, %v3730
      %v3774 = vpack.c.b16 %v3733, %v3732
      %v3775 = vpack.c.b16 %v3735, %v3734
      %v3776 = vpack.c.b16 %v3737, %v3736
      %v3777 = vpack.c.b16 %v3739, %v3738
      %v3778 = vpack.c.b16 %v3741, %v3740
      %v3779 = vpack.c.b16 %v3743, %v3742
      %v3817 = vsel %vm201, %v3451, 0
      %v3820 = vsel %vm201, %v3456, 0
      %v3823 = vsel %vm201, %v3461, 0
      %v3826 = vsel %vm201, %v3466, 0
      %v3829 = vsel %vm201, %v3471, 0
      %v3832 = vsel %vm201, %v3476, 0
      %v3835 = vsel %vm201, %v3481, 0
      %v3838 = vsel %vm201, %v3486, 0
      %v3841 = vsel %vm201, %v3491, 0
      %v3844 = vsel %vm201, %v3496, 0
      %v3847 = vsel %vm201, %v3501, 0
      %v3850 = vsel %vm201, %v3506, 0
      %v3853 = vsel %vm201, %v3511, 0
      %v3856 = vsel %vm201, %v3516, 0
      %v3859 = vsel %vm201, %v3521, 0
      %v3862 = vsel %vm201, %v3526, 0
      %3864 = vmatprep.subr.bf16.mxu0 0
      %3865 = vmatpush1.bf16.msra.mxu0 %v3744
      %3866 = vmatprep.subr.bf16.mxu0 0
      %3867 = vmatpush1.bf16.msra.mxu0 %v3745
      %3868 = vmatprep.subr.bf16.mxu0 0
      %3869 = vmatpush1.bf16.msra.mxu0 %v3746
      %3870 = vmatprep.subr.bf16.mxu0 0
      %3871 = vmatpush1.bf16.msra.mxu0 %v3747
      %3872 = vmatprep.subr.bf16.mxu0 0
      %3873 = vmatpush1.bf16.msra.mxu0 %v3748
      %3874 = vmatprep.subr.bf16.mxu0 0
      %3875 = vmatpush1.bf16.msra.mxu0 %v3749
      %3876 = vmatprep.subr.bf16.mxu0 0
      %3877 = vmatpush1.bf16.msra.mxu0 %v3750
      %3878 = vmatprep.subr.bf16.mxu0 0
      %3879 = vmatpush1.bf16.msra.mxu0 %v3751
      %3880 = vmatprep.subr.bf16.mxu0 0
      %3881 = vmatpush1.bf16.msra.mxu0 %v3752
      %3882 = vmatprep.subr.bf16.mxu0 0
      %3883 = vmatpush1.bf16.msra.mxu0 %v3753
      %3884 = vmatprep.subr.bf16.mxu0 0
      %3885 = vmatpush1.bf16.msra.mxu0 %v3754
      %3886 = vmatprep.subr.bf16.mxu0 0
      %3887 = vmatpush1.bf16.msra.mxu0 %v3755
      %3888 = vmatprep.subr.bf16.mxu0 0
      %3889 = vmatpush1.bf16.msra.mxu0 %v3756
      %3890 = vmatprep.subr.bf16.mxu0 0
      %3891 = vmatpush1.bf16.msra.mxu0 %v3757
      %3892 = vmatprep.subr.bf16.mxu0 0
      %3893 = vmatpush1.bf16.msra.mxu0 %v3758
      %3894 = vmatprep.subr.bf16.mxu0 0
      %3895 = vmatpush1.bf16.msra.mxu0 %v3759
      %3896 = vmatprep.mubr.bf16.mxu0 %v3448
      %3897 = vmatmul.mubr.bf16.gmra.mrb[0].mxu0 %v3447
      %v3898 = vpop.f32.mrb[0].mxu0
      %v3899 = vadd.f32 0.0, %v3898
      %v3900 = vpop.f32.mrb[0].mxu0
      %v3901 = vpop.f32.mrb[0].mxu0
      %v3902 = vadd.f32 0.0, %v3901
      %v3903 = vpop.f32.mrb[0].mxu0
      %3904 = vmatprep.mubr.bf16.mxu0 %v3453
      %3905 = vmatmul.mubr.bf16.gmra.mrb[0].mxu0 %v3452
      %v3906 = vpop.f32.mrb[0].mxu0
      %v3907 = vadd.f32 0.0, %v3906
      %v3908 = vpop.f32.mrb[0].mxu0
      %v3909 = vpop.f32.mrb[0].mxu0
      %v3910 = vadd.f32 0.0, %v3909
      %v3911 = vpop.f32.mrb[0].mxu0
      %3912 = vmatprep.mubr.bf16.mxu0 %v3458
      %3913 = vmatmul.mubr.bf16.gmra.mrb[0].mxu0 %v3457
      %v3914 = vpop.f32.mrb[0].mxu0
      %v3915 = vadd.f32 0.0, %v3914
      %v3916 = vpop.f32.mrb[0].mxu0
      %v3917 = vpop.f32.mrb[0].mxu0
      %v3918 = vadd.f32 0.0, %v3917
      %v3919 = vpop.f32.mrb[0].mxu0
      %3920 = vmatprep.mubr.bf16.mxu0 %v3463
      %3921 = vmatmul.mubr.bf16.gmra.mrb[0].mxu0 %v3462
      %v3922 = vpop.f32.mrb[0].mxu0
      %v3923 = vadd.f32 0.0, %v3922
      %v3924 = vpop.f32.mrb[0].mxu0
      %v3925 = vpop.f32.mrb[0].mxu0
      %v3926 = vadd.f32 0.0, %v3925
      %v3927 = vpop.f32.mrb[0].mxu0
      %3928 = vmatprep.mubr.bf16.mxu0 %v3468
      %3929 = vmatmul.mubr.bf16.gmra.mrb[0].mxu0 %v3467
      %v3930 = vpop.f32.mrb[0].mxu0
      %v3931 = vadd.f32 0.0, %v3930
      %v3932 = vpop.f32.mrb[0].mxu0
      %v3933 = vpop.f32.mrb[0].mxu0
      %v3934 = vadd.f32 0.0, %v3933
      %v3935 = vpop.f32.mrb[0].mxu0
      %3936 = vmatprep.mubr.bf16.mxu0 %v3473
      %3937 = vmatmul.mubr.bf16.gmra.mrb[0].mxu0 %v3472
      %v3938 = vpop.f32.mrb[0].mxu0
      %v3939 = vadd.f32 0.0, %v3938
      %v3940 = vpop.f32.mrb[0].mxu0
      %v3941 = vpop.f32.mrb[0].mxu0
      %v3942 = vadd.f32 0.0, %v3941
      %v3943 = vpop.f32.mrb[0].mxu0
      %3944 = vmatprep.mubr.bf16.mxu0 %v3478
      %3945 = vmatmul.mubr.bf16.gmra.mrb[0].mxu0 %v3477
      %v3946 = vpop.f32.mrb[0].mxu0
      %v3947 = vadd.f32 0.0, %v3946
      %v3948 = vpop.f32.mrb[0].mxu0
      %v3949 = vpop.f32.mrb[0].mxu0
      %v3950 = vadd.f32 0.0, %v3949
      %v3951 = vpop.f32.mrb[0].mxu0
      %3952 = vmatprep.mubr.bf16.mxu0 %v3483
      %3953 = vmatmul.mubr.bf16.gmra.mrb[0].mxu0 %v3482
      %v3954 = vpop.f32.mrb[0].mxu0
      %v3955 = vadd.f32 0.0, %v3954
      %v3956 = vpop.f32.mrb[0].mxu0
      %v3957 = vpop.f32.mrb[0].mxu0
      %v3958 = vadd.f32 0.0, %v3957
      %v3959 = vpop.f32.mrb[0].mxu0
      %3960 = vmatprep.mubr.bf16.mxu0 %v3488
      %3961 = vmatmul.mubr.bf16.gmra.mrb[0].mxu0 %v3487
      %v3962 = vpop.f32.mrb[0].mxu0
      %v3963 = vadd.f32 0.0, %v3962
      %v3964 = vpop.f32.mrb[0].mxu0
      %v3965 = vpop.f32.mrb[0].mxu0
      %v3966 = vadd.f32 0.0, %v3965
      %v3967 = vpop.f32.mrb[0].mxu0
      %3968 = vmatprep.mubr.bf16.mxu0 %v3493
      %3969 = vmatmul.mubr.bf16.gmra.mrb[0].mxu0 %v3492
      %v3970 = vpop.f32.mrb[0].mxu0
      %v3971 = vadd.f32 0.0, %v3970
      %v3972 = vpop.f32.mrb[0].mxu0
      %v3973 = vpop.f32.mrb[0].mxu0
      %v3974 = vadd.f32 0.0, %v3973
      %v3975 = vpop.f32.mrb[0].mxu0
      %3976 = vmatprep.mubr.bf16.mxu0 %v3498
      %3977 = vmatmul.mubr.bf16.gmra.mrb[0].mxu0 %v3497
      %v3978 = vpop.f32.mrb[0].mxu0
      %v3979 = vadd.f32 0.0, %v3978
      %v3980 = vpop.f32.mrb[0].mxu0
      %v3981 = vpop.f32.mrb[0].mxu0
      %v3982 = vadd.f32 0.0, %v3981
      %v3983 = vpop.f32.mrb[0].mxu0
      %3984 = vmatprep.mubr.bf16.mxu0 %v3503
      %3985 = vmatmul.mubr.bf16.gmra.mrb[0].mxu0 %v3502
      %v3986 = vpop.f32.mrb[0].mxu0
      %v3987 = vadd.f32 0.0, %v3986
      %v3988 = vpop.f32.mrb[0].mxu0
      %v3989 = vpop.f32.mrb[0].mxu0
      %v3990 = vadd.f32 0.0, %v3989
      %v3991 = vpop.f32.mrb[0].mxu0
      %3992 = vmatprep.mubr.bf16.mxu0 %v3508
      %3993 = vmatmul.mubr.bf16.gmra.mrb[0].mxu0 %v3507
      %v3994 = vpop.f32.mrb[0].mxu0
      %v3995 = vadd.f32 0.0, %v3994
      %v3996 = vpop.f32.mrb[0].mxu0
      %v3997 = vpop.f32.mrb[0].mxu0
      %v3998 = vadd.f32 0.0, %v3997
      %v3999 = vpop.f32.mrb[0].mxu0
      %4000 = vmatprep.mubr.bf16.mxu0 %v3513
      %4001 = vmatmul.mubr.bf16.gmra.mrb[0].mxu0 %v3512
      %v4002 = vpop.f32.mrb[0].mxu0
      %v4003 = vadd.f32 0.0, %v4002
      %v4004 = vpop.f32.mrb[0].mxu0
      %v4005 = vpop.f32.mrb[0].mxu0
      %v4006 = vadd.f32 0.0, %v4005
      %v4007 = vpop.f32.mrb[0].mxu0
      %4008 = vmatprep.mubr.bf16.mxu0 %v3518
      %4009 = vmatmul.mubr.bf16.gmra.mrb[0].mxu0 %v3517
      %v4010 = vpop.f32.mrb[0].mxu0
      %v4011 = vadd.f32 0.0, %v4010
      %v4012 = vpop.f32.mrb[0].mxu0
      %v4013 = vpop.f32.mrb[0].mxu0
      %v4014 = vadd.f32 0.0, %v4013
      %v4015 = vpop.f32.mrb[0].mxu0
      %4016 = vmatprep.mubr.bf16.mxu0 %v3523
      %4017 = vmatmul.mubr.bf16.gmra.mrb[0].mxu0 %v3522
      %v4018 = vpop.f32.mrb[0].mxu0
      %v4019 = vadd.f32 0.0, %v4018
      %v4020 = vpop.f32.mrb[0].mxu0
      %v4021 = vpop.f32.mrb[0].mxu0
      %v4022 = vadd.f32 0.0, %v4021
      %v4023 = vpop.f32.mrb[0].mxu0
      %4024 = vdwg.mxu0
      %4025 = vmatprep.subr.bf16.mxu0 0
      %4026 = vmatpush1.bf16.msra.mxu0 %v3760
      %4027 = vmatprep.subr.bf16.mxu0 0
      %4028 = vmatpush1.bf16.msra.mxu0 %v3761
      %4029 = vmatprep.subr.bf16.mxu0 0
      %4030 = vmatpush1.bf16.msra.mxu0 %v3762
      %4031 = vmatprep.subr.bf16.mxu0 0
      %4032 = vmatpush1.bf16.msra.mxu0 %v3763
      %4033 = vmatprep.subr.bf16.mxu0 0
      %4034 = vmatpush1.bf16.msra.mxu0 %v3764
      %4035 = vmatprep.subr.bf16.mxu0 0
      %4036 = vmatpush1.bf16.msra.mxu0 %v3765
      %4037 = vmatprep.subr.bf16.mxu0 0
      %4038 = vmatpush1.bf16.msra.mxu0 %v3766
      %4039 = vmatprep.subr.bf16.mxu0 0
      %4040 = vmatpush1.bf16.msra.mxu0 %v3767
      %4041 = vmatprep.subr.bf16.mxu0 0
      %4042 = vmatpush1.bf16.msra.mxu0 %v3768
      %4043 = vmatprep.subr.bf16.mxu0 0
      %4044 = vmatpush1.bf16.msra.mxu0 %v3769
      %4045 = vmatprep.subr.bf16.mxu0 0
      %4046 = vmatpush1.bf16.msra.mxu0 %v3770
      %4047 = vmatprep.subr.bf16.mxu0 0
      %4048 = vmatpush1.bf16.msra.mxu0 %v3771
      %4049 = vmatprep.subr.bf16.mxu0 0
      %4050 = vmatpush1.bf16.msra.mxu0 %v3772
      %4051 = vmatprep.subr.bf16.mxu0 0
      %4052 = vmatpush1.bf16.msra.mxu0 %v3773
      %4053 = vmatprep.subr.bf16.mxu0 0
      %4054 = vmatpush1.bf16.msra.mxu0 %v3774
      %4055 = vmatprep.subr.bf16.mxu0 0
      %4056 = vmatpush1.bf16.msra.mxu0 %v3775
      %4057 = vmatprep.mubr.bf16.mxu0 %v3450
      %4058 = vmatmul.mubr.bf16.gmra.mrb[0].mxu0 %v3449
      %v4059 = vpop.f32.mrb[0].mxu0
      %v4060 = vadd.f32 %v3899, %v4059
      %v4061 = vpop.f32.mrb[0].mxu0
      %v4062 = vpop.f32.mrb[0].mxu0
      %v4063 = vadd.f32 %v3902, %v4062
      %v4064 = vpop.f32.mrb[0].mxu0
      %4065 = vmatprep.mubr.bf16.mxu0 %v3455
      %4066 = vmatmul.mubr.bf16.gmra.mrb[0].mxu0 %v3454
      %v4067 = vpop.f32.mrb[0].mxu0
      %v4068 = vadd.f32 %v3907, %v4067
      %v4069 = vpop.f32.mrb[0].mxu0
      %v4070 = vpop.f32.mrb[0].mxu0
      %v4071 = vadd.f32 %v3910, %v4070
      %v4072 = vpop.f32.mrb[0].mxu0
      %4073 = vmatprep.mubr.bf16.mxu0 %v3460
      %4074 = vmatmul.mubr.bf16.gmra.mrb[0].mxu0 %v3459
      %v4075 = vpop.f32.mrb[0].mxu0
      %v4076 = vadd.f32 %v3915, %v4075
      %v4077 = vpop.f32.mrb[0].mxu0
      %v4078 = vpop.f32.mrb[0].mxu0
      %v4079 = vadd.f32 %v3918, %v4078
      %v4080 = vpop.f32.mrb[0].mxu0
      %4081 = vmatprep.mubr.bf16.mxu0 %v3465
      %4082 = vmatmul.mubr.bf16.gmra.mrb[0].mxu0 %v3464
      %v4083 = vpop.f32.mrb[0].mxu0
      %v4084 = vadd.f32 %v3923, %v4083
      %v4085 = vpop.f32.mrb[0].mxu0
      %v4086 = vpop.f32.mrb[0].mxu0
      %v4087 = vadd.f32 %v3926, %v4086
      %v4088 = vpop.f32.mrb[0].mxu0
      %4089 = vmatprep.mubr.bf16.mxu0 %v3470
      %4090 = vmatmul.mubr.bf16.gmra.mrb[0].mxu0 %v3469
      %v4091 = vpop.f32.mrb[0].mxu0
      %v4092 = vadd.f32 %v3931, %v4091
      %v4093 = vpop.f32.mrb[0].mxu0
      %v4094 = vpop.f32.mrb[0].mxu0
      %v4095 = vadd.f32 %v3934, %v4094
      %v4096 = vpop.f32.mrb[0].mxu0
      %4097 = vmatprep.mubr.bf16.mxu0 %v3475
      %4098 = vmatmul.mubr.bf16.gmra.mrb[0].mxu0 %v3474
      %v4099 = vpop.f32.mrb[0].mxu0
      %v4100 = vadd.f32 %v3939, %v4099
      %v4101 = vpop.f32.mrb[0].mxu0
      %v4102 = vpop.f32.mrb[0].mxu0
      %v4103 = vadd.f32 %v3942, %v4102
      %v4104 = vpop.f32.mrb[0].mxu0
      %4105 = vmatprep.mubr.bf16.mxu0 %v3480
      %4106 = vmatmul.mubr.bf16.gmra.mrb[0].mxu0 %v3479
      %v4107 = vpop.f32.mrb[0].mxu0
      %v4108 = vadd.f32 %v3947, %v4107
      %v4109 = vpop.f32.mrb[0].mxu0
      %v4110 = vpop.f32.mrb[0].mxu0
      %v4111 = vadd.f32 %v3950, %v4110
      %v4112 = vpop.f32.mrb[0].mxu0
      %4113 = vmatprep.mubr.bf16.mxu0 %v3485
      %4114 = vmatmul.mubr.bf16.gmra.mrb[0].mxu0 %v3484
      %v4115 = vpop.f32.mrb[0].mxu0
      %v4116 = vadd.f32 %v3955, %v4115
      %v4117 = vpop.f32.mrb[0].mxu0
      %v4118 = vpop.f32.mrb[0].mxu0
      %v4119 = vadd.f32 %v3958, %v4118
      %v4120 = vpop.f32.mrb[0].mxu0
      %4121 = vmatprep.mubr.bf16.mxu0 %v3490
      %4122 = vmatmul.mubr.bf16.gmra.mrb[0].mxu0 %v3489
      %v4123 = vpop.f32.mrb[0].mxu0
      %v4124 = vadd.f32 %v3963, %v4123
      %v4125 = vpop.f32.mrb[0].mxu0
      %v4126 = vpop.f32.mrb[0].mxu0
      %v4127 = vadd.f32 %v3966, %v4126
      %v4128 = vpop.f32.mrb[0].mxu0
      %4129 = vmatprep.mubr.bf16.mxu0 %v3495
      %4130 = vmatmul.mubr.bf16.gmra.mrb[0].mxu0 %v3494
      %v4131 = vpop.f32.mrb[0].mxu0
      %v4132 = vadd.f32 %v3971, %v4131
      %v4133 = vpop.f32.mrb[0].mxu0
      %v4134 = vpop.f32.mrb[0].mxu0
      %v4135 = vadd.f32 %v3974, %v4134
      %v4136 = vpop.f32.mrb[0].mxu0
      %4137 = vmatprep.mubr.bf16.mxu0 %v3500
      %4138 = vmatmul.mubr.bf16.gmra.mrb[0].mxu0 %v3499
      %v4139 = vpop.f32.mrb[0].mxu0
      %v4140 = vadd.f32 %v3979, %v4139
      %v4141 = vpop.f32.mrb[0].mxu0
      %v4142 = vpop.f32.mrb[0].mxu0
      %v4143 = vadd.f32 %v3982, %v4142
      %v4144 = vpop.f32.mrb[0].mxu0
      %4145 = vmatprep.mubr.bf16.mxu0 %v3505
      %4146 = vmatmul.mubr.bf16.gmra.mrb[0].mxu0 %v3504
      %v4147 = vpop.f32.mrb[0].mxu0
      %v4148 = vadd.f32 %v3987, %v4147
      %v4149 = vpop.f32.mrb[0].mxu0
      %v4150 = vpop.f32.mrb[0].mxu0
      %v4151 = vadd.f32 %v3990, %v4150
      %v4152 = vpop.f32.mrb[0].mxu0
      %4153 = vmatprep.mubr.bf16.mxu0 %v3510
      %4154 = vmatmul.mubr.bf16.gmra.mrb[0].mxu0 %v3509
      %v4155 = vpop.f32.mrb[0].mxu0
      %v4156 = vadd.f32 %v3995, %v4155
      %v4157 = vpop.f32.mrb[0].mxu0
      %v4158 = vpop.f32.mrb[0].mxu0
      %v4159 = vadd.f32 %v3998, %v4158
      %v4160 = vpop.f32.mrb[0].mxu0
      %4161 = vmatprep.mubr.bf16.mxu0 %v3515
      %4162 = vmatmul.mubr.bf16.gmra.mrb[0].mxu0 %v3514
      %v4163 = vpop.f32.mrb[0].mxu0
      %v4164 = vadd.f32 %v4003, %v4163
      %v4165 = vpop.f32.mrb[0].mxu0
      %v4166 = vpop.f32.mrb[0].mxu0
      %v4167 = vadd.f32 %v4006, %v4166
      %v4168 = vpop.f32.mrb[0].mxu0
      %4169 = vmatprep.mubr.bf16.mxu0 %v3520
      %4170 = vmatmul.mubr.bf16.gmra.mrb[0].mxu0 %v3519
      %v4171 = vpop.f32.mrb[0].mxu0
      %v4172 = vadd.f32 %v4011, %v4171
      %v4173 = vpop.f32.mrb[0].mxu0
      %v4174 = vpop.f32.mrb[0].mxu0
      %v4175 = vadd.f32 %v4014, %v4174
      %v4176 = vpop.f32.mrb[0].mxu0
      %4177 = vmatprep.mubr.bf16.mxu0 %v3525
      %4178 = vmatmul.mubr.bf16.gmra.mrb[0].mxu0 %v3524
      %v4179 = vpop.f32.mrb[0].mxu0
      %v4180 = vadd.f32 %v4019, %v4179
      %v4181 = vpop.f32.mrb[0].mxu0
      %v4182 = vpop.f32.mrb[0].mxu0
      %v4183 = vadd.f32 %v4022, %v4182
      %v4184 = vpop.f32.mrb[0].mxu0
      %4185 = vdwg.mxu0
      %4186 = vmatprep.subr.bf16.mxu0 0
      %4187 = vmatpush1.bf16.msra.mxu0 %v3776
      %4188 = vmatprep.subr.bf16.mxu0 0
      %4189 = vmatpush1.bf16.msra.mxu0 %v3777
      %4190 = vmatprep.subr.bf16.mxu0 0
      %4191 = vmatpush1.bf16.msra.mxu0 %v3778
      %4192 = vmatprep.subr.bf16.mxu0 0
      %4193 = vmatpush1.bf16.msra.mxu0 %v3779
      %4194 = vmatprep.subr.bf16.mxu0 0
      %4195 = vmatpush1.bf16.msra.mxu0 0
      %4196 = vmatprep.subr.bf16.mxu0 0
      %4197 = vmatpush1.bf16.msra.mxu0 0
      %4198 = vmatprep.subr.bf16.mxu0 0
      %4199 = vmatpush1.bf16.msra.mxu0 0
      %4200 = vmatprep.subr.bf16.mxu0 0
      %4201 = vmatpush1.bf16.msra.mxu0 0
      %4202 = vmatprep.subr.bf16.mxu0 0
      %4203 = vmatpush1.bf16.msra.mxu0 0
      %4204 = vmatprep.subr.bf16.mxu0 0
      %4205 = vmatpush1.bf16.msra.mxu0 0
      %4206 = vmatprep.subr.bf16.mxu0 0
      %4207 = vmatpush1.bf16.msra.mxu0 0
      %4208 = vmatprep.subr.bf16.mxu0 0
      %4209 = vmatpush1.bf16.msra.mxu0 0
      %4210 = vmatprep.subr.bf16.mxu0 0
      %4211 = vmatpush1.bf16.msra.mxu0 0
      %4212 = vmatprep.subr.bf16.mxu0 0
      %4213 = vmatpush1.bf16.msra.mxu0 0
      %4214 = vmatprep.subr.bf16.mxu0 0
      %4215 = vmatpush1.bf16.msra.mxu0 0
      %4216 = vmatprep.subr.bf16.mxu0 0
      %4217 = vmatpush1.bf16.msra.mxu0 0
      %4218 = vmatprep.mubr.bf16.mxu0 0
      %4219 = vmatmul.mubr.bf16.gmra.mrb[0].mxu0 %v3817
      %v4220 = vpop.f32.mrb[0].mxu0
      %v4221 = vadd.f32 %v4060, %v4220
      %v4222 = vpop.f32.mrb[0].mxu0
      %v4223 = vpop.f32.mrb[0].mxu0
      %v4224 = vadd.f32 %v4063, %v4223
      %v4225 = vpop.f32.mrb[0].mxu0
      %4226 = vmatprep.mubr.bf16.mxu0 0
      %4227 = vmatmul.mubr.bf16.gmra.mrb[0].mxu0 %v3820
      %v4228 = vpop.f32.mrb[0].mxu0
      %v4229 = vadd.f32 %v4068, %v4228
      %v4230 = vpop.f32.mrb[0].mxu0
      %v4231 = vpop.f32.mrb[0].mxu0
      %v4232 = vadd.f32 %v4071, %v4231
      %v4233 = vpop.f32.mrb[0].mxu0
      %4234 = vmatprep.mubr.bf16.mxu0 0
      %4235 = vmatmul.mubr.bf16.gmra.mrb[0].mxu0 %v3823
      %v4236 = vpop.f32.mrb[0].mxu0
      %v4237 = vadd.f32 %v4076, %v4236
      %v4238 = vpop.f32.mrb[0].mxu0
      %v4239 = vpop.f32.mrb[0].mxu0
      %v4240 = vadd.f32 %v4079, %v4239
      %v4241 = vpop.f32.mrb[0].mxu0
      %4242 = vmatprep.mubr.bf16.mxu0 0
      %4243 = vmatmul.mubr.bf16.gmra.mrb[0].mxu0 %v3826
      %v4244 = vpop.f32.mrb[0].mxu0
      %v4245 = vadd.f32 %v4084, %v4244
      %v4246 = vpop.f32.mrb[0].mxu0
      %v4247 = vpop.f32.mrb[0].mxu0
      %v4248 = vadd.f32 %v4087, %v4247
      %v4249 = vpop.f32.mrb[0].mxu0
      %4250 = vmatprep.mubr.bf16.mxu0 0
      %4251 = vmatmul.mubr.bf16.gmra.mrb[0].mxu0 %v3829
      %v4252 = vpop.f32.mrb[0].mxu0
      %v4253 = vadd.f32 %v4092, %v4252
      %v4254 = vpop.f32.mrb[0].mxu0
      %v4255 = vpop.f32.mrb[0].mxu0
      %v4256 = vadd.f32 %v4095, %v4255
      %v4257 = vpop.f32.mrb[0].mxu0
      %4258 = vmatprep.mubr.bf16.mxu0 0
      %4259 = vmatmul.mubr.bf16.gmra.mrb[0].mxu0 %v3832
      %v4260 = vpop.f32.mrb[0].mxu0
      %v4261 = vadd.f32 %v4100, %v4260
      %v4262 = vpop.f32.mrb[0].mxu0
      %v4263 = vpop.f32.mrb[0].mxu0
      %v4264 = vadd.f32 %v4103, %v4263
      %v4265 = vpop.f32.mrb[0].mxu0
      %4266 = vmatprep.mubr.bf16.mxu0 0
      %4267 = vmatmul.mubr.bf16.gmra.mrb[0].mxu0 %v3835
      %v4268 = vpop.f32.mrb[0].mxu0
      %v4269 = vadd.f32 %v4108, %v4268
      %v4270 = vpop.f32.mrb[0].mxu0
      %v4271 = vpop.f32.mrb[0].mxu0
      %v4272 = vadd.f32 %v4111, %v4271
      %v4273 = vpop.f32.mrb[0].mxu0
      %4274 = vmatprep.mubr.bf16.mxu0 0
      %4275 = vmatmul.mubr.bf16.gmra.mrb[0].mxu0 %v3838
      %v4276 = vpop.f32.mrb[0].mxu0
      %v4277 = vadd.f32 %v4116, %v4276
      %v4278 = vpop.f32.mrb[0].mxu0
      %v4279 = vpop.f32.mrb[0].mxu0
      %v4280 = vadd.f32 %v4119, %v4279
      %v4281 = vpop.f32.mrb[0].mxu0
      %4282 = vmatprep.mubr.bf16.mxu0 0
      %4283 = vmatmul.mubr.bf16.gmra.mrb[0].mxu0 %v3841
      %v4284 = vpop.f32.mrb[0].mxu0
      %v4285 = vadd.f32 %v4124, %v4284
      %v4286 = vpop.f32.mrb[0].mxu0
      %v4287 = vpop.f32.mrb[0].mxu0
      %v4288 = vadd.f32 %v4127, %v4287
      %v4289 = vpop.f32.mrb[0].mxu0
      %4290 = vmatprep.mubr.bf16.mxu0 0
      %4291 = vmatmul.mubr.bf16.gmra.mrb[0].mxu0 %v3844
      %v4292 = vpop.f32.mrb[0].mxu0
      %v4293 = vadd.f32 %v4132, %v4292
      %v4294 = vpop.f32.mrb[0].mxu0
      %v4295 = vpop.f32.mrb[0].mxu0
      %v4296 = vadd.f32 %v4135, %v4295
      %v4297 = vpop.f32.mrb[0].mxu0
      %4298 = vmatprep.mubr.bf16.mxu0 0
      %4299 = vmatmul.mubr.bf16.gmra.mrb[0].mxu0 %v3847
      %v4300 = vpop.f32.mrb[0].mxu0
      %v4301 = vadd.f32 %v4140, %v4300
      %v4302 = vpop.f32.mrb[0].mxu0
      %v4303 = vpop.f32.mrb[0].mxu0
      %v4304 = vadd.f32 %v4143, %v4303
      %v4305 = vpop.f32.mrb[0].mxu0
      %4306 = vmatprep.mubr.bf16.mxu0 0
      %4307 = vmatmul.mubr.bf16.gmra.mrb[0].mxu0 %v3850
      %v4308 = vpop.f32.mrb[0].mxu0
      %v4309 = vadd.f32 %v4148, %v4308
      %v4310 = vpop.f32.mrb[0].mxu0
      %v4311 = vpop.f32.mrb[0].mxu0
      %v4312 = vadd.f32 %v4151, %v4311
      %v4313 = vpop.f32.mrb[0].mxu0
      %4314 = vmatprep.mubr.bf16.mxu0 0
      %4315 = vmatmul.mubr.bf16.gmra.mrb[0].mxu0 %v3853
      %v4316 = vpop.f32.mrb[0].mxu0
      %v4317 = vadd.f32 %v4156, %v4316
      %v4318 = vpop.f32.mrb[0].mxu0
      %v4319 = vpop.f32.mrb[0].mxu0
      %v4320 = vadd.f32 %v4159, %v4319
      %v4321 = vpop.f32.mrb[0].mxu0
      %4322 = vmatprep.mubr.bf16.mxu0 0
      %4323 = vmatmul.mubr.bf16.gmra.mrb[0].mxu0 %v3856
      %v4324 = vpop.f32.mrb[0].mxu0
      %v4325 = vadd.f32 %v4164, %v4324
      %v4326 = vpop.f32.mrb[0].mxu0
      %v4327 = vpop.f32.mrb[0].mxu0
      %v4328 = vadd.f32 %v4167, %v4327
      %v4329 = vpop.f32.mrb[0].mxu0
      %4330 = vmatprep.mubr.bf16.mxu0 0
      %4331 = vmatmul.mubr.bf16.gmra.mrb[0].mxu0 %v3859
      %v4332 = vpop.f32.mrb[0].mxu0
      %v4333 = vadd.f32 %v4172, %v4332
      %v4334 = vpop.f32.mrb[0].mxu0
      %v4335 = vpop.f32.mrb[0].mxu0
      %v4336 = vadd.f32 %v4175, %v4335
      %v4337 = vpop.f32.mrb[0].mxu0
      %4338 = vmatprep.mubr.bf16.mxu0 0
      %4339 = vmatmul.mubr.bf16.gmra.mrb[0].mxu0 %v3862
      %v4340 = vpop.f32.mrb[0].mxu0
      %v4341 = vadd.f32 %v4180, %v4340
      %v4342 = vpop.f32.mrb[0].mxu0
      %v4343 = vpop.f32.mrb[0].mxu0
      %v4344 = vadd.f32 %v4183, %v4343
      %v4345 = vpop.f32.mrb[0].mxu0
      %4346 = vdwg.mxu0
      %v4347 = vsel %vm201, %v4221, 0.0
      %v4348 = vsel %vm201, %v4224, 0.0
      %v4349 = vadd.f32 %v4347, %v4348
      %v4350 = vsel %vm201, %v4229, 0.0
      %v4351 = vadd.f32 %v4349, %v4350
      %v4352 = vsel %vm201, %v4232, 0.0
      %v4353 = vadd.f32 %v4351, %v4352
      %v4354 = vsel %vm201, %v4237, 0.0
      %v4355 = vadd.f32 %v4353, %v4354
      %v4356 = vsel %vm201, %v4240, 0.0
      %v4357 = vadd.f32 %v4355, %v4356
      %v4358 = vsel %vm201, %v4245, 0.0
      %v4359 = vadd.f32 %v4357, %v4358
      %v4360 = vsel %vm201, %v4248, 0.0
      %v4361 = vadd.f32 %v4359, %v4360
      %v4362 = vsel %vm201, %v4253, 0.0
      %v4363 = vadd.f32 %v4361, %v4362
      %v4364 = vsel %vm201, %v4256, 0.0
      %v4365 = vadd.f32 %v4363, %v4364
      %v4366 = vsel %vm201, %v4261, 0.0
      %v4367 = vadd.f32 %v4365, %v4366
      %v4368 = vsel %vm201, %v4264, 0.0
      %v4369 = vadd.f32 %v4367, %v4368
      %v4370 = vsel %vm201, %v4269, 0.0
      %v4371 = vadd.f32 %v4369, %v4370
      %v4372 = vsel %vm201, %v4272, 0.0
      %v4373 = vadd.f32 %v4371, %v4372
      %v4374 = vsel %vm201, %v4277, 0.0
      %v4375 = vadd.f32 %v4373, %v4374
      %v4376 = vsel %vm201, %v4280, 0.0
      %v4377 = vadd.f32 %v4375, %v4376
      %v4378 = vsel %vm201, %v4285, 0.0
      %v4379 = vadd.f32 %v4377, %v4378
      %v4380 = vsel %vm201, %v4288, 0.0
      %v4381 = vadd.f32 %v4379, %v4380
      %v4382 = vsel %vm201, %v4293, 0.0
      %v4383 = vadd.f32 %v4381, %v4382
      %v4384 = vsel %vm201, %v4296, 0.0
      %v4385 = vadd.f32 %v4383, %v4384
      %v4386 = vsel %vm201, %v4301, 0.0
      %v4387 = vadd.f32 %v4385, %v4386
      %v4388 = vsel %vm201, %v4304, 0.0
      %v4389 = vadd.f32 %v4387, %v4388
      %v4390 = vsel %vm201, %v4309, 0.0
      %v4391 = vadd.f32 %v4389, %v4390
      %v4392 = vsel %vm201, %v4312, 0.0
      %v4393 = vadd.f32 %v4391, %v4392
      %v4394 = vsel %vm201, %v4317, 0.0
      %v4395 = vadd.f32 %v4393, %v4394
      %v4396 = vsel %vm201, %v4320, 0.0
      %v4397 = vadd.f32 %v4395, %v4396
      %v4398 = vsel %vm201, %v4325, 0.0
      %v4399 = vadd.f32 %v4397, %v4398
      %v4400 = vsel %vm201, %v4328, 0.0
      %v4401 = vadd.f32 %v4399, %v4400
      %v4402 = vsel %vm201, %v4333, 0.0
      %v4403 = vadd.f32 %v4401, %v4402
      %v4404 = vsel %vm201, %v4336, 0.0
      %v4405 = vadd.f32 %v4403, %v4404
      %v4406 = vsel %vm201, %v4341, 0.0
      %v4407 = vadd.f32 %v4405, %v4406
      %v4408 = vsel %vm201, %v4344, 0.0
      %v4409 = vadd.f32 %v4407, %v4408
      %v4410 = vrot.slane %v4409, 4
      %v4411 = vadd.f32 %v4409, %v4410
      %v4412 = vrot.slane %v4411, 2
      %v4413 = vadd.f32 %v4411, %v4412
      %v4414 = vrot.slane %v4413, 1
      %v4415 = vadd.f32 %v4413, %v4414
      %v4416 = vmul.f32 %v4415, 0.00390625
      %v4417 = vmul.f32 %v4221, %v4221
      %v4418 = vmul.f32 %v4224, %v4224
      %v4419 = vmul.f32 %v4229, %v4229
      %v4420 = vmul.f32 %v4232, %v4232
      %v4421 = vmul.f32 %v4237, %v4237
      %v4422 = vmul.f32 %v4240, %v4240
      %v4423 = vmul.f32 %v4245, %v4245
      %v4424 = vmul.f32 %v4248, %v4248
      %v4425 = vmul.f32 %v4253, %v4253
      %v4426 = vmul.f32 %v4256, %v4256
      %v4427 = vmul.f32 %v4261, %v4261
      %v4428 = vmul.f32 %v4264, %v4264
      %v4429 = vmul.f32 %v4269, %v4269
      %v4430 = vmul.f32 %v4272, %v4272
      %v4431 = vmul.f32 %v4277, %v4277
      %v4432 = vmul.f32 %v4280, %v4280
      %v4433 = vmul.f32 %v4285, %v4285
      %v4434 = vmul.f32 %v4288, %v4288
      %v4435 = vmul.f32 %v4293, %v4293
      %v4436 = vmul.f32 %v4296, %v4296
      %v4437 = vmul.f32 %v4301, %v4301
      %v4438 = vmul.f32 %v4304, %v4304
      %v4439 = vmul.f32 %v4309, %v4309
      %v4440 = vmul.f32 %v4312, %v4312
      %v4441 = vmul.f32 %v4317, %v4317
      %v4442 = vmul.f32 %v4320, %v4320
      %v4443 = vmul.f32 %v4325, %v4325
      %v4444 = vmul.f32 %v4328, %v4328
      %v4445 = vmul.f32 %v4333, %v4333
      %v4446 = vmul.f32 %v4336, %v4336
      %v4447 = vmul.f32 %v4341, %v4341
      %v4448 = vmul.f32 %v4344, %v4344
      %v4449 = vsel %vm201, %v4417, 0.0
      %v4450 = vsel %vm201, %v4418, 0.0
      %v4451 = vadd.f32 %v4449, %v4450
      %v4452 = vsel %vm201, %v4419, 0.0
      %v4453 = vadd.f32 %v4451, %v4452
      %v4454 = vsel %vm201, %v4420, 0.0
      %v4455 = vadd.f32 %v4453, %v4454
      %v4456 = vsel %vm201, %v4421, 0.0
      %v4457 = vadd.f32 %v4455, %v4456
      %v4458 = vsel %vm201, %v4422, 0.0
      %v4459 = vadd.f32 %v4457, %v4458
      %v4460 = vsel %vm201, %v4423, 0.0
      %v4461 = vadd.f32 %v4459, %v4460
      %v4462 = vsel %vm201, %v4424, 0.0
      %v4463 = vadd.f32 %v4461, %v4462
      %v4464 = vsel %vm201, %v4425, 0.0
      %v4465 = vadd.f32 %v4463, %v4464
      %v4466 = vsel %vm201, %v4426, 0.0
      %v4467 = vadd.f32 %v4465, %v4466
      %v4468 = vsel %vm201, %v4427, 0.0
      %v4469 = vadd.f32 %v4467, %v4468
      %v4470 = vsel %vm201, %v4428, 0.0
      %v4471 = vadd.f32 %v4469, %v4470
      %v4472 = vsel %vm201, %v4429, 0.0
      %v4473 = vadd.f32 %v4471, %v4472
      %v4474 = vsel %vm201, %v4430, 0.0
      %v4475 = vadd.f32 %v4473, %v4474
      %v4476 = vsel %vm201, %v4431, 0.0
      %v4477 = vadd.f32 %v4475, %v4476
      %v4478 = vsel %vm201, %v4432, 0.0
      %v4479 = vadd.f32 %v4477, %v4478
      %v4480 = vsel %vm201, %v4433, 0.0
      %v4481 = vadd.f32 %v4479, %v4480
      %v4482 = vsel %vm201, %v4434, 0.0
      %v4483 = vadd.f32 %v4481, %v4482
      %v4484 = vsel %vm201, %v4435, 0.0
      %v4485 = vadd.f32 %v4483, %v4484
      %v4486 = vsel %vm201, %v4436, 0.0
      %v4487 = vadd.f32 %v4485, %v4486
      %v4488 = vsel %vm201, %v4437, 0.0
      %v4489 = vadd.f32 %v4487, %v4488
      %v4490 = vsel %vm201, %v4438, 0.0
      %v4491 = vadd.f32 %v4489, %v4490
      %v4492 = vsel %vm201, %v4439, 0.0
      %v4493 = vadd.f32 %v4491, %v4492
      %v4494 = vsel %vm201, %v4440, 0.0
      %v4495 = vadd.f32 %v4493, %v4494
      %v4496 = vsel %vm201, %v4441, 0.0
      %v4497 = vadd.f32 %v4495, %v4496
      %v4498 = vsel %vm201, %v4442, 0.0
      %v4499 = vadd.f32 %v4497, %v4498
      %v4500 = vsel %vm201, %v4443, 0.0
      %v4501 = vadd.f32 %v4499, %v4500
      %v4502 = vsel %vm201, %v4444, 0.0
      %v4503 = vadd.f32 %v4501, %v4502
      %v4504 = vsel %vm201, %v4445, 0.0
      %v4505 = vadd.f32 %v4503, %v4504
      %v4506 = vsel %vm201, %v4446, 0.0
      %v4507 = vadd.f32 %v4505, %v4506
      %v4508 = vsel %vm201, %v4447, 0.0
      %v4509 = vadd.f32 %v4507, %v4508
      %v4510 = vsel %vm201, %v4448, 0.0
      %v4511 = vadd.f32 %v4509, %v4510
      %v4512 = vrot.slane %v4511, 4
      %v4513 = vadd.f32 %v4511, %v4512
      %v4514 = vrot.slane %v4513, 2
      %v4515 = vadd.f32 %v4513, %v4514
      %v4516 = vrot.slane %v4515, 1
      %v4517 = vadd.f32 %v4515, %v4516
      %v4518 = vmul.f32 %v4517, 0.00390625
      %v4519 = vmul.f32 %v4416, %v4416
      %v4520 = vsub.f32 %v4518, %v4519
      %v4521 = vsub.f32 %v4221, %v4416
      %v4522 = vsub.f32 %v4224, %v4416
      %v4523 = vsub.f32 %v4229, %v4416
      %v4524 = vsub.f32 %v4232, %v4416
      %v4525 = vsub.f32 %v4237, %v4416
      %v4526 = vsub.f32 %v4240, %v4416
      %v4527 = vsub.f32 %v4245, %v4416
      %v4528 = vsub.f32 %v4248, %v4416
      %v4529 = vsub.f32 %v4253, %v4416
      %v4530 = vsub.f32 %v4256, %v4416
      %v4531 = vsub.f32 %v4261, %v4416
      %v4532 = vsub.f32 %v4264, %v4416
      %v4533 = vsub.f32 %v4269, %v4416
      %v4534 = vsub.f32 %v4272, %v4416
      %v4535 = vsub.f32 %v4277, %v4416
      %v4536 = vsub.f32 %v4280, %v4416
      %v4537 = vsub.f32 %v4285, %v4416
      %v4538 = vsub.f32 %v4288, %v4416
      %v4539 = vsub.f32 %v4293, %v4416
      %v4540 = vsub.f32 %v4296, %v4416
      %v4541 = vsub.f32 %v4301, %v4416
      %v4542 = vsub.f32 %v4304, %v4416
      %v4543 = vsub.f32 %v4309, %v4416
      %v4544 = vsub.f32 %v4312, %v4416
      %v4545 = vsub.f32 %v4317, %v4416
      %v4546 = vsub.f32 %v4320, %v4416
      %v4547 = vsub.f32 %v4325, %v4416
      %v4548 = vsub.f32 %v4328, %v4416
      %v4549 = vsub.f32 %v4333, %v4416
      %v4550 = vsub.f32 %v4336, %v4416
      %v4551 = vsub.f32 %v4341, %v4416
      %v4552 = vsub.f32 %v4344, %v4416
      %v4553 = vadd.f32 %v4520, 1e-05
      %v4554 = vrsqrt.pop %v4553
      %v4555 = vmul.f32 %v4521, %v4554
      %v4556 = vmul.f32 %v4522, %v4554
      %v4557 = vmul.f32 %v4523, %v4554
      %v4558 = vmul.f32 %v4524, %v4554
      %v4559 = vmul.f32 %v4525, %v4554
      %v4560 = vmul.f32 %v4526, %v4554
      %v4561 = vmul.f32 %v4527, %v4554
      %v4562 = vmul.f32 %v4528, %v4554
      %v4563 = vmul.f32 %v4529, %v4554
      %v4564 = vmul.f32 %v4530, %v4554
      %v4565 = vmul.f32 %v4531, %v4554
      %v4566 = vmul.f32 %v4532, %v4554
      %v4567 = vmul.f32 %v4533, %v4554
      %v4568 = vmul.f32 %v4534, %v4554
      %v4569 = vmul.f32 %v4535, %v4554
      %v4570 = vmul.f32 %v4536, %v4554
      %v4571 = vmul.f32 %v4537, %v4554
      %v4572 = vmul.f32 %v4538, %v4554
      %v4573 = vmul.f32 %v4539, %v4554
      %v4574 = vmul.f32 %v4540, %v4554
      %v4575 = vmul.f32 %v4541, %v4554
      %v4576 = vmul.f32 %v4542, %v4554
      %v4577 = vmul.f32 %v4543, %v4554
      %v4578 = vmul.f32 %v4544, %v4554
      %v4579 = vmul.f32 %v4545, %v4554
      %v4580 = vmul.f32 %v4546, %v4554
      %v4581 = vmul.f32 %v4547, %v4554
      %v4582 = vmul.f32 %v4548, %v4554
      %v4583 = vmul.f32 %v4549, %v4554
      %v4584 = vmul.f32 %v4550, %v4554
      %v4585 = vmul.f32 %v4551, %v4554
      %v4586 = vmul.f32 %v4552, %v4554
      %vm4587 = vcmp.ge.f32.partialorder %v4555, 0.0
      %vm4588 = vcmp.ge.f32.partialorder %v4556, 0.0
      %vm4589 = vcmp.ge.f32.partialorder %v4557, 0.0
      %vm4590 = vcmp.ge.f32.partialorder %v4558, 0.0
      %vm4591 = vcmp.ge.f32.partialorder %v4559, 0.0
      %vm4592 = vcmp.ge.f32.partialorder %v4560, 0.0
      %vm4593 = vcmp.ge.f32.partialorder %v4561, 0.0
      %vm4594 = vcmp.ge.f32.partialorder %v4562, 0.0
      %vm4595 = vcmp.ge.f32.partialorder %v4563, 0.0
      %vm4596 = vcmp.ge.f32.partialorder %v4564, 0.0
      %vm4597 = vcmp.ge.f32.partialorder %v4565, 0.0
      %vm4598 = vcmp.ge.f32.partialorder %v4566, 0.0
      %vm4599 = vcmp.ge.f32.partialorder %v4567, 0.0
      %vm4600 = vcmp.ge.f32.partialorder %v4568, 0.0
      %vm4601 = vcmp.ge.f32.partialorder %v4569, 0.0
      %vm4602 = vcmp.ge.f32.partialorder %v4570, 0.0
      %vm4603 = vcmp.ge.f32.partialorder %v4571, 0.0
      %vm4604 = vcmp.ge.f32.partialorder %v4572, 0.0
      %vm4605 = vcmp.ge.f32.partialorder %v4573, 0.0
      %vm4606 = vcmp.ge.f32.partialorder %v4574, 0.0
      %vm4607 = vcmp.ge.f32.partialorder %v4575, 0.0
      %vm4608 = vcmp.ge.f32.partialorder %v4576, 0.0
      %vm4609 = vcmp.ge.f32.partialorder %v4577, 0.0
      %vm4610 = vcmp.ge.f32.partialorder %v4578, 0.0
      %vm4611 = vcmp.ge.f32.partialorder %v4579, 0.0
      %vm4612 = vcmp.ge.f32.partialorder %v4580, 0.0
      %vm4613 = vcmp.ge.f32.partialorder %v4581, 0.0
      %vm4614 = vcmp.ge.f32.partialorder %v4582, 0.0
      %vm4615 = vcmp.ge.f32.partialorder %v4583, 0.0
      %vm4616 = vcmp.ge.f32.partialorder %v4584, 0.0
      %vm4617 = vcmp.ge.f32.partialorder %v4585, 0.0
      %vm4618 = vcmp.ge.f32.partialorder %v4586, 0.0
      %v4619 = vmul.f32 %v4555, 0.2
      %v4620 = vmul.f32 %v4556, 0.2
      %v4621 = vmul.f32 %v4557, 0.2
      %v4622 = vmul.f32 %v4558, 0.2
      %v4623 = vmul.f32 %v4559, 0.2
      %v4624 = vmul.f32 %v4560, 0.2
      %v4625 = vmul.f32 %v4561, 0.2
      %v4626 = vmul.f32 %v4562, 0.2
      %v4627 = vmul.f32 %v4563, 0.2
      %v4628 = vmul.f32 %v4564, 0.2
      %v4629 = vmul.f32 %v4565, 0.2
      %v4630 = vmul.f32 %v4566, 0.2
      %v4631 = vmul.f32 %v4567, 0.2
      %v4632 = vmul.f32 %v4568, 0.2
      %v4633 = vmul.f32 %v4569, 0.2
      %v4634 = vmul.f32 %v4570, 0.2
      %v4635 = vmul.f32 %v4571, 0.2
      %v4636 = vmul.f32 %v4572, 0.2
      %v4637 = vmul.f32 %v4573, 0.2
      %v4638 = vmul.f32 %v4574, 0.2
      %v4639 = vmul.f32 %v4575, 0.2
      %v4640 = vmul.f32 %v4576, 0.2
      %v4641 = vmul.f32 %v4577, 0.2
      %v4642 = vmul.f32 %v4578, 0.2
      %v4643 = vmul.f32 %v4579, 0.2
      %v4644 = vmul.f32 %v4580, 0.2
      %v4645 = vmul.f32 %v4581, 0.2
      %v4646 = vmul.f32 %v4582, 0.2
      %v4647 = vmul.f32 %v4583, 0.2
      %v4648 = vmul.f32 %v4584, 0.2
      %v4649 = vmul.f32 %v4585, 0.2
      %v4650 = vmul.f32 %v4586, 0.2
      %v4651 = vsel %vm4587, %v4555, %v4619
      %v4652 = vsel %vm4588, %v4556, %v4620
      %v4653 = vsel %vm4589, %v4557, %v4621
      %v4654 = vsel %vm4590, %v4558, %v4622
      %v4655 = vsel %vm4591, %v4559, %v4623
      %v4656 = vsel %vm4592, %v4560, %v4624
      %v4657 = vsel %vm4593, %v4561, %v4625
      %v4658 = vsel %vm4594, %v4562, %v4626
      %v4659 = vsel %vm4595, %v4563, %v4627
      %v4660 = vsel %vm4596, %v4564, %v4628
      %v4661 = vsel %vm4597, %v4565, %v4629
      %v4662 = vsel %vm4598, %v4566, %v4630
      %v4663 = vsel %vm4599, %v4567, %v4631
      %v4664 = vsel %vm4600, %v4568, %v4632
      %v4665 = vsel %vm4601, %v4569, %v4633
      %v4666 = vsel %vm4602, %v4570, %v4634
      %v4667 = vsel %vm4603, %v4571, %v4635
      %v4668 = vsel %vm4604, %v4572, %v4636
      %v4669 = vsel %vm4605, %v4573, %v4637
      %v4670 = vsel %vm4606, %v4574, %v4638
      %v4671 = vsel %vm4607, %v4575, %v4639
      %v4672 = vsel %vm4608, %v4576, %v4640
      %v4673 = vsel %vm4609, %v4577, %v4641
      %v4674 = vsel %vm4610, %v4578, %v4642
      %v4675 = vsel %vm4611, %v4579, %v4643
      %v4676 = vsel %vm4612, %v4580, %v4644
      %v4677 = vsel %vm4613, %v4581, %v4645
      %v4678 = vsel %vm4614, %v4582, %v4646
      %v4679 = vsel %vm4615, %v4583, %v4647
      %v4680 = vsel %vm4616, %v4584, %v4648
      %v4681 = vsel %vm4617, %v4585, %v4649
      %v4682 = vsel %vm4618, %v4586, %v4650
      %4683 = vst.msk [vmem:[%s289 + $0x1] sm:$0xff] %vm201, %v4651
      %4684 = vst.msk [vmem:[%s289 + $0x9] sm:$0xff] %vm201, %v4652
      %4685 = vst.msk [vmem:[%s289 + $0x19] sm:$0xff] %vm201, %v4653
      %4686 = vst.msk [vmem:[%s289 + $0x21] sm:$0xff] %vm201, %v4654
      %4687 = vst.msk [vmem:[%s289 + $0x31] sm:$0xff] %vm201, %v4655
      %4688 = vst.msk [vmem:[%s289 + $0x39] sm:$0xff] %vm201, %v4656
      %4689 = vst.msk [vmem:[%s289 + $0x49] sm:$0xff] %vm201, %v4657
      %4690 = vst.msk [vmem:[%s289 + $0x51] sm:$0xff] %vm201, %v4658
      %4691 = vst.msk [vmem:[%s289 + $0x61] sm:$0xff] %vm201, %v4659
      %4692 = vst.msk [vmem:[%s289 + $0x69] sm:$0xff] %vm201, %v4660
      %4693 = vst.msk [vmem:[%s289 + $0x79] sm:$0xff] %vm201, %v4661
      %4694 = vst.msk [vmem:[%s289 + $0x81] sm:$0xff] %vm201, %v4662
      %4695 = vst.msk [vmem:[%s289 + $0x91] sm:$0xff] %vm201, %v4663
      %4696 = vst.msk [vmem:[%s289 + $0x99] sm:$0xff] %vm201, %v4664
      %4697 = vst.msk [vmem:[%s289 + $0xa9] sm:$0xff] %vm201, %v4665
      %4698 = vst.msk [vmem:[%s289 + $0xb1] sm:$0xff] %vm201, %v4666
      %4699 = vst.msk [vmem:[%s289 + $0xc1] sm:$0xff] %vm201, %v4667
      %4700 = vst.msk [vmem:[%s289 + $0xc9] sm:$0xff] %vm201, %v4668
      %4701 = vst.msk [vmem:[%s289 + $0xd9] sm:$0xff] %vm201, %v4669
      %4702 = vst.msk [vmem:[%s289 + $0xe1] sm:$0xff] %vm201, %v4670
      %4703 = vst.msk [vmem:[%s289 + $0xf1] sm:$0xff] %vm201, %v4671
      %4704 = vst.msk [vmem:[%s289 + $0xf9] sm:$0xff] %vm201, %v4672
      %4705 = vst.msk [vmem:[%s289 + $0x109] sm:$0xff] %vm201, %v4673
      %4706 = vst.msk [vmem:[%s289 + $0x111] sm:$0xff] %vm201, %v4674
      %4707 = vst.msk [vmem:[%s289 + $0x121] sm:$0xff] %vm201, %v4675
      %4708 = vst.msk [vmem:[%s289 + $0x129] sm:$0xff] %vm201, %v4676
      %4709 = vst.msk [vmem:[%s289 + $0x139] sm:$0xff] %vm201, %v4677
      %4710 = vst.msk [vmem:[%s289 + $0x141] sm:$0xff] %vm201, %v4678
      %4711 = vst.msk [vmem:[%s289 + $0x151] sm:$0xff] %vm201, %v4679
      %4712 = vst.msk [vmem:[%s289 + $0x159] sm:$0xff] %vm201, %v4680
      %4713 = vst.msk [vmem:[%s289 + $0x169] sm:$0xff] %vm201, %v4681
      %4714 = vst.msk [vmem:[%s289 + $0x171] sm:$0xff] %vm201, %v4682
      %v4715 = vld [vmem:[#allocation2] sm:$0xff]
      %v4716 = vld [vmem:[#allocation2 + $0x8] sm:$0xff]
      %v4717 = vld [vmem:[#allocation2 + $0x18] sm:$0xff]
      %v4718 = vld [vmem:[#allocation2 + $0x20] sm:$0xff]
      %v4719 = vld [vmem:[#allocation2 + $0x30] sm:$0xff]
      %v4720 = vld [vmem:[#allocation2 + $0x38] sm:$0xff]
      %v4721 = vld [vmem:[#allocation2 + $0x48] sm:$0xff]
      %v4722 = vld [vmem:[#allocation2 + $0x50] sm:$0xff]
      %v4723 = vld [vmem:[#allocation2 + $0x60] sm:$0xff]
      %v4724 = vld [vmem:[#allocation2 + $0x68] sm:$0xff]
      %v4725 = vld [vmem:[#allocation2 + $0x78] sm:$0xff]
      %v4726 = vld [vmem:[#allocation2 + $0x80] sm:$0xff]
      %v4727 = vld [vmem:[#allocation2 + $0x90] sm:$0xff]
      %v4728 = vld [vmem:[#allocation2 + $0x98] sm:$0xff]
      %v4729 = vld [vmem:[#allocation2 + $0xa8] sm:$0xff]
      %v4730 = vld [vmem:[#allocation2 + $0xb0] sm:$0xff]
      %v4731 = vld [vmem:[#allocation2 + $0xc0] sm:$0xff]
      %v4732 = vld [vmem:[#allocation2 + $0xc8] sm:$0xff]
      %v4733 = vld [vmem:[#allocation2 + $0xd8] sm:$0xff]
      %v4734 = vld [vmem:[#allocation2 + $0xe0] sm:$0xff]
      %v4735 = vld [vmem:[#allocation2 + $0xf0] sm:$0xff]
      %v4736 = vld [vmem:[#allocation2 + $0xf8] sm:$0xff]
      %v4737 = vld [vmem:[#allocation2 + $0x108] sm:$0xff]
      %v4738 = vld [vmem:[#allocation2 + $0x110] sm:$0xff]
      %v4739 = vld [vmem:[#allocation2 + $0x120] sm:$0xff]
      %v4740 = vld [vmem:[#allocation2 + $0x128] sm:$0xff]
      %v4741 = vld [vmem:[#allocation2 + $0x138] sm:$0xff]
      %v4742 = vld [vmem:[#allocation2 + $0x140] sm:$0xff]
      %v4743 = vld [vmem:[#allocation2 + $0x150] sm:$0xff]
      %v4744 = vld [vmem:[#allocation2 + $0x158] sm:$0xff]
      %v4745 = vld [vmem:[#allocation2 + $0x168] sm:$0xff]
      %v4746 = vld [vmem:[#allocation2 + $0x170] sm:$0xff]
      %v4747 = vld [vmem:[#allocation2 + $0x1] sm:$0xff]
      %v4748 = vld [vmem:[#allocation2 + $0x9] sm:$0xff]
      %v4749 = vld [vmem:[#allocation2 + $0x19] sm:$0xff]
      %v4750 = vld [vmem:[#allocation2 + $0x21] sm:$0xff]
      %v4751 = vld [vmem:[#allocation2 + $0x31] sm:$0xff]
      %v4752 = vld [vmem:[#allocation2 + $0x39] sm:$0xff]
      %v4753 = vld [vmem:[#allocation2 + $0x49] sm:$0xff]
      %v4754 = vld [vmem:[#allocation2 + $0x51] sm:$0xff]
      %v4755 = vld [vmem:[#allocation2 + $0x61] sm:$0xff]
      %v4756 = vld [vmem:[#allocation2 + $0x69] sm:$0xff]
      %v4757 = vld [vmem:[#allocation2 + $0x79] sm:$0xff]
      %v4758 = vld [vmem:[#allocation2 + $0x81] sm:$0xff]
      %v4759 = vld [vmem:[#allocation2 + $0x91] sm:$0xff]
      %v4760 = vld [vmem:[#allocation2 + $0x99] sm:$0xff]
      %v4761 = vld [vmem:[#allocation2 + $0xa9] sm:$0xff]
      %v4762 = vld [vmem:[#allocation2 + $0xb1] sm:$0xff]
      %v4763 = vld [vmem:[#allocation2 + $0xc1] sm:$0xff]
      %v4764 = vld [vmem:[#allocation2 + $0xc9] sm:$0xff]
      %v4765 = vld [vmem:[#allocation2 + $0xd9] sm:$0xff]
      %v4766 = vld [vmem:[#allocation2 + $0xe1] sm:$0xff]
      %v4767 = vld [vmem:[#allocation2 + $0xf1] sm:$0xff]
      %v4768 = vld [vmem:[#allocation2 + $0xf9] sm:$0xff]
      %v4769 = vld [vmem:[#allocation2 + $0x109] sm:$0xff]
      %v4770 = vld [vmem:[#allocation2 + $0x111] sm:$0xff]
      %v4771 = vld [vmem:[#allocation2 + $0x121] sm:$0xff]
      %v4772 = vld [vmem:[#allocation2 + $0x129] sm:$0xff]
      %v4773 = vld [vmem:[#allocation2 + $0x139] sm:$0xff]
      %v4774 = vld [vmem:[#allocation2 + $0x141] sm:$0xff]
      %v4775 = vld [vmem:[#allocation2 + $0x151] sm:$0xff]
      %v4776 = vld [vmem:[#allocation2 + $0x159] sm:$0xff]
      %v4777 = vld [vmem:[#allocation2 + $0x169] sm:$0xff]
      %v4778 = vld [vmem:[#allocation2 + $0x171] sm:$0xff]
      %v4779 = vld [vmem:[#allocation2 + $0x2] sm:$0xff]
      %v4780 = vld [vmem:[#allocation2 + $0xa] sm:$0xff]
      %v4781 = vld [vmem:[#allocation2 + $0x1a] sm:$0xff]
      %v4782 = vld [vmem:[#allocation2 + $0x22] sm:$0xff]
      %v4783 = vld [vmem:[#allocation2 + $0x32] sm:$0xff]
      %v4784 = vld [vmem:[#allocation2 + $0x3a] sm:$0xff]
      %v4785 = vld [vmem:[#allocation2 + $0x4a] sm:$0xff]
      %v4786 = vld [vmem:[#allocation2 + $0x52] sm:$0xff]
      %v4787 = vld [vmem:[#allocation2 + $0x62] sm:$0xff]
      %v4788 = vld [vmem:[#allocation2 + $0x6a] sm:$0xff]
      %v4789 = vld [vmem:[#allocation2 + $0x7a] sm:$0xff]
      %v4790 = vld [vmem:[#allocation2 + $0x82] sm:$0xff]
      %v4791 = vld [vmem:[#allocation2 + $0x92] sm:$0xff]
      %v4792 = vld [vmem:[#allocation2 + $0x9a] sm:$0xff]
      %v4793 = vld [vmem:[#allocation2 + $0xaa] sm:$0xff]
      %v4794 = vld [vmem:[#allocation2 + $0xb2] sm:$0xff]
      %v4795 = vld [vmem:[#allocation2 + $0xc2] sm:$0xff]
      %v4796 = vld [vmem:[#allocation2 + $0xca] sm:$0xff]
      %v4797 = vld [vmem:[#allocation2 + $0xda] sm:$0xff]
      %v4798 = vld [vmem:[#allocation2 + $0xe2] sm:$0xff]
      %v4799 = vld [vmem:[#allocation2 + $0xf2] sm:$0xff]
      %v4800 = vld [vmem:[#allocation2 + $0xfa] sm:$0xff]
      %v4801 = vld [vmem:[#allocation2 + $0x10a] sm:$0xff]
      %v4802 = vld [vmem:[#allocation2 + $0x112] sm:$0xff]
      %v4803 = vld [vmem:[#allocation2 + $0x122] sm:$0xff]
      %v4804 = vld [vmem:[#allocation2 + $0x12a] sm:$0xff]
      %v4805 = vld [vmem:[#allocation2 + $0x13a] sm:$0xff]
      %v4806 = vld [vmem:[#allocation2 + $0x142] sm:$0xff]
      %v4807 = vld [vmem:[#allocation2 + $0x152] sm:$0xff]
      %v4808 = vld [vmem:[#allocation2 + $0x15a] sm:$0xff]
      %v4809 = vld [vmem:[#allocation2 + $0x16a] sm:$0xff]
      %v4810 = vld [vmem:[#allocation2 + $0x172] sm:$0xff]
      %v4811 = vld [vmem:[%s289] sm:$0xff]
      %v4812 = vld [vmem:[%s289 + $0x8] sm:$0xff]
      %v4813 = vld [vmem:[%s289 + $0x18] sm:$0xff]
      %v4814 = vld [vmem:[%s289 + $0x20] sm:$0xff]
      %v4815 = vld [vmem:[%s289 + $0x30] sm:$0xff]
      %v4816 = vld [vmem:[%s289 + $0x38] sm:$0xff]
      %v4817 = vld [vmem:[%s289 + $0x48] sm:$0xff]
      %v4818 = vld [vmem:[%s289 + $0x50] sm:$0xff]
      %v4819 = vld [vmem:[%s289 + $0x60] sm:$0xff]
      %v4820 = vld [vmem:[%s289 + $0x68] sm:$0xff]
      %v4821 = vld [vmem:[%s289 + $0x78] sm:$0xff]
      %v4822 = vld [vmem:[%s289 + $0x80] sm:$0xff]
      %v4823 = vld [vmem:[%s289 + $0x90] sm:$0xff]
      %v4824 = vld [vmem:[%s289 + $0x98] sm:$0xff]
      %v4825 = vld [vmem:[%s289 + $0xa8] sm:$0xff]
      %v4826 = vld [vmem:[%s289 + $0xb0] sm:$0xff]
      %v4827 = vld [vmem:[%s289 + $0xc0] sm:$0xff]
      %v4828 = vld [vmem:[%s289 + $0xc8] sm:$0xff]
      %v4829 = vld [vmem:[%s289 + $0xd8] sm:$0xff]
      %v4830 = vld [vmem:[%s289 + $0xe0] sm:$0xff]
      %v4831 = vld [vmem:[%s289 + $0xf0] sm:$0xff]
      %v4832 = vld [vmem:[%s289 + $0xf8] sm:$0xff]
      %v4833 = vld [vmem:[%s289 + $0x108] sm:$0xff]
      %v4834 = vld [vmem:[%s289 + $0x110] sm:$0xff]
      %v4835 = vld [vmem:[%s289 + $0x120] sm:$0xff]
      %v4836 = vld [vmem:[%s289 + $0x128] sm:$0xff]
      %v4837 = vld [vmem:[%s289 + $0x138] sm:$0xff]
      %v4838 = vld [vmem:[%s289 + $0x140] sm:$0xff]
      %v4839 = vld [vmem:[%s289 + $0x150] sm:$0xff]
      %v4840 = vld [vmem:[%s289 + $0x158] sm:$0xff]
      %v4841 = vld [vmem:[%s289 + $0x168] sm:$0xff]
      %v4842 = vld [vmem:[%s289 + $0x170] sm:$0xff]
      %v4843 = vld [vmem:[%s289 + $0x1] sm:$0xff]
      %v4844 = vld [vmem:[%s289 + $0x9] sm:$0xff]
      %v4845 = vld [vmem:[%s289 + $0x19] sm:$0xff]
      %v4846 = vld [vmem:[%s289 + $0x21] sm:$0xff]
      %v4847 = vld [vmem:[%s289 + $0x31] sm:$0xff]
      %v4848 = vld [vmem:[%s289 + $0x39] sm:$0xff]
      %v4849 = vld [vmem:[%s289 + $0x49] sm:$0xff]
      %v4850 = vld [vmem:[%s289 + $0x51] sm:$0xff]
      %v4851 = vld [vmem:[%s289 + $0x61] sm:$0xff]
      %v4852 = vld [vmem:[%s289 + $0x69] sm:$0xff]
      %v4853 = vld [vmem:[%s289 + $0x79] sm:$0xff]
      %v4854 = vld [vmem:[%s289 + $0x81] sm:$0xff]
      %v4855 = vld [vmem:[%s289 + $0x91] sm:$0xff]
      %v4856 = vld [vmem:[%s289 + $0x99] sm:$0xff]
      %v4857 = vld [vmem:[%s289 + $0xa9] sm:$0xff]
      %v4858 = vld [vmem:[%s289 + $0xb1] sm:$0xff]
      %v4859 = vld [vmem:[%s289 + $0xc1] sm:$0xff]
      %v4860 = vld [vmem:[%s289 + $0xc9] sm:$0xff]
      %v4861 = vld [vmem:[%s289 + $0xd9] sm:$0xff]
      %v4862 = vld [vmem:[%s289 + $0xe1] sm:$0xff]
      %v4863 = vld [vmem:[%s289 + $0xf1] sm:$0xff]
      %v4864 = vld [vmem:[%s289 + $0xf9] sm:$0xff]
      %v4865 = vld [vmem:[%s289 + $0x109] sm:$0xff]
      %v4866 = vld [vmem:[%s289 + $0x111] sm:$0xff]
      %v4867 = vld [vmem:[%s289 + $0x121] sm:$0xff]
      %v4868 = vld [vmem:[%s289 + $0x129] sm:$0xff]
      %v4869 = vld [vmem:[%s289 + $0x139] sm:$0xff]
      %v4870 = vld [vmem:[%s289 + $0x141] sm:$0xff]
      %v4871 = vld [vmem:[%s289 + $0x151] sm:$0xff]
      %v4872 = vld [vmem:[%s289 + $0x159] sm:$0xff]
      %v4873 = vld [vmem:[%s289 + $0x169] sm:$0xff]
      %v4874 = vld [vmem:[%s289 + $0x171] sm:$0xff]
      %v4875 = vld [vmem:[%s289 + $0x2] sm:$0xff]
      %v4876 = vld [vmem:[%s289 + $0xa] sm:$0xff]
      %v4877 = vld [vmem:[%s289 + $0x1a] sm:$0xff]
      %v4878 = vld [vmem:[%s289 + $0x22] sm:$0xff]
      %v4879 = vld [vmem:[%s289 + $0x32] sm:$0xff]
      %v4880 = vld [vmem:[%s289 + $0x3a] sm:$0xff]
      %v4881 = vld [vmem:[%s289 + $0x4a] sm:$0xff]
      %v4882 = vld [vmem:[%s289 + $0x52] sm:$0xff]
      %v4883 = vld [vmem:[%s289 + $0x62] sm:$0xff]
      %v4884 = vld [vmem:[%s289 + $0x6a] sm:$0xff]
      %v4885 = vld [vmem:[%s289 + $0x7a] sm:$0xff]
      %v4886 = vld [vmem:[%s289 + $0x82] sm:$0xff]
      %v4887 = vld [vmem:[%s289 + $0x92] sm:$0xff]
      %v4888 = vld [vmem:[%s289 + $0x9a] sm:$0xff]
      %v4889 = vld [vmem:[%s289 + $0xaa] sm:$0xff]
      %v4890 = vld [vmem:[%s289 + $0xb2] sm:$0xff]
      %v4891 = vld [vmem:[%s289 + $0xc2] sm:$0xff]
      %v4892 = vld [vmem:[%s289 + $0xca] sm:$0xff]
      %v4893 = vld [vmem:[%s289 + $0xda] sm:$0xff]
      %v4894 = vld [vmem:[%s289 + $0xe2] sm:$0xff]
      %v4895 = vld [vmem:[%s289 + $0xf2] sm:$0xff]
      %v4896 = vld [vmem:[%s289 + $0xfa] sm:$0xff]
      %v4897 = vld [vmem:[%s289 + $0x10a] sm:$0xff]
      %v4898 = vld [vmem:[%s289 + $0x112] sm:$0xff]
      %v4899 = vld [vmem:[%s289 + $0x122] sm:$0xff]
      %v4900 = vld [vmem:[%s289 + $0x12a] sm:$0xff]
      %v4901 = vld [vmem:[%s289 + $0x13a] sm:$0xff]
      %v4902 = vld [vmem:[%s289 + $0x142] sm:$0xff]
      %v4903 = vld [vmem:[%s289 + $0x152] sm:$0xff]
      %v4904 = vld [vmem:[%s289 + $0x15a] sm:$0xff]
      %v4905 = vld [vmem:[%s289 + $0x16a] sm:$0xff]
      %v4906 = vld [vmem:[%s289 + $0x172] sm:$0xff]
      %v4907 = vld [vmem:[%s515] sm:$0xff]
      %v4908 = vld [vmem:[%s515 + $0x8] sm:$0xff]
      %v4909 = vld [vmem:[%s515 + $0x18] sm:$0xff]
      %v4910 = vld [vmem:[%s515 + $0x20] sm:$0xff]
      %v4911 = vld [vmem:[%s515 + $0x30] sm:$0xff]
      %v4912 = vld [vmem:[%s515 + $0x38] sm:$0xff]
      %v4913 = vld [vmem:[%s515 + $0x48] sm:$0xff]
      %v4914 = vld [vmem:[%s515 + $0x50] sm:$0xff]
      %v4915 = vld [vmem:[%s515 + $0x60] sm:$0xff]
      %v4916 = vld [vmem:[%s515 + $0x68] sm:$0xff]
      %v4917 = vld [vmem:[%s515 + $0x78] sm:$0xff]
      %v4918 = vld [vmem:[%s515 + $0x80] sm:$0xff]
      %v4919 = vld [vmem:[%s515 + $0x90] sm:$0xff]
      %v4920 = vld [vmem:[%s515 + $0x98] sm:$0xff]
      %v4921 = vld [vmem:[%s515 + $0xa8] sm:$0xff]
      %v4922 = vld [vmem:[%s515 + $0xb0] sm:$0xff]
      %v4923 = vld [vmem:[%s515 + $0xc0] sm:$0xff]
      %v4924 = vld [vmem:[%s515 + $0xc8] sm:$0xff]
      %v4925 = vld [vmem:[%s515 + $0xd8] sm:$0xff]
      %v4926 = vld [vmem:[%s515 + $0xe0] sm:$0xff]
      %v4927 = vld [vmem:[%s515 + $0xf0] sm:$0xff]
      %v4928 = vld [vmem:[%s515 + $0xf8] sm:$0xff]
      %v4929 = vld [vmem:[%s515 + $0x108] sm:$0xff]
      %v4930 = vld [vmem:[%s515 + $0x110] sm:$0xff]
      %v4931 = vld [vmem:[%s515 + $0x120] sm:$0xff]
      %v4932 = vld [vmem:[%s515 + $0x128] sm:$0xff]
      %v4933 = vld [vmem:[%s515 + $0x138] sm:$0xff]
      %v4934 = vld [vmem:[%s515 + $0x140] sm:$0xff]
      %v4935 = vld [vmem:[%s515 + $0x150] sm:$0xff]
      %v4936 = vld [vmem:[%s515 + $0x158] sm:$0xff]
      %v4937 = vld [vmem:[%s515 + $0x168] sm:$0xff]
      %v4938 = vld [vmem:[%s515 + $0x170] sm:$0xff]
      %v4939 = vld [vmem:[%s515 + $0x1] sm:$0xff]
      %v4940 = vld [vmem:[%s515 + $0x9] sm:$0xff]
      %v4941 = vld [vmem:[%s515 + $0x19] sm:$0xff]
      %v4942 = vld [vmem:[%s515 + $0x21] sm:$0xff]
      %v4943 = vld [vmem:[%s515 + $0x31] sm:$0xff]
      %v4944 = vld [vmem:[%s515 + $0x39] sm:$0xff]
      %v4945 = vld [vmem:[%s515 + $0x49] sm:$0xff]
      %v4946 = vld [vmem:[%s515 + $0x51] sm:$0xff]
      %v4947 = vld [vmem:[%s515 + $0x61] sm:$0xff]
      %v4948 = vld [vmem:[%s515 + $0x69] sm:$0xff]
      %v4949 = vld [vmem:[%s515 + $0x79] sm:$0xff]
      %v4950 = vld [vmem:[%s515 + $0x81] sm:$0xff]
      %v4951 = vld [vmem:[%s515 + $0x91] sm:$0xff]
      %v4952 = vld [vmem:[%s515 + $0x99] sm:$0xff]
      %v4953 = vld [vmem:[%s515 + $0xa9] sm:$0xff]
      %v4954 = vld [vmem:[%s515 + $0xb1] sm:$0xff]
      %v4955 = vld [vmem:[%s515 + $0xc1] sm:$0xff]
      %v4956 = vld [vmem:[%s515 + $0xc9] sm:$0xff]
      %v4957 = vld [vmem:[%s515 + $0xd9] sm:$0xff]
      %v4958 = vld [vmem:[%s515 + $0xe1] sm:$0xff]
      %v4959 = vld [vmem:[%s515 + $0xf1] sm:$0xff]
      %v4960 = vld [vmem:[%s515 + $0xf9] sm:$0xff]
      %v4961 = vld [vmem:[%s515 + $0x109] sm:$0xff]
      %v4962 = vld [vmem:[%s515 + $0x111] sm:$0xff]
      %v4963 = vld [vmem:[%s515 + $0x121] sm:$0xff]
      %v4964 = vld [vmem:[%s515 + $0x129] sm:$0xff]
      %v4965 = vld [vmem:[%s515 + $0x139] sm:$0xff]
      %v4966 = vld [vmem:[%s515 + $0x141] sm:$0xff]
      %v4967 = vld [vmem:[%s515 + $0x151] sm:$0xff]
      %v4968 = vld [vmem:[%s515 + $0x159] sm:$0xff]
      %v4969 = vld [vmem:[%s515 + $0x169] sm:$0xff]
      %v4970 = vld [vmem:[%s515 + $0x171] sm:$0xff]
      %v4971 = vld [vmem:[%s515 + $0x2] sm:$0xff]
      %v4972 = vld [vmem:[%s515 + $0xa] sm:$0xff]
      %v4973 = vld [vmem:[%s515 + $0x1a] sm:$0xff]
      %v4974 = vld [vmem:[%s515 + $0x22] sm:$0xff]
      %v4975 = vld [vmem:[%s515 + $0x32] sm:$0xff]
      %v4976 = vld [vmem:[%s515 + $0x3a] sm:$0xff]
      %v4977 = vld [vmem:[%s515 + $0x4a] sm:$0xff]
      %v4978 = vld [vmem:[%s515 + $0x52] sm:$0xff]
      %v4979 = vld [vmem:[%s515 + $0x62] sm:$0xff]
      %v4980 = vld [vmem:[%s515 + $0x6a] sm:$0xff]
      %v4981 = vld [vmem:[%s515 + $0x7a] sm:$0xff]
      %v4982 = vld [vmem:[%s515 + $0x82] sm:$0xff]
      %v4983 = vld [vmem:[%s515 + $0x92] sm:$0xff]
      %v4984 = vld [vmem:[%s515 + $0x9a] sm:$0xff]
      %v4985 = vld [vmem:[%s515 + $0xaa] sm:$0xff]
      %v4986 = vld [vmem:[%s515 + $0xb2] sm:$0xff]
      %v4987 = vld [vmem:[%s515 + $0xc2] sm:$0xff]
      %v4988 = vld [vmem:[%s515 + $0xca] sm:$0xff]
      %v4989 = vld [vmem:[%s515 + $0xda] sm:$0xff]
      %v4990 = vld [vmem:[%s515 + $0xe2] sm:$0xff]
      %v4991 = vld [vmem:[%s515 + $0xf2] sm:$0xff]
      %v4992 = vld [vmem:[%s515 + $0xfa] sm:$0xff]
      %v4993 = vld [vmem:[%s515 + $0x10a] sm:$0xff]
      %v4994 = vld [vmem:[%s515 + $0x112] sm:$0xff]
      %v4995 = vld [vmem:[%s515 + $0x122] sm:$0xff]
      %v4996 = vld [vmem:[%s515 + $0x12a] sm:$0xff]
      %v4997 = vld [vmem:[%s515 + $0x13a] sm:$0xff]
      %v4998 = vld [vmem:[%s515 + $0x142] sm:$0xff]
      %v4999 = vld [vmem:[%s515 + $0x152] sm:$0xff]
      %v5000 = vld [vmem:[%s515 + $0x15a] sm:$0xff]
      %v5001 = vld [vmem:[%s515 + $0x16a] sm:$0xff]
      %v5002 = vld [vmem:[%s515 + $0x172] sm:$0xff]
      %5035 = vrot.lane.b32.xlu0 %v4747, 64
      %v5036 = vpop.permute.xlu0 %5035
      %5037 = vrot.lane.b32.xlu0 %v4748, 64
      %v5038 = vpop.permute.xlu0 %5037
      %5039 = vrot.lane.b32.xlu0 %v4749, 64
      %v5040 = vpop.permute.xlu0 %5039
      %5041 = vrot.lane.b32.xlu0 %v4750, 64
      %v5042 = vpop.permute.xlu0 %5041
      %5043 = vrot.lane.b32.xlu0 %v4751, 64
      %v5044 = vpop.permute.xlu0 %5043
      %5045 = vrot.lane.b32.xlu0 %v4752, 64
      %v5046 = vpop.permute.xlu0 %5045
      %5047 = vrot.lane.b32.xlu0 %v4753, 64
      %v5048 = vpop.permute.xlu0 %5047
      %5049 = vrot.lane.b32.xlu0 %v4754, 64
      %v5050 = vpop.permute.xlu0 %5049
      %5051 = vrot.lane.b32.xlu0 %v4755, 64
      %v5052 = vpop.permute.xlu0 %5051
      %5053 = vrot.lane.b32.xlu0 %v4756, 64
      %v5054 = vpop.permute.xlu0 %5053
      %5055 = vrot.lane.b32.xlu0 %v4757, 64
      %v5056 = vpop.permute.xlu0 %5055
      %5057 = vrot.lane.b32.xlu0 %v4758, 64
      %v5058 = vpop.permute.xlu0 %5057
      %5059 = vrot.lane.b32.xlu0 %v4759, 64
      %v5060 = vpop.permute.xlu0 %5059
      %5061 = vrot.lane.b32.xlu0 %v4760, 64
      %v5062 = vpop.permute.xlu0 %5061
      %5063 = vrot.lane.b32.xlu0 %v4761, 64
      %v5064 = vpop.permute.xlu0 %5063
      %5065 = vrot.lane.b32.xlu0 %v4762, 64
      %v5066 = vpop.permute.xlu0 %5065
      %5067 = vrot.lane.b32.xlu0 %v4763, 64
      %v5068 = vpop.permute.xlu0 %5067
      %5069 = vrot.lane.b32.xlu0 %v4764, 64
      %v5070 = vpop.permute.xlu0 %5069
      %5071 = vrot.lane.b32.xlu0 %v4765, 64
      %v5072 = vpop.permute.xlu0 %5071
      %5073 = vrot.lane.b32.xlu0 %v4766, 64
      %v5074 = vpop.permute.xlu0 %5073
      %5075 = vrot.lane.b32.xlu0 %v4767, 64
      %v5076 = vpop.permute.xlu0 %5075
      %5077 = vrot.lane.b32.xlu0 %v4768, 64
      %v5078 = vpop.permute.xlu0 %5077
      %5079 = vrot.lane.b32.xlu0 %v4769, 64
      %v5080 = vpop.permute.xlu0 %5079
      %5081 = vrot.lane.b32.xlu0 %v4770, 64
      %v5082 = vpop.permute.xlu0 %5081
      %5083 = vrot.lane.b32.xlu0 %v4771, 64
      %v5084 = vpop.permute.xlu0 %5083
      %5085 = vrot.lane.b32.xlu0 %v4772, 64
      %v5086 = vpop.permute.xlu0 %5085
      %5087 = vrot.lane.b32.xlu0 %v4773, 64
      %v5088 = vpop.permute.xlu0 %5087
      %5089 = vrot.lane.b32.xlu0 %v4774, 64
      %v5090 = vpop.permute.xlu0 %5089
      %5091 = vrot.lane.b32.xlu0 %v4775, 64
      %v5092 = vpop.permute.xlu0 %5091
      %5093 = vrot.lane.b32.xlu0 %v4776, 64
      %v5094 = vpop.permute.xlu0 %5093
      %5095 = vrot.lane.b32.xlu0 %v4777, 64
      %v5096 = vpop.permute.xlu0 %5095
      %5097 = vrot.lane.b32.xlu0 %v4778, 64
      %v5098 = vpop.permute.xlu0 %5097
      %5163 = vrot.lane.b32.xlu0 %v4811, 64
      %v5164 = vpop.permute.xlu0 %5163
      %5165 = vrot.lane.b32.xlu0 %v4812, 64
      %v5166 = vpop.permute.xlu0 %5165
      %5167 = vrot.lane.b32.xlu0 %v4813, 64
      %v5168 = vpop.permute.xlu0 %5167
      %5169 = vrot.lane.b32.xlu0 %v4814, 64
      %v5170 = vpop.permute.xlu0 %5169
      %5171 = vrot.lane.b32.xlu0 %v4815, 64
      %v5172 = vpop.permute.xlu0 %5171
      %5173 = vrot.lane.b32.xlu0 %v4816, 64
      %v5174 = vpop.permute.xlu0 %5173
      %5175 = vrot.lane.b32.xlu0 %v4817, 64
      %v5176 = vpop.permute.xlu0 %5175
      %5177 = vrot.lane.b32.xlu0 %v4818, 64
      %v5178 = vpop.permute.xlu0 %5177
      %5179 = vrot.lane.b32.xlu0 %v4819, 64
      %v5180 = vpop.permute.xlu0 %5179
      %5181 = vrot.lane.b32.xlu0 %v4820, 64
      %v5182 = vpop.permute.xlu0 %5181
      %5183 = vrot.lane.b32.xlu0 %v4821, 64
      %v5184 = vpop.permute.xlu0 %5183
      %5185 = vrot.lane.b32.xlu0 %v4822, 64
      %v5186 = vpop.permute.xlu0 %5185
      %5187 = vrot.lane.b32.xlu0 %v4823, 64
      %v5188 = vpop.permute.xlu0 %5187
      %5189 = vrot.lane.b32.xlu0 %v4824, 64
      %v5190 = vpop.permute.xlu0 %5189
      %5191 = vrot.lane.b32.xlu0 %v4825, 64
      %v5192 = vpop.permute.xlu0 %5191
      %5193 = vrot.lane.b32.xlu0 %v4826, 64
      %v5194 = vpop.permute.xlu0 %5193
      %5195 = vrot.lane.b32.xlu0 %v4827, 64
      %v5196 = vpop.permute.xlu0 %5195
      %5197 = vrot.lane.b32.xlu0 %v4828, 64
      %v5198 = vpop.permute.xlu0 %5197
      %5199 = vrot.lane.b32.xlu0 %v4829, 64
      %v5200 = vpop.permute.xlu0 %5199
      %5201 = vrot.lane.b32.xlu0 %v4830, 64
      %v5202 = vpop.permute.xlu0 %5201
      %5203 = vrot.lane.b32.xlu0 %v4831, 64
      %v5204 = vpop.permute.xlu0 %5203
      %5205 = vrot.lane.b32.xlu0 %v4832, 64
      %v5206 = vpop.permute.xlu0 %5205
      %5207 = vrot.lane.b32.xlu0 %v4833, 64
      %v5208 = vpop.permute.xlu0 %5207
      %5209 = vrot.lane.b32.xlu0 %v4834, 64
      %v5210 = vpop.permute.xlu0 %5209
      %5211 = vrot.lane.b32.xlu0 %v4835, 64
      %v5212 = vpop.permute.xlu0 %5211
      %5213 = vrot.lane.b32.xlu0 %v4836, 64
      %v5214 = vpop.permute.xlu0 %5213
      %5215 = vrot.lane.b32.xlu0 %v4837, 64
      %v5216 = vpop.permute.xlu0 %5215
      %5217 = vrot.lane.b32.xlu0 %v4838, 64
      %v5218 = vpop.permute.xlu0 %5217
      %5219 = vrot.lane.b32.xlu0 %v4839, 64
      %v5220 = vpop.permute.xlu0 %5219
      %5221 = vrot.lane.b32.xlu0 %v4840, 64
      %v5222 = vpop.permute.xlu0 %5221
      %5223 = vrot.lane.b32.xlu0 %v4841, 64
      %v5224 = vpop.permute.xlu0 %5223
      %5225 = vrot.lane.b32.xlu0 %v4842, 64
      %v5226 = vpop.permute.xlu0 %5225
      %5291 = vrot.lane.b32.xlu0 %v4875, 64
      %v5292 = vpop.permute.xlu0 %5291
      %5293 = vrot.lane.b32.xlu0 %v4876, 64
      %v5294 = vpop.permute.xlu0 %5293
      %5295 = vrot.lane.b32.xlu0 %v4877, 64
      %v5296 = vpop.permute.xlu0 %5295
      %5297 = vrot.lane.b32.xlu0 %v4878, 64
      %v5298 = vpop.permute.xlu0 %5297
      %5299 = vrot.lane.b32.xlu0 %v4879, 64
      %v5300 = vpop.permute.xlu0 %5299
      %5301 = vrot.lane.b32.xlu0 %v4880, 64
      %v5302 = vpop.permute.xlu0 %5301
      %5303 = vrot.lane.b32.xlu0 %v4881, 64
      %v5304 = vpop.permute.xlu0 %5303
      %5305 = vrot.lane.b32.xlu0 %v4882, 64
      %v5306 = vpop.permute.xlu0 %5305
      %5307 = vrot.lane.b32.xlu0 %v4883, 64
      %v5308 = vpop.permute.xlu0 %5307
      %5309 = vrot.lane.b32.xlu0 %v4884, 64
      %v5310 = vpop.permute.xlu0 %5309
      %5311 = vrot.lane.b32.xlu0 %v4885, 64
      %v5312 = vpop.permute.xlu0 %5311
      %5313 = vrot.lane.b32.xlu0 %v4886, 64
      %v5314 = vpop.permute.xlu0 %5313
      %5315 = vrot.lane.b32.xlu0 %v4887, 64
      %v5316 = vpop.permute.xlu0 %5315
      %5317 = vrot.lane.b32.xlu0 %v4888, 64
      %v5318 = vpop.permute.xlu0 %5317
      %5319 = vrot.lane.b32.xlu0 %v4889, 64
      %v5320 = vpop.permute.xlu0 %5319
      %5321 = vrot.lane.b32.xlu0 %v4890, 64
      %v5322 = vpop.permute.xlu0 %5321
      %5323 = vrot.lane.b32.xlu0 %v4891, 64
      %v5324 = vpop.permute.xlu0 %5323
      %5325 = vrot.lane.b32.xlu0 %v4892, 64
      %v5326 = vpop.permute.xlu0 %5325
      %5327 = vrot.lane.b32.xlu0 %v4893, 64
      %v5328 = vpop.permute.xlu0 %5327
      %5329 = vrot.lane.b32.xlu0 %v4894, 64
      %v5330 = vpop.permute.xlu0 %5329
      %5331 = vrot.lane.b32.xlu0 %v4895, 64
      %v5332 = vpop.permute.xlu0 %5331
      %5333 = vrot.lane.b32.xlu0 %v4896, 64
      %v5334 = vpop.permute.xlu0 %5333
      %5335 = vrot.lane.b32.xlu0 %v4897, 64
      %v5336 = vpop.permute.xlu0 %5335
      %5337 = vrot.lane.b32.xlu0 %v4898, 64
      %v5338 = vpop.permute.xlu0 %5337
      %5339 = vrot.lane.b32.xlu0 %v4899, 64
      %v5340 = vpop.permute.xlu0 %5339
      %5341 = vrot.lane.b32.xlu0 %v4900, 64
      %v5342 = vpop.permute.xlu0 %5341
      %5343 = vrot.lane.b32.xlu0 %v4901, 64
      %v5344 = vpop.permute.xlu0 %5343
      %5345 = vrot.lane.b32.xlu0 %v4902, 64
      %v5346 = vpop.permute.xlu0 %5345
      %5347 = vrot.lane.b32.xlu0 %v4903, 64
      %v5348 = vpop.permute.xlu0 %5347
      %5349 = vrot.lane.b32.xlu0 %v4904, 64
      %v5350 = vpop.permute.xlu0 %5349
      %5351 = vrot.lane.b32.xlu0 %v4905, 64
      %v5352 = vpop.permute.xlu0 %5351
      %5353 = vrot.lane.b32.xlu0 %v4906, 64
      %v5354 = vpop.permute.xlu0 %5353
      %5419 = vrot.lane.b32.xlu0 %v4939, 64
      %v5420 = vpop.permute.xlu0 %5419
      %5421 = vrot.lane.b32.xlu0 %v4940, 64
      %v5422 = vpop.permute.xlu0 %5421
      %5423 = vrot.lane.b32.xlu0 %v4941, 64
      %v5424 = vpop.permute.xlu0 %5423
      %5425 = vrot.lane.b32.xlu0 %v4942, 64
      %v5426 = vpop.permute.xlu0 %5425
      %5427 = vrot.lane.b32.xlu0 %v4943, 64
      %v5428 = vpop.permute.xlu0 %5427
      %5429 = vrot.lane.b32.xlu0 %v4944, 64
      %v5430 = vpop.permute.xlu0 %5429
      %5431 = vrot.lane.b32.xlu0 %v4945, 64
      %v5432 = vpop.permute.xlu0 %5431
      %5433 = vrot.lane.b32.xlu0 %v4946, 64
      %v5434 = vpop.permute.xlu0 %5433
      %5435 = vrot.lane.b32.xlu0 %v4947, 64
      %v5436 = vpop.permute.xlu0 %5435
      %5437 = vrot.lane.b32.xlu0 %v4948, 64
      %v5438 = vpop.permute.xlu0 %5437
      %5439 = vrot.lane.b32.xlu0 %v4949, 64
      %v5440 = vpop.permute.xlu0 %5439
      %5441 = vrot.lane.b32.xlu0 %v4950, 64
      %v5442 = vpop.permute.xlu0 %5441
      %5443 = vrot.lane.b32.xlu0 %v4951, 64
      %v5444 = vpop.permute.xlu0 %5443
      %5445 = vrot.lane.b32.xlu0 %v4952, 64
      %v5446 = vpop.permute.xlu0 %5445
      %5447 = vrot.lane.b32.xlu0 %v4953, 64
      %v5448 = vpop.permute.xlu0 %5447
      %5449 = vrot.lane.b32.xlu0 %v4954, 64
      %v5450 = vpop.permute.xlu0 %5449
      %5451 = vrot.lane.b32.xlu0 %v4955, 64
      %v5452 = vpop.permute.xlu0 %5451
      %5453 = vrot.lane.b32.xlu0 %v4956, 64
      %v5454 = vpop.permute.xlu0 %5453
      %5455 = vrot.lane.b32.xlu0 %v4957, 64
      %v5456 = vpop.permute.xlu0 %5455
      %5457 = vrot.lane.b32.xlu0 %v4958, 64
      %v5458 = vpop.permute.xlu0 %5457
      %5459 = vrot.lane.b32.xlu0 %v4959, 64
      %v5460 = vpop.permute.xlu0 %5459
      %5461 = vrot.lane.b32.xlu0 %v4960, 64
      %v5462 = vpop.permute.xlu0 %5461
      %5463 = vrot.lane.b32.xlu0 %v4961, 64
      %v5464 = vpop.permute.xlu0 %5463
      %5465 = vrot.lane.b32.xlu0 %v4962, 64
      %v5466 = vpop.permute.xlu0 %5465
      %5467 = vrot.lane.b32.xlu0 %v4963, 64
      %v5468 = vpop.permute.xlu0 %5467
      %5469 = vrot.lane.b32.xlu0 %v4964, 64
      %v5470 = vpop.permute.xlu0 %5469
      %5471 = vrot.lane.b32.xlu0 %v4965, 64
      %v5472 = vpop.permute.xlu0 %5471
      %5473 = vrot.lane.b32.xlu0 %v4966, 64
      %v5474 = vpop.permute.xlu0 %5473
      %5475 = vrot.lane.b32.xlu0 %v4967, 64
      %v5476 = vpop.permute.xlu0 %5475
      %5477 = vrot.lane.b32.xlu0 %v4968, 64
      %v5478 = vpop.permute.xlu0 %5477
      %5479 = vrot.lane.b32.xlu0 %v4969, 64
      %v5480 = vpop.permute.xlu0 %5479
      %5481 = vrot.lane.b32.xlu0 %v4970, 64
      %v5482 = vpop.permute.xlu0 %5481
      %v5515 = vsel %vm201, %v4715, %v5036
      %v5516 = vsel %vm201, %v4716, %v5038
      %v5517 = vsel %vm201, %v4717, %v5040
      %v5518 = vsel %vm201, %v4718, %v5042
      %v5519 = vsel %vm201, %v4719, %v5044
      %v5520 = vsel %vm201, %v4720, %v5046
      %v5521 = vsel %vm201, %v4721, %v5048
      %v5522 = vsel %vm201, %v4722, %v5050
      %v5523 = vsel %vm201, %v4723, %v5052
      %v5524 = vsel %vm201, %v4724, %v5054
      %v5525 = vsel %vm201, %v4725, %v5056
      %v5526 = vsel %vm201, %v4726, %v5058
      %v5527 = vsel %vm201, %v4727, %v5060
      %v5528 = vsel %vm201, %v4728, %v5062
      %v5529 = vsel %vm201, %v4729, %v5064
      %v5530 = vsel %vm201, %v4730, %v5066
      %v5531 = vsel %vm201, %v4731, %v5068
      %v5532 = vsel %vm201, %v4732, %v5070
      %v5533 = vsel %vm201, %v4733, %v5072
      %v5534 = vsel %vm201, %v4734, %v5074
      %v5535 = vsel %vm201, %v4735, %v5076
      %v5536 = vsel %vm201, %v4736, %v5078
      %v5537 = vsel %vm201, %v4737, %v5080
      %v5538 = vsel %vm201, %v4738, %v5082
      %v5539 = vsel %vm201, %v4739, %v5084
      %v5540 = vsel %vm201, %v4740, %v5086
      %v5541 = vsel %vm201, %v4741, %v5088
      %v5542 = vsel %vm201, %v4742, %v5090
      %v5543 = vsel %vm201, %v4743, %v5092
      %v5544 = vsel %vm201, %v4744, %v5094
      %v5545 = vsel %vm201, %v4745, %v5096
      %v5546 = vsel %vm201, %v4746, %v5098
      %v5547 = vsel %vm201, %v4779, %v5164
      %v5548 = vsel %vm201, %v4780, %v5166
      %v5549 = vsel %vm201, %v4781, %v5168
      %v5550 = vsel %vm201, %v4782, %v5170
      %v5551 = vsel %vm201, %v4783, %v5172
      %v5552 = vsel %vm201, %v4784, %v5174
      %v5553 = vsel %vm201, %v4785, %v5176
      %v5554 = vsel %vm201, %v4786, %v5178
      %v5555 = vsel %vm201, %v4787, %v5180
      %v5556 = vsel %vm201, %v4788, %v5182
      %v5557 = vsel %vm201, %v4789, %v5184
      %v5558 = vsel %vm201, %v4790, %v5186
      %v5559 = vsel %vm201, %v4791, %v5188
      %v5560 = vsel %vm201, %v4792, %v5190
      %v5561 = vsel %vm201, %v4793, %v5192
      %v5562 = vsel %vm201, %v4794, %v5194
      %v5563 = vsel %vm201, %v4795, %v5196
      %v5564 = vsel %vm201, %v4796, %v5198
      %v5565 = vsel %vm201, %v4797, %v5200
      %v5566 = vsel %vm201, %v4798, %v5202
      %v5567 = vsel %vm201, %v4799, %v5204
      %v5568 = vsel %vm201, %v4800, %v5206
      %v5569 = vsel %vm201, %v4801, %v5208
      %v5570 = vsel %vm201, %v4802, %v5210
      %v5571 = vsel %vm201, %v4803, %v5212
      %v5572 = vsel %vm201, %v4804, %v5214
      %v5573 = vsel %vm201, %v4805, %v5216
      %v5574 = vsel %vm201, %v4806, %v5218
      %v5575 = vsel %vm201, %v4807, %v5220
      %v5576 = vsel %vm201, %v4808, %v5222
      %v5577 = vsel %vm201, %v4809, %v5224
      %v5578 = vsel %vm201, %v4810, %v5226
      %v5579 = vsel %vm201, %v4843, %v5292
      %v5580 = vsel %vm201, %v4844, %v5294
      %v5581 = vsel %vm201, %v4845, %v5296
      %v5582 = vsel %vm201, %v4846, %v5298
      %v5583 = vsel %vm201, %v4847, %v5300
      %v5584 = vsel %vm201, %v4848, %v5302
      %v5585 = vsel %vm201, %v4849, %v5304
      %v5586 = vsel %vm201, %v4850, %v5306
      %v5587 = vsel %vm201, %v4851, %v5308
      %v5588 = vsel %vm201, %v4852, %v5310
      %v5589 = vsel %vm201, %v4853, %v5312
      %v5590 = vsel %vm201, %v4854, %v5314
      %v5591 = vsel %vm201, %v4855, %v5316
      %v5592 = vsel %vm201, %v4856, %v5318
      %v5593 = vsel %vm201, %v4857, %v5320
      %v5594 = vsel %vm201, %v4858, %v5322
      %v5595 = vsel %vm201, %v4859, %v5324
      %v5596 = vsel %vm201, %v4860, %v5326
      %v5597 = vsel %vm201, %v4861, %v5328
      %v5598 = vsel %vm201, %v4862, %v5330
      %v5599 = vsel %vm201, %v4863, %v5332
      %v5600 = vsel %vm201, %v4864, %v5334
      %v5601 = vsel %vm201, %v4865, %v5336
      %v5602 = vsel %vm201, %v4866, %v5338
      %v5603 = vsel %vm201, %v4867, %v5340
      %v5604 = vsel %vm201, %v4868, %v5342
      %v5605 = vsel %vm201, %v4869, %v5344
      %v5606 = vsel %vm201, %v4870, %v5346
      %v5607 = vsel %vm201, %v4871, %v5348
      %v5608 = vsel %vm201, %v4872, %v5350
      %v5609 = vsel %vm201, %v4873, %v5352
      %v5610 = vsel %vm201, %v4874, %v5354
      %v5611 = vsel %vm201, %v4907, %v5420
      %v5612 = vsel %vm201, %v4908, %v5422
      %v5613 = vsel %vm201, %v4909, %v5424
      %v5614 = vsel %vm201, %v4910, %v5426
      %v5615 = vsel %vm201, %v4911, %v5428
      %v5616 = vsel %vm201, %v4912, %v5430
      %v5617 = vsel %vm201, %v4913, %v5432
      %v5618 = vsel %vm201, %v4914, %v5434
      %v5619 = vsel %vm201, %v4915, %v5436
      %v5620 = vsel %vm201, %v4916, %v5438
      %v5621 = vsel %vm201, %v4917, %v5440
      %v5622 = vsel %vm201, %v4918, %v5442
      %v5623 = vsel %vm201, %v4919, %v5444
      %v5624 = vsel %vm201, %v4920, %v5446
      %v5625 = vsel %vm201, %v4921, %v5448
      %v5626 = vsel %vm201, %v4922, %v5450
      %v5627 = vsel %vm201, %v4923, %v5452
      %v5628 = vsel %vm201, %v4924, %v5454
      %v5629 = vsel %vm201, %v4925, %v5456
      %v5630 = vsel %vm201, %v4926, %v5458
      %v5631 = vsel %vm201, %v4927, %v5460
      %v5632 = vsel %vm201, %v4928, %v5462
      %v5633 = vsel %vm201, %v4929, %v5464
      %v5634 = vsel %vm201, %v4930, %v5466
      %v5635 = vsel %vm201, %v4931, %v5468
      %v5636 = vsel %vm201, %v4932, %v5470
      %v5637 = vsel %vm201, %v4933, %v5472
      %v5638 = vsel %vm201, %v4934, %v5474
      %v5639 = vsel %vm201, %v4935, %v5476
      %v5640 = vsel %vm201, %v4936, %v5478
      %v5641 = vsel %vm201, %v4937, %v5480
      %v5642 = vsel %vm201, %v4938, %v5482
      %v5643 = vpack.c.bf16 %v5516, %v5515
      %v5644 = vpack.c.bf16 %v5548, %v5547
      %v5645 = vpack.c.bf16 %v5580, %v5579
      %v5646 = vpack.c.bf16 %v5612, %v5611
      %v5647 = vpack.c.bf16 %v4972, %v4971
      %v5648 = vpack.c.bf16 %v5518, %v5517
      %v5649 = vpack.c.bf16 %v5550, %v5549
      %v5650 = vpack.c.bf16 %v5582, %v5581
      %v5651 = vpack.c.bf16 %v5614, %v5613
      %v5652 = vpack.c.bf16 %v4974, %v4973
      %v5653 = vpack.c.bf16 %v5520, %v5519
      %v5654 = vpack.c.bf16 %v5552, %v5551
      %v5655 = vpack.c.bf16 %v5584, %v5583
      %v5656 = vpack.c.bf16 %v5616, %v5615
      %v5657 = vpack.c.bf16 %v4976, %v4975
      %v5658 = vpack.c.bf16 %v5522, %v5521
      %v5659 = vpack.c.bf16 %v5554, %v5553
      %v5660 = vpack.c.bf16 %v5586, %v5585
      %v5661 = vpack.c.bf16 %v5618, %v5617
      %v5662 = vpack.c.bf16 %v4978, %v4977
      %v5663 = vpack.c.bf16 %v5524, %v5523
      %v5664 = vpack.c.bf16 %v5556, %v5555
      %v5665 = vpack.c.bf16 %v5588, %v5587
      %v5666 = vpack.c.bf16 %v5620, %v5619
      %v5667 = vpack.c.bf16 %v4980, %v4979
      %v5668 = vpack.c.bf16 %v5526, %v5525
      %v5669 = vpack.c.bf16 %v5558, %v5557
      %v5670 = vpack.c.bf16 %v5590, %v5589
      %v5671 = vpack.c.bf16 %v5622, %v5621
      %v5672 = vpack.c.bf16 %v4982, %v4981
      %v5673 = vpack.c.bf16 %v5528, %v5527
      %v5674 = vpack.c.bf16 %v5560, %v5559
      %v5675 = vpack.c.bf16 %v5592, %v5591
      %v5676 = vpack.c.bf16 %v5624, %v5623
      %v5677 = vpack.c.bf16 %v4984, %v4983
      %v5678 = vpack.c.bf16 %v5530, %v5529
      %v5679 = vpack.c.bf16 %v5562, %v5561
      %v5680 = vpack.c.bf16 %v5594, %v5593
      %v5681 = vpack.c.bf16 %v5626, %v5625
      %v5682 = vpack.c.bf16 %v4986, %v4985
      %v5683 = vpack.c.bf16 %v5532, %v5531
      %v5684 = vpack.c.bf16 %v5564, %v5563
      %v5685 = vpack.c.bf16 %v5596, %v5595
      %v5686 = vpack.c.bf16 %v5628, %v5627
      %v5687 = vpack.c.bf16 %v4988, %v4987
      %v5688 = vpack.c.bf16 %v5534, %v5533
      %v5689 = vpack.c.bf16 %v5566, %v5565
      %v5690 = vpack.c.bf16 %v5598, %v5597
      %v5691 = vpack.c.bf16 %v5630, %v5629
      %v5692 = vpack.c.bf16 %v4990, %v4989
      %v5693 = vpack.c.bf16 %v5536, %v5535
      %v5694 = vpack.c.bf16 %v5568, %v5567
      %v5695 = vpack.c.bf16 %v5600, %v5599
      %v5696 = vpack.c.bf16 %v5632, %v5631
      %v5697 = vpack.c.bf16 %v4992, %v4991
      %v5698 = vpack.c.bf16 %v5538, %v5537
      %v5699 = vpack.c.bf16 %v5570, %v5569
      %v5700 = vpack.c.bf16 %v5602, %v5601
      %v5701 = vpack.c.bf16 %v5634, %v5633
      %v5702 = vpack.c.bf16 %v4994, %v4993
      %v5703 = vpack.c.bf16 %v5540, %v5539
      %v5704 = vpack.c.bf16 %v5572, %v5571
      %v5705 = vpack.c.bf16 %v5604, %v5603
      %v5706 = vpack.c.bf16 %v5636, %v5635
      %v5707 = vpack.c.bf16 %v4996, %v4995
      %v5708 = vpack.c.bf16 %v5542, %v5541
      %v5709 = vpack.c.bf16 %v5574, %v5573
      %v5710 = vpack.c.bf16 %v5606, %v5605
      %v5711 = vpack.c.bf16 %v5638, %v5637
      %v5712 = vpack.c.bf16 %v4998, %v4997
      %v5713 = vpack.c.bf16 %v5544, %v5543
      %v5714 = vpack.c.bf16 %v5576, %v5575
      %v5715 = vpack.c.bf16 %v5608, %v5607
      %v5716 = vpack.c.bf16 %v5640, %v5639
      %v5717 = vpack.c.bf16 %v5000, %v4999
      %v5718 = vpack.c.bf16 %v5546, %v5545
      %v5719 = vpack.c.bf16 %v5578, %v5577
      %v5720 = vpack.c.bf16 %v5610, %v5609
      %v5721 = vpack.c.bf16 %v5642, %v5641
      %v5722 = vpack.c.bf16 %v5002, %v5001
      %s5723 = scalar_lea.vmem %s1, 576
      %v5724 = vld [vmem:[%s5723] sm:$0xf]
      %v5725 = vld [vmem:[%s5723 + $0x4] sm:$0xf]
      %v5726 = vld [vmem:[%s5723 + $0x8] sm:$0xf]
      %v5727 = vld [vmem:[%s5723 + $0xc] sm:$0xf]
      %v5728 = vld [vmem:[%s5723 + $0x10] sm:$0xf]
      %v5729 = vld [vmem:[%s5723 + $0x14] sm:$0xf]
      %v5730 = vld [vmem:[%s5723 + $0x18] sm:$0xf]
      %v5731 = vld [vmem:[%s5723 + $0x1c] sm:$0xf]
      %v5732 = vld [vmem:[%s5723 + $0x20] sm:$0xf]
      %v5733 = vld [vmem:[%s5723 + $0x24] sm:$0xf]
      %v5734 = vld [vmem:[%s5723 + $0x28] sm:$0xf]
      %v5735 = vld [vmem:[%s5723 + $0x2c] sm:$0xf]
      %v5736 = vld [vmem:[%s5723 + $0x30] sm:$0xf]
      %v5737 = vld [vmem:[%s5723 + $0x34] sm:$0xf]
      %v5738 = vld [vmem:[%s5723 + $0x38] sm:$0xf]
      %v5739 = vld [vmem:[%s5723 + $0x3c] sm:$0xf]
      %v5740 = vld [vmem:[%s5723 + $0x40] sm:$0xf]
      %v5741 = vld [vmem:[%s5723 + $0x44] sm:$0xf]
      %v5742 = vld [vmem:[%s5723 + $0x48] sm:$0xf]
      %v5743 = vld [vmem:[%s5723 + $0x4c] sm:$0xf]
      %v5744 = vld [vmem:[%s5723 + $0x50] sm:$0xf]
      %v5745 = vld [vmem:[%s5723 + $0x54] sm:$0xf]
      %v5746 = vld [vmem:[%s5723 + $0x58] sm:$0xf]
      %v5747 = vld [vmem:[%s5723 + $0x5c] sm:$0xf]
      %v5748 = vld [vmem:[%s5723 + $0x60] sm:$0xf]
      %v5749 = vld [vmem:[%s5723 + $0x64] sm:$0xf]
      %v5750 = vld [vmem:[%s5723 + $0x68] sm:$0xf]
      %v5751 = vld [vmem:[%s5723 + $0x6c] sm:$0xf]
      %v5752 = vld [vmem:[%s5723 + $0x70] sm:$0xf]
      %v5753 = vld [vmem:[%s5723 + $0x74] sm:$0xf]
      %v5754 = vld [vmem:[%s5723 + $0x78] sm:$0xf]
      %v5755 = vld [vmem:[%s5723 + $0x7c] sm:$0xf]
      %v5756 = vld [vmem:[%s5723 + $0x80] sm:$0xf]
      %v5757 = vld [vmem:[%s5723 + $0x84] sm:$0xf]
      %v5758 = vld [vmem:[%s5723 + $0x88] sm:$0xf]
      %v5759 = vld [vmem:[%s5723 + $0x8c] sm:$0xf]
      %v5760 = vld [vmem:[%s5723 + $0x90] sm:$0xf]
      %v5761 = vld [vmem:[%s5723 + $0x94] sm:$0xf]
      %v5762 = vld [vmem:[%s5723 + $0x98] sm:$0xf]
      %v5763 = vld [vmem:[%s5723 + $0x9c] sm:$0xf]
      %v5764 = vld [vmem:[%s5723 + $0xa0] sm:$0xf]
      %v5765 = vld [vmem:[%s5723 + $0xa4] sm:$0xf]
      %v5766 = vld [vmem:[%s5723 + $0xa8] sm:$0xf]
      %v5767 = vld [vmem:[%s5723 + $0xac] sm:$0xf]
      %v5768 = vld [vmem:[%s5723 + $0xb0] sm:$0xf]
      %v5769 = vld [vmem:[%s5723 + $0xb4] sm:$0xf]
      %v5770 = vld [vmem:[%s5723 + $0xb8] sm:$0xf]
      %v5771 = vld [vmem:[%s5723 + $0xbc] sm:$0xf]
      %v5772 = vld [vmem:[%s5723 + $0xc0] sm:$0xf]
      %v5773 = vld [vmem:[%s5723 + $0xc4] sm:$0xf]
      %v5774 = vld [vmem:[%s5723 + $0xc8] sm:$0xf]
      %v5775 = vld [vmem:[%s5723 + $0xcc] sm:$0xf]
      %v5776 = vld [vmem:[%s5723 + $0xd0] sm:$0xf]
      %v5777 = vld [vmem:[%s5723 + $0xd4] sm:$0xf]
      %v5778 = vld [vmem:[%s5723 + $0xd8] sm:$0xf]
      %v5779 = vld [vmem:[%s5723 + $0xdc] sm:$0xf]
      %v5780 = vld [vmem:[%s5723 + $0xe0] sm:$0xf]
      %v5781 = vld [vmem:[%s5723 + $0xe4] sm:$0xf]
      %v5782 = vld [vmem:[%s5723 + $0xe8] sm:$0xf]
      %v5783 = vld [vmem:[%s5723 + $0xec] sm:$0xf]
      %v5784 = vld [vmem:[%s5723 + $0xf0] sm:$0xf]
      %v5785 = vld [vmem:[%s5723 + $0xf4] sm:$0xf]
      %v5786 = vld [vmem:[%s5723 + $0xf8] sm:$0xf]
      %v5787 = vld [vmem:[%s5723 + $0xfc] sm:$0xf]
      %v5788 = vld [vmem:[%s5723 + $0x100] sm:$0xf]
      %v5789 = vld [vmem:[%s5723 + $0x104] sm:$0xf]
      %v5790 = vld [vmem:[%s5723 + $0x108] sm:$0xf]
      %v5791 = vld [vmem:[%s5723 + $0x10c] sm:$0xf]
      %v5792 = vld [vmem:[%s5723 + $0x110] sm:$0xf]
      %v5793 = vld [vmem:[%s5723 + $0x114] sm:$0xf]
      %v5794 = vld [vmem:[%s5723 + $0x118] sm:$0xf]
      %v5795 = vld [vmem:[%s5723 + $0x11c] sm:$0xf]
      %v5868 = vunpack.c.l.b16 %v5724
      %v5869 = vunpack.c.l.b16 %v5725
      %v5870 = vunpack.c.l.b16 %v5726
      %v5871 = vunpack.c.l.b16 %v5727
      %v5872 = vunpack.c.l.b16 %v5728
      %v5873 = vunpack.c.l.b16 %v5729
      %v5874 = vunpack.c.l.b16 %v5730
      %v5875 = vunpack.c.l.b16 %v5731
      %v5876 = vunpack.c.l.b16 %v5732
      %v5877 = vunpack.c.l.b16 %v5733
      %v5878 = vunpack.c.l.b16 %v5734
      %v5879 = vunpack.c.l.b16 %v5735
      %v5880 = vunpack.c.l.b16 %v5736
      %v5881 = vunpack.c.l.b16 %v5737
      %v5882 = vunpack.c.l.b16 %v5738
      %v5883 = vunpack.c.l.b16 %v5739
      %v5884 = vunpack.c.l.b16 %v5740
      %v5885 = vunpack.c.l.b16 %v5741
      %v5886 = vunpack.c.l.b16 %v5742
      %v5887 = vunpack.c.l.b16 %v5743
      %v5888 = vunpack.c.l.b16 %v5744
      %v5889 = vunpack.c.l.b16 %v5745
      %v5890 = vunpack.c.l.b16 %v5746
      %v5891 = vunpack.c.l.b16 %v5747
      %v5892 = vunpack.c.l.b16 %v5748
      %v5893 = vunpack.c.l.b16 %v5749
      %v5894 = vunpack.c.l.b16 %v5750
      %v5895 = vunpack.c.l.b16 %v5751
      %v5896 = vunpack.c.l.b16 %v5752
      %v5897 = vunpack.c.l.b16 %v5753
      %v5898 = vunpack.c.l.b16 %v5754
      %v5899 = vunpack.c.l.b16 %v5755
      %v5900 = vunpack.c.l.b16 %v5756
      %v5901 = vunpack.c.l.b16 %v5757
      %v5902 = vunpack.c.l.b16 %v5758
      %v5903 = vunpack.c.l.b16 %v5759
      %v5904 = vunpack.c.l.b16 %v5760
      %v5905 = vunpack.c.l.b16 %v5761
      %v5906 = vunpack.c.l.b16 %v5762
      %v5907 = vunpack.c.l.b16 %v5763
      %v5908 = vunpack.c.l.b16 %v5764
      %v5909 = vunpack.c.l.b16 %v5765
      %v5910 = vunpack.c.l.b16 %v5766
      %v5911 = vunpack.c.l.b16 %v5767
      %v5912 = vunpack.c.l.b16 %v5768
      %v5913 = vunpack.c.l.b16 %v5769
      %v5914 = vunpack.c.l.b16 %v5770
      %v5915 = vunpack.c.l.b16 %v5771
      %v5916 = vunpack.c.l.b16 %v5772
      %v5917 = vunpack.c.l.b16 %v5773
      %v5918 = vunpack.c.l.b16 %v5774
      %v5919 = vunpack.c.l.b16 %v5775
      %v5920 = vunpack.c.l.b16 %v5776
      %v5921 = vunpack.c.l.b16 %v5777
      %v5922 = vunpack.c.l.b16 %v5778
      %v5923 = vunpack.c.l.b16 %v5779
      %v5924 = vunpack.c.l.b16 %v5780
      %v5925 = vunpack.c.l.b16 %v5781
      %v5926 = vunpack.c.l.b16 %v5782
      %v5927 = vunpack.c.l.b16 %v5783
      %v5928 = vunpack.c.l.b16 %v5784
      %v5929 = vunpack.c.l.b16 %v5785
      %v5930 = vunpack.c.l.b16 %v5786
      %v5931 = vunpack.c.l.b16 %v5787
      %v5932 = vunpack.c.l.b16 %v5788
      %v5933 = vunpack.c.l.b16 %v5789
      %v5934 = vunpack.c.l.b16 %v5790
      %v5935 = vunpack.c.l.b16 %v5791
      %v5936 = vunpack.c.l.b16 %v5792
      %v5937 = vunpack.c.l.b16 %v5793
      %v5938 = vunpack.c.l.b16 %v5794
      %v5939 = vunpack.c.l.b16 %v5795
      %v5940 = vpack.c.b16 %v5869, %v5868
      %v5941 = vpack.c.b16 %v5871, %v5870
      %v5942 = vpack.c.b16 %v5873, %v5872
      %v5943 = vpack.c.b16 %v5875, %v5874
      %v5944 = vpack.c.b16 %v5877, %v5876
      %v5945 = vpack.c.b16 %v5879, %v5878
      %v5946 = vpack.c.b16 %v5881, %v5880
      %v5947 = vpack.c.b16 %v5883, %v5882
      %v5948 = vpack.c.b16 %v5885, %v5884
      %v5949 = vpack.c.b16 %v5887, %v5886
      %v5950 = vpack.c.b16 %v5889, %v5888
      %v5951 = vpack.c.b16 %v5891, %v5890
      %v5952 = vpack.c.b16 %v5893, %v5892
      %v5953 = vpack.c.b16 %v5895, %v5894
      %v5954 = vpack.c.b16 %v5897, %v5896
      %v5955 = vpack.c.b16 %v5899, %v5898
      %v5956 = vpack.c.b16 %v5901, %v5900
      %v5957 = vpack.c.b16 %v5903, %v5902
      %v5958 = vpack.c.b16 %v5905, %v5904
      %v5959 = vpack.c.b16 %v5907, %v5906
      %v5960 = vpack.c.b16 %v5909, %v5908
      %v5961 = vpack.c.b16 %v5911, %v5910
      %v5962 = vpack.c.b16 %v5913, %v5912
      %v5963 = vpack.c.b16 %v5915, %v5914
      %v5964 = vpack.c.b16 %v5917, %v5916
      %v5965 = vpack.c.b16 %v5919, %v5918
      %v5966 = vpack.c.b16 %v5921, %v5920
      %v5967 = vpack.c.b16 %v5923, %v5922
      %v5968 = vpack.c.b16 %v5925, %v5924
      %v5969 = vpack.c.b16 %v5927, %v5926
      %v5970 = vpack.c.b16 %v5929, %v5928
      %v5971 = vpack.c.b16 %v5931, %v5930
      %v5972 = vpack.c.b16 %v5933, %v5932
      %v5973 = vpack.c.b16 %v5935, %v5934
      %v5974 = vpack.c.b16 %v5937, %v5936
      %v5975 = vpack.c.b16 %v5939, %v5938
      %v6013 = vsel %vm201, %v5647, 0
      %v6016 = vsel %vm201, %v5652, 0
      %v6019 = vsel %vm201, %v5657, 0
      %v6022 = vsel %vm201, %v5662, 0
      %v6025 = vsel %vm201, %v5667, 0
      %v6028 = vsel %vm201, %v5672, 0
      %v6031 = vsel %vm201, %v5677, 0
      %v6034 = vsel %vm201, %v5682, 0
      %v6037 = vsel %vm201, %v5687, 0
      %v6040 = vsel %vm201, %v5692, 0
      %v6043 = vsel %vm201, %v5697, 0
      %v6046 = vsel %vm201, %v5702, 0
      %v6049 = vsel %vm201, %v5707, 0
      %v6052 = vsel %vm201, %v5712, 0
      %v6055 = vsel %vm201, %v5717, 0
      %v6058 = vsel %vm201, %v5722, 0
      %6060 = vmatprep.subr.bf16.mxu0 0
      %6061 = vmatpush1.bf16.msra.mxu0 %v5940
      %6062 = vmatprep.subr.bf16.mxu0 0
      %6063 = vmatpush1.bf16.msra.mxu0 %v5941
      %6064 = vmatprep.subr.bf16.mxu0 0
      %6065 = vmatpush1.bf16.msra.mxu0 %v5942
      %6066 = vmatprep.subr.bf16.mxu0 0
      %6067 = vmatpush1.bf16.msra.mxu0 %v5943
      %6068 = vmatprep.subr.bf16.mxu0 0
      %6069 = vmatpush1.bf16.msra.mxu0 %v5944
      %6070 = vmatprep.subr.bf16.mxu0 0
      %6071 = vmatpush1.bf16.msra.mxu0 %v5945
      %6072 = vmatprep.subr.bf16.mxu0 0
      %6073 = vmatpush1.bf16.msra.mxu0 %v5946
      %6074 = vmatprep.subr.bf16.mxu0 0
      %6075 = vmatpush1.bf16.msra.mxu0 %v5947
      %6076 = vmatprep.subr.bf16.mxu0 0
      %6077 = vmatpush1.bf16.msra.mxu0 %v5948
      %6078 = vmatprep.subr.bf16.mxu0 0
      %6079 = vmatpush1.bf16.msra.mxu0 %v5949
      %6080 = vmatprep.subr.bf16.mxu0 0
      %6081 = vmatpush1.bf16.msra.mxu0 %v5950
      %6082 = vmatprep.subr.bf16.mxu0 0
      %6083 = vmatpush1.bf16.msra.mxu0 %v5951
      %6084 = vmatprep.subr.bf16.mxu0 0
      %6085 = vmatpush1.bf16.msra.mxu0 %v5952
      %6086 = vmatprep.subr.bf16.mxu0 0
      %6087 = vmatpush1.bf16.msra.mxu0 %v5953
      %6088 = vmatprep.subr.bf16.mxu0 0
      %6089 = vmatpush1.bf16.msra.mxu0 %v5954
      %6090 = vmatprep.subr.bf16.mxu0 0
      %6091 = vmatpush1.bf16.msra.mxu0 %v5955
      %6092 = vmatprep.mubr.bf16.mxu0 %v5644
      %6093 = vmatmul.mubr.bf16.gmra.mrb[0].mxu0 %v5643
      %v6094 = vpop.f32.mrb[0].mxu0
      %v6095 = vadd.f32 0.0, %v6094
      %v6096 = vpop.f32.mrb[0].mxu0
      %v6097 = vpop.f32.mrb[0].mxu0
      %v6098 = vadd.f32 0.0, %v6097
      %v6099 = vpop.f32.mrb[0].mxu0
      %6100 = vmatprep.mubr.bf16.mxu0 %v5649
      %6101 = vmatmul.mubr.bf16.gmra.mrb[0].mxu0 %v5648
      %v6102 = vpop.f32.mrb[0].mxu0
      %v6103 = vadd.f32 0.0, %v6102
      %v6104 = vpop.f32.mrb[0].mxu0
      %v6105 = vpop.f32.mrb[0].mxu0
      %v6106 = vadd.f32 0.0, %v6105
      %v6107 = vpop.f32.mrb[0].mxu0
      %6108 = vmatprep.mubr.bf16.mxu0 %v5654
      %6109 = vmatmul.mubr.bf16.gmra.mrb[0].mxu0 %v5653
      %v6110 = vpop.f32.mrb[0].mxu0
      %v6111 = vadd.f32 0.0, %v6110
      %v6112 = vpop.f32.mrb[0].mxu0
      %v6113 = vpop.f32.mrb[0].mxu0
      %v6114 = vadd.f32 0.0, %v6113
      %v6115 = vpop.f32.mrb[0].mxu0
      %6116 = vmatprep.mubr.bf16.mxu0 %v5659
      %6117 = vmatmul.mubr.bf16.gmra.mrb[0].mxu0 %v5658
      %v6118 = vpop.f32.mrb[0].mxu0
      %v6119 = vadd.f32 0.0, %v6118
      %v6120 = vpop.f32.mrb[0].mxu0
      %v6121 = vpop.f32.mrb[0].mxu0
      %v6122 = vadd.f32 0.0, %v6121
      %v6123 = vpop.f32.mrb[0].mxu0
      %6124 = vmatprep.mubr.bf16.mxu0 %v5664
      %6125 = vmatmul.mubr.bf16.gmra.mrb[0].mxu0 %v5663
      %v6126 = vpop.f32.mrb[0].mxu0
      %v6127 = vadd.f32 0.0, %v6126
      %v6128 = vpop.f32.mrb[0].mxu0
      %v6129 = vpop.f32.mrb[0].mxu0
      %v6130 = vadd.f32 0.0, %v6129
      %v6131 = vpop.f32.mrb[0].mxu0
      %6132 = vmatprep.mubr.bf16.mxu0 %v5669
      %6133 = vmatmul.mubr.bf16.gmra.mrb[0].mxu0 %v5668
      %v6134 = vpop.f32.mrb[0].mxu0
      %v6135 = vadd.f32 0.0, %v6134
      %v6136 = vpop.f32.mrb[0].mxu0
      %v6137 = vpop.f32.mrb[0].mxu0
      %v6138 = vadd.f32 0.0, %v6137
      %v6139 = vpop.f32.mrb[0].mxu0
      %6140 = vmatprep.mubr.bf16.mxu0 %v5674
      %6141 = vmatmul.mubr.bf16.gmra.mrb[0].mxu0 %v5673
      %v6142 = vpop.f32.mrb[0].mxu0
      %v6143 = vadd.f32 0.0, %v6142
      %v6144 = vpop.f32.mrb[0].mxu0
      %v6145 = vpop.f32.mrb[0].mxu0
      %v6146 = vadd.f32 0.0, %v6145
      %v6147 = vpop.f32.mrb[0].mxu0
      %6148 = vmatprep.mubr.bf16.mxu0 %v5679
      %6149 = vmatmul.mubr.bf16.gmra.mrb[0].mxu0 %v5678
      %v6150 = vpop.f32.mrb[0].mxu0
      %v6151 = vadd.f32 0.0, %v6150
      %v6152 = vpop.f32.mrb[0].mxu0
      %v6153 = vpop.f32.mrb[0].mxu0
      %v6154 = vadd.f32 0.0, %v6153
      %v6155 = vpop.f32.mrb[0].mxu0
      %6156 = vmatprep.mubr.bf16.mxu0 %v5684
      %6157 = vmatmul.mubr.bf16.gmra.mrb[0].mxu0 %v5683
      %v6158 = vpop.f32.mrb[0].mxu0
      %v6159 = vadd.f32 0.0, %v6158
      %v6160 = vpop.f32.mrb[0].mxu0
      %v6161 = vpop.f32.mrb[0].mxu0
      %v6162 = vadd.f32 0.0, %v6161
      %v6163 = vpop.f32.mrb[0].mxu0
      %6164 = vmatprep.mubr.bf16.mxu0 %v5689
      %6165 = vmatmul.mubr.bf16.gmra.mrb[0].mxu0 %v5688
      %v6166 = vpop.f32.mrb[0].mxu0
      %v6167 = vadd.f32 0.0, %v6166
      %v6168 = vpop.f32.mrb[0].mxu0
      %v6169 = vpop.f32.mrb[0].mxu0
      %v6170 = vadd.f32 0.0, %v6169
      %v6171 = vpop.f32.mrb[0].mxu0
      %6172 = vmatprep.mubr.bf16.mxu0 %v5694
      %6173 = vmatmul.mubr.bf16.gmra.mrb[0].mxu0 %v5693
      %v6174 = vpop.f32.mrb[0].mxu0
      %v6175 = vadd.f32 0.0, %v6174
      %v6176 = vpop.f32.mrb[0].mxu0
      %v6177 = vpop.f32.mrb[0].mxu0
      %v6178 = vadd.f32 0.0, %v6177
      %v6179 = vpop.f32.mrb[0].mxu0
      %6180 = vmatprep.mubr.bf16.mxu0 %v5699
      %6181 = vmatmul.mubr.bf16.gmra.mrb[0].mxu0 %v5698
      %v6182 = vpop.f32.mrb[0].mxu0
      %v6183 = vadd.f32 0.0, %v6182
      %v6184 = vpop.f32.mrb[0].mxu0
      %v6185 = vpop.f32.mrb[0].mxu0
      %v6186 = vadd.f32 0.0, %v6185
      %v6187 = vpop.f32.mrb[0].mxu0
      %6188 = vmatprep.mubr.bf16.mxu0 %v5704
      %6189 = vmatmul.mubr.bf16.gmra.mrb[0].mxu0 %v5703
      %v6190 = vpop.f32.mrb[0].mxu0
      %v6191 = vadd.f32 0.0, %v6190
      %v6192 = vpop.f32.mrb[0].mxu0
      %v6193 = vpop.f32.mrb[0].mxu0
      %v6194 = vadd.f32 0.0, %v6193
      %v6195 = vpop.f32.mrb[0].mxu0
      %6196 = vmatprep.mubr.bf16.mxu0 %v5709
      %6197 = vmatmul.mubr.bf16.gmra.mrb[0].mxu0 %v5708
      %v6198 = vpop.f32.mrb[0].mxu0
      %v6199 = vadd.f32 0.0, %v6198
      %v6200 = vpop.f32.mrb[0].mxu0
      %v6201 = vpop.f32.mrb[0].mxu0
      %v6202 = vadd.f32 0.0, %v6201
      %v6203 = vpop.f32.mrb[0].mxu0
      %6204 = vmatprep.mubr.bf16.mxu0 %v5714
      %6205 = vmatmul.mubr.bf16.gmra.mrb[0].mxu0 %v5713
      %v6206 = vpop.f32.mrb[0].mxu0
      %v6207 = vadd.f32 0.0, %v6206
      %v6208 = vpop.f32.mrb[0].mxu0
      %v6209 = vpop.f32.mrb[0].mxu0
      %v6210 = vadd.f32 0.0, %v6209
      %v6211 = vpop.f32.mrb[0].mxu0
      %6212 = vmatprep.mubr.bf16.mxu0 %v5719
      %6213 = vmatmul.mubr.bf16.gmra.mrb[0].mxu0 %v5718
      %v6214 = vpop.f32.mrb[0].mxu0
      %v6215 = vadd.f32 0.0, %v6214
      %v6216 = vpop.f32.mrb[0].mxu0
      %v6217 = vpop.f32.mrb[0].mxu0
      %v6218 = vadd.f32 0.0, %v6217
      %v6219 = vpop.f32.mrb[0].mxu0
      %6220 = vdwg.mxu0
      %6221 = vmatprep.subr.bf16.mxu0 0
      %6222 = vmatpush1.bf16.msra.mxu0 %v5956
      %6223 = vmatprep.subr.bf16.mxu0 0
      %6224 = vmatpush1.bf16.msra.mxu0 %v5957
      %6225 = vmatprep.subr.bf16.mxu0 0
      %6226 = vmatpush1.bf16.msra.mxu0 %v5958
      %6227 = vmatprep.subr.bf16.mxu0 0
      %6228 = vmatpush1.bf16.msra.mxu0 %v5959
      %6229 = vmatprep.subr.bf16.mxu0 0
      %6230 = vmatpush1.bf16.msra.mxu0 %v5960
      %6231 = vmatprep.subr.bf16.mxu0 0
      %6232 = vmatpush1.bf16.msra.mxu0 %v5961
      %6233 = vmatprep.subr.bf16.mxu0 0
      %6234 = vmatpush1.bf16.msra.mxu0 %v5962
      %6235 = vmatprep.subr.bf16.mxu0 0
      %6236 = vmatpush1.bf16.msra.mxu0 %v5963
      %6237 = vmatprep.subr.bf16.mxu0 0
      %6238 = vmatpush1.bf16.msra.mxu0 %v5964
      %6239 = vmatprep.subr.bf16.mxu0 0
      %6240 = vmatpush1.bf16.msra.mxu0 %v5965
      %6241 = vmatprep.subr.bf16.mxu0 0
      %6242 = vmatpush1.bf16.msra.mxu0 %v5966
      %6243 = vmatprep.subr.bf16.mxu0 0
      %6244 = vmatpush1.bf16.msra.mxu0 %v5967
      %6245 = vmatprep.subr.bf16.mxu0 0
      %6246 = vmatpush1.bf16.msra.mxu0 %v5968
      %6247 = vmatprep.subr.bf16.mxu0 0
      %6248 = vmatpush1.bf16.msra.mxu0 %v5969
      %6249 = vmatprep.subr.bf16.mxu0 0
      %6250 = vmatpush1.bf16.msra.mxu0 %v5970
      %6251 = vmatprep.subr.bf16.mxu0 0
      %6252 = vmatpush1.bf16.msra.mxu0 %v5971
      %6253 = vmatprep.mubr.bf16.mxu0 %v5646
      %6254 = vmatmul.mubr.bf16.gmra.mrb[0].mxu0 %v5645
      %v6255 = vpop.f32.mrb[0].mxu0
      %v6256 = vadd.f32 %v6095, %v6255
      %v6257 = vpop.f32.mrb[0].mxu0
      %v6258 = vpop.f32.mrb[0].mxu0
      %v6259 = vadd.f32 %v6098, %v6258
      %v6260 = vpop.f32.mrb[0].mxu0
      %6261 = vmatprep.mubr.bf16.mxu0 %v5651
      %6262 = vmatmul.mubr.bf16.gmra.mrb[0].mxu0 %v5650
      %v6263 = vpop.f32.mrb[0].mxu0
      %v6264 = vadd.f32 %v6103, %v6263
      %v6265 = vpop.f32.mrb[0].mxu0
      %v6266 = vpop.f32.mrb[0].mxu0
      %v6267 = vadd.f32 %v6106, %v6266
      %v6268 = vpop.f32.mrb[0].mxu0
      %6269 = vmatprep.mubr.bf16.mxu0 %v5656
      %6270 = vmatmul.mubr.bf16.gmra.mrb[0].mxu0 %v5655
      %v6271 = vpop.f32.mrb[0].mxu0
      %v6272 = vadd.f32 %v6111, %v6271
      %v6273 = vpop.f32.mrb[0].mxu0
      %v6274 = vpop.f32.mrb[0].mxu0
      %v6275 = vadd.f32 %v6114, %v6274
      %v6276 = vpop.f32.mrb[0].mxu0
      %6277 = vmatprep.mubr.bf16.mxu0 %v5661
      %6278 = vmatmul.mubr.bf16.gmra.mrb[0].mxu0 %v5660
      %v6279 = vpop.f32.mrb[0].mxu0
      %v6280 = vadd.f32 %v6119, %v6279
      %v6281 = vpop.f32.mrb[0].mxu0
      %v6282 = vpop.f32.mrb[0].mxu0
      %v6283 = vadd.f32 %v6122, %v6282
      %v6284 = vpop.f32.mrb[0].mxu0
      %6285 = vmatprep.mubr.bf16.mxu0 %v5666
      %6286 = vmatmul.mubr.bf16.gmra.mrb[0].mxu0 %v5665
      %v6287 = vpop.f32.mrb[0].mxu0
      %v6288 = vadd.f32 %v6127, %v6287
      %v6289 = vpop.f32.mrb[0].mxu0
      %v6290 = vpop.f32.mrb[0].mxu0
      %v6291 = vadd.f32 %v6130, %v6290
      %v6292 = vpop.f32.mrb[0].mxu0
      %6293 = vmatprep.mubr.bf16.mxu0 %v5671
      %6294 = vmatmul.mubr.bf16.gmra.mrb[0].mxu0 %v5670
      %v6295 = vpop.f32.mrb[0].mxu0
      %v6296 = vadd.f32 %v6135, %v6295
      %v6297 = vpop.f32.mrb[0].mxu0
      %v6298 = vpop.f32.mrb[0].mxu0
      %v6299 = vadd.f32 %v6138, %v6298
      %v6300 = vpop.f32.mrb[0].mxu0
      %6301 = vmatprep.mubr.bf16.mxu0 %v5676
      %6302 = vmatmul.mubr.bf16.gmra.mrb[0].mxu0 %v5675
      %v6303 = vpop.f32.mrb[0].mxu0
      %v6304 = vadd.f32 %v6143, %v6303
      %v6305 = vpop.f32.mrb[0].mxu0
      %v6306 = vpop.f32.mrb[0].mxu0
      %v6307 = vadd.f32 %v6146, %v6306
      %v6308 = vpop.f32.mrb[0].mxu0
      %6309 = vmatprep.mubr.bf16.mxu0 %v5681
      %6310 = vmatmul.mubr.bf16.gmra.mrb[0].mxu0 %v5680
      %v6311 = vpop.f32.mrb[0].mxu0
      %v6312 = vadd.f32 %v6151, %v6311
      %v6313 = vpop.f32.mrb[0].mxu0
      %v6314 = vpop.f32.mrb[0].mxu0
      %v6315 = vadd.f32 %v6154, %v6314
      %v6316 = vpop.f32.mrb[0].mxu0
      %6317 = vmatprep.mubr.bf16.mxu0 %v5686
      %6318 = vmatmul.mubr.bf16.gmra.mrb[0].mxu0 %v5685
      %v6319 = vpop.f32.mrb[0].mxu0
      %v6320 = vadd.f32 %v6159, %v6319
      %v6321 = vpop.f32.mrb[0].mxu0
      %v6322 = vpop.f32.mrb[0].mxu0
      %v6323 = vadd.f32 %v6162, %v6322
      %v6324 = vpop.f32.mrb[0].mxu0
      %6325 = vmatprep.mubr.bf16.mxu0 %v5691
      %6326 = vmatmul.mubr.bf16.gmra.mrb[0].mxu0 %v5690
      %v6327 = vpop.f32.mrb[0].mxu0
      %v6328 = vadd.f32 %v6167, %v6327
      %v6329 = vpop.f32.mrb[0].mxu0
      %v6330 = vpop.f32.mrb[0].mxu0
      %v6331 = vadd.f32 %v6170, %v6330
      %v6332 = vpop.f32.mrb[0].mxu0
      %6333 = vmatprep.mubr.bf16.mxu0 %v5696
      %6334 = vmatmul.mubr.bf16.gmra.mrb[0].mxu0 %v5695
      %v6335 = vpop.f32.mrb[0].mxu0
      %v6336 = vadd.f32 %v6175, %v6335
      %v6337 = vpop.f32.mrb[0].mxu0
      %v6338 = vpop.f32.mrb[0].mxu0
      %v6339 = vadd.f32 %v6178, %v6338
      %v6340 = vpop.f32.mrb[0].mxu0
      %6341 = vmatprep.mubr.bf16.mxu0 %v5701
      %6342 = vmatmul.mubr.bf16.gmra.mrb[0].mxu0 %v5700
      %v6343 = vpop.f32.mrb[0].mxu0
      %v6344 = vadd.f32 %v6183, %v6343
      %v6345 = vpop.f32.mrb[0].mxu0
      %v6346 = vpop.f32.mrb[0].mxu0
      %v6347 = vadd.f32 %v6186, %v6346
      %v6348 = vpop.f32.mrb[0].mxu0
      %6349 = vmatprep.mubr.bf16.mxu0 %v5706
      %6350 = vmatmul.mubr.bf16.gmra.mrb[0].mxu0 %v5705
      %v6351 = vpop.f32.mrb[0].mxu0
      %v6352 = vadd.f32 %v6191, %v6351
      %v6353 = vpop.f32.mrb[0].mxu0
      %v6354 = vpop.f32.mrb[0].mxu0
      %v6355 = vadd.f32 %v6194, %v6354
      %v6356 = vpop.f32.mrb[0].mxu0
      %6357 = vmatprep.mubr.bf16.mxu0 %v5711
      %6358 = vmatmul.mubr.bf16.gmra.mrb[0].mxu0 %v5710
      %v6359 = vpop.f32.mrb[0].mxu0
      %v6360 = vadd.f32 %v6199, %v6359
      %v6361 = vpop.f32.mrb[0].mxu0
      %v6362 = vpop.f32.mrb[0].mxu0
      %v6363 = vadd.f32 %v6202, %v6362
      %v6364 = vpop.f32.mrb[0].mxu0
      %6365 = vmatprep.mubr.bf16.mxu0 %v5716
      %6366 = vmatmul.mubr.bf16.gmra.mrb[0].mxu0 %v5715
      %v6367 = vpop.f32.mrb[0].mxu0
      %v6368 = vadd.f32 %v6207, %v6367
      %v6369 = vpop.f32.mrb[0].mxu0
      %v6370 = vpop.f32.mrb[0].mxu0
      %v6371 = vadd.f32 %v6210, %v6370
      %v6372 = vpop.f32.mrb[0].mxu0
      %6373 = vmatprep.mubr.bf16.mxu0 %v5721
      %6374 = vmatmul.mubr.bf16.gmra.mrb[0].mxu0 %v5720
      %v6375 = vpop.f32.mrb[0].mxu0
      %v6376 = vadd.f32 %v6215, %v6375
      %v6377 = vpop.f32.mrb[0].mxu0
      %v6378 = vpop.f32.mrb[0].mxu0
      %v6379 = vadd.f32 %v6218, %v6378
      %v6380 = vpop.f32.mrb[0].mxu0
      %6381 = vdwg.mxu0
      %6382 = vmatprep.subr.bf16.mxu0 0
      %6383 = vmatpush1.bf16.msra.mxu0 %v5972
      %6384 = vmatprep.subr.bf16.mxu0 0
      %6385 = vmatpush1.bf16.msra.mxu0 %v5973
      %6386 = vmatprep.subr.bf16.mxu0 0
      %6387 = vmatpush1.bf16.msra.mxu0 %v5974
      %6388 = vmatprep.subr.bf16.mxu0 0
      %6389 = vmatpush1.bf16.msra.mxu0 %v5975
      %6390 = vmatprep.subr.bf16.mxu0 0
      %6391 = vmatpush1.bf16.msra.mxu0 0
      %6392 = vmatprep.subr.bf16.mxu0 0
      %6393 = vmatpush1.bf16.msra.mxu0 0
      %6394 = vmatprep.subr.bf16.mxu0 0
      %6395 = vmatpush1.bf16.msra.mxu0 0
      %6396 = vmatprep.subr.bf16.mxu0 0
      %6397 = vmatpush1.bf16.msra.mxu0 0
      %6398 = vmatprep.subr.bf16.mxu0 0
      %6399 = vmatpush1.bf16.msra.mxu0 0
      %6400 = vmatprep.subr.bf16.mxu0 0
      %6401 = vmatpush1.bf16.msra.mxu0 0
      %6402 = vmatprep.subr.bf16.mxu0 0
      %6403 = vmatpush1.bf16.msra.mxu0 0
      %6404 = vmatprep.subr.bf16.mxu0 0
      %6405 = vmatpush1.bf16.msra.mxu0 0
      %6406 = vmatprep.subr.bf16.mxu0 0
      %6407 = vmatpush1.bf16.msra.mxu0 0
      %6408 = vmatprep.subr.bf16.mxu0 0
      %6409 = vmatpush1.bf16.msra.mxu0 0
      %6410 = vmatprep.subr.bf16.mxu0 0
      %6411 = vmatpush1.bf16.msra.mxu0 0
      %6412 = vmatprep.subr.bf16.mxu0 0
      %6413 = vmatpush1.bf16.msra.mxu0 0
      %6414 = vmatprep.mubr.bf16.mxu0 0
      %6415 = vmatmul.mubr.bf16.gmra.mrb[0].mxu0 %v6013
      %v6416 = vpop.f32.mrb[0].mxu0
      %v6417 = vadd.f32 %v6256, %v6416
      %v6418 = vpop.f32.mrb[0].mxu0
      %v6419 = vpop.f32.mrb[0].mxu0
      %v6420 = vadd.f32 %v6259, %v6419
      %v6421 = vpop.f32.mrb[0].mxu0
      %6422 = vmatprep.mubr.bf16.mxu0 0
      %6423 = vmatmul.mubr.bf16.gmra.mrb[0].mxu0 %v6016
      %v6424 = vpop.f32.mrb[0].mxu0
      %v6425 = vadd.f32 %v6264, %v6424
      %v6426 = vpop.f32.mrb[0].mxu0
      %v6427 = vpop.f32.mrb[0].mxu0
      %v6428 = vadd.f32 %v6267, %v6427
      %v6429 = vpop.f32.mrb[0].mxu0
      %6430 = vmatprep.mubr.bf16.mxu0 0
      %6431 = vmatmul.mubr.bf16.gmra.mrb[0].mxu0 %v6019
      %v6432 = vpop.f32.mrb[0].mxu0
      %v6433 = vadd.f32 %v6272, %v6432
      %v6434 = vpop.f32.mrb[0].mxu0
      %v6435 = vpop.f32.mrb[0].mxu0
      %v6436 = vadd.f32 %v6275, %v6435
      %v6437 = vpop.f32.mrb[0].mxu0
      %6438 = vmatprep.mubr.bf16.mxu0 0
      %6439 = vmatmul.mubr.bf16.gmra.mrb[0].mxu0 %v6022
      %v6440 = vpop.f32.mrb[0].mxu0
      %v6441 = vadd.f32 %v6280, %v6440
      %v6442 = vpop.f32.mrb[0].mxu0
      %v6443 = vpop.f32.mrb[0].mxu0
      %v6444 = vadd.f32 %v6283, %v6443
      %v6445 = vpop.f32.mrb[0].mxu0
      %6446 = vmatprep.mubr.bf16.mxu0 0
      %6447 = vmatmul.mubr.bf16.gmra.mrb[0].mxu0 %v6025
      %v6448 = vpop.f32.mrb[0].mxu0
      %v6449 = vadd.f32 %v6288, %v6448
      %v6450 = vpop.f32.mrb[0].mxu0
      %v6451 = vpop.f32.mrb[0].mxu0
      %v6452 = vadd.f32 %v6291, %v6451
      %v6453 = vpop.f32.mrb[0].mxu0
      %6454 = vmatprep.mubr.bf16.mxu0 0
      %6455 = vmatmul.mubr.bf16.gmra.mrb[0].mxu0 %v6028
      %v6456 = vpop.f32.mrb[0].mxu0
      %v6457 = vadd.f32 %v6296, %v6456
      %v6458 = vpop.f32.mrb[0].mxu0
      %v6459 = vpop.f32.mrb[0].mxu0
      %v6460 = vadd.f32 %v6299, %v6459
      %v6461 = vpop.f32.mrb[0].mxu0
      %6462 = vmatprep.mubr.bf16.mxu0 0
      %6463 = vmatmul.mubr.bf16.gmra.mrb[0].mxu0 %v6031
      %v6464 = vpop.f32.mrb[0].mxu0
      %v6465 = vadd.f32 %v6304, %v6464
      %v6466 = vpop.f32.mrb[0].mxu0
      %v6467 = vpop.f32.mrb[0].mxu0
      %v6468 = vadd.f32 %v6307, %v6467
      %v6469 = vpop.f32.mrb[0].mxu0
      %6470 = vmatprep.mubr.bf16.mxu0 0
      %6471 = vmatmul.mubr.bf16.gmra.mrb[0].mxu0 %v6034
      %v6472 = vpop.f32.mrb[0].mxu0
      %v6473 = vadd.f32 %v6312, %v6472
      %v6474 = vpop.f32.mrb[0].mxu0
      %v6475 = vpop.f32.mrb[0].mxu0
      %v6476 = vadd.f32 %v6315, %v6475
      %v6477 = vpop.f32.mrb[0].mxu0
      %6478 = vmatprep.mubr.bf16.mxu0 0
      %6479 = vmatmul.mubr.bf16.gmra.mrb[0].mxu0 %v6037
      %v6480 = vpop.f32.mrb[0].mxu0
      %v6481 = vadd.f32 %v6320, %v6480
      %v6482 = vpop.f32.mrb[0].mxu0
      %v6483 = vpop.f32.mrb[0].mxu0
      %v6484 = vadd.f32 %v6323, %v6483
      %v6485 = vpop.f32.mrb[0].mxu0
      %6486 = vmatprep.mubr.bf16.mxu0 0
      %6487 = vmatmul.mubr.bf16.gmra.mrb[0].mxu0 %v6040
      %v6488 = vpop.f32.mrb[0].mxu0
      %v6489 = vadd.f32 %v6328, %v6488
      %v6490 = vpop.f32.mrb[0].mxu0
      %v6491 = vpop.f32.mrb[0].mxu0
      %v6492 = vadd.f32 %v6331, %v6491
      %v6493 = vpop.f32.mrb[0].mxu0
      %6494 = vmatprep.mubr.bf16.mxu0 0
      %6495 = vmatmul.mubr.bf16.gmra.mrb[0].mxu0 %v6043
      %v6496 = vpop.f32.mrb[0].mxu0
      %v6497 = vadd.f32 %v6336, %v6496
      %v6498 = vpop.f32.mrb[0].mxu0
      %v6499 = vpop.f32.mrb[0].mxu0
      %v6500 = vadd.f32 %v6339, %v6499
      %v6501 = vpop.f32.mrb[0].mxu0
      %6502 = vmatprep.mubr.bf16.mxu0 0
      %6503 = vmatmul.mubr.bf16.gmra.mrb[0].mxu0 %v6046
      %v6504 = vpop.f32.mrb[0].mxu0
      %v6505 = vadd.f32 %v6344, %v6504
      %v6506 = vpop.f32.mrb[0].mxu0
      %v6507 = vpop.f32.mrb[0].mxu0
      %v6508 = vadd.f32 %v6347, %v6507
      %v6509 = vpop.f32.mrb[0].mxu0
      %6510 = vmatprep.mubr.bf16.mxu0 0
      %6511 = vmatmul.mubr.bf16.gmra.mrb[0].mxu0 %v6049
      %v6512 = vpop.f32.mrb[0].mxu0
      %v6513 = vadd.f32 %v6352, %v6512
      %v6514 = vpop.f32.mrb[0].mxu0
      %v6515 = vpop.f32.mrb[0].mxu0
      %v6516 = vadd.f32 %v6355, %v6515
      %v6517 = vpop.f32.mrb[0].mxu0
      %6518 = vmatprep.mubr.bf16.mxu0 0
      %6519 = vmatmul.mubr.bf16.gmra.mrb[0].mxu0 %v6052
      %v6520 = vpop.f32.mrb[0].mxu0
      %v6521 = vadd.f32 %v6360, %v6520
      %v6522 = vpop.f32.mrb[0].mxu0
      %v6523 = vpop.f32.mrb[0].mxu0
      %v6524 = vadd.f32 %v6363, %v6523
      %v6525 = vpop.f32.mrb[0].mxu0
      %6526 = vmatprep.mubr.bf16.mxu0 0
      %6527 = vmatmul.mubr.bf16.gmra.mrb[0].mxu0 %v6055
      %v6528 = vpop.f32.mrb[0].mxu0
      %v6529 = vadd.f32 %v6368, %v6528
      %v6530 = vpop.f32.mrb[0].mxu0
      %v6531 = vpop.f32.mrb[0].mxu0
      %v6532 = vadd.f32 %v6371, %v6531
      %v6533 = vpop.f32.mrb[0].mxu0
      %6534 = vmatprep.mubr.bf16.mxu0 0
      %6535 = vmatmul.mubr.bf16.gmra.mrb[0].mxu0 %v6058
      %v6536 = vpop.f32.mrb[0].mxu0
      %v6537 = vadd.f32 %v6376, %v6536
      %v6538 = vpop.f32.mrb[0].mxu0
      %v6539 = vpop.f32.mrb[0].mxu0
      %v6540 = vadd.f32 %v6379, %v6539
      %v6541 = vpop.f32.mrb[0].mxu0
      %6542 = vdwg.mxu0
      %v6543 = vsel %vm201, %v6417, 0.0
      %v6544 = vsel %vm201, %v6420, 0.0
      %v6545 = vadd.f32 %v6543, %v6544
      %v6546 = vsel %vm201, %v6425, 0.0
      %v6547 = vadd.f32 %v6545, %v6546
      %v6548 = vsel %vm201, %v6428, 0.0
      %v6549 = vadd.f32 %v6547, %v6548
      %v6550 = vsel %vm201, %v6433, 0.0
      %v6551 = vadd.f32 %v6549, %v6550
      %v6552 = vsel %vm201, %v6436, 0.0
      %v6553 = vadd.f32 %v6551, %v6552
      %v6554 = vsel %vm201, %v6441, 0.0
      %v6555 = vadd.f32 %v6553, %v6554
      %v6556 = vsel %vm201, %v6444, 0.0
      %v6557 = vadd.f32 %v6555, %v6556
      %v6558 = vsel %vm201, %v6449, 0.0
      %v6559 = vadd.f32 %v6557, %v6558
      %v6560 = vsel %vm201, %v6452, 0.0
      %v6561 = vadd.f32 %v6559, %v6560
      %v6562 = vsel %vm201, %v6457, 0.0
      %v6563 = vadd.f32 %v6561, %v6562
      %v6564 = vsel %vm201, %v6460, 0.0
      %v6565 = vadd.f32 %v6563, %v6564
      %v6566 = vsel %vm201, %v6465, 0.0
      %v6567 = vadd.f32 %v6565, %v6566
      %v6568 = vsel %vm201, %v6468, 0.0
      %v6569 = vadd.f32 %v6567, %v6568
      %v6570 = vsel %vm201, %v6473, 0.0
      %v6571 = vadd.f32 %v6569, %v6570
      %v6572 = vsel %vm201, %v6476, 0.0
      %v6573 = vadd.f32 %v6571, %v6572
      %v6574 = vsel %vm201, %v6481, 0.0
      %v6575 = vadd.f32 %v6573, %v6574
      %v6576 = vsel %vm201, %v6484, 0.0
      %v6577 = vadd.f32 %v6575, %v6576
      %v6578 = vsel %vm201, %v6489, 0.0
      %v6579 = vadd.f32 %v6577, %v6578
      %v6580 = vsel %vm201, %v6492, 0.0
      %v6581 = vadd.f32 %v6579, %v6580
      %v6582 = vsel %vm201, %v6497, 0.0
      %v6583 = vadd.f32 %v6581, %v6582
      %v6584 = vsel %vm201, %v6500, 0.0
      %v6585 = vadd.f32 %v6583, %v6584
      %v6586 = vsel %vm201, %v6505, 0.0
      %v6587 = vadd.f32 %v6585, %v6586
      %v6588 = vsel %vm201, %v6508, 0.0
      %v6589 = vadd.f32 %v6587, %v6588
      %v6590 = vsel %vm201, %v6513, 0.0
      %v6591 = vadd.f32 %v6589, %v6590
      %v6592 = vsel %vm201, %v6516, 0.0
      %v6593 = vadd.f32 %v6591, %v6592
      %v6594 = vsel %vm201, %v6521, 0.0
      %v6595 = vadd.f32 %v6593, %v6594
      %v6596 = vsel %vm201, %v6524, 0.0
      %v6597 = vadd.f32 %v6595, %v6596
      %v6598 = vsel %vm201, %v6529, 0.0
      %v6599 = vadd.f32 %v6597, %v6598
      %v6600 = vsel %vm201, %v6532, 0.0
      %v6601 = vadd.f32 %v6599, %v6600
      %v6602 = vsel %vm201, %v6537, 0.0
      %v6603 = vadd.f32 %v6601, %v6602
      %v6604 = vsel %vm201, %v6540, 0.0
      %v6605 = vadd.f32 %v6603, %v6604
      %v6606 = vrot.slane %v6605, 4
      %v6607 = vadd.f32 %v6605, %v6606
      %v6608 = vrot.slane %v6607, 2
      %v6609 = vadd.f32 %v6607, %v6608
      %v6610 = vrot.slane %v6609, 1
      %v6611 = vadd.f32 %v6609, %v6610
      %v6612 = vmul.f32 %v6611, 0.00390625
      %v6613 = vmul.f32 %v6417, %v6417
      %v6614 = vmul.f32 %v6420, %v6420
      %v6615 = vmul.f32 %v6425, %v6425
      %v6616 = vmul.f32 %v6428, %v6428
      %v6617 = vmul.f32 %v6433, %v6433
      %v6618 = vmul.f32 %v6436, %v6436
      %v6619 = vmul.f32 %v6441, %v6441
      %v6620 = vmul.f32 %v6444, %v6444
      %v6621 = vmul.f32 %v6449, %v6449
      %v6622 = vmul.f32 %v6452, %v6452
      %v6623 = vmul.f32 %v6457, %v6457
      %v6624 = vmul.f32 %v6460, %v6460
      %v6625 = vmul.f32 %v6465, %v6465
      %v6626 = vmul.f32 %v6468, %v6468
      %v6627 = vmul.f32 %v6473, %v6473
      %v6628 = vmul.f32 %v6476, %v6476
      %v6629 = vmul.f32 %v6481, %v6481
      %v6630 = vmul.f32 %v6484, %v6484
      %v6631 = vmul.f32 %v6489, %v6489
      %v6632 = vmul.f32 %v6492, %v6492
      %v6633 = vmul.f32 %v6497, %v6497
      %v6634 = vmul.f32 %v6500, %v6500
      %v6635 = vmul.f32 %v6505, %v6505
      %v6636 = vmul.f32 %v6508, %v6508
      %v6637 = vmul.f32 %v6513, %v6513
      %v6638 = vmul.f32 %v6516, %v6516
      %v6639 = vmul.f32 %v6521, %v6521
      %v6640 = vmul.f32 %v6524, %v6524
      %v6641 = vmul.f32 %v6529, %v6529
      %v6642 = vmul.f32 %v6532, %v6532
      %v6643 = vmul.f32 %v6537, %v6537
      %v6644 = vmul.f32 %v6540, %v6540
      %v6645 = vsel %vm201, %v6613, 0.0
      %v6646 = vsel %vm201, %v6614, 0.0
      %v6647 = vadd.f32 %v6645, %v6646
      %v6648 = vsel %vm201, %v6615, 0.0
      %v6649 = vadd.f32 %v6647, %v6648
      %v6650 = vsel %vm201, %v6616, 0.0
      %v6651 = vadd.f32 %v6649, %v6650
      %v6652 = vsel %vm201, %v6617, 0.0
      %v6653 = vadd.f32 %v6651, %v6652
      %v6654 = vsel %vm201, %v6618, 0.0
      %v6655 = vadd.f32 %v6653, %v6654
      %v6656 = vsel %vm201, %v6619, 0.0
      %v6657 = vadd.f32 %v6655, %v6656
      %v6658 = vsel %vm201, %v6620, 0.0
      %v6659 = vadd.f32 %v6657, %v6658
      %v6660 = vsel %vm201, %v6621, 0.0
      %v6661 = vadd.f32 %v6659, %v6660
      %v6662 = vsel %vm201, %v6622, 0.0
      %v6663 = vadd.f32 %v6661, %v6662
      %v6664 = vsel %vm201, %v6623, 0.0
      %v6665 = vadd.f32 %v6663, %v6664
      %v6666 = vsel %vm201, %v6624, 0.0
      %v6667 = vadd.f32 %v6665, %v6666
      %v6668 = vsel %vm201, %v6625, 0.0
      %v6669 = vadd.f32 %v6667, %v6668
      %v6670 = vsel %vm201, %v6626, 0.0
      %v6671 = vadd.f32 %v6669, %v6670
      %v6672 = vsel %vm201, %v6627, 0.0
      %v6673 = vadd.f32 %v6671, %v6672
      %v6674 = vsel %vm201, %v6628, 0.0
      %v6675 = vadd.f32 %v6673, %v6674
      %v6676 = vsel %vm201, %v6629, 0.0
      %v6677 = vadd.f32 %v6675, %v6676
      %v6678 = vsel %vm201, %v6630, 0.0
      %v6679 = vadd.f32 %v6677, %v6678
      %v6680 = vsel %vm201, %v6631, 0.0
      %v6681 = vadd.f32 %v6679, %v6680
      %v6682 = vsel %vm201, %v6632, 0.0
      %v6683 = vadd.f32 %v6681, %v6682
      %v6684 = vsel %vm201, %v6633, 0.0
      %v6685 = vadd.f32 %v6683, %v6684
      %v6686 = vsel %vm201, %v6634, 0.0
      %v6687 = vadd.f32 %v6685, %v6686
      %v6688 = vsel %vm201, %v6635, 0.0
      %v6689 = vadd.f32 %v6687, %v6688
      %v6690 = vsel %vm201, %v6636, 0.0
      %v6691 = vadd.f32 %v6689, %v6690
      %v6692 = vsel %vm201, %v6637, 0.0
      %v6693 = vadd.f32 %v6691, %v6692
      %v6694 = vsel %vm201, %v6638, 0.0
      %v6695 = vadd.f32 %v6693, %v6694
      %v6696 = vsel %vm201, %v6639, 0.0
      %v6697 = vadd.f32 %v6695, %v6696
      %v6698 = vsel %vm201, %v6640, 0.0
      %v6699 = vadd.f32 %v6697, %v6698
      %v6700 = vsel %vm201, %v6641, 0.0
      %v6701 = vadd.f32 %v6699, %v6700
      %v6702 = vsel %vm201, %v6642, 0.0
      %v6703 = vadd.f32 %v6701, %v6702
      %v6704 = vsel %vm201, %v6643, 0.0
      %v6705 = vadd.f32 %v6703, %v6704
      %v6706 = vsel %vm201, %v6644, 0.0
      %v6707 = vadd.f32 %v6705, %v6706
      %v6708 = vrot.slane %v6707, 4
      %v6709 = vadd.f32 %v6707, %v6708
      %v6710 = vrot.slane %v6709, 2
      %v6711 = vadd.f32 %v6709, %v6710
      %v6712 = vrot.slane %v6711, 1
      %v6713 = vadd.f32 %v6711, %v6712
      %v6714 = vmul.f32 %v6713, 0.00390625
      %v6715 = vmul.f32 %v6612, %v6612
      %v6716 = vsub.f32 %v6714, %v6715
      %v6717 = vsub.f32 %v6417, %v6612
      %v6718 = vsub.f32 %v6420, %v6612
      %v6719 = vsub.f32 %v6425, %v6612
      %v6720 = vsub.f32 %v6428, %v6612
      %v6721 = vsub.f32 %v6433, %v6612
      %v6722 = vsub.f32 %v6436, %v6612
      %v6723 = vsub.f32 %v6441, %v6612
      %v6724 = vsub.f32 %v6444, %v6612
      %v6725 = vsub.f32 %v6449, %v6612
      %v6726 = vsub.f32 %v6452, %v6612
      %v6727 = vsub.f32 %v6457, %v6612
      %v6728 = vsub.f32 %v6460, %v6612
      %v6729 = vsub.f32 %v6465, %v6612
      %v6730 = vsub.f32 %v6468, %v6612
      %v6731 = vsub.f32 %v6473, %v6612
      %v6732 = vsub.f32 %v6476, %v6612
      %v6733 = vsub.f32 %v6481, %v6612
      %v6734 = vsub.f32 %v6484, %v6612
      %v6735 = vsub.f32 %v6489, %v6612
      %v6736 = vsub.f32 %v6492, %v6612
      %v6737 = vsub.f32 %v6497, %v6612
      %v6738 = vsub.f32 %v6500, %v6612
      %v6739 = vsub.f32 %v6505, %v6612
      %v6740 = vsub.f32 %v6508, %v6612
      %v6741 = vsub.f32 %v6513, %v6612
      %v6742 = vsub.f32 %v6516, %v6612
      %v6743 = vsub.f32 %v6521, %v6612
      %v6744 = vsub.f32 %v6524, %v6612
      %v6745 = vsub.f32 %v6529, %v6612
      %v6746 = vsub.f32 %v6532, %v6612
      %v6747 = vsub.f32 %v6537, %v6612
      %v6748 = vsub.f32 %v6540, %v6612
      %v6749 = vadd.f32 %v6716, 1e-05
      %v6750 = vrsqrt.pop %v6749
      %v6751 = vmul.f32 %v6717, %v6750
      %v6752 = vmul.f32 %v6718, %v6750
      %v6753 = vmul.f32 %v6719, %v6750
      %v6754 = vmul.f32 %v6720, %v6750
      %v6755 = vmul.f32 %v6721, %v6750
      %v6756 = vmul.f32 %v6722, %v6750
      %v6757 = vmul.f32 %v6723, %v6750
      %v6758 = vmul.f32 %v6724, %v6750
      %v6759 = vmul.f32 %v6725, %v6750
      %v6760 = vmul.f32 %v6726, %v6750
      %v6761 = vmul.f32 %v6727, %v6750
      %v6762 = vmul.f32 %v6728, %v6750
      %v6763 = vmul.f32 %v6729, %v6750
      %v6764 = vmul.f32 %v6730, %v6750
      %v6765 = vmul.f32 %v6731, %v6750
      %v6766 = vmul.f32 %v6732, %v6750
      %v6767 = vmul.f32 %v6733, %v6750
      %v6768 = vmul.f32 %v6734, %v6750
      %v6769 = vmul.f32 %v6735, %v6750
      %v6770 = vmul.f32 %v6736, %v6750
      %v6771 = vmul.f32 %v6737, %v6750
      %v6772 = vmul.f32 %v6738, %v6750
      %v6773 = vmul.f32 %v6739, %v6750
      %v6774 = vmul.f32 %v6740, %v6750
      %v6775 = vmul.f32 %v6741, %v6750
      %v6776 = vmul.f32 %v6742, %v6750
      %v6777 = vmul.f32 %v6743, %v6750
      %v6778 = vmul.f32 %v6744, %v6750
      %v6779 = vmul.f32 %v6745, %v6750
      %v6780 = vmul.f32 %v6746, %v6750
      %v6781 = vmul.f32 %v6747, %v6750
      %v6782 = vmul.f32 %v6748, %v6750
      %vm6783 = vcmp.ge.f32.partialorder %v6751, 0.0
      %vm6784 = vcmp.ge.f32.partialorder %v6752, 0.0
      %vm6785 = vcmp.ge.f32.partialorder %v6753, 0.0
      %vm6786 = vcmp.ge.f32.partialorder %v6754, 0.0
      %vm6787 = vcmp.ge.f32.partialorder %v6755, 0.0
      %vm6788 = vcmp.ge.f32.partialorder %v6756, 0.0
      %vm6789 = vcmp.ge.f32.partialorder %v6757, 0.0
      %vm6790 = vcmp.ge.f32.partialorder %v6758, 0.0
      %vm6791 = vcmp.ge.f32.partialorder %v6759, 0.0
      %vm6792 = vcmp.ge.f32.partialorder %v6760, 0.0
      %vm6793 = vcmp.ge.f32.partialorder %v6761, 0.0
      %vm6794 = vcmp.ge.f32.partialorder %v6762, 0.0
      %vm6795 = vcmp.ge.f32.partialorder %v6763, 0.0
      %vm6796 = vcmp.ge.f32.partialorder %v6764, 0.0
      %vm6797 = vcmp.ge.f32.partialorder %v6765, 0.0
      %vm6798 = vcmp.ge.f32.partialorder %v6766, 0.0
      %vm6799 = vcmp.ge.f32.partialorder %v6767, 0.0
      %vm6800 = vcmp.ge.f32.partialorder %v6768, 0.0
      %vm6801 = vcmp.ge.f32.partialorder %v6769, 0.0
      %vm6802 = vcmp.ge.f32.partialorder %v6770, 0.0
      %vm6803 = vcmp.ge.f32.partialorder %v6771, 0.0
      %vm6804 = vcmp.ge.f32.partialorder %v6772, 0.0
      %vm6805 = vcmp.ge.f32.partialorder %v6773, 0.0
      %vm6806 = vcmp.ge.f32.partialorder %v6774, 0.0
      %vm6807 = vcmp.ge.f32.partialorder %v6775, 0.0
      %vm6808 = vcmp.ge.f32.partialorder %v6776, 0.0
      %vm6809 = vcmp.ge.f32.partialorder %v6777, 0.0
      %vm6810 = vcmp.ge.f32.partialorder %v6778, 0.0
      %vm6811 = vcmp.ge.f32.partialorder %v6779, 0.0
      %vm6812 = vcmp.ge.f32.partialorder %v6780, 0.0
      %vm6813 = vcmp.ge.f32.partialorder %v6781, 0.0
      %vm6814 = vcmp.ge.f32.partialorder %v6782, 0.0
      %v6815 = vmul.f32 %v6751, 0.2
      %v6816 = vmul.f32 %v6752, 0.2
      %v6817 = vmul.f32 %v6753, 0.2
      %v6818 = vmul.f32 %v6754, 0.2
      %v6819 = vmul.f32 %v6755, 0.2
      %v6820 = vmul.f32 %v6756, 0.2
      %v6821 = vmul.f32 %v6757, 0.2
      %v6822 = vmul.f32 %v6758, 0.2
      %v6823 = vmul.f32 %v6759, 0.2
      %v6824 = vmul.f32 %v6760, 0.2
      %v6825 = vmul.f32 %v6761, 0.2
      %v6826 = vmul.f32 %v6762, 0.2
      %v6827 = vmul.f32 %v6763, 0.2
      %v6828 = vmul.f32 %v6764, 0.2
      %v6829 = vmul.f32 %v6765, 0.2
      %v6830 = vmul.f32 %v6766, 0.2
      %v6831 = vmul.f32 %v6767, 0.2
      %v6832 = vmul.f32 %v6768, 0.2
      %v6833 = vmul.f32 %v6769, 0.2
      %v6834 = vmul.f32 %v6770, 0.2
      %v6835 = vmul.f32 %v6771, 0.2
      %v6836 = vmul.f32 %v6772, 0.2
      %v6837 = vmul.f32 %v6773, 0.2
      %v6838 = vmul.f32 %v6774, 0.2
      %v6839 = vmul.f32 %v6775, 0.2
      %v6840 = vmul.f32 %v6776, 0.2
      %v6841 = vmul.f32 %v6777, 0.2
      %v6842 = vmul.f32 %v6778, 0.2
      %v6843 = vmul.f32 %v6779, 0.2
      %v6844 = vmul.f32 %v6780, 0.2
      %v6845 = vmul.f32 %v6781, 0.2
      %v6846 = vmul.f32 %v6782, 0.2
      %v6847 = vsel %vm6783, %v6751, %v6815
      %v6848 = vsel %vm6784, %v6752, %v6816
      %v6849 = vsel %vm6785, %v6753, %v6817
      %v6850 = vsel %vm6786, %v6754, %v6818
      %v6851 = vsel %vm6787, %v6755, %v6819
      %v6852 = vsel %vm6788, %v6756, %v6820
      %v6853 = vsel %vm6789, %v6757, %v6821
      %v6854 = vsel %vm6790, %v6758, %v6822
      %v6855 = vsel %vm6791, %v6759, %v6823
      %v6856 = vsel %vm6792, %v6760, %v6824
      %v6857 = vsel %vm6793, %v6761, %v6825
      %v6858 = vsel %vm6794, %v6762, %v6826
      %v6859 = vsel %vm6795, %v6763, %v6827
      %v6860 = vsel %vm6796, %v6764, %v6828
      %v6861 = vsel %vm6797, %v6765, %v6829
      %v6862 = vsel %vm6798, %v6766, %v6830
      %v6863 = vsel %vm6799, %v6767, %v6831
      %v6864 = vsel %vm6800, %v6768, %v6832
      %v6865 = vsel %vm6801, %v6769, %v6833
      %v6866 = vsel %vm6802, %v6770, %v6834
      %v6867 = vsel %vm6803, %v6771, %v6835
      %v6868 = vsel %vm6804, %v6772, %v6836
      %v6869 = vsel %vm6805, %v6773, %v6837
      %v6870 = vsel %vm6806, %v6774, %v6838
      %v6871 = vsel %vm6807, %v6775, %v6839
      %v6872 = vsel %vm6808, %v6776, %v6840
      %v6873 = vsel %vm6809, %v6777, %v6841
      %v6874 = vsel %vm6810, %v6778, %v6842
      %v6875 = vsel %vm6811, %v6779, %v6843
      %v6876 = vsel %vm6812, %v6780, %v6844
      %v6877 = vsel %vm6813, %v6781, %v6845
      %v6878 = vsel %vm6814, %v6782, %v6846
      %6879 = vst.msk [vmem:[%s289 + $0x1] sm:$0xff] %vm201, %v6847
      %6880 = vst.msk [vmem:[%s289 + $0x9] sm:$0xff] %vm201, %v6848
      %6881 = vst.msk [vmem:[%s289 + $0x19] sm:$0xff] %vm201, %v6849
      %6882 = vst.msk [vmem:[%s289 + $0x21] sm:$0xff] %vm201, %v6850
      %6883 = vst.msk [vmem:[%s289 + $0x31] sm:$0xff] %vm201, %v6851
      %6884 = vst.msk [vmem:[%s289 + $0x39] sm:$0xff] %vm201, %v6852
      %6885 = vst.msk [vmem:[%s289 + $0x49] sm:$0xff] %vm201, %v6853
      %6886 = vst.msk [vmem:[%s289 + $0x51] sm:$0xff] %vm201, %v6854
      %6887 = vst.msk [vmem:[%s289 + $0x61] sm:$0xff] %vm201, %v6855
      %6888 = vst.msk [vmem:[%s289 + $0x69] sm:$0xff] %vm201, %v6856
      %6889 = vst.msk [vmem:[%s289 + $0x79] sm:$0xff] %vm201, %v6857
      %6890 = vst.msk [vmem:[%s289 + $0x81] sm:$0xff] %vm201, %v6858
      %6891 = vst.msk [vmem:[%s289 + $0x91] sm:$0xff] %vm201, %v6859
      %6892 = vst.msk [vmem:[%s289 + $0x99] sm:$0xff] %vm201, %v6860
      %6893 = vst.msk [vmem:[%s289 + $0xa9] sm:$0xff] %vm201, %v6861
      %6894 = vst.msk [vmem:[%s289 + $0xb1] sm:$0xff] %vm201, %v6862
      %6895 = vst.msk [vmem:[%s289 + $0xc1] sm:$0xff] %vm201, %v6863
      %6896 = vst.msk [vmem:[%s289 + $0xc9] sm:$0xff] %vm201, %v6864
      %6897 = vst.msk [vmem:[%s289 + $0xd9] sm:$0xff] %vm201, %v6865
      %6898 = vst.msk [vmem:[%s289 + $0xe1] sm:$0xff] %vm201, %v6866
      %6899 = vst.msk [vmem:[%s289 + $0xf1] sm:$0xff] %vm201, %v6867
      %6900 = vst.msk [vmem:[%s289 + $0xf9] sm:$0xff] %vm201, %v6868
      %6901 = vst.msk [vmem:[%s289 + $0x109] sm:$0xff] %vm201, %v6869
      %6902 = vst.msk [vmem:[%s289 + $0x111] sm:$0xff] %vm201, %v6870
      %6903 = vst.msk [vmem:[%s289 + $0x121] sm:$0xff] %vm201, %v6871
      %6904 = vst.msk [vmem:[%s289 + $0x129] sm:$0xff] %vm201, %v6872
      %6905 = vst.msk [vmem:[%s289 + $0x139] sm:$0xff] %vm201, %v6873
      %6906 = vst.msk [vmem:[%s289 + $0x141] sm:$0xff] %vm201, %v6874
      %6907 = vst.msk [vmem:[%s289 + $0x151] sm:$0xff] %vm201, %v6875
      %6908 = vst.msk [vmem:[%s289 + $0x159] sm:$0xff] %vm201, %v6876
      %6909 = vst.msk [vmem:[%s289 + $0x169] sm:$0xff] %vm201, %v6877
      %6910 = vst.msk [vmem:[%s289 + $0x171] sm:$0xff] %vm201, %v6878
      %v6911 = vld [vmem:[#allocation2] sm:$0xff]
      %v6912 = vld [vmem:[#allocation2 + $0x8] sm:$0xff]
      %v6913 = vld [vmem:[#allocation2 + $0x18] sm:$0xff]
      %v6914 = vld [vmem:[#allocation2 + $0x20] sm:$0xff]
      %v6915 = vld [vmem:[#allocation2 + $0x30] sm:$0xff]
      %v6916 = vld [vmem:[#allocation2 + $0x38] sm:$0xff]
      %v6917 = vld [vmem:[#allocation2 + $0x48] sm:$0xff]
      %v6918 = vld [vmem:[#allocation2 + $0x50] sm:$0xff]
      %v6919 = vld [vmem:[#allocation2 + $0x60] sm:$0xff]
      %v6920 = vld [vmem:[#allocation2 + $0x68] sm:$0xff]
      %v6921 = vld [vmem:[#allocation2 + $0x78] sm:$0xff]
      %v6922 = vld [vmem:[#allocation2 + $0x80] sm:$0xff]
      %v6923 = vld [vmem:[#allocation2 + $0x90] sm:$0xff]
      %v6924 = vld [vmem:[#allocation2 + $0x98] sm:$0xff]
      %v6925 = vld [vmem:[#allocation2 + $0xa8] sm:$0xff]
      %v6926 = vld [vmem:[#allocation2 + $0xb0] sm:$0xff]
      %v6927 = vld [vmem:[#allocation2 + $0xc0] sm:$0xff]
      %v6928 = vld [vmem:[#allocation2 + $0xc8] sm:$0xff]
      %v6929 = vld [vmem:[#allocation2 + $0xd8] sm:$0xff]
      %v6930 = vld [vmem:[#allocation2 + $0xe0] sm:$0xff]
      %v6931 = vld [vmem:[#allocation2 + $0xf0] sm:$0xff]
      %v6932 = vld [vmem:[#allocation2 + $0xf8] sm:$0xff]
      %v6933 = vld [vmem:[#allocation2 + $0x108] sm:$0xff]
      %v6934 = vld [vmem:[#allocation2 + $0x110] sm:$0xff]
      %v6935 = vld [vmem:[#allocation2 + $0x120] sm:$0xff]
      %v6936 = vld [vmem:[#allocation2 + $0x128] sm:$0xff]
      %v6937 = vld [vmem:[#allocation2 + $0x138] sm:$0xff]
      %v6938 = vld [vmem:[#allocation2 + $0x140] sm:$0xff]
      %v6939 = vld [vmem:[#allocation2 + $0x150] sm:$0xff]
      %v6940 = vld [vmem:[#allocation2 + $0x158] sm:$0xff]
      %v6941 = vld [vmem:[#allocation2 + $0x168] sm:$0xff]
      %v6942 = vld [vmem:[#allocation2 + $0x170] sm:$0xff]
      %v6943 = vld [vmem:[#allocation2 + $0x1] sm:$0xff]
      %v6944 = vld [vmem:[#allocation2 + $0x9] sm:$0xff]
      %v6945 = vld [vmem:[#allocation2 + $0x19] sm:$0xff]
      %v6946 = vld [vmem:[#allocation2 + $0x21] sm:$0xff]
      %v6947 = vld [vmem:[#allocation2 + $0x31] sm:$0xff]
      %v6948 = vld [vmem:[#allocation2 + $0x39] sm:$0xff]
      %v6949 = vld [vmem:[#allocation2 + $0x49] sm:$0xff]
      %v6950 = vld [vmem:[#allocation2 + $0x51] sm:$0xff]
      %v6951 = vld [vmem:[#allocation2 + $0x61] sm:$0xff]
      %v6952 = vld [vmem:[#allocation2 + $0x69] sm:$0xff]
      %v6953 = vld [vmem:[#allocation2 + $0x79] sm:$0xff]
      %v6954 = vld [vmem:[#allocation2 + $0x81] sm:$0xff]
      %v6955 = vld [vmem:[#allocation2 + $0x91] sm:$0xff]
      %v6956 = vld [vmem:[#allocation2 + $0x99] sm:$0xff]
      %v6957 = vld [vmem:[#allocation2 + $0xa9] sm:$0xff]
      %v6958 = vld [vmem:[#allocation2 + $0xb1] sm:$0xff]
      %v6959 = vld [vmem:[#allocation2 + $0xc1] sm:$0xff]
      %v6960 = vld [vmem:[#allocation2 + $0xc9] sm:$0xff]
      %v6961 = vld [vmem:[#allocation2 + $0xd9] sm:$0xff]
      %v6962 = vld [vmem:[#allocation2 + $0xe1] sm:$0xff]
      %v6963 = vld [vmem:[#allocation2 + $0xf1] sm:$0xff]
      %v6964 = vld [vmem:[#allocation2 + $0xf9] sm:$0xff]
      %v6965 = vld [vmem:[#allocation2 + $0x109] sm:$0xff]
      %v6966 = vld [vmem:[#allocation2 + $0x111] sm:$0xff]
      %v6967 = vld [vmem:[#allocation2 + $0x121] sm:$0xff]
      %v6968 = vld [vmem:[#allocation2 + $0x129] sm:$0xff]
      %v6969 = vld [vmem:[#allocation2 + $0x139] sm:$0xff]
      %v6970 = vld [vmem:[#allocation2 + $0x141] sm:$0xff]
      %v6971 = vld [vmem:[#allocation2 + $0x151] sm:$0xff]
      %v6972 = vld [vmem:[#allocation2 + $0x159] sm:$0xff]
      %v6973 = vld [vmem:[#allocation2 + $0x169] sm:$0xff]
      %v6974 = vld [vmem:[#allocation2 + $0x171] sm:$0xff]
      %v6975 = vld [vmem:[#allocation2 + $0x2] sm:$0xff]
      %v6976 = vld [vmem:[#allocation2 + $0xa] sm:$0xff]
      %v6977 = vld [vmem:[#allocation2 + $0x1a] sm:$0xff]
      %v6978 = vld [vmem:[#allocation2 + $0x22] sm:$0xff]
      %v6979 = vld [vmem:[#allocation2 + $0x32] sm:$0xff]
      %v6980 = vld [vmem:[#allocation2 + $0x3a] sm:$0xff]
      %v6981 = vld [vmem:[#allocation2 + $0x4a] sm:$0xff]
      %v6982 = vld [vmem:[#allocation2 + $0x52] sm:$0xff]
      %v6983 = vld [vmem:[#allocation2 + $0x62] sm:$0xff]
      %v6984 = vld [vmem:[#allocation2 + $0x6a] sm:$0xff]
      %v6985 = vld [vmem:[#allocation2 + $0x7a] sm:$0xff]
      %v6986 = vld [vmem:[#allocation2 + $0x82] sm:$0xff]
      %v6987 = vld [vmem:[#allocation2 + $0x92] sm:$0xff]
      %v6988 = vld [vmem:[#allocation2 + $0x9a] sm:$0xff]
      %v6989 = vld [vmem:[#allocation2 + $0xaa] sm:$0xff]
      %v6990 = vld [vmem:[#allocation2 + $0xb2] sm:$0xff]
      %v6991 = vld [vmem:[#allocation2 + $0xc2] sm:$0xff]
      %v6992 = vld [vmem:[#allocation2 + $0xca] sm:$0xff]
      %v6993 = vld [vmem:[#allocation2 + $0xda] sm:$0xff]
      %v6994 = vld [vmem:[#allocation2 + $0xe2] sm:$0xff]
      %v6995 = vld [vmem:[#allocation2 + $0xf2] sm:$0xff]
      %v6996 = vld [vmem:[#allocation2 + $0xfa] sm:$0xff]
      %v6997 = vld [vmem:[#allocation2 + $0x10a] sm:$0xff]
      %v6998 = vld [vmem:[#allocation2 + $0x112] sm:$0xff]
      %v6999 = vld [vmem:[#allocation2 + $0x122] sm:$0xff]
      %v7000 = vld [vmem:[#allocation2 + $0x12a] sm:$0xff]
      %v7001 = vld [vmem:[#allocation2 + $0x13a] sm:$0xff]
      %v7002 = vld [vmem:[#allocation2 + $0x142] sm:$0xff]
      %v7003 = vld [vmem:[#allocation2 + $0x152] sm:$0xff]
      %v7004 = vld [vmem:[#allocation2 + $0x15a] sm:$0xff]
      %v7005 = vld [vmem:[#allocation2 + $0x16a] sm:$0xff]
      %v7006 = vld [vmem:[#allocation2 + $0x172] sm:$0xff]
      %v7007 = vld [vmem:[%s289] sm:$0xff]
      %v7008 = vld [vmem:[%s289 + $0x8] sm:$0xff]
      %v7009 = vld [vmem:[%s289 + $0x18] sm:$0xff]
      %v7010 = vld [vmem:[%s289 + $0x20] sm:$0xff]
      %v7011 = vld [vmem:[%s289 + $0x30] sm:$0xff]
      %v7012 = vld [vmem:[%s289 + $0x38] sm:$0xff]
      %v7013 = vld [vmem:[%s289 + $0x48] sm:$0xff]
      %v7014 = vld [vmem:[%s289 + $0x50] sm:$0xff]
      %v7015 = vld [vmem:[%s289 + $0x60] sm:$0xff]
      %v7016 = vld [vmem:[%s289 + $0x68] sm:$0xff]
      %v7017 = vld [vmem:[%s289 + $0x78] sm:$0xff]
      %v7018 = vld [vmem:[%s289 + $0x80] sm:$0xff]
      %v7019 = vld [vmem:[%s289 + $0x90] sm:$0xff]
      %v7020 = vld [vmem:[%s289 + $0x98] sm:$0xff]
      %v7021 = vld [vmem:[%s289 + $0xa8] sm:$0xff]
      %v7022 = vld [vmem:[%s289 + $0xb0] sm:$0xff]
      %v7023 = vld [vmem:[%s289 + $0xc0] sm:$0xff]
      %v7024 = vld [vmem:[%s289 + $0xc8] sm:$0xff]
      %v7025 = vld [vmem:[%s289 + $0xd8] sm:$0xff]
      %v7026 = vld [vmem:[%s289 + $0xe0] sm:$0xff]
      %v7027 = vld [vmem:[%s289 + $0xf0] sm:$0xff]
      %v7028 = vld [vmem:[%s289 + $0xf8] sm:$0xff]
      %v7029 = vld [vmem:[%s289 + $0x108] sm:$0xff]
      %v7030 = vld [vmem:[%s289 + $0x110] sm:$0xff]
      %v7031 = vld [vmem:[%s289 + $0x120] sm:$0xff]
      %v7032 = vld [vmem:[%s289 + $0x128] sm:$0xff]
      %v7033 = vld [vmem:[%s289 + $0x138] sm:$0xff]
      %v7034 = vld [vmem:[%s289 + $0x140] sm:$0xff]
      %v7035 = vld [vmem:[%s289 + $0x150] sm:$0xff]
      %v7036 = vld [vmem:[%s289 + $0x158] sm:$0xff]
      %v7037 = vld [vmem:[%s289 + $0x168] sm:$0xff]
      %v7038 = vld [vmem:[%s289 + $0x170] sm:$0xff]
      %v7039 = vld [vmem:[%s289 + $0x1] sm:$0xff]
      %v7040 = vld [vmem:[%s289 + $0x9] sm:$0xff]
      %v7041 = vld [vmem:[%s289 + $0x19] sm:$0xff]
      %v7042 = vld [vmem:[%s289 + $0x21] sm:$0xff]
      %v7043 = vld [vmem:[%s289 + $0x31] sm:$0xff]
      %v7044 = vld [vmem:[%s289 + $0x39] sm:$0xff]
      %v7045 = vld [vmem:[%s289 + $0x49] sm:$0xff]
      %v7046 = vld [vmem:[%s289 + $0x51] sm:$0xff]
      %v7047 = vld [vmem:[%s289 + $0x61] sm:$0xff]
      %v7048 = vld [vmem:[%s289 + $0x69] sm:$0xff]
      %v7049 = vld [vmem:[%s289 + $0x79] sm:$0xff]
      %v7050 = vld [vmem:[%s289 + $0x81] sm:$0xff]
      %v7051 = vld [vmem:[%s289 + $0x91] sm:$0xff]
      %v7052 = vld [vmem:[%s289 + $0x99] sm:$0xff]
      %v7053 = vld [vmem:[%s289 + $0xa9] sm:$0xff]
      %v7054 = vld [vmem:[%s289 + $0xb1] sm:$0xff]
      %v7055 = vld [vmem:[%s289 + $0xc1] sm:$0xff]
      %v7056 = vld [vmem:[%s289 + $0xc9] sm:$0xff]
      %v7057 = vld [vmem:[%s289 + $0xd9] sm:$0xff]
      %v7058 = vld [vmem:[%s289 + $0xe1] sm:$0xff]
      %v7059 = vld [vmem:[%s289 + $0xf1] sm:$0xff]
      %v7060 = vld [vmem:[%s289 + $0xf9] sm:$0xff]
      %v7061 = vld [vmem:[%s289 + $0x109] sm:$0xff]
      %v7062 = vld [vmem:[%s289 + $0x111] sm:$0xff]
      %v7063 = vld [vmem:[%s289 + $0x121] sm:$0xff]
      %v7064 = vld [vmem:[%s289 + $0x129] sm:$0xff]
      %v7065 = vld [vmem:[%s289 + $0x139] sm:$0xff]
      %v7066 = vld [vmem:[%s289 + $0x141] sm:$0xff]
      %v7067 = vld [vmem:[%s289 + $0x151] sm:$0xff]
      %v7068 = vld [vmem:[%s289 + $0x159] sm:$0xff]
      %v7069 = vld [vmem:[%s289 + $0x169] sm:$0xff]
      %v7070 = vld [vmem:[%s289 + $0x171] sm:$0xff]
      %v7071 = vld [vmem:[%s289 + $0x2] sm:$0xff]
      %v7072 = vld [vmem:[%s289 + $0xa] sm:$0xff]
      %v7073 = vld [vmem:[%s289 + $0x1a] sm:$0xff]
      %v7074 = vld [vmem:[%s289 + $0x22] sm:$0xff]
      %v7075 = vld [vmem:[%s289 + $0x32] sm:$0xff]
      %v7076 = vld [vmem:[%s289 + $0x3a] sm:$0xff]
      %v7077 = vld [vmem:[%s289 + $0x4a] sm:$0xff]
      %v7078 = vld [vmem:[%s289 + $0x52] sm:$0xff]
      %v7079 = vld [vmem:[%s289 + $0x62] sm:$0xff]
      %v7080 = vld [vmem:[%s289 + $0x6a] sm:$0xff]
      %v7081 = vld [vmem:[%s289 + $0x7a] sm:$0xff]
      %v7082 = vld [vmem:[%s289 + $0x82] sm:$0xff]
      %v7083 = vld [vmem:[%s289 + $0x92] sm:$0xff]
      %v7084 = vld [vmem:[%s289 + $0x9a] sm:$0xff]
      %v7085 = vld [vmem:[%s289 + $0xaa] sm:$0xff]
      %v7086 = vld [vmem:[%s289 + $0xb2] sm:$0xff]
      %v7087 = vld [vmem:[%s289 + $0xc2] sm:$0xff]
      %v7088 = vld [vmem:[%s289 + $0xca] sm:$0xff]
      %v7089 = vld [vmem:[%s289 + $0xda] sm:$0xff]
      %v7090 = vld [vmem:[%s289 + $0xe2] sm:$0xff]
      %v7091 = vld [vmem:[%s289 + $0xf2] sm:$0xff]
      %v7092 = vld [vmem:[%s289 + $0xfa] sm:$0xff]
      %v7093 = vld [vmem:[%s289 + $0x10a] sm:$0xff]
      %v7094 = vld [vmem:[%s289 + $0x112] sm:$0xff]
      %v7095 = vld [vmem:[%s289 + $0x122] sm:$0xff]
      %v7096 = vld [vmem:[%s289 + $0x12a] sm:$0xff]
      %v7097 = vld [vmem:[%s289 + $0x13a] sm:$0xff]
      %v7098 = vld [vmem:[%s289 + $0x142] sm:$0xff]
      %v7099 = vld [vmem:[%s289 + $0x152] sm:$0xff]
      %v7100 = vld [vmem:[%s289 + $0x15a] sm:$0xff]
      %v7101 = vld [vmem:[%s289 + $0x16a] sm:$0xff]
      %v7102 = vld [vmem:[%s289 + $0x172] sm:$0xff]
      %v7103 = vld [vmem:[%s515] sm:$0xff]
      %v7104 = vld [vmem:[%s515 + $0x8] sm:$0xff]
      %v7105 = vld [vmem:[%s515 + $0x18] sm:$0xff]
      %v7106 = vld [vmem:[%s515 + $0x20] sm:$0xff]
      %v7107 = vld [vmem:[%s515 + $0x30] sm:$0xff]
      %v7108 = vld [vmem:[%s515 + $0x38] sm:$0xff]
      %v7109 = vld [vmem:[%s515 + $0x48] sm:$0xff]
      %v7110 = vld [vmem:[%s515 + $0x50] sm:$0xff]
      %v7111 = vld [vmem:[%s515 + $0x60] sm:$0xff]
      %v7112 = vld [vmem:[%s515 + $0x68] sm:$0xff]
      %v7113 = vld [vmem:[%s515 + $0x78] sm:$0xff]
      %v7114 = vld [vmem:[%s515 + $0x80] sm:$0xff]
      %v7115 = vld [vmem:[%s515 + $0x90] sm:$0xff]
      %v7116 = vld [vmem:[%s515 + $0x98] sm:$0xff]
      %v7117 = vld [vmem:[%s515 + $0xa8] sm:$0xff]
      %v7118 = vld [vmem:[%s515 + $0xb0] sm:$0xff]
      %v7119 = vld [vmem:[%s515 + $0xc0] sm:$0xff]
      %v7120 = vld [vmem:[%s515 + $0xc8] sm:$0xff]
      %v7121 = vld [vmem:[%s515 + $0xd8] sm:$0xff]
      %v7122 = vld [vmem:[%s515 + $0xe0] sm:$0xff]
      %v7123 = vld [vmem:[%s515 + $0xf0] sm:$0xff]
      %v7124 = vld [vmem:[%s515 + $0xf8] sm:$0xff]
      %v7125 = vld [vmem:[%s515 + $0x108] sm:$0xff]
      %v7126 = vld [vmem:[%s515 + $0x110] sm:$0xff]
      %v7127 = vld [vmem:[%s515 + $0x120] sm:$0xff]
      %v7128 = vld [vmem:[%s515 + $0x128] sm:$0xff]
      %v7129 = vld [vmem:[%s515 + $0x138] sm:$0xff]
      %v7130 = vld [vmem:[%s515 + $0x140] sm:$0xff]
      %v7131 = vld [vmem:[%s515 + $0x150] sm:$0xff]
      %v7132 = vld [vmem:[%s515 + $0x158] sm:$0xff]
      %v7133 = vld [vmem:[%s515 + $0x168] sm:$0xff]
      %v7134 = vld [vmem:[%s515 + $0x170] sm:$0xff]
      %v7135 = vld [vmem:[%s515 + $0x1] sm:$0xff]
      %v7136 = vld [vmem:[%s515 + $0x9] sm:$0xff]
      %v7137 = vld [vmem:[%s515 + $0x19] sm:$0xff]
      %v7138 = vld [vmem:[%s515 + $0x21] sm:$0xff]
      %v7139 = vld [vmem:[%s515 + $0x31] sm:$0xff]
      %v7140 = vld [vmem:[%s515 + $0x39] sm:$0xff]
      %v7141 = vld [vmem:[%s515 + $0x49] sm:$0xff]
      %v7142 = vld [vmem:[%s515 + $0x51] sm:$0xff]
      %v7143 = vld [vmem:[%s515 + $0x61] sm:$0xff]
      %v7144 = vld [vmem:[%s515 + $0x69] sm:$0xff]
      %v7145 = vld [vmem:[%s515 + $0x79] sm:$0xff]
      %v7146 = vld [vmem:[%s515 + $0x81] sm:$0xff]
      %v7147 = vld [vmem:[%s515 + $0x91] sm:$0xff]
      %v7148 = vld [vmem:[%s515 + $0x99] sm:$0xff]
      %v7149 = vld [vmem:[%s515 + $0xa9] sm:$0xff]
      %v7150 = vld [vmem:[%s515 + $0xb1] sm:$0xff]
      %v7151 = vld [vmem:[%s515 + $0xc1] sm:$0xff]
      %v7152 = vld [vmem:[%s515 + $0xc9] sm:$0xff]
      %v7153 = vld [vmem:[%s515 + $0xd9] sm:$0xff]
      %v7154 = vld [vmem:[%s515 + $0xe1] sm:$0xff]
      %v7155 = vld [vmem:[%s515 + $0xf1] sm:$0xff]
      %v7156 = vld [vmem:[%s515 + $0xf9] sm:$0xff]
      %v7157 = vld [vmem:[%s515 + $0x109] sm:$0xff]
      %v7158 = vld [vmem:[%s515 + $0x111] sm:$0xff]
      %v7159 = vld [vmem:[%s515 + $0x121] sm:$0xff]
      %v7160 = vld [vmem:[%s515 + $0x129] sm:$0xff]
      %v7161 = vld [vmem:[%s515 + $0x139] sm:$0xff]
      %v7162 = vld [vmem:[%s515 + $0x141] sm:$0xff]
      %v7163 = vld [vmem:[%s515 + $0x151] sm:$0xff]
      %v7164 = vld [vmem:[%s515 + $0x159] sm:$0xff]
      %v7165 = vld [vmem:[%s515 + $0x169] sm:$0xff]
      %v7166 = vld [vmem:[%s515 + $0x171] sm:$0xff]
      %v7167 = vld [vmem:[%s515 + $0x2] sm:$0xff]
      %v7168 = vld [vmem:[%s515 + $0xa] sm:$0xff]
      %v7169 = vld [vmem:[%s515 + $0x1a] sm:$0xff]
      %v7170 = vld [vmem:[%s515 + $0x22] sm:$0xff]
      %v7171 = vld [vmem:[%s515 + $0x32] sm:$0xff]
      %v7172 = vld [vmem:[%s515 + $0x3a] sm:$0xff]
      %v7173 = vld [vmem:[%s515 + $0x4a] sm:$0xff]
      %v7174 = vld [vmem:[%s515 + $0x52] sm:$0xff]
      %v7175 = vld [vmem:[%s515 + $0x62] sm:$0xff]
      %v7176 = vld [vmem:[%s515 + $0x6a] sm:$0xff]
      %v7177 = vld [vmem:[%s515 + $0x7a] sm:$0xff]
      %v7178 = vld [vmem:[%s515 + $0x82] sm:$0xff]
      %v7179 = vld [vmem:[%s515 + $0x92] sm:$0xff]
      %v7180 = vld [vmem:[%s515 + $0x9a] sm:$0xff]
      %v7181 = vld [vmem:[%s515 + $0xaa] sm:$0xff]
      %v7182 = vld [vmem:[%s515 + $0xb2] sm:$0xff]
      %v7183 = vld [vmem:[%s515 + $0xc2] sm:$0xff]
      %v7184 = vld [vmem:[%s515 + $0xca] sm:$0xff]
      %v7185 = vld [vmem:[%s515 + $0xda] sm:$0xff]
      %v7186 = vld [vmem:[%s515 + $0xe2] sm:$0xff]
      %v7187 = vld [vmem:[%s515 + $0xf2] sm:$0xff]
      %v7188 = vld [vmem:[%s515 + $0xfa] sm:$0xff]
      %v7189 = vld [vmem:[%s515 + $0x10a] sm:$0xff]
      %v7190 = vld [vmem:[%s515 + $0x112] sm:$0xff]
      %v7191 = vld [vmem:[%s515 + $0x122] sm:$0xff]
      %v7192 = vld [vmem:[%s515 + $0x12a] sm:$0xff]
      %v7193 = vld [vmem:[%s515 + $0x13a] sm:$0xff]
      %v7194 = vld [vmem:[%s515 + $0x142] sm:$0xff]
      %v7195 = vld [vmem:[%s515 + $0x152] sm:$0xff]
      %v7196 = vld [vmem:[%s515 + $0x15a] sm:$0xff]
      %v7197 = vld [vmem:[%s515 + $0x16a] sm:$0xff]
      %v7198 = vld [vmem:[%s515 + $0x172] sm:$0xff]
      %7231 = vrot.lane.b32.xlu0 %v6943, 64
      %v7232 = vpop.permute.xlu0 %7231
      %7233 = vrot.lane.b32.xlu0 %v6944, 64
      %v7234 = vpop.permute.xlu0 %7233
      %7235 = vrot.lane.b32.xlu0 %v6945, 64
      %v7236 = vpop.permute.xlu0 %7235
      %7237 = vrot.lane.b32.xlu0 %v6946, 64
      %v7238 = vpop.permute.xlu0 %7237
      %7239 = vrot.lane.b32.xlu0 %v6947, 64
      %v7240 = vpop.permute.xlu0 %7239
      %7241 = vrot.lane.b32.xlu0 %v6948, 64
      %v7242 = vpop.permute.xlu0 %7241
      %7243 = vrot.lane.b32.xlu0 %v6949, 64
      %v7244 = vpop.permute.xlu0 %7243
      %7245 = vrot.lane.b32.xlu0 %v6950, 64
      %v7246 = vpop.permute.xlu0 %7245
      %7247 = vrot.lane.b32.xlu0 %v6951, 64
      %v7248 = vpop.permute.xlu0 %7247
      %7249 = vrot.lane.b32.xlu0 %v6952, 64
      %v7250 = vpop.permute.xlu0 %7249
      %7251 = vrot.lane.b32.xlu0 %v6953, 64
      %v7252 = vpop.permute.xlu0 %7251
      %7253 = vrot.lane.b32.xlu0 %v6954, 64
      %v7254 = vpop.permute.xlu0 %7253
      %7255 = vrot.lane.b32.xlu0 %v6955, 64
      %v7256 = vpop.permute.xlu0 %7255
      %7257 = vrot.lane.b32.xlu0 %v6956, 64
      %v7258 = vpop.permute.xlu0 %7257
      %7259 = vrot.lane.b32.xlu0 %v6957, 64
      %v7260 = vpop.permute.xlu0 %7259
      %7261 = vrot.lane.b32.xlu0 %v6958, 64
      %v7262 = vpop.permute.xlu0 %7261
      %7263 = vrot.lane.b32.xlu0 %v6959, 64
      %v7264 = vpop.permute.xlu0 %7263
      %7265 = vrot.lane.b32.xlu0 %v6960, 64
      %v7266 = vpop.permute.xlu0 %7265
      %7267 = vrot.lane.b32.xlu0 %v6961, 64
      %v7268 = vpop.permute.xlu0 %7267
      %7269 = vrot.lane.b32.xlu0 %v6962, 64
      %v7270 = vpop.permute.xlu0 %7269
      %7271 = vrot.lane.b32.xlu0 %v6963, 64
      %v7272 = vpop.permute.xlu0 %7271
      %7273 = vrot.lane.b32.xlu0 %v6964, 64
      %v7274 = vpop.permute.xlu0 %7273
      %7275 = vrot.lane.b32.xlu0 %v6965, 64
      %v7276 = vpop.permute.xlu0 %7275
      %7277 = vrot.lane.b32.xlu0 %v6966, 64
      %v7278 = vpop.permute.xlu0 %7277
      %7279 = vrot.lane.b32.xlu0 %v6967, 64
      %v7280 = vpop.permute.xlu0 %7279
      %7281 = vrot.lane.b32.xlu0 %v6968, 64
      %v7282 = vpop.permute.xlu0 %7281
      %7283 = vrot.lane.b32.xlu0 %v6969, 64
      %v7284 = vpop.permute.xlu0 %7283
      %7285 = vrot.lane.b32.xlu0 %v6970, 64
      %v7286 = vpop.permute.xlu0 %7285
      %7287 = vrot.lane.b32.xlu0 %v6971, 64
      %v7288 = vpop.permute.xlu0 %7287
      %7289 = vrot.lane.b32.xlu0 %v6972, 64
      %v7290 = vpop.permute.xlu0 %7289
      %7291 = vrot.lane.b32.xlu0 %v6973, 64
      %v7292 = vpop.permute.xlu0 %7291
      %7293 = vrot.lane.b32.xlu0 %v6974, 64
      %v7294 = vpop.permute.xlu0 %7293
      %7359 = vrot.lane.b32.xlu0 %v7007, 64
      %v7360 = vpop.permute.xlu0 %7359
      %7361 = vrot.lane.b32.xlu0 %v7008, 64
      %v7362 = vpop.permute.xlu0 %7361
      %7363 = vrot.lane.b32.xlu0 %v7009, 64
      %v7364 = vpop.permute.xlu0 %7363
      %7365 = vrot.lane.b32.xlu0 %v7010, 64
      %v7366 = vpop.permute.xlu0 %7365
      %7367 = vrot.lane.b32.xlu0 %v7011, 64
      %v7368 = vpop.permute.xlu0 %7367
      %7369 = vrot.lane.b32.xlu0 %v7012, 64
      %v7370 = vpop.permute.xlu0 %7369
      %7371 = vrot.lane.b32.xlu0 %v7013, 64
      %v7372 = vpop.permute.xlu0 %7371
      %7373 = vrot.lane.b32.xlu0 %v7014, 64
      %v7374 = vpop.permute.xlu0 %7373
      %7375 = vrot.lane.b32.xlu0 %v7015, 64
      %v7376 = vpop.permute.xlu0 %7375
      %7377 = vrot.lane.b32.xlu0 %v7016, 64
      %v7378 = vpop.permute.xlu0 %7377
      %7379 = vrot.lane.b32.xlu0 %v7017, 64
      %v7380 = vpop.permute.xlu0 %7379
      %7381 = vrot.lane.b32.xlu0 %v7018, 64
      %v7382 = vpop.permute.xlu0 %7381
      %7383 = vrot.lane.b32.xlu0 %v7019, 64
      %v7384 = vpop.permute.xlu0 %7383
      %7385 = vrot.lane.b32.xlu0 %v7020, 64
      %v7386 = vpop.permute.xlu0 %7385
      %7387 = vrot.lane.b32.xlu0 %v7021, 64
      %v7388 = vpop.permute.xlu0 %7387
      %7389 = vrot.lane.b32.xlu0 %v7022, 64
      %v7390 = vpop.permute.xlu0 %7389
      %7391 = vrot.lane.b32.xlu0 %v7023, 64
      %v7392 = vpop.permute.xlu0 %7391
      %7393 = vrot.lane.b32.xlu0 %v7024, 64
      %v7394 = vpop.permute.xlu0 %7393
      %7395 = vrot.lane.b32.xlu0 %v7025, 64
      %v7396 = vpop.permute.xlu0 %7395
      %7397 = vrot.lane.b32.xlu0 %v7026, 64
      %v7398 = vpop.permute.xlu0 %7397
      %7399 = vrot.lane.b32.xlu0 %v7027, 64
      %v7400 = vpop.permute.xlu0 %7399
      %7401 = vrot.lane.b32.xlu0 %v7028, 64
      %v7402 = vpop.permute.xlu0 %7401
      %7403 = vrot.lane.b32.xlu0 %v7029, 64
      %v7404 = vpop.permute.xlu0 %7403
      %7405 = vrot.lane.b32.xlu0 %v7030, 64
      %v7406 = vpop.permute.xlu0 %7405
      %7407 = vrot.lane.b32.xlu0 %v7031, 64
      %v7408 = vpop.permute.xlu0 %7407
      %7409 = vrot.lane.b32.xlu0 %v7032, 64
      %v7410 = vpop.permute.xlu0 %7409
      %7411 = vrot.lane.b32.xlu0 %v7033, 64
      %v7412 = vpop.permute.xlu0 %7411
      %7413 = vrot.lane.b32.xlu0 %v7034, 64
      %v7414 = vpop.permute.xlu0 %7413
      %7415 = vrot.lane.b32.xlu0 %v7035, 64
      %v7416 = vpop.permute.xlu0 %7415
      %7417 = vrot.lane.b32.xlu0 %v7036, 64
      %v7418 = vpop.permute.xlu0 %7417
      %7419 = vrot.lane.b32.xlu0 %v7037, 64
      %v7420 = vpop.permute.xlu0 %7419
      %7421 = vrot.lane.b32.xlu0 %v7038, 64
      %v7422 = vpop.permute.xlu0 %7421
      %7487 = vrot.lane.b32.xlu0 %v7071, 64
      %v7488 = vpop.permute.xlu0 %7487
      %7489 = vrot.lane.b32.xlu0 %v7072, 64
      %v7490 = vpop.permute.xlu0 %7489
      %7491 = vrot.lane.b32.xlu0 %v7073, 64
      %v7492 = vpop.permute.xlu0 %7491
      %7493 = vrot.lane.b32.xlu0 %v7074, 64
      %v7494 = vpop.permute.xlu0 %7493
      %7495 = vrot.lane.b32.xlu0 %v7075, 64
      %v7496 = vpop.permute.xlu0 %7495
      %7497 = vrot.lane.b32.xlu0 %v7076, 64
      %v7498 = vpop.permute.xlu0 %7497
      %7499 = vrot.lane.b32.xlu0 %v7077, 64
      %v7500 = vpop.permute.xlu0 %7499
      %7501 = vrot.lane.b32.xlu0 %v7078, 64
      %v7502 = vpop.permute.xlu0 %7501
      %7503 = vrot.lane.b32.xlu0 %v7079, 64
      %v7504 = vpop.permute.xlu0 %7503
      %7505 = vrot.lane.b32.xlu0 %v7080, 64
      %v7506 = vpop.permute.xlu0 %7505
      %7507 = vrot.lane.b32.xlu0 %v7081, 64
      %v7508 = vpop.permute.xlu0 %7507
      %7509 = vrot.lane.b32.xlu0 %v7082, 64
      %v7510 = vpop.permute.xlu0 %7509
      %7511 = vrot.lane.b32.xlu0 %v7083, 64
      %v7512 = vpop.permute.xlu0 %7511
      %7513 = vrot.lane.b32.xlu0 %v7084, 64
      %v7514 = vpop.permute.xlu0 %7513
      %7515 = vrot.lane.b32.xlu0 %v7085, 64
      %v7516 = vpop.permute.xlu0 %7515
      %7517 = vrot.lane.b32.xlu0 %v7086, 64
      %v7518 = vpop.permute.xlu0 %7517
      %7519 = vrot.lane.b32.xlu0 %v7087, 64
      %v7520 = vpop.permute.xlu0 %7519
      %7521 = vrot.lane.b32.xlu0 %v7088, 64
      %v7522 = vpop.permute.xlu0 %7521
      %7523 = vrot.lane.b32.xlu0 %v7089, 64
      %v7524 = vpop.permute.xlu0 %7523
      %7525 = vrot.lane.b32.xlu0 %v7090, 64
      %v7526 = vpop.permute.xlu0 %7525
      %7527 = vrot.lane.b32.xlu0 %v7091, 64
      %v7528 = vpop.permute.xlu0 %7527
      %7529 = vrot.lane.b32.xlu0 %v7092, 64
      %v7530 = vpop.permute.xlu0 %7529
      %7531 = vrot.lane.b32.xlu0 %v7093, 64
      %v7532 = vpop.permute.xlu0 %7531
      %7533 = vrot.lane.b32.xlu0 %v7094, 64
      %v7534 = vpop.permute.xlu0 %7533
      %7535 = vrot.lane.b32.xlu0 %v7095, 64
      %v7536 = vpop.permute.xlu0 %7535
      %7537 = vrot.lane.b32.xlu0 %v7096, 64
      %v7538 = vpop.permute.xlu0 %7537
      %7539 = vrot.lane.b32.xlu0 %v7097, 64
      %v7540 = vpop.permute.xlu0 %7539
      %7541 = vrot.lane.b32.xlu0 %v7098, 64
      %v7542 = vpop.permute.xlu0 %7541
      %7543 = vrot.lane.b32.xlu0 %v7099, 64
      %v7544 = vpop.permute.xlu0 %7543
      %7545 = vrot.lane.b32.xlu0 %v7100, 64
      %v7546 = vpop.permute.xlu0 %7545
      %7547 = vrot.lane.b32.xlu0 %v7101, 64
      %v7548 = vpop.permute.xlu0 %7547
      %7549 = vrot.lane.b32.xlu0 %v7102, 64
      %v7550 = vpop.permute.xlu0 %7549
      %7615 = vrot.lane.b32.xlu0 %v7135, 64
      %v7616 = vpop.permute.xlu0 %7615
      %7617 = vrot.lane.b32.xlu0 %v7136, 64
      %v7618 = vpop.permute.xlu0 %7617
      %7619 = vrot.lane.b32.xlu0 %v7137, 64
      %v7620 = vpop.permute.xlu0 %7619
      %7621 = vrot.lane.b32.xlu0 %v7138, 64
      %v7622 = vpop.permute.xlu0 %7621
      %7623 = vrot.lane.b32.xlu0 %v7139, 64
      %v7624 = vpop.permute.xlu0 %7623
      %7625 = vrot.lane.b32.xlu0 %v7140, 64
      %v7626 = vpop.permute.xlu0 %7625
      %7627 = vrot.lane.b32.xlu0 %v7141, 64
      %v7628 = vpop.permute.xlu0 %7627
      %7629 = vrot.lane.b32.xlu0 %v7142, 64
      %v7630 = vpop.permute.xlu0 %7629
      %7631 = vrot.lane.b32.xlu0 %v7143, 64
      %v7632 = vpop.permute.xlu0 %7631
      %7633 = vrot.lane.b32.xlu0 %v7144, 64
      %v7634 = vpop.permute.xlu0 %7633
      %7635 = vrot.lane.b32.xlu0 %v7145, 64
      %v7636 = vpop.permute.xlu0 %7635
      %7637 = vrot.lane.b32.xlu0 %v7146, 64
      %v7638 = vpop.permute.xlu0 %7637
      %7639 = vrot.lane.b32.xlu0 %v7147, 64
      %v7640 = vpop.permute.xlu0 %7639
      %7641 = vrot.lane.b32.xlu0 %v7148, 64
      %v7642 = vpop.permute.xlu0 %7641
      %7643 = vrot.lane.b32.xlu0 %v7149, 64
      %v7644 = vpop.permute.xlu0 %7643
      %7645 = vrot.lane.b32.xlu0 %v7150, 64
      %v7646 = vpop.permute.xlu0 %7645
      %7647 = vrot.lane.b32.xlu0 %v7151, 64
      %v7648 = vpop.permute.xlu0 %7647
      %7649 = vrot.lane.b32.xlu0 %v7152, 64
      %v7650 = vpop.permute.xlu0 %7649
      %7651 = vrot.lane.b32.xlu0 %v7153, 64
      %v7652 = vpop.permute.xlu0 %7651
      %7653 = vrot.lane.b32.xlu0 %v7154, 64
      %v7654 = vpop.permute.xlu0 %7653
      %7655 = vrot.lane.b32.xlu0 %v7155, 64
      %v7656 = vpop.permute.xlu0 %7655
      %7657 = vrot.lane.b32.xlu0 %v7156, 64
      %v7658 = vpop.permute.xlu0 %7657
      %7659 = vrot.lane.b32.xlu0 %v7157, 64
      %v7660 = vpop.permute.xlu0 %7659
      %7661 = vrot.lane.b32.xlu0 %v7158, 64
      %v7662 = vpop.permute.xlu0 %7661
      %7663 = vrot.lane.b32.xlu0 %v7159, 64
      %v7664 = vpop.permute.xlu0 %7663
      %7665 = vrot.lane.b32.xlu0 %v7160, 64
      %v7666 = vpop.permute.xlu0 %7665
      %7667 = vrot.lane.b32.xlu0 %v7161, 64
      %v7668 = vpop.permute.xlu0 %7667
      %7669 = vrot.lane.b32.xlu0 %v7162, 64
      %v7670 = vpop.permute.xlu0 %7669
      %7671 = vrot.lane.b32.xlu0 %v7163, 64
      %v7672 = vpop.permute.xlu0 %7671
      %7673 = vrot.lane.b32.xlu0 %v7164, 64
      %v7674 = vpop.permute.xlu0 %7673
      %7675 = vrot.lane.b32.xlu0 %v7165, 64
      %v7676 = vpop.permute.xlu0 %7675
      %7677 = vrot.lane.b32.xlu0 %v7166, 64
      %v7678 = vpop.permute.xlu0 %7677
      %v7711 = vsel %vm201, %v6911, %v7232
      %v7712 = vsel %vm201, %v6912, %v7234
      %v7713 = vsel %vm201, %v6913, %v7236
      %v7714 = vsel %vm201, %v6914, %v7238
      %v7715 = vsel %vm201, %v6915, %v7240
      %v7716 = vsel %vm201, %v6916, %v7242
      %v7717 = vsel %vm201, %v6917, %v7244
      %v7718 = vsel %vm201, %v6918, %v7246
      %v7719 = vsel %vm201, %v6919, %v7248
      %v7720 = vsel %vm201, %v6920, %v7250
      %v7721 = vsel %vm201, %v6921, %v7252
      %v7722 = vsel %vm201, %v6922, %v7254
      %v7723 = vsel %vm201, %v6923, %v7256
      %v7724 = vsel %vm201, %v6924, %v7258
      %v7725 = vsel %vm201, %v6925, %v7260
      %v7726 = vsel %vm201, %v6926, %v7262
      %v7727 = vsel %vm201, %v6927, %v7264
      %v7728 = vsel %vm201, %v6928, %v7266
      %v7729 = vsel %vm201, %v6929, %v7268
      %v7730 = vsel %vm201, %v6930, %v7270
      %v7731 = vsel %vm201, %v6931, %v7272
      %v7732 = vsel %vm201, %v6932, %v7274
      %v7733 = vsel %vm201, %v6933, %v7276
      %v7734 = vsel %vm201, %v6934, %v7278
      %v7735 = vsel %vm201, %v6935, %v7280
      %v7736 = vsel %vm201, %v6936, %v7282
      %v7737 = vsel %vm201, %v6937, %v7284
      %v7738 = vsel %vm201, %v6938, %v7286
      %v7739 = vsel %vm201, %v6939, %v7288
      %v7740 = vsel %vm201, %v6940, %v7290
      %v7741 = vsel %vm201, %v6941, %v7292
      %v7742 = vsel %vm201, %v6942, %v7294
      %v7743 = vsel %vm201, %v6975, %v7360
      %v7744 = vsel %vm201, %v6976, %v7362
      %v7745 = vsel %vm201, %v6977, %v7364
      %v7746 = vsel %vm201, %v6978, %v7366
      %v7747 = vsel %vm201, %v6979, %v7368
      %v7748 = vsel %vm201, %v6980, %v7370
      %v7749 = vsel %vm201, %v6981, %v7372
      %v7750 = vsel %vm201, %v6982, %v7374
      %v7751 = vsel %vm201, %v6983, %v7376
      %v7752 = vsel %vm201, %v6984, %v7378
      %v7753 = vsel %vm201, %v6985, %v7380
      %v7754 = vsel %vm201, %v6986, %v7382
      %v7755 = vsel %vm201, %v6987, %v7384
      %v7756 = vsel %vm201, %v6988, %v7386
      %v7757 = vsel %vm201, %v6989, %v7388
      %v7758 = vsel %vm201, %v6990, %v7390
      %v7759 = vsel %vm201, %v6991, %v7392
      %v7760 = vsel %vm201, %v6992, %v7394
      %v7761 = vsel %vm201, %v6993, %v7396
      %v7762 = vsel %vm201, %v6994, %v7398
      %v7763 = vsel %vm201, %v6995, %v7400
      %v7764 = vsel %vm201, %v6996, %v7402
      %v7765 = vsel %vm201, %v6997, %v7404
      %v7766 = vsel %vm201, %v6998, %v7406
      %v7767 = vsel %vm201, %v6999, %v7408
      %v7768 = vsel %vm201, %v7000, %v7410
      %v7769 = vsel %vm201, %v7001, %v7412
      %v7770 = vsel %vm201, %v7002, %v7414
      %v7771 = vsel %vm201, %v7003, %v7416
      %v7772 = vsel %vm201, %v7004, %v7418
      %v7773 = vsel %vm201, %v7005, %v7420
      %v7774 = vsel %vm201, %v7006, %v7422
      %v7775 = vsel %vm201, %v7039, %v7488
      %v7776 = vsel %vm201, %v7040, %v7490
      %v7777 = vsel %vm201, %v7041, %v7492
      %v7778 = vsel %vm201, %v7042, %v7494
      %v7779 = vsel %vm201, %v7043, %v7496
      %v7780 = vsel %vm201, %v7044, %v7498
      %v7781 = vsel %vm201, %v7045, %v7500
      %v7782 = vsel %vm201, %v7046, %v7502
      %v7783 = vsel %vm201, %v7047, %v7504
      %v7784 = vsel %vm201, %v7048, %v7506
      %v7785 = vsel %vm201, %v7049, %v7508
      %v7786 = vsel %vm201, %v7050, %v7510
      %v7787 = vsel %vm201, %v7051, %v7512
      %v7788 = vsel %vm201, %v7052, %v7514
      %v7789 = vsel %vm201, %v7053, %v7516
      %v7790 = vsel %vm201, %v7054, %v7518
      %v7791 = vsel %vm201, %v7055, %v7520
      %v7792 = vsel %vm201, %v7056, %v7522
      %v7793 = vsel %vm201, %v7057, %v7524
      %v7794 = vsel %vm201, %v7058, %v7526
      %v7795 = vsel %vm201, %v7059, %v7528
      %v7796 = vsel %vm201, %v7060, %v7530
      %v7797 = vsel %vm201, %v7061, %v7532
      %v7798 = vsel %vm201, %v7062, %v7534
      %v7799 = vsel %vm201, %v7063, %v7536
      %v7800 = vsel %vm201, %v7064, %v7538
      %v7801 = vsel %vm201, %v7065, %v7540
      %v7802 = vsel %vm201, %v7066, %v7542
      %v7803 = vsel %vm201, %v7067, %v7544
      %v7804 = vsel %vm201, %v7068, %v7546
      %v7805 = vsel %vm201, %v7069, %v7548
      %v7806 = vsel %vm201, %v7070, %v7550
      %v7807 = vsel %vm201, %v7103, %v7616
      %v7808 = vsel %vm201, %v7104, %v7618
      %v7809 = vsel %vm201, %v7105, %v7620
      %v7810 = vsel %vm201, %v7106, %v7622
      %v7811 = vsel %vm201, %v7107, %v7624
      %v7812 = vsel %vm201, %v7108, %v7626
      %v7813 = vsel %vm201, %v7109, %v7628
      %v7814 = vsel %vm201, %v7110, %v7630
      %v7815 = vsel %vm201, %v7111, %v7632
      %v7816 = vsel %vm201, %v7112, %v7634
      %v7817 = vsel %vm201, %v7113, %v7636
      %v7818 = vsel %vm201, %v7114, %v7638
      %v7819 = vsel %vm201, %v7115, %v7640
      %v7820 = vsel %vm201, %v7116, %v7642
      %v7821 = vsel %vm201, %v7117, %v7644
      %v7822 = vsel %vm201, %v7118, %v7646
      %v7823 = vsel %vm201, %v7119, %v7648
      %v7824 = vsel %vm201, %v7120, %v7650
      %v7825 = vsel %vm201, %v7121, %v7652
      %v7826 = vsel %vm201, %v7122, %v7654
      %v7827 = vsel %vm201, %v7123, %v7656
      %v7828 = vsel %vm201, %v7124, %v7658
      %v7829 = vsel %vm201, %v7125, %v7660
      %v7830 = vsel %vm201, %v7126, %v7662
      %v7831 = vsel %vm201, %v7127, %v7664
      %v7832 = vsel %vm201, %v7128, %v7666
      %v7833 = vsel %vm201, %v7129, %v7668
      %v7834 = vsel %vm201, %v7130, %v7670
      %v7835 = vsel %vm201, %v7131, %v7672
      %v7836 = vsel %vm201, %v7132, %v7674
      %v7837 = vsel %vm201, %v7133, %v7676
      %v7838 = vsel %vm201, %v7134, %v7678
      %v7839 = vpack.c.bf16 %v7712, %v7711
      %v7840 = vpack.c.bf16 %v7744, %v7743
      %v7841 = vpack.c.bf16 %v7776, %v7775
      %v7842 = vpack.c.bf16 %v7808, %v7807
      %v7843 = vpack.c.bf16 %v7168, %v7167
      %v7844 = vpack.c.bf16 %v7714, %v7713
      %v7845 = vpack.c.bf16 %v7746, %v7745
      %v7846 = vpack.c.bf16 %v7778, %v7777
      %v7847 = vpack.c.bf16 %v7810, %v7809
      %v7848 = vpack.c.bf16 %v7170, %v7169
      %v7849 = vpack.c.bf16 %v7716, %v7715
      %v7850 = vpack.c.bf16 %v7748, %v7747
      %v7851 = vpack.c.bf16 %v7780, %v7779
      %v7852 = vpack.c.bf16 %v7812, %v7811
      %v7853 = vpack.c.bf16 %v7172, %v7171
      %v7854 = vpack.c.bf16 %v7718, %v7717
      %v7855 = vpack.c.bf16 %v7750, %v7749
      %v7856 = vpack.c.bf16 %v7782, %v7781
      %v7857 = vpack.c.bf16 %v7814, %v7813
      %v7858 = vpack.c.bf16 %v7174, %v7173
      %v7859 = vpack.c.bf16 %v7720, %v7719
      %v7860 = vpack.c.bf16 %v7752, %v7751
      %v7861 = vpack.c.bf16 %v7784, %v7783
      %v7862 = vpack.c.bf16 %v7816, %v7815
      %v7863 = vpack.c.bf16 %v7176, %v7175
      %v7864 = vpack.c.bf16 %v7722, %v7721
      %v7865 = vpack.c.bf16 %v7754, %v7753
      %v7866 = vpack.c.bf16 %v7786, %v7785
      %v7867 = vpack.c.bf16 %v7818, %v7817
      %v7868 = vpack.c.bf16 %v7178, %v7177
      %v7869 = vpack.c.bf16 %v7724, %v7723
      %v7870 = vpack.c.bf16 %v7756, %v7755
      %v7871 = vpack.c.bf16 %v7788, %v7787
      %v7872 = vpack.c.bf16 %v7820, %v7819
      %v7873 = vpack.c.bf16 %v7180, %v7179
      %v7874 = vpack.c.bf16 %v7726, %v7725
      %v7875 = vpack.c.bf16 %v7758, %v7757
      %v7876 = vpack.c.bf16 %v7790, %v7789
      %v7877 = vpack.c.bf16 %v7822, %v7821
      %v7878 = vpack.c.bf16 %v7182, %v7181
      %v7879 = vpack.c.bf16 %v7728, %v7727
      %v7880 = vpack.c.bf16 %v7760, %v7759
      %v7881 = vpack.c.bf16 %v7792, %v7791
      %v7882 = vpack.c.bf16 %v7824, %v7823
      %v7883 = vpack.c.bf16 %v7184, %v7183
      %v7884 = vpack.c.bf16 %v7730, %v7729
      %v7885 = vpack.c.bf16 %v7762, %v7761
      %v7886 = vpack.c.bf16 %v7794, %v7793
      %v7887 = vpack.c.bf16 %v7826, %v7825
      %v7888 = vpack.c.bf16 %v7186, %v7185
      %v7889 = vpack.c.bf16 %v7732, %v7731
      %v7890 = vpack.c.bf16 %v7764, %v7763
      %v7891 = vpack.c.bf16 %v7796, %v7795
      %v7892 = vpack.c.bf16 %v7828, %v7827
      %v7893 = vpack.c.bf16 %v7188, %v7187
      %v7894 = vpack.c.bf16 %v7734, %v7733
      %v7895 = vpack.c.bf16 %v7766, %v7765
      %v7896 = vpack.c.bf16 %v7798, %v7797
      %v7897 = vpack.c.bf16 %v7830, %v7829
      %v7898 = vpack.c.bf16 %v7190, %v7189
      %v7899 = vpack.c.bf16 %v7736, %v7735
      %v7900 = vpack.c.bf16 %v7768, %v7767
      %v7901 = vpack.c.bf16 %v7800, %v7799
      %v7902 = vpack.c.bf16 %v7832, %v7831
      %v7903 = vpack.c.bf16 %v7192, %v7191
      %v7904 = vpack.c.bf16 %v7738, %v7737
      %v7905 = vpack.c.bf16 %v7770, %v7769
      %v7906 = vpack.c.bf16 %v7802, %v7801
      %v7907 = vpack.c.bf16 %v7834, %v7833
      %v7908 = vpack.c.bf16 %v7194, %v7193
      %v7909 = vpack.c.bf16 %v7740, %v7739
      %v7910 = vpack.c.bf16 %v7772, %v7771
      %v7911 = vpack.c.bf16 %v7804, %v7803
      %v7912 = vpack.c.bf16 %v7836, %v7835
      %v7913 = vpack.c.bf16 %v7196, %v7195
      %v7914 = vpack.c.bf16 %v7742, %v7741
      %v7915 = vpack.c.bf16 %v7774, %v7773
      %v7916 = vpack.c.bf16 %v7806, %v7805
      %v7917 = vpack.c.bf16 %v7838, %v7837
      %v7918 = vpack.c.bf16 %v7198, %v7197
      %s7919 = scalar_lea.vmem %s1, 864
      %v7920 = vld [vmem:[%s7919] sm:$0xf]
      %v7921 = vld [vmem:[%s7919 + $0x4] sm:$0xf]
      %v7922 = vld [vmem:[%s7919 + $0x8] sm:$0xf]
      %v7923 = vld [vmem:[%s7919 + $0xc] sm:$0xf]
      %v7924 = vld [vmem:[%s7919 + $0x10] sm:$0xf]
      %v7925 = vld [vmem:[%s7919 + $0x14] sm:$0xf]
      %v7926 = vld [vmem:[%s7919 + $0x18] sm:$0xf]
      %v7927 = vld [vmem:[%s7919 + $0x1c] sm:$0xf]
      %v7928 = vld [vmem:[%s7919 + $0x20] sm:$0xf]
      %v7929 = vld [vmem:[%s7919 + $0x24] sm:$0xf]
      %v7930 = vld [vmem:[%s7919 + $0x28] sm:$0xf]
      %v7931 = vld [vmem:[%s7919 + $0x2c] sm:$0xf]
      %v7932 = vld [vmem:[%s7919 + $0x30] sm:$0xf]
      %v7933 = vld [vmem:[%s7919 + $0x34] sm:$0xf]
      %v7934 = vld [vmem:[%s7919 + $0x38] sm:$0xf]
      %v7935 = vld [vmem:[%s7919 + $0x3c] sm:$0xf]
      %v7936 = vld [vmem:[%s7919 + $0x40] sm:$0xf]
      %v7937 = vld [vmem:[%s7919 + $0x44] sm:$0xf]
      %v7938 = vld [vmem:[%s7919 + $0x48] sm:$0xf]
      %v7939 = vld [vmem:[%s7919 + $0x4c] sm:$0xf]
      %v7940 = vld [vmem:[%s7919 + $0x50] sm:$0xf]
      %v7941 = vld [vmem:[%s7919 + $0x54] sm:$0xf]
      %v7942 = vld [vmem:[%s7919 + $0x58] sm:$0xf]
      %v7943 = vld [vmem:[%s7919 + $0x5c] sm:$0xf]
      %v7944 = vld [vmem:[%s7919 + $0x60] sm:$0xf]
      %v7945 = vld [vmem:[%s7919 + $0x64] sm:$0xf]
      %v7946 = vld [vmem:[%s7919 + $0x68] sm:$0xf]
      %v7947 = vld [vmem:[%s7919 + $0x6c] sm:$0xf]
      %v7948 = vld [vmem:[%s7919 + $0x70] sm:$0xf]
      %v7949 = vld [vmem:[%s7919 + $0x74] sm:$0xf]
      %v7950 = vld [vmem:[%s7919 + $0x78] sm:$0xf]
      %v7951 = vld [vmem:[%s7919 + $0x7c] sm:$0xf]
      %v7952 = vld [vmem:[%s7919 + $0x80] sm:$0xf]
      %v7953 = vld [vmem:[%s7919 + $0x84] sm:$0xf]
      %v7954 = vld [vmem:[%s7919 + $0x88] sm:$0xf]
      %v7955 = vld [vmem:[%s7919 + $0x8c] sm:$0xf]
      %v7956 = vld [vmem:[%s7919 + $0x90] sm:$0xf]
      %v7957 = vld [vmem:[%s7919 + $0x94] sm:$0xf]
      %v7958 = vld [vmem:[%s7919 + $0x98] sm:$0xf]
      %v7959 = vld [vmem:[%s7919 + $0x9c] sm:$0xf]
      %v7960 = vld [vmem:[%s7919 + $0xa0] sm:$0xf]
      %v7961 = vld [vmem:[%s7919 + $0xa4] sm:$0xf]
      %v7962 = vld [vmem:[%s7919 + $0xa8] sm:$0xf]
      %v7963 = vld [vmem:[%s7919 + $0xac] sm:$0xf]
      %v7964 = vld [vmem:[%s7919 + $0xb0] sm:$0xf]
      %v7965 = vld [vmem:[%s7919 + $0xb4] sm:$0xf]
      %v7966 = vld [vmem:[%s7919 + $0xb8] sm:$0xf]
      %v7967 = vld [vmem:[%s7919 + $0xbc] sm:$0xf]
      %v7968 = vld [vmem:[%s7919 + $0xc0] sm:$0xf]
      %v7969 = vld [vmem:[%s7919 + $0xc4] sm:$0xf]
      %v7970 = vld [vmem:[%s7919 + $0xc8] sm:$0xf]
      %v7971 = vld [vmem:[%s7919 + $0xcc] sm:$0xf]
      %v7972 = vld [vmem:[%s7919 + $0xd0] sm:$0xf]
      %v7973 = vld [vmem:[%s7919 + $0xd4] sm:$0xf]
      %v7974 = vld [vmem:[%s7919 + $0xd8] sm:$0xf]
      %v7975 = vld [vmem:[%s7919 + $0xdc] sm:$0xf]
      %v7976 = vld [vmem:[%s7919 + $0xe0] sm:$0xf]
      %v7977 = vld [vmem:[%s7919 + $0xe4] sm:$0xf]
      %v7978 = vld [vmem:[%s7919 + $0xe8] sm:$0xf]
      %v7979 = vld [vmem:[%s7919 + $0xec] sm:$0xf]
      %v7980 = vld [vmem:[%s7919 + $0xf0] sm:$0xf]
      %v7981 = vld [vmem:[%s7919 + $0xf4] sm:$0xf]
      %v7982 = vld [vmem:[%s7919 + $0xf8] sm:$0xf]
      %v7983 = vld [vmem:[%s7919 + $0xfc] sm:$0xf]
      %v7984 = vld [vmem:[%s7919 + $0x100] sm:$0xf]
      %v7985 = vld [vmem:[%s7919 + $0x104] sm:$0xf]
      %v7986 = vld [vmem:[%s7919 + $0x108] sm:$0xf]
      %v7987 = vld [vmem:[%s7919 + $0x10c] sm:$0xf]
      %v7988 = vld [vmem:[%s7919 + $0x110] sm:$0xf]
      %v7989 = vld [vmem:[%s7919 + $0x114] sm:$0xf]
      %v7990 = vld [vmem:[%s7919 + $0x118] sm:$0xf]
      %v7991 = vld [vmem:[%s7919 + $0x11c] sm:$0xf]
      %v8064 = vunpack.c.l.b16 %v7920
      %v8065 = vunpack.c.l.b16 %v7921
      %v8066 = vunpack.c.l.b16 %v7922
      %v8067 = vunpack.c.l.b16 %v7923
      %v8068 = vunpack.c.l.b16 %v7924
      %v8069 = vunpack.c.l.b16 %v7925
      %v8070 = vunpack.c.l.b16 %v7926
      %v8071 = vunpack.c.l.b16 %v7927
      %v8072 = vunpack.c.l.b16 %v7928
      %v8073 = vunpack.c.l.b16 %v7929
      %v8074 = vunpack.c.l.b16 %v7930
      %v8075 = vunpack.c.l.b16 %v7931
      %v8076 = vunpack.c.l.b16 %v7932
      %v8077 = vunpack.c.l.b16 %v7933
      %v8078 = vunpack.c.l.b16 %v7934
      %v8079 = vunpack.c.l.b16 %v7935
      %v8080 = vunpack.c.l.b16 %v7936
      %v8081 = vunpack.c.l.b16 %v7937
      %v8082 = vunpack.c.l.b16 %v7938
      %v8083 = vunpack.c.l.b16 %v7939
      %v8084 = vunpack.c.l.b16 %v7940
      %v8085 = vunpack.c.l.b16 %v7941
      %v8086 = vunpack.c.l.b16 %v7942
      %v8087 = vunpack.c.l.b16 %v7943
      %v8088 = vunpack.c.l.b16 %v7944
      %v8089 = vunpack.c.l.b16 %v7945
      %v8090 = vunpack.c.l.b16 %v7946
      %v8091 = vunpack.c.l.b16 %v7947
      %v8092 = vunpack.c.l.b16 %v7948
      %v8093 = vunpack.c.l.b16 %v7949
      %v8094 = vunpack.c.l.b16 %v7950
      %v8095 = vunpack.c.l.b16 %v7951
      %v8096 = vunpack.c.l.b16 %v7952
      %v8097 = vunpack.c.l.b16 %v7953
      %v8098 = vunpack.c.l.b16 %v7954
      %v8099 = vunpack.c.l.b16 %v7955
      %v8100 = vunpack.c.l.b16 %v7956
      %v8101 = vunpack.c.l.b16 %v7957
      %v8102 = vunpack.c.l.b16 %v7958
      %v8103 = vunpack.c.l.b16 %v7959
      %v8104 = vunpack.c.l.b16 %v7960
      %v8105 = vunpack.c.l.b16 %v7961
      %v8106 = vunpack.c.l.b16 %v7962
      %v8107 = vunpack.c.l.b16 %v7963
      %v8108 = vunpack.c.l.b16 %v7964
      %v8109 = vunpack.c.l.b16 %v7965
      %v8110 = vunpack.c.l.b16 %v7966
      %v8111 = vunpack.c.l.b16 %v7967
      %v8112 = vunpack.c.l.b16 %v7968
      %v8113 = vunpack.c.l.b16 %v7969
      %v8114 = vunpack.c.l.b16 %v7970
      %v8115 = vunpack.c.l.b16 %v7971
      %v8116 = vunpack.c.l.b16 %v7972
      %v8117 = vunpack.c.l.b16 %v7973
      %v8118 = vunpack.c.l.b16 %v7974
      %v8119 = vunpack.c.l.b16 %v7975
      %v8120 = vunpack.c.l.b16 %v7976
      %v8121 = vunpack.c.l.b16 %v7977
      %v8122 = vunpack.c.l.b16 %v7978
      %v8123 = vunpack.c.l.b16 %v7979
      %v8124 = vunpack.c.l.b16 %v7980
      %v8125 = vunpack.c.l.b16 %v7981
      %v8126 = vunpack.c.l.b16 %v7982
      %v8127 = vunpack.c.l.b16 %v7983
      %v8128 = vunpack.c.l.b16 %v7984
      %v8129 = vunpack.c.l.b16 %v7985
      %v8130 = vunpack.c.l.b16 %v7986
      %v8131 = vunpack.c.l.b16 %v7987
      %v8132 = vunpack.c.l.b16 %v7988
      %v8133 = vunpack.c.l.b16 %v7989
      %v8134 = vunpack.c.l.b16 %v7990
      %v8135 = vunpack.c.l.b16 %v7991
      %v8136 = vpack.c.b16 %v8065, %v8064
      %v8137 = vpack.c.b16 %v8067, %v8066
      %v8138 = vpack.c.b16 %v8069, %v8068
      %v8139 = vpack.c.b16 %v8071, %v8070
      %v8140 = vpack.c.b16 %v8073, %v8072
      %v8141 = vpack.c.b16 %v8075, %v8074
      %v8142 = vpack.c.b16 %v8077, %v8076
      %v8143 = vpack.c.b16 %v8079, %v8078
      %v8144 = vpack.c.b16 %v8081, %v8080
      %v8145 = vpack.c.b16 %v8083, %v8082
      %v8146 = vpack.c.b16 %v8085, %v8084
      %v8147 = vpack.c.b16 %v8087, %v8086
      %v8148 = vpack.c.b16 %v8089, %v8088
      %v8149 = vpack.c.b16 %v8091, %v8090
      %v8150 = vpack.c.b16 %v8093, %v8092
      %v8151 = vpack.c.b16 %v8095, %v8094
      %v8152 = vpack.c.b16 %v8097, %v8096
      %v8153 = vpack.c.b16 %v8099, %v8098
      %v8154 = vpack.c.b16 %v8101, %v8100
      %v8155 = vpack.c.b16 %v8103, %v8102
      %v8156 = vpack.c.b16 %v8105, %v8104
      %v8157 = vpack.c.b16 %v8107, %v8106
      %v8158 = vpack.c.b16 %v8109, %v8108
      %v8159 = vpack.c.b16 %v8111, %v8110
      %v8160 = vpack.c.b16 %v8113, %v8112
      %v8161 = vpack.c.b16 %v8115, %v8114
      %v8162 = vpack.c.b16 %v8117, %v8116
      %v8163 = vpack.c.b16 %v8119, %v8118
      %v8164 = vpack.c.b16 %v8121, %v8120
      %v8165 = vpack.c.b16 %v8123, %v8122
      %v8166 = vpack.c.b16 %v8125, %v8124
      %v8167 = vpack.c.b16 %v8127, %v8126
      %v8168 = vpack.c.b16 %v8129, %v8128
      %v8169 = vpack.c.b16 %v8131, %v8130
      %v8170 = vpack.c.b16 %v8133, %v8132
      %v8171 = vpack.c.b16 %v8135, %v8134
      %v8209 = vsel %vm201, %v7843, 0
      %v8212 = vsel %vm201, %v7848, 0
      %v8215 = vsel %vm201, %v7853, 0
      %v8218 = vsel %vm201, %v7858, 0
      %v8221 = vsel %vm201, %v7863, 0
      %v8224 = vsel %vm201, %v7868, 0
      %v8227 = vsel %vm201, %v7873, 0
      %v8230 = vsel %vm201, %v7878, 0
      %v8233 = vsel %vm201, %v7883, 0
      %v8236 = vsel %vm201, %v7888, 0
      %v8239 = vsel %vm201, %v7893, 0
      %v8242 = vsel %vm201, %v7898, 0
      %v8245 = vsel %vm201, %v7903, 0
      %v8248 = vsel %vm201, %v7908, 0
      %v8251 = vsel %vm201, %v7913, 0
      %v8254 = vsel %vm201, %v7918, 0
      %8256 = vmatprep.subr.bf16.mxu0 0
      %8257 = vmatpush1.bf16.msra.mxu0 %v8136
      %8258 = vmatprep.subr.bf16.mxu0 0
      %8259 = vmatpush1.bf16.msra.mxu0 %v8137
      %8260 = vmatprep.subr.bf16.mxu0 0
      %8261 = vmatpush1.bf16.msra.mxu0 %v8138
      %8262 = vmatprep.subr.bf16.mxu0 0
      %8263 = vmatpush1.bf16.msra.mxu0 %v8139
      %8264 = vmatprep.subr.bf16.mxu0 0
      %8265 = vmatpush1.bf16.msra.mxu0 %v8140
      %8266 = vmatprep.subr.bf16.mxu0 0
      %8267 = vmatpush1.bf16.msra.mxu0 %v8141
      %8268 = vmatprep.subr.bf16.mxu0 0
      %8269 = vmatpush1.bf16.msra.mxu0 %v8142
      %8270 = vmatprep.subr.bf16.mxu0 0
      %8271 = vmatpush1.bf16.msra.mxu0 %v8143
      %8272 = vmatprep.subr.bf16.mxu0 0
      %8273 = vmatpush1.bf16.msra.mxu0 %v8144
      %8274 = vmatprep.subr.bf16.mxu0 0
      %8275 = vmatpush1.bf16.msra.mxu0 %v8145
      %8276 = vmatprep.subr.bf16.mxu0 0
      %8277 = vmatpush1.bf16.msra.mxu0 %v8146
      %8278 = vmatprep.subr.bf16.mxu0 0
      %8279 = vmatpush1.bf16.msra.mxu0 %v8147
      %8280 = vmatprep.subr.bf16.mxu0 0
      %8281 = vmatpush1.bf16.msra.mxu0 %v8148
      %8282 = vmatprep.subr.bf16.mxu0 0
      %8283 = vmatpush1.bf16.msra.mxu0 %v8149
      %8284 = vmatprep.subr.bf16.mxu0 0
      %8285 = vmatpush1.bf16.msra.mxu0 %v8150
      %8286 = vmatprep.subr.bf16.mxu0 0
      %8287 = vmatpush1.bf16.msra.mxu0 %v8151
      %8288 = vmatprep.mubr.bf16.mxu0 %v7840
      %8289 = vmatmul.mubr.bf16.gmra.mrb[0].mxu0 %v7839
      %v8290 = vpop.f32.mrb[0].mxu0
      %v8291 = vadd.f32 0.0, %v8290
      %v8292 = vpop.f32.mrb[0].mxu0
      %v8293 = vpop.f32.mrb[0].mxu0
      %v8294 = vadd.f32 0.0, %v8293
      %v8295 = vpop.f32.mrb[0].mxu0
      %8296 = vmatprep.mubr.bf16.mxu0 %v7845
      %8297 = vmatmul.mubr.bf16.gmra.mrb[0].mxu0 %v7844
      %v8298 = vpop.f32.mrb[0].mxu0
      %v8299 = vadd.f32 0.0, %v8298
      %v8300 = vpop.f32.mrb[0].mxu0
      %v8301 = vpop.f32.mrb[0].mxu0
      %v8302 = vadd.f32 0.0, %v8301
      %v8303 = vpop.f32.mrb[0].mxu0
      %8304 = vmatprep.mubr.bf16.mxu0 %v7850
      %8305 = vmatmul.mubr.bf16.gmra.mrb[0].mxu0 %v7849
      %v8306 = vpop.f32.mrb[0].mxu0
      %v8307 = vadd.f32 0.0, %v8306
      %v8308 = vpop.f32.mrb[0].mxu0
      %v8309 = vpop.f32.mrb[0].mxu0
      %v8310 = vadd.f32 0.0, %v8309
      %v8311 = vpop.f32.mrb[0].mxu0
      %8312 = vmatprep.mubr.bf16.mxu0 %v7855
      %8313 = vmatmul.mubr.bf16.gmra.mrb[0].mxu0 %v7854
      %v8314 = vpop.f32.mrb[0].mxu0
      %v8315 = vadd.f32 0.0, %v8314
      %v8316 = vpop.f32.mrb[0].mxu0
      %v8317 = vpop.f32.mrb[0].mxu0
      %v8318 = vadd.f32 0.0, %v8317
      %v8319 = vpop.f32.mrb[0].mxu0
      %8320 = vmatprep.mubr.bf16.mxu0 %v7860
      %8321 = vmatmul.mubr.bf16.gmra.mrb[0].mxu0 %v7859
      %v8322 = vpop.f32.mrb[0].mxu0
      %v8323 = vadd.f32 0.0, %v8322
      %v8324 = vpop.f32.mrb[0].mxu0
      %v8325 = vpop.f32.mrb[0].mxu0
      %v8326 = vadd.f32 0.0, %v8325
      %v8327 = vpop.f32.mrb[0].mxu0
      %8328 = vmatprep.mubr.bf16.mxu0 %v7865
      %8329 = vmatmul.mubr.bf16.gmra.mrb[0].mxu0 %v7864
      %v8330 = vpop.f32.mrb[0].mxu0
      %v8331 = vadd.f32 0.0, %v8330
      %v8332 = vpop.f32.mrb[0].mxu0
      %v8333 = vpop.f32.mrb[0].mxu0
      %v8334 = vadd.f32 0.0, %v8333
      %v8335 = vpop.f32.mrb[0].mxu0
      %8336 = vmatprep.mubr.bf16.mxu0 %v7870
      %8337 = vmatmul.mubr.bf16.gmra.mrb[0].mxu0 %v7869
      %v8338 = vpop.f32.mrb[0].mxu0
      %v8339 = vadd.f32 0.0, %v8338
      %v8340 = vpop.f32.mrb[0].mxu0
      %v8341 = vpop.f32.mrb[0].mxu0
      %v8342 = vadd.f32 0.0, %v8341
      %v8343 = vpop.f32.mrb[0].mxu0
      %8344 = vmatprep.mubr.bf16.mxu0 %v7875
      %8345 = vmatmul.mubr.bf16.gmra.mrb[0].mxu0 %v7874
      %v8346 = vpop.f32.mrb[0].mxu0
      %v8347 = vadd.f32 0.0, %v8346
      %v8348 = vpop.f32.mrb[0].mxu0
      %v8349 = vpop.f32.mrb[0].mxu0
      %v8350 = vadd.f32 0.0, %v8349
      %v8351 = vpop.f32.mrb[0].mxu0
      %8352 = vmatprep.mubr.bf16.mxu0 %v7880
      %8353 = vmatmul.mubr.bf16.gmra.mrb[0].mxu0 %v7879
      %v8354 = vpop.f32.mrb[0].mxu0
      %v8355 = vadd.f32 0.0, %v8354
      %v8356 = vpop.f32.mrb[0].mxu0
      %v8357 = vpop.f32.mrb[0].mxu0
      %v8358 = vadd.f32 0.0, %v8357
      %v8359 = vpop.f32.mrb[0].mxu0
      %8360 = vmatprep.mubr.bf16.mxu0 %v7885
      %8361 = vmatmul.mubr.bf16.gmra.mrb[0].mxu0 %v7884
      %v8362 = vpop.f32.mrb[0].mxu0
      %v8363 = vadd.f32 0.0, %v8362
      %v8364 = vpop.f32.mrb[0].mxu0
      %v8365 = vpop.f32.mrb[0].mxu0
      %v8366 = vadd.f32 0.0, %v8365
      %v8367 = vpop.f32.mrb[0].mxu0
      %8368 = vmatprep.mubr.bf16.mxu0 %v7890
      %8369 = vmatmul.mubr.bf16.gmra.mrb[0].mxu0 %v7889
      %v8370 = vpop.f32.mrb[0].mxu0
      %v8371 = vadd.f32 0.0, %v8370
      %v8372 = vpop.f32.mrb[0].mxu0
      %v8373 = vpop.f32.mrb[0].mxu0
      %v8374 = vadd.f32 0.0, %v8373
      %v8375 = vpop.f32.mrb[0].mxu0
      %8376 = vmatprep.mubr.bf16.mxu0 %v7895
      %8377 = vmatmul.mubr.bf16.gmra.mrb[0].mxu0 %v7894
      %v8378 = vpop.f32.mrb[0].mxu0
      %v8379 = vadd.f32 0.0, %v8378
      %v8380 = vpop.f32.mrb[0].mxu0
      %v8381 = vpop.f32.mrb[0].mxu0
      %v8382 = vadd.f32 0.0, %v8381
      %v8383 = vpop.f32.mrb[0].mxu0
      %8384 = vmatprep.mubr.bf16.mxu0 %v7900
      %8385 = vmatmul.mubr.bf16.gmra.mrb[0].mxu0 %v7899
      %v8386 = vpop.f32.mrb[0].mxu0
      %v8387 = vadd.f32 0.0, %v8386
      %v8388 = vpop.f32.mrb[0].mxu0
      %v8389 = vpop.f32.mrb[0].mxu0
      %v8390 = vadd.f32 0.0, %v8389
      %v8391 = vpop.f32.mrb[0].mxu0
      %8392 = vmatprep.mubr.bf16.mxu0 %v7905
      %8393 = vmatmul.mubr.bf16.gmra.mrb[0].mxu0 %v7904
      %v8394 = vpop.f32.mrb[0].mxu0
      %v8395 = vadd.f32 0.0, %v8394
      %v8396 = vpop.f32.mrb[0].mxu0
      %v8397 = vpop.f32.mrb[0].mxu0
      %v8398 = vadd.f32 0.0, %v8397
      %v8399 = vpop.f32.mrb[0].mxu0
      %8400 = vmatprep.mubr.bf16.mxu0 %v7910
      %8401 = vmatmul.mubr.bf16.gmra.mrb[0].mxu0 %v7909
      %v8402 = vpop.f32.mrb[0].mxu0
      %v8403 = vadd.f32 0.0, %v8402
      %v8404 = vpop.f32.mrb[0].mxu0
      %v8405 = vpop.f32.mrb[0].mxu0
      %v8406 = vadd.f32 0.0, %v8405
      %v8407 = vpop.f32.mrb[0].mxu0
      %8408 = vmatprep.mubr.bf16.mxu0 %v7915
      %8409 = vmatmul.mubr.bf16.gmra.mrb[0].mxu0 %v7914
      %v8410 = vpop.f32.mrb[0].mxu0
      %v8411 = vadd.f32 0.0, %v8410
      %v8412 = vpop.f32.mrb[0].mxu0
      %v8413 = vpop.f32.mrb[0].mxu0
      %v8414 = vadd.f32 0.0, %v8413
      %v8415 = vpop.f32.mrb[0].mxu0
      %8416 = vdwg.mxu0
      %8417 = vmatprep.subr.bf16.mxu0 0
      %8418 = vmatpush1.bf16.msra.mxu0 %v8152
      %8419 = vmatprep.subr.bf16.mxu0 0
      %8420 = vmatpush1.bf16.msra.mxu0 %v8153
      %8421 = vmatprep.subr.bf16.mxu0 0
      %8422 = vmatpush1.bf16.msra.mxu0 %v8154
      %8423 = vmatprep.subr.bf16.mxu0 0
      %8424 = vmatpush1.bf16.msra.mxu0 %v8155
      %8425 = vmatprep.subr.bf16.mxu0 0
      %8426 = vmatpush1.bf16.msra.mxu0 %v8156
      %8427 = vmatprep.subr.bf16.mxu0 0
      %8428 = vmatpush1.bf16.msra.mxu0 %v8157
      %8429 = vmatprep.subr.bf16.mxu0 0
      %8430 = vmatpush1.bf16.msra.mxu0 %v8158
      %8431 = vmatprep.subr.bf16.mxu0 0
      %8432 = vmatpush1.bf16.msra.mxu0 %v8159
      %8433 = vmatprep.subr.bf16.mxu0 0
      %8434 = vmatpush1.bf16.msra.mxu0 %v8160
      %8435 = vmatprep.subr.bf16.mxu0 0
      %8436 = vmatpush1.bf16.msra.mxu0 %v8161
      %8437 = vmatprep.subr.bf16.mxu0 0
      %8438 = vmatpush1.bf16.msra.mxu0 %v8162
      %8439 = vmatprep.subr.bf16.mxu0 0
      %8440 = vmatpush1.bf16.msra.mxu0 %v8163
      %8441 = vmatprep.subr.bf16.mxu0 0
      %8442 = vmatpush1.bf16.msra.mxu0 %v8164
      %8443 = vmatprep.subr.bf16.mxu0 0
      %8444 = vmatpush1.bf16.msra.mxu0 %v8165
      %8445 = vmatprep.subr.bf16.mxu0 0
      %8446 = vmatpush1.bf16.msra.mxu0 %v8166
      %8447 = vmatprep.subr.bf16.mxu0 0
      %8448 = vmatpush1.bf16.msra.mxu0 %v8167
      %8449 = vmatprep.mubr.bf16.mxu0 %v7842
      %8450 = vmatmul.mubr.bf16.gmra.mrb[0].mxu0 %v7841
      %v8451 = vpop.f32.mrb[0].mxu0
      %v8452 = vadd.f32 %v8291, %v8451
      %v8453 = vpop.f32.mrb[0].mxu0
      %v8454 = vpop.f32.mrb[0].mxu0
      %v8455 = vadd.f32 %v8294, %v8454
      %v8456 = vpop.f32.mrb[0].mxu0
      %8457 = vmatprep.mubr.bf16.mxu0 %v7847
      %8458 = vmatmul.mubr.bf16.gmra.mrb[0].mxu0 %v7846
      %v8459 = vpop.f32.mrb[0].mxu0
      %v8460 = vadd.f32 %v8299, %v8459
      %v8461 = vpop.f32.mrb[0].mxu0
      %v8462 = vpop.f32.mrb[0].mxu0
      %v8463 = vadd.f32 %v8302, %v8462
      %v8464 = vpop.f32.mrb[0].mxu0
      %8465 = vmatprep.mubr.bf16.mxu0 %v7852
      %8466 = vmatmul.mubr.bf16.gmra.mrb[0].mxu0 %v7851
      %v8467 = vpop.f32.mrb[0].mxu0
      %v8468 = vadd.f32 %v8307, %v8467
      %v8469 = vpop.f32.mrb[0].mxu0
      %v8470 = vpop.f32.mrb[0].mxu0
      %v8471 = vadd.f32 %v8310, %v8470
      %v8472 = vpop.f32.mrb[0].mxu0
      %8473 = vmatprep.mubr.bf16.mxu0 %v7857
      %8474 = vmatmul.mubr.bf16.gmra.mrb[0].mxu0 %v7856
      %v8475 = vpop.f32.mrb[0].mxu0
      %v8476 = vadd.f32 %v8315, %v8475
      %v8477 = vpop.f32.mrb[0].mxu0
      %v8478 = vpop.f32.mrb[0].mxu0
      %v8479 = vadd.f32 %v8318, %v8478
      %v8480 = vpop.f32.mrb[0].mxu0
      %8481 = vmatprep.mubr.bf16.mxu0 %v7862
      %8482 = vmatmul.mubr.bf16.gmra.mrb[0].mxu0 %v7861
      %v8483 = vpop.f32.mrb[0].mxu0
      %v8484 = vadd.f32 %v8323, %v8483
      %v8485 = vpop.f32.mrb[0].mxu0
      %v8486 = vpop.f32.mrb[0].mxu0
      %v8487 = vadd.f32 %v8326, %v8486
      %v8488 = vpop.f32.mrb[0].mxu0
      %8489 = vmatprep.mubr.bf16.mxu0 %v7867
      %8490 = vmatmul.mubr.bf16.gmra.mrb[0].mxu0 %v7866
      %v8491 = vpop.f32.mrb[0].mxu0
      %v8492 = vadd.f32 %v8331, %v8491
      %v8493 = vpop.f32.mrb[0].mxu0
      %v8494 = vpop.f32.mrb[0].mxu0
      %v8495 = vadd.f32 %v8334, %v8494
      %v8496 = vpop.f32.mrb[0].mxu0
      %8497 = vmatprep.mubr.bf16.mxu0 %v7872
      %8498 = vmatmul.mubr.bf16.gmra.mrb[0].mxu0 %v7871
      %v8499 = vpop.f32.mrb[0].mxu0
      %v8500 = vadd.f32 %v8339, %v8499
      %v8501 = vpop.f32.mrb[0].mxu0
      %v8502 = vpop.f32.mrb[0].mxu0
      %v8503 = vadd.f32 %v8342, %v8502
      %v8504 = vpop.f32.mrb[0].mxu0
      %8505 = vmatprep.mubr.bf16.mxu0 %v7877
      %8506 = vmatmul.mubr.bf16.gmra.mrb[0].mxu0 %v7876
      %v8507 = vpop.f32.mrb[0].mxu0
      %v8508 = vadd.f32 %v8347, %v8507
      %v8509 = vpop.f32.mrb[0].mxu0
      %v8510 = vpop.f32.mrb[0].mxu0
      %v8511 = vadd.f32 %v8350, %v8510
      %v8512 = vpop.f32.mrb[0].mxu0
      %8513 = vmatprep.mubr.bf16.mxu0 %v7882
      %8514 = vmatmul.mubr.bf16.gmra.mrb[0].mxu0 %v7881
      %v8515 = vpop.f32.mrb[0].mxu0
      %v8516 = vadd.f32 %v8355, %v8515
      %v8517 = vpop.f32.mrb[0].mxu0
      %v8518 = vpop.f32.mrb[0].mxu0
      %v8519 = vadd.f32 %v8358, %v8518
      %v8520 = vpop.f32.mrb[0].mxu0
      %8521 = vmatprep.mubr.bf16.mxu0 %v7887
      %8522 = vmatmul.mubr.bf16.gmra.mrb[0].mxu0 %v7886
      %v8523 = vpop.f32.mrb[0].mxu0
      %v8524 = vadd.f32 %v8363, %v8523
      %v8525 = vpop.f32.mrb[0].mxu0
      %v8526 = vpop.f32.mrb[0].mxu0
      %v8527 = vadd.f32 %v8366, %v8526
      %v8528 = vpop.f32.mrb[0].mxu0
      %8529 = vmatprep.mubr.bf16.mxu0 %v7892
      %8530 = vmatmul.mubr.bf16.gmra.mrb[0].mxu0 %v7891
      %v8531 = vpop.f32.mrb[0].mxu0
      %v8532 = vadd.f32 %v8371, %v8531
      %v8533 = vpop.f32.mrb[0].mxu0
      %v8534 = vpop.f32.mrb[0].mxu0
      %v8535 = vadd.f32 %v8374, %v8534
      %v8536 = vpop.f32.mrb[0].mxu0
      %8537 = vmatprep.mubr.bf16.mxu0 %v7897
      %8538 = vmatmul.mubr.bf16.gmra.mrb[0].mxu0 %v7896
      %v8539 = vpop.f32.mrb[0].mxu0
      %v8540 = vadd.f32 %v8379, %v8539
      %v8541 = vpop.f32.mrb[0].mxu0
      %v8542 = vpop.f32.mrb[0].mxu0
      %v8543 = vadd.f32 %v8382, %v8542
      %v8544 = vpop.f32.mrb[0].mxu0
      %8545 = vmatprep.mubr.bf16.mxu0 %v7902
      %8546 = vmatmul.mubr.bf16.gmra.mrb[0].mxu0 %v7901
      %v8547 = vpop.f32.mrb[0].mxu0
      %v8548 = vadd.f32 %v8387, %v8547
      %v8549 = vpop.f32.mrb[0].mxu0
      %v8550 = vpop.f32.mrb[0].mxu0
      %v8551 = vadd.f32 %v8390, %v8550
      %v8552 = vpop.f32.mrb[0].mxu0
      %8553 = vmatprep.mubr.bf16.mxu0 %v7907
      %8554 = vmatmul.mubr.bf16.gmra.mrb[0].mxu0 %v7906
      %v8555 = vpop.f32.mrb[0].mxu0
      %v8556 = vadd.f32 %v8395, %v8555
      %v8557 = vpop.f32.mrb[0].mxu0
      %v8558 = vpop.f32.mrb[0].mxu0
      %v8559 = vadd.f32 %v8398, %v8558
      %v8560 = vpop.f32.mrb[0].mxu0
      %8561 = vmatprep.mubr.bf16.mxu0 %v7912
      %8562 = vmatmul.mubr.bf16.gmra.mrb[0].mxu0 %v7911
      %v8563 = vpop.f32.mrb[0].mxu0
      %v8564 = vadd.f32 %v8403, %v8563
      %v8565 = vpop.f32.mrb[0].mxu0
      %v8566 = vpop.f32.mrb[0].mxu0
      %v8567 = vadd.f32 %v8406, %v8566
      %v8568 = vpop.f32.mrb[0].mxu0
      %8569 = vmatprep.mubr.bf16.mxu0 %v7917
      %8570 = vmatmul.mubr.bf16.gmra.mrb[0].mxu0 %v7916
      %v8571 = vpop.f32.mrb[0].mxu0
      %v8572 = vadd.f32 %v8411, %v8571
      %v8573 = vpop.f32.mrb[0].mxu0
      %v8574 = vpop.f32.mrb[0].mxu0
      %v8575 = vadd.f32 %v8414, %v8574
      %v8576 = vpop.f32.mrb[0].mxu0
      %8577 = vdwg.mxu0
      %8578 = vmatprep.subr.bf16.mxu0 0
      %8579 = vmatpush1.bf16.msra.mxu0 %v8168
      %8580 = vmatprep.subr.bf16.mxu0 0
      %8581 = vmatpush1.bf16.msra.mxu0 %v8169
      %8582 = vmatprep.subr.bf16.mxu0 0
      %8583 = vmatpush1.bf16.msra.mxu0 %v8170
      %8584 = vmatprep.subr.bf16.mxu0 0
      %8585 = vmatpush1.bf16.msra.mxu0 %v8171
      %8586 = vmatprep.subr.bf16.mxu0 0
      %8587 = vmatpush1.bf16.msra.mxu0 0
      %8588 = vmatprep.subr.bf16.mxu0 0
      %8589 = vmatpush1.bf16.msra.mxu0 0
      %8590 = vmatprep.subr.bf16.mxu0 0
      %8591 = vmatpush1.bf16.msra.mxu0 0
      %8592 = vmatprep.subr.bf16.mxu0 0
      %8593 = vmatpush1.bf16.msra.mxu0 0
      %8594 = vmatprep.subr.bf16.mxu0 0
      %8595 = vmatpush1.bf16.msra.mxu0 0
      %8596 = vmatprep.subr.bf16.mxu0 0
      %8597 = vmatpush1.bf16.msra.mxu0 0
      %8598 = vmatprep.subr.bf16.mxu0 0
      %8599 = vmatpush1.bf16.msra.mxu0 0
      %8600 = vmatprep.subr.bf16.mxu0 0
      %8601 = vmatpush1.bf16.msra.mxu0 0
      %8602 = vmatprep.subr.bf16.mxu0 0
      %8603 = vmatpush1.bf16.msra.mxu0 0
      %8604 = vmatprep.subr.bf16.mxu0 0
      %8605 = vmatpush1.bf16.msra.mxu0 0
      %8606 = vmatprep.subr.bf16.mxu0 0
      %8607 = vmatpush1.bf16.msra.mxu0 0
      %8608 = vmatprep.subr.bf16.mxu0 0
      %8609 = vmatpush1.bf16.msra.mxu0 0
      %8610 = vmatprep.mubr.bf16.mxu0 0
      %8611 = vmatmul.mubr.bf16.gmra.mrb[0].mxu0 %v8209
      %v8612 = vpop.f32.mrb[0].mxu0
      %v8613 = vadd.f32 %v8452, %v8612
      %v8614 = vpop.f32.mrb[0].mxu0
      %v8615 = vpop.f32.mrb[0].mxu0
      %v8616 = vadd.f32 %v8455, %v8615
      %v8617 = vpop.f32.mrb[0].mxu0
      %8618 = vmatprep.mubr.bf16.mxu0 0
      %8619 = vmatmul.mubr.bf16.gmra.mrb[0].mxu0 %v8212
      %v8620 = vpop.f32.mrb[0].mxu0
      %v8621 = vadd.f32 %v8460, %v8620
      %v8622 = vpop.f32.mrb[0].mxu0
      %v8623 = vpop.f32.mrb[0].mxu0
      %v8624 = vadd.f32 %v8463, %v8623
      %v8625 = vpop.f32.mrb[0].mxu0
      %8626 = vmatprep.mubr.bf16.mxu0 0
      %8627 = vmatmul.mubr.bf16.gmra.mrb[0].mxu0 %v8215
      %v8628 = vpop.f32.mrb[0].mxu0
      %v8629 = vadd.f32 %v8468, %v8628
      %v8630 = vpop.f32.mrb[0].mxu0
      %v8631 = vpop.f32.mrb[0].mxu0
      %v8632 = vadd.f32 %v8471, %v8631
      %v8633 = vpop.f32.mrb[0].mxu0
      %8634 = vmatprep.mubr.bf16.mxu0 0
      %8635 = vmatmul.mubr.bf16.gmra.mrb[0].mxu0 %v8218
      %v8636 = vpop.f32.mrb[0].mxu0
      %v8637 = vadd.f32 %v8476, %v8636
      %v8638 = vpop.f32.mrb[0].mxu0
      %v8639 = vpop.f32.mrb[0].mxu0
      %v8640 = vadd.f32 %v8479, %v8639
      %v8641 = vpop.f32.mrb[0].mxu0
      %8642 = vmatprep.mubr.bf16.mxu0 0
      %8643 = vmatmul.mubr.bf16.gmra.mrb[0].mxu0 %v8221
      %v8644 = vpop.f32.mrb[0].mxu0
      %v8645 = vadd.f32 %v8484, %v8644
      %v8646 = vpop.f32.mrb[0].mxu0
      %v8647 = vpop.f32.mrb[0].mxu0
      %v8648 = vadd.f32 %v8487, %v8647
      %v8649 = vpop.f32.mrb[0].mxu0
      %8650 = vmatprep.mubr.bf16.mxu0 0
      %8651 = vmatmul.mubr.bf16.gmra.mrb[0].mxu0 %v8224
      %v8652 = vpop.f32.mrb[0].mxu0
      %v8653 = vadd.f32 %v8492, %v8652
      %v8654 = vpop.f32.mrb[0].mxu0
      %v8655 = vpop.f32.mrb[0].mxu0
      %v8656 = vadd.f32 %v8495, %v8655
      %v8657 = vpop.f32.mrb[0].mxu0
      %8658 = vmatprep.mubr.bf16.mxu0 0
      %8659 = vmatmul.mubr.bf16.gmra.mrb[0].mxu0 %v8227
      %v8660 = vpop.f32.mrb[0].mxu0
      %v8661 = vadd.f32 %v8500, %v8660
      %v8662 = vpop.f32.mrb[0].mxu0
      %v8663 = vpop.f32.mrb[0].mxu0
      %v8664 = vadd.f32 %v8503, %v8663
      %v8665 = vpop.f32.mrb[0].mxu0
      %8666 = vmatprep.mubr.bf16.mxu0 0
      %8667 = vmatmul.mubr.bf16.gmra.mrb[0].mxu0 %v8230
      %v8668 = vpop.f32.mrb[0].mxu0
      %v8669 = vadd.f32 %v8508, %v8668
      %v8670 = vpop.f32.mrb[0].mxu0
      %v8671 = vpop.f32.mrb[0].mxu0
      %v8672 = vadd.f32 %v8511, %v8671
      %v8673 = vpop.f32.mrb[0].mxu0
      %8674 = vmatprep.mubr.bf16.mxu0 0
      %8675 = vmatmul.mubr.bf16.gmra.mrb[0].mxu0 %v8233
      %v8676 = vpop.f32.mrb[0].mxu0
      %v8677 = vadd.f32 %v8516, %v8676
      %v8678 = vpop.f32.mrb[0].mxu0
      %v8679 = vpop.f32.mrb[0].mxu0
      %v8680 = vadd.f32 %v8519, %v8679
      %v8681 = vpop.f32.mrb[0].mxu0
      %8682 = vmatprep.mubr.bf16.mxu0 0
      %8683 = vmatmul.mubr.bf16.gmra.mrb[0].mxu0 %v8236
      %v8684 = vpop.f32.mrb[0].mxu0
      %v8685 = vadd.f32 %v8524, %v8684
      %v8686 = vpop.f32.mrb[0].mxu0
      %v8687 = vpop.f32.mrb[0].mxu0
      %v8688 = vadd.f32 %v8527, %v8687
      %v8689 = vpop.f32.mrb[0].mxu0
      %8690 = vmatprep.mubr.bf16.mxu0 0
      %8691 = vmatmul.mubr.bf16.gmra.mrb[0].mxu0 %v8239
      %v8692 = vpop.f32.mrb[0].mxu0
      %v8693 = vadd.f32 %v8532, %v8692
      %v8694 = vpop.f32.mrb[0].mxu0
      %v8695 = vpop.f32.mrb[0].mxu0
      %v8696 = vadd.f32 %v8535, %v8695
      %v8697 = vpop.f32.mrb[0].mxu0
      %8698 = vmatprep.mubr.bf16.mxu0 0
      %8699 = vmatmul.mubr.bf16.gmra.mrb[0].mxu0 %v8242
      %v8700 = vpop.f32.mrb[0].mxu0
      %v8701 = vadd.f32 %v8540, %v8700
      %v8702 = vpop.f32.mrb[0].mxu0
      %v8703 = vpop.f32.mrb[0].mxu0
      %v8704 = vadd.f32 %v8543, %v8703
      %v8705 = vpop.f32.mrb[0].mxu0
      %8706 = vmatprep.mubr.bf16.mxu0 0
      %8707 = vmatmul.mubr.bf16.gmra.mrb[0].mxu0 %v8245
      %v8708 = vpop.f32.mrb[0].mxu0
      %v8709 = vadd.f32 %v8548, %v8708
      %v8710 = vpop.f32.mrb[0].mxu0
      %v8711 = vpop.f32.mrb[0].mxu0
      %v8712 = vadd.f32 %v8551, %v8711
      %v8713 = vpop.f32.mrb[0].mxu0
      %8714 = vmatprep.mubr.bf16.mxu0 0
      %8715 = vmatmul.mubr.bf16.gmra.mrb[0].mxu0 %v8248
      %v8716 = vpop.f32.mrb[0].mxu0
      %v8717 = vadd.f32 %v8556, %v8716
      %v8718 = vpop.f32.mrb[0].mxu0
      %v8719 = vpop.f32.mrb[0].mxu0
      %v8720 = vadd.f32 %v8559, %v8719
      %v8721 = vpop.f32.mrb[0].mxu0
      %8722 = vmatprep.mubr.bf16.mxu0 0
      %8723 = vmatmul.mubr.bf16.gmra.mrb[0].mxu0 %v8251
      %v8724 = vpop.f32.mrb[0].mxu0
      %v8725 = vadd.f32 %v8564, %v8724
      %v8726 = vpop.f32.mrb[0].mxu0
      %v8727 = vpop.f32.mrb[0].mxu0
      %v8728 = vadd.f32 %v8567, %v8727
      %v8729 = vpop.f32.mrb[0].mxu0
      %8730 = vmatprep.mubr.bf16.mxu0 0
      %8731 = vmatmul.mubr.bf16.gmra.mrb[0].mxu0 %v8254
      %v8732 = vpop.f32.mrb[0].mxu0
      %v8733 = vadd.f32 %v8572, %v8732
      %v8734 = vpop.f32.mrb[0].mxu0
      %v8735 = vpop.f32.mrb[0].mxu0
      %v8736 = vadd.f32 %v8575, %v8735
      %v8737 = vpop.f32.mrb[0].mxu0
      %8738 = vdwg.mxu0
      %v8739 = vsel %vm201, %v8613, 0.0
      %v8740 = vsel %vm201, %v8616, 0.0
      %v8741 = vadd.f32 %v8739, %v8740
      %v8742 = vsel %vm201, %v8621, 0.0
      %v8743 = vadd.f32 %v8741, %v8742
      %v8744 = vsel %vm201, %v8624, 0.0
      %v8745 = vadd.f32 %v8743, %v8744
      %v8746 = vsel %vm201, %v8629, 0.0
      %v8747 = vadd.f32 %v8745, %v8746
      %v8748 = vsel %vm201, %v8632, 0.0
      %v8749 = vadd.f32 %v8747, %v8748
      %v8750 = vsel %vm201, %v8637, 0.0
      %v8751 = vadd.f32 %v8749, %v8750
      %v8752 = vsel %vm201, %v8640, 0.0
      %v8753 = vadd.f32 %v8751, %v8752
      %v8754 = vsel %vm201, %v8645, 0.0
      %v8755 = vadd.f32 %v8753, %v8754
      %v8756 = vsel %vm201, %v8648, 0.0
      %v8757 = vadd.f32 %v8755, %v8756
      %v8758 = vsel %vm201, %v8653, 0.0
      %v8759 = vadd.f32 %v8757, %v8758
      %v8760 = vsel %vm201, %v8656, 0.0
      %v8761 = vadd.f32 %v8759, %v8760
      %v8762 = vsel %vm201, %v8661, 0.0
      %v8763 = vadd.f32 %v8761, %v8762
      %v8764 = vsel %vm201, %v8664, 0.0
      %v8765 = vadd.f32 %v8763, %v8764
      %v8766 = vsel %vm201, %v8669, 0.0
      %v8767 = vadd.f32 %v8765, %v8766
      %v8768 = vsel %vm201, %v8672, 0.0
      %v8769 = vadd.f32 %v8767, %v8768
      %v8770 = vsel %vm201, %v8677, 0.0
      %v8771 = vadd.f32 %v8769, %v8770
      %v8772 = vsel %vm201, %v8680, 0.0
      %v8773 = vadd.f32 %v8771, %v8772
      %v8774 = vsel %vm201, %v8685, 0.0
      %v8775 = vadd.f32 %v8773, %v8774
      %v8776 = vsel %vm201, %v8688, 0.0
      %v8777 = vadd.f32 %v8775, %v8776
      %v8778 = vsel %vm201, %v8693, 0.0
      %v8779 = vadd.f32 %v8777, %v8778
      %v8780 = vsel %vm201, %v8696, 0.0
      %v8781 = vadd.f32 %v8779, %v8780
      %v8782 = vsel %vm201, %v8701, 0.0
      %v8783 = vadd.f32 %v8781, %v8782
      %v8784 = vsel %vm201, %v8704, 0.0
      %v8785 = vadd.f32 %v8783, %v8784
      %v8786 = vsel %vm201, %v8709, 0.0
      %v8787 = vadd.f32 %v8785, %v8786
      %v8788 = vsel %vm201, %v8712, 0.0
      %v8789 = vadd.f32 %v8787, %v8788
      %v8790 = vsel %vm201, %v8717, 0.0
      %v8791 = vadd.f32 %v8789, %v8790
      %v8792 = vsel %vm201, %v8720, 0.0
      %v8793 = vadd.f32 %v8791, %v8792
      %v8794 = vsel %vm201, %v8725, 0.0
      %v8795 = vadd.f32 %v8793, %v8794
      %v8796 = vsel %vm201, %v8728, 0.0
      %v8797 = vadd.f32 %v8795, %v8796
      %v8798 = vsel %vm201, %v8733, 0.0
      %v8799 = vadd.f32 %v8797, %v8798
      %v8800 = vsel %vm201, %v8736, 0.0
      %v8801 = vadd.f32 %v8799, %v8800
      %v8802 = vrot.slane %v8801, 4
      %v8803 = vadd.f32 %v8801, %v8802
      %v8804 = vrot.slane %v8803, 2
      %v8805 = vadd.f32 %v8803, %v8804
      %v8806 = vrot.slane %v8805, 1
      %v8807 = vadd.f32 %v8805, %v8806
      %v8808 = vmul.f32 %v8807, 0.00390625
      %v8809 = vmul.f32 %v8613, %v8613
      %v8810 = vmul.f32 %v8616, %v8616
      %v8811 = vmul.f32 %v8621, %v8621
      %v8812 = vmul.f32 %v8624, %v8624
      %v8813 = vmul.f32 %v8629, %v8629
      %v8814 = vmul.f32 %v8632, %v8632
      %v8815 = vmul.f32 %v8637, %v8637
      %v8816 = vmul.f32 %v8640, %v8640
      %v8817 = vmul.f32 %v8645, %v8645
      %v8818 = vmul.f32 %v8648, %v8648
      %v8819 = vmul.f32 %v8653, %v8653
      %v8820 = vmul.f32 %v8656, %v8656
      %v8821 = vmul.f32 %v8661, %v8661
      %v8822 = vmul.f32 %v8664, %v8664
      %v8823 = vmul.f32 %v8669, %v8669
      %v8824 = vmul.f32 %v8672, %v8672
      %v8825 = vmul.f32 %v8677, %v8677
      %v8826 = vmul.f32 %v8680, %v8680
      %v8827 = vmul.f32 %v8685, %v8685
      %v8828 = vmul.f32 %v8688, %v8688
      %v8829 = vmul.f32 %v8693, %v8693
      %v8830 = vmul.f32 %v8696, %v8696
      %v8831 = vmul.f32 %v8701, %v8701
      %v8832 = vmul.f32 %v8704, %v8704
      %v8833 = vmul.f32 %v8709, %v8709
      %v8834 = vmul.f32 %v8712, %v8712
      %v8835 = vmul.f32 %v8717, %v8717
      %v8836 = vmul.f32 %v8720, %v8720
      %v8837 = vmul.f32 %v8725, %v8725
      %v8838 = vmul.f32 %v8728, %v8728
      %v8839 = vmul.f32 %v8733, %v8733
      %v8840 = vmul.f32 %v8736, %v8736
      %v8841 = vsel %vm201, %v8809, 0.0
      %v8842 = vsel %vm201, %v8810, 0.0
      %v8843 = vadd.f32 %v8841, %v8842
      %v8844 = vsel %vm201, %v8811, 0.0
      %v8845 = vadd.f32 %v8843, %v8844
      %v8846 = vsel %vm201, %v8812, 0.0
      %v8847 = vadd.f32 %v8845, %v8846
      %v8848 = vsel %vm201, %v8813, 0.0
      %v8849 = vadd.f32 %v8847, %v8848
      %v8850 = vsel %vm201, %v8814, 0.0
      %v8851 = vadd.f32 %v8849, %v8850
      %v8852 = vsel %vm201, %v8815, 0.0
      %v8853 = vadd.f32 %v8851, %v8852
      %v8854 = vsel %vm201, %v8816, 0.0
      %v8855 = vadd.f32 %v8853, %v8854
      %v8856 = vsel %vm201, %v8817, 0.0
      %v8857 = vadd.f32 %v8855, %v8856
      %v8858 = vsel %vm201, %v8818, 0.0
      %v8859 = vadd.f32 %v8857, %v8858
      %v8860 = vsel %vm201, %v8819, 0.0
      %v8861 = vadd.f32 %v8859, %v8860
      %v8862 = vsel %vm201, %v8820, 0.0
      %v8863 = vadd.f32 %v8861, %v8862
      %v8864 = vsel %vm201, %v8821, 0.0
      %v8865 = vadd.f32 %v8863, %v8864
      %v8866 = vsel %vm201, %v8822, 0.0
      %v8867 = vadd.f32 %v8865, %v8866
      %v8868 = vsel %vm201, %v8823, 0.0
      %v8869 = vadd.f32 %v8867, %v8868
      %v8870 = vsel %vm201, %v8824, 0.0
      %v8871 = vadd.f32 %v8869, %v8870
      %v8872 = vsel %vm201, %v8825, 0.0
      %v8873 = vadd.f32 %v8871, %v8872
      %v8874 = vsel %vm201, %v8826, 0.0
      %v8875 = vadd.f32 %v8873, %v8874
      %v8876 = vsel %vm201, %v8827, 0.0
      %v8877 = vadd.f32 %v8875, %v8876
      %v8878 = vsel %vm201, %v8828, 0.0
      %v8879 = vadd.f32 %v8877, %v8878
      %v8880 = vsel %vm201, %v8829, 0.0
      %v8881 = vadd.f32 %v8879, %v8880
      %v8882 = vsel %vm201, %v8830, 0.0
      %v8883 = vadd.f32 %v8881, %v8882
      %v8884 = vsel %vm201, %v8831, 0.0
      %v8885 = vadd.f32 %v8883, %v8884
      %v8886 = vsel %vm201, %v8832, 0.0
      %v8887 = vadd.f32 %v8885, %v8886
      %v8888 = vsel %vm201, %v8833, 0.0
      %v8889 = vadd.f32 %v8887, %v8888
      %v8890 = vsel %vm201, %v8834, 0.0
      %v8891 = vadd.f32 %v8889, %v8890
      %v8892 = vsel %vm201, %v8835, 0.0
      %v8893 = vadd.f32 %v8891, %v8892
      %v8894 = vsel %vm201, %v8836, 0.0
      %v8895 = vadd.f32 %v8893, %v8894
      %v8896 = vsel %vm201, %v8837, 0.0
      %v8897 = vadd.f32 %v8895, %v8896
      %v8898 = vsel %vm201, %v8838, 0.0
      %v8899 = vadd.f32 %v8897, %v8898
      %v8900 = vsel %vm201, %v8839, 0.0
      %v8901 = vadd.f32 %v8899, %v8900
      %v8902 = vsel %vm201, %v8840, 0.0
      %v8903 = vadd.f32 %v8901, %v8902
      %v8904 = vrot.slane %v8903, 4
      %v8905 = vadd.f32 %v8903, %v8904
      %v8906 = vrot.slane %v8905, 2
      %v8907 = vadd.f32 %v8905, %v8906
      %v8908 = vrot.slane %v8907, 1
      %v8909 = vadd.f32 %v8907, %v8908
      %v8910 = vmul.f32 %v8909, 0.00390625
      %v8911 = vmul.f32 %v8808, %v8808
      %v8912 = vsub.f32 %v8910, %v8911
      %v8913 = vsub.f32 %v8613, %v8808
      %v8914 = vsub.f32 %v8616, %v8808
      %v8915 = vsub.f32 %v8621, %v8808
      %v8916 = vsub.f32 %v8624, %v8808
      %v8917 = vsub.f32 %v8629, %v8808
      %v8918 = vsub.f32 %v8632, %v8808
      %v8919 = vsub.f32 %v8637, %v8808
      %v8920 = vsub.f32 %v8640, %v8808
      %v8921 = vsub.f32 %v8645, %v8808
      %v8922 = vsub.f32 %v8648, %v8808
      %v8923 = vsub.f32 %v8653, %v8808
      %v8924 = vsub.f32 %v8656, %v8808
      %v8925 = vsub.f32 %v8661, %v8808
      %v8926 = vsub.f32 %v8664, %v8808
      %v8927 = vsub.f32 %v8669, %v8808
      %v8928 = vsub.f32 %v8672, %v8808
      %v8929 = vsub.f32 %v8677, %v8808
      %v8930 = vsub.f32 %v8680, %v8808
      %v8931 = vsub.f32 %v8685, %v8808
      %v8932 = vsub.f32 %v8688, %v8808
      %v8933 = vsub.f32 %v8693, %v8808
      %v8934 = vsub.f32 %v8696, %v8808
      %v8935 = vsub.f32 %v8701, %v8808
      %v8936 = vsub.f32 %v8704, %v8808
      %v8937 = vsub.f32 %v8709, %v8808
      %v8938 = vsub.f32 %v8712, %v8808
      %v8939 = vsub.f32 %v8717, %v8808
      %v8940 = vsub.f32 %v8720, %v8808
      %v8941 = vsub.f32 %v8725, %v8808
      %v8942 = vsub.f32 %v8728, %v8808
      %v8943 = vsub.f32 %v8733, %v8808
      %v8944 = vsub.f32 %v8736, %v8808
      %v8945 = vadd.f32 %v8912, 1e-05
      %v8946 = vrsqrt.pop %v8945
      %v8947 = vmul.f32 %v8913, %v8946
      %v8948 = vmul.f32 %v8914, %v8946
      %v8949 = vmul.f32 %v8915, %v8946
      %v8950 = vmul.f32 %v8916, %v8946
      %v8951 = vmul.f32 %v8917, %v8946
      %v8952 = vmul.f32 %v8918, %v8946
      %v8953 = vmul.f32 %v8919, %v8946
      %v8954 = vmul.f32 %v8920, %v8946
      %v8955 = vmul.f32 %v8921, %v8946
      %v8956 = vmul.f32 %v8922, %v8946
      %v8957 = vmul.f32 %v8923, %v8946
      %v8958 = vmul.f32 %v8924, %v8946
      %v8959 = vmul.f32 %v8925, %v8946
      %v8960 = vmul.f32 %v8926, %v8946
      %v8961 = vmul.f32 %v8927, %v8946
      %v8962 = vmul.f32 %v8928, %v8946
      %v8963 = vmul.f32 %v8929, %v8946
      %v8964 = vmul.f32 %v8930, %v8946
      %v8965 = vmul.f32 %v8931, %v8946
      %v8966 = vmul.f32 %v8932, %v8946
      %v8967 = vmul.f32 %v8933, %v8946
      %v8968 = vmul.f32 %v8934, %v8946
      %v8969 = vmul.f32 %v8935, %v8946
      %v8970 = vmul.f32 %v8936, %v8946
      %v8971 = vmul.f32 %v8937, %v8946
      %v8972 = vmul.f32 %v8938, %v8946
      %v8973 = vmul.f32 %v8939, %v8946
      %v8974 = vmul.f32 %v8940, %v8946
      %v8975 = vmul.f32 %v8941, %v8946
      %v8976 = vmul.f32 %v8942, %v8946
      %v8977 = vmul.f32 %v8943, %v8946
      %v8978 = vmul.f32 %v8944, %v8946
      %vm8979 = vcmp.ge.f32.partialorder %v8947, 0.0
      %vm8980 = vcmp.ge.f32.partialorder %v8948, 0.0
      %vm8981 = vcmp.ge.f32.partialorder %v8949, 0.0
      %vm8982 = vcmp.ge.f32.partialorder %v8950, 0.0
      %vm8983 = vcmp.ge.f32.partialorder %v8951, 0.0
      %vm8984 = vcmp.ge.f32.partialorder %v8952, 0.0
      %vm8985 = vcmp.ge.f32.partialorder %v8953, 0.0
      %vm8986 = vcmp.ge.f32.partialorder %v8954, 0.0
      %vm8987 = vcmp.ge.f32.partialorder %v8955, 0.0
      %vm8988 = vcmp.ge.f32.partialorder %v8956, 0.0
      %vm8989 = vcmp.ge.f32.partialorder %v8957, 0.0
      %vm8990 = vcmp.ge.f32.partialorder %v8958, 0.0
      %vm8991 = vcmp.ge.f32.partialorder %v8959, 0.0
      %vm8992 = vcmp.ge.f32.partialorder %v8960, 0.0
      %vm8993 = vcmp.ge.f32.partialorder %v8961, 0.0
      %vm8994 = vcmp.ge.f32.partialorder %v8962, 0.0
      %vm8995 = vcmp.ge.f32.partialorder %v8963, 0.0
      %vm8996 = vcmp.ge.f32.partialorder %v8964, 0.0
      %vm8997 = vcmp.ge.f32.partialorder %v8965, 0.0
      %vm8998 = vcmp.ge.f32.partialorder %v8966, 0.0
      %vm8999 = vcmp.ge.f32.partialorder %v8967, 0.0
      %vm9000 = vcmp.ge.f32.partialorder %v8968, 0.0
      %vm9001 = vcmp.ge.f32.partialorder %v8969, 0.0
      %vm9002 = vcmp.ge.f32.partialorder %v8970, 0.0
      %vm9003 = vcmp.ge.f32.partialorder %v8971, 0.0
      %vm9004 = vcmp.ge.f32.partialorder %v8972, 0.0
      %vm9005 = vcmp.ge.f32.partialorder %v8973, 0.0
      %vm9006 = vcmp.ge.f32.partialorder %v8974, 0.0
      %vm9007 = vcmp.ge.f32.partialorder %v8975, 0.0
      %vm9008 = vcmp.ge.f32.partialorder %v8976, 0.0
      %vm9009 = vcmp.ge.f32.partialorder %v8977, 0.0
      %vm9010 = vcmp.ge.f32.partialorder %v8978, 0.0
      %v9011 = vmul.f32 %v8947, 0.2
      %v9012 = vmul.f32 %v8948, 0.2
      %v9013 = vmul.f32 %v8949, 0.2
      %v9014 = vmul.f32 %v8950, 0.2
      %v9015 = vmul.f32 %v8951, 0.2
      %v9016 = vmul.f32 %v8952, 0.2
      %v9017 = vmul.f32 %v8953, 0.2
      %v9018 = vmul.f32 %v8954, 0.2
      %v9019 = vmul.f32 %v8955, 0.2
      %v9020 = vmul.f32 %v8956, 0.2
      %v9021 = vmul.f32 %v8957, 0.2
      %v9022 = vmul.f32 %v8958, 0.2
      %v9023 = vmul.f32 %v8959, 0.2
      %v9024 = vmul.f32 %v8960, 0.2
      %v9025 = vmul.f32 %v8961, 0.2
      %v9026 = vmul.f32 %v8962, 0.2
      %v9027 = vmul.f32 %v8963, 0.2
      %v9028 = vmul.f32 %v8964, 0.2
      %v9029 = vmul.f32 %v8965, 0.2
      %v9030 = vmul.f32 %v8966, 0.2
      %v9031 = vmul.f32 %v8967, 0.2
      %v9032 = vmul.f32 %v8968, 0.2
      %v9033 = vmul.f32 %v8969, 0.2
      %v9034 = vmul.f32 %v8970, 0.2
      %v9035 = vmul.f32 %v8971, 0.2
      %v9036 = vmul.f32 %v8972, 0.2
      %v9037 = vmul.f32 %v8973, 0.2
      %v9038 = vmul.f32 %v8974, 0.2
      %v9039 = vmul.f32 %v8975, 0.2
      %v9040 = vmul.f32 %v8976, 0.2
      %v9041 = vmul.f32 %v8977, 0.2
      %v9042 = vmul.f32 %v8978, 0.2
      %v9043 = vsel %vm8979, %v8947, %v9011
      %v9044 = vsel %vm8980, %v8948, %v9012
      %v9045 = vsel %vm8981, %v8949, %v9013
      %v9046 = vsel %vm8982, %v8950, %v9014
      %v9047 = vsel %vm8983, %v8951, %v9015
      %v9048 = vsel %vm8984, %v8952, %v9016
      %v9049 = vsel %vm8985, %v8953, %v9017
      %v9050 = vsel %vm8986, %v8954, %v9018
      %v9051 = vsel %vm8987, %v8955, %v9019
      %v9052 = vsel %vm8988, %v8956, %v9020
      %v9053 = vsel %vm8989, %v8957, %v9021
      %v9054 = vsel %vm8990, %v8958, %v9022
      %v9055 = vsel %vm8991, %v8959, %v9023
      %v9056 = vsel %vm8992, %v8960, %v9024
      %v9057 = vsel %vm8993, %v8961, %v9025
      %v9058 = vsel %vm8994, %v8962, %v9026
      %v9059 = vsel %vm8995, %v8963, %v9027
      %v9060 = vsel %vm8996, %v8964, %v9028
      %v9061 = vsel %vm8997, %v8965, %v9029
      %v9062 = vsel %vm8998, %v8966, %v9030
      %v9063 = vsel %vm8999, %v8967, %v9031
      %v9064 = vsel %vm9000, %v8968, %v9032
      %v9065 = vsel %vm9001, %v8969, %v9033
      %v9066 = vsel %vm9002, %v8970, %v9034
      %v9067 = vsel %vm9003, %v8971, %v9035
      %v9068 = vsel %vm9004, %v8972, %v9036
      %v9069 = vsel %vm9005, %v8973, %v9037
      %v9070 = vsel %vm9006, %v8974, %v9038
      %v9071 = vsel %vm9007, %v8975, %v9039
      %v9072 = vsel %vm9008, %v8976, %v9040
      %v9073 = vsel %vm9009, %v8977, %v9041
      %v9074 = vsel %vm9010, %v8978, %v9042
      %9075 = vst.msk [vmem:[%s289 + $0x1] sm:$0xff] %vm201, %v9043
      %9076 = vst.msk [vmem:[%s289 + $0x9] sm:$0xff] %vm201, %v9044
      %9077 = vst.msk [vmem:[%s289 + $0x19] sm:$0xff] %vm201, %v9045
      %9078 = vst.msk [vmem:[%s289 + $0x21] sm:$0xff] %vm201, %v9046
      %9079 = vst.msk [vmem:[%s289 + $0x31] sm:$0xff] %vm201, %v9047
      %9080 = vst.msk [vmem:[%s289 + $0x39] sm:$0xff] %vm201, %v9048
      %9081 = vst.msk [vmem:[%s289 + $0x49] sm:$0xff] %vm201, %v9049
      %9082 = vst.msk [vmem:[%s289 + $0x51] sm:$0xff] %vm201, %v9050
      %9083 = vst.msk [vmem:[%s289 + $0x61] sm:$0xff] %vm201, %v9051
      %9084 = vst.msk [vmem:[%s289 + $0x69] sm:$0xff] %vm201, %v9052
      %9085 = vst.msk [vmem:[%s289 + $0x79] sm:$0xff] %vm201, %v9053
      %9086 = vst.msk [vmem:[%s289 + $0x81] sm:$0xff] %vm201, %v9054
      %9087 = vst.msk [vmem:[%s289 + $0x91] sm:$0xff] %vm201, %v9055
      %9088 = vst.msk [vmem:[%s289 + $0x99] sm:$0xff] %vm201, %v9056
      %9089 = vst.msk [vmem:[%s289 + $0xa9] sm:$0xff] %vm201, %v9057
      %9090 = vst.msk [vmem:[%s289 + $0xb1] sm:$0xff] %vm201, %v9058
      %9091 = vst.msk [vmem:[%s289 + $0xc1] sm:$0xff] %vm201, %v9059
      %9092 = vst.msk [vmem:[%s289 + $0xc9] sm:$0xff] %vm201, %v9060
      %9093 = vst.msk [vmem:[%s289 + $0xd9] sm:$0xff] %vm201, %v9061
      %9094 = vst.msk [vmem:[%s289 + $0xe1] sm:$0xff] %vm201, %v9062
      %9095 = vst.msk [vmem:[%s289 + $0xf1] sm:$0xff] %vm201, %v9063
      %9096 = vst.msk [vmem:[%s289 + $0xf9] sm:$0xff] %vm201, %v9064
      %9097 = vst.msk [vmem:[%s289 + $0x109] sm:$0xff] %vm201, %v9065
      %9098 = vst.msk [vmem:[%s289 + $0x111] sm:$0xff] %vm201, %v9066
      %9099 = vst.msk [vmem:[%s289 + $0x121] sm:$0xff] %vm201, %v9067
      %9100 = vst.msk [vmem:[%s289 + $0x129] sm:$0xff] %vm201, %v9068
      %9101 = vst.msk [vmem:[%s289 + $0x139] sm:$0xff] %vm201, %v9069
      %9102 = vst.msk [vmem:[%s289 + $0x141] sm:$0xff] %vm201, %v9070
      %9103 = vst.msk [vmem:[%s289 + $0x151] sm:$0xff] %vm201, %v9071
      %9104 = vst.msk [vmem:[%s289 + $0x159] sm:$0xff] %vm201, %v9072
      %9105 = vst.msk [vmem:[%s289 + $0x169] sm:$0xff] %vm201, %v9073
      %9106 = vst.msk [vmem:[%s289 + $0x171] sm:$0xff] %vm201, %v9074
      %v9107 = vld [vmem:[#allocation2] sm:$0xff]
      %v9108 = vld [vmem:[#allocation2 + $0x8] sm:$0xff]
      %v9109 = vld [vmem:[#allocation2 + $0x18] sm:$0xff]
      %v9110 = vld [vmem:[#allocation2 + $0x20] sm:$0xff]
      %v9111 = vld [vmem:[#allocation2 + $0x30] sm:$0xff]
      %v9112 = vld [vmem:[#allocation2 + $0x38] sm:$0xff]
      %v9113 = vld [vmem:[#allocation2 + $0x48] sm:$0xff]
      %v9114 = vld [vmem:[#allocation2 + $0x50] sm:$0xff]
      %v9115 = vld [vmem:[#allocation2 + $0x60] sm:$0xff]
      %v9116 = vld [vmem:[#allocation2 + $0x68] sm:$0xff]
      %v9117 = vld [vmem:[#allocation2 + $0x78] sm:$0xff]
      %v9118 = vld [vmem:[#allocation2 + $0x80] sm:$0xff]
      %v9119 = vld [vmem:[#allocation2 + $0x90] sm:$0xff]
      %v9120 = vld [vmem:[#allocation2 + $0x98] sm:$0xff]
      %v9121 = vld [vmem:[#allocation2 + $0xa8] sm:$0xff]
      %v9122 = vld [vmem:[#allocation2 + $0xb0] sm:$0xff]
      %v9123 = vld [vmem:[#allocation2 + $0xc0] sm:$0xff]
      %v9124 = vld [vmem:[#allocation2 + $0xc8] sm:$0xff]
      %v9125 = vld [vmem:[#allocation2 + $0xd8] sm:$0xff]
      %v9126 = vld [vmem:[#allocation2 + $0xe0] sm:$0xff]
      %v9127 = vld [vmem:[#allocation2 + $0xf0] sm:$0xff]
      %v9128 = vld [vmem:[#allocation2 + $0xf8] sm:$0xff]
      %v9129 = vld [vmem:[#allocation2 + $0x108] sm:$0xff]
      %v9130 = vld [vmem:[#allocation2 + $0x110] sm:$0xff]
      %v9131 = vld [vmem:[#allocation2 + $0x120] sm:$0xff]
      %v9132 = vld [vmem:[#allocation2 + $0x128] sm:$0xff]
      %v9133 = vld [vmem:[#allocation2 + $0x138] sm:$0xff]
      %v9134 = vld [vmem:[#allocation2 + $0x140] sm:$0xff]
      %v9135 = vld [vmem:[#allocation2 + $0x150] sm:$0xff]
      %v9136 = vld [vmem:[#allocation2 + $0x158] sm:$0xff]
      %v9137 = vld [vmem:[#allocation2 + $0x168] sm:$0xff]
      %v9138 = vld [vmem:[#allocation2 + $0x170] sm:$0xff]
      %v9139 = vld [vmem:[#allocation2 + $0x1] sm:$0xff]
      %v9140 = vld [vmem:[#allocation2 + $0x9] sm:$0xff]
      %v9141 = vld [vmem:[#allocation2 + $0x19] sm:$0xff]
      %v9142 = vld [vmem:[#allocation2 + $0x21] sm:$0xff]
      %v9143 = vld [vmem:[#allocation2 + $0x31] sm:$0xff]
      %v9144 = vld [vmem:[#allocation2 + $0x39] sm:$0xff]
      %v9145 = vld [vmem:[#allocation2 + $0x49] sm:$0xff]
      %v9146 = vld [vmem:[#allocation2 + $0x51] sm:$0xff]
      %v9147 = vld [vmem:[#allocation2 + $0x61] sm:$0xff]
      %v9148 = vld [vmem:[#allocation2 + $0x69] sm:$0xff]
      %v9149 = vld [vmem:[#allocation2 + $0x79] sm:$0xff]
      %v9150 = vld [vmem:[#allocation2 + $0x81] sm:$0xff]
      %v9151 = vld [vmem:[#allocation2 + $0x91] sm:$0xff]
      %v9152 = vld [vmem:[#allocation2 + $0x99] sm:$0xff]
      %v9153 = vld [vmem:[#allocation2 + $0xa9] sm:$0xff]
      %v9154 = vld [vmem:[#allocation2 + $0xb1] sm:$0xff]
      %v9155 = vld [vmem:[#allocation2 + $0xc1] sm:$0xff]
      %v9156 = vld [vmem:[#allocation2 + $0xc9] sm:$0xff]
      %v9157 = vld [vmem:[#allocation2 + $0xd9] sm:$0xff]
      %v9158 = vld [vmem:[#allocation2 + $0xe1] sm:$0xff]
      %v9159 = vld [vmem:[#allocation2 + $0xf1] sm:$0xff]
      %v9160 = vld [vmem:[#allocation2 + $0xf9] sm:$0xff]
      %v9161 = vld [vmem:[#allocation2 + $0x109] sm:$0xff]
      %v9162 = vld [vmem:[#allocation2 + $0x111] sm:$0xff]
      %v9163 = vld [vmem:[#allocation2 + $0x121] sm:$0xff]
      %v9164 = vld [vmem:[#allocation2 + $0x129] sm:$0xff]
      %v9165 = vld [vmem:[#allocation2 + $0x139] sm:$0xff]
      %v9166 = vld [vmem:[#allocation2 + $0x141] sm:$0xff]
      %v9167 = vld [vmem:[#allocation2 + $0x151] sm:$0xff]
      %v9168 = vld [vmem:[#allocation2 + $0x159] sm:$0xff]
      %v9169 = vld [vmem:[#allocation2 + $0x169] sm:$0xff]
      %v9170 = vld [vmem:[#allocation2 + $0x171] sm:$0xff]
      %v9171 = vld [vmem:[#allocation2 + $0x2] sm:$0xff]
      %v9172 = vld [vmem:[#allocation2 + $0xa] sm:$0xff]
      %v9173 = vld [vmem:[#allocation2 + $0x1a] sm:$0xff]
      %v9174 = vld [vmem:[#allocation2 + $0x22] sm:$0xff]
      %v9175 = vld [vmem:[#allocation2 + $0x32] sm:$0xff]
      %v9176 = vld [vmem:[#allocation2 + $0x3a] sm:$0xff]
      %v9177 = vld [vmem:[#allocation2 + $0x4a] sm:$0xff]
      %v9178 = vld [vmem:[#allocation2 + $0x52] sm:$0xff]
      %v9179 = vld [vmem:[#allocation2 + $0x62] sm:$0xff]
      %v9180 = vld [vmem:[#allocation2 + $0x6a] sm:$0xff]
      %v9181 = vld [vmem:[#allocation2 + $0x7a] sm:$0xff]
      %v9182 = vld [vmem:[#allocation2 + $0x82] sm:$0xff]
      %v9183 = vld [vmem:[#allocation2 + $0x92] sm:$0xff]
      %v9184 = vld [vmem:[#allocation2 + $0x9a] sm:$0xff]
      %v9185 = vld [vmem:[#allocation2 + $0xaa] sm:$0xff]
      %v9186 = vld [vmem:[#allocation2 + $0xb2] sm:$0xff]
      %v9187 = vld [vmem:[#allocation2 + $0xc2] sm:$0xff]
      %v9188 = vld [vmem:[#allocation2 + $0xca] sm:$0xff]
      %v9189 = vld [vmem:[#allocation2 + $0xda] sm:$0xff]
      %v9190 = vld [vmem:[#allocation2 + $0xe2] sm:$0xff]
      %v9191 = vld [vmem:[#allocation2 + $0xf2] sm:$0xff]
      %v9192 = vld [vmem:[#allocation2 + $0xfa] sm:$0xff]
      %v9193 = vld [vmem:[#allocation2 + $0x10a] sm:$0xff]
      %v9194 = vld [vmem:[#allocation2 + $0x112] sm:$0xff]
      %v9195 = vld [vmem:[#allocation2 + $0x122] sm:$0xff]
      %v9196 = vld [vmem:[#allocation2 + $0x12a] sm:$0xff]
      %v9197 = vld [vmem:[#allocation2 + $0x13a] sm:$0xff]
      %v9198 = vld [vmem:[#allocation2 + $0x142] sm:$0xff]
      %v9199 = vld [vmem:[#allocation2 + $0x152] sm:$0xff]
      %v9200 = vld [vmem:[#allocation2 + $0x15a] sm:$0xff]
      %v9201 = vld [vmem:[#allocation2 + $0x16a] sm:$0xff]
      %v9202 = vld [vmem:[#allocation2 + $0x172] sm:$0xff]
      %v9203 = vld [vmem:[%s289] sm:$0xff]
      %v9204 = vld [vmem:[%s289 + $0x8] sm:$0xff]
      %v9205 = vld [vmem:[%s289 + $0x18] sm:$0xff]
      %v9206 = vld [vmem:[%s289 + $0x20] sm:$0xff]
      %v9207 = vld [vmem:[%s289 + $0x30] sm:$0xff]
      %v9208 = vld [vmem:[%s289 + $0x38] sm:$0xff]
      %v9209 = vld [vmem:[%s289 + $0x48] sm:$0xff]
      %v9210 = vld [vmem:[%s289 + $0x50] sm:$0xff]
      %v9211 = vld [vmem:[%s289 + $0x60] sm:$0xff]
      %v9212 = vld [vmem:[%s289 + $0x68] sm:$0xff]
      %v9213 = vld [vmem:[%s289 + $0x78] sm:$0xff]
      %v9214 = vld [vmem:[%s289 + $0x80] sm:$0xff]
      %v9215 = vld [vmem:[%s289 + $0x90] sm:$0xff]
      %v9216 = vld [vmem:[%s289 + $0x98] sm:$0xff]
      %v9217 = vld [vmem:[%s289 + $0xa8] sm:$0xff]
      %v9218 = vld [vmem:[%s289 + $0xb0] sm:$0xff]
      %v9219 = vld [vmem:[%s289 + $0xc0] sm:$0xff]
      %v9220 = vld [vmem:[%s289 + $0xc8] sm:$0xff]
      %v9221 = vld [vmem:[%s289 + $0xd8] sm:$0xff]
      %v9222 = vld [vmem:[%s289 + $0xe0] sm:$0xff]
      %v9223 = vld [vmem:[%s289 + $0xf0] sm:$0xff]
      %v9224 = vld [vmem:[%s289 + $0xf8] sm:$0xff]
      %v9225 = vld [vmem:[%s289 + $0x108] sm:$0xff]
      %v9226 = vld [vmem:[%s289 + $0x110] sm:$0xff]
      %v9227 = vld [vmem:[%s289 + $0x120] sm:$0xff]
      %v9228 = vld [vmem:[%s289 + $0x128] sm:$0xff]
      %v9229 = vld [vmem:[%s289 + $0x138] sm:$0xff]
      %v9230 = vld [vmem:[%s289 + $0x140] sm:$0xff]
      %v9231 = vld [vmem:[%s289 + $0x150] sm:$0xff]
      %v9232 = vld [vmem:[%s289 + $0x158] sm:$0xff]
      %v9233 = vld [vmem:[%s289 + $0x168] sm:$0xff]
      %v9234 = vld [vmem:[%s289 + $0x170] sm:$0xff]
      %v9235 = vld [vmem:[%s289 + $0x1] sm:$0xff]
      %v9236 = vld [vmem:[%s289 + $0x9] sm:$0xff]
      %v9237 = vld [vmem:[%s289 + $0x19] sm:$0xff]
      %v9238 = vld [vmem:[%s289 + $0x21] sm:$0xff]
      %v9239 = vld [vmem:[%s289 + $0x31] sm:$0xff]
      %v9240 = vld [vmem:[%s289 + $0x39] sm:$0xff]
      %v9241 = vld [vmem:[%s289 + $0x49] sm:$0xff]
      %v9242 = vld [vmem:[%s289 + $0x51] sm:$0xff]
      %v9243 = vld [vmem:[%s289 + $0x61] sm:$0xff]
      %v9244 = vld [vmem:[%s289 + $0x69] sm:$0xff]
      %v9245 = vld [vmem:[%s289 + $0x79] sm:$0xff]
      %v9246 = vld [vmem:[%s289 + $0x81] sm:$0xff]
      %v9247 = vld [vmem:[%s289 + $0x91] sm:$0xff]
      %v9248 = vld [vmem:[%s289 + $0x99] sm:$0xff]
      %v9249 = vld [vmem:[%s289 + $0xa9] sm:$0xff]
      %v9250 = vld [vmem:[%s289 + $0xb1] sm:$0xff]
      %v9251 = vld [vmem:[%s289 + $0xc1] sm:$0xff]
      %v9252 = vld [vmem:[%s289 + $0xc9] sm:$0xff]
      %v9253 = vld [vmem:[%s289 + $0xd9] sm:$0xff]
      %v9254 = vld [vmem:[%s289 + $0xe1] sm:$0xff]
      %v9255 = vld [vmem:[%s289 + $0xf1] sm:$0xff]
      %v9256 = vld [vmem:[%s289 + $0xf9] sm:$0xff]
      %v9257 = vld [vmem:[%s289 + $0x109] sm:$0xff]
      %v9258 = vld [vmem:[%s289 + $0x111] sm:$0xff]
      %v9259 = vld [vmem:[%s289 + $0x121] sm:$0xff]
      %v9260 = vld [vmem:[%s289 + $0x129] sm:$0xff]
      %v9261 = vld [vmem:[%s289 + $0x139] sm:$0xff]
      %v9262 = vld [vmem:[%s289 + $0x141] sm:$0xff]
      %v9263 = vld [vmem:[%s289 + $0x151] sm:$0xff]
      %v9264 = vld [vmem:[%s289 + $0x159] sm:$0xff]
      %v9265 = vld [vmem:[%s289 + $0x169] sm:$0xff]
      %v9266 = vld [vmem:[%s289 + $0x171] sm:$0xff]
      %v9267 = vld [vmem:[%s289 + $0x2] sm:$0xff]
      %v9268 = vld [vmem:[%s289 + $0xa] sm:$0xff]
      %v9269 = vld [vmem:[%s289 + $0x1a] sm:$0xff]
      %v9270 = vld [vmem:[%s289 + $0x22] sm:$0xff]
      %v9271 = vld [vmem:[%s289 + $0x32] sm:$0xff]
      %v9272 = vld [vmem:[%s289 + $0x3a] sm:$0xff]
      %v9273 = vld [vmem:[%s289 + $0x4a] sm:$0xff]
      %v9274 = vld [vmem:[%s289 + $0x52] sm:$0xff]
      %v9275 = vld [vmem:[%s289 + $0x62] sm:$0xff]
      %v9276 = vld [vmem:[%s289 + $0x6a] sm:$0xff]
      %v9277 = vld [vmem:[%s289 + $0x7a] sm:$0xff]
      %v9278 = vld [vmem:[%s289 + $0x82] sm:$0xff]
      %v9279 = vld [vmem:[%s289 + $0x92] sm:$0xff]
      %v9280 = vld [vmem:[%s289 + $0x9a] sm:$0xff]
      %v9281 = vld [vmem:[%s289 + $0xaa] sm:$0xff]
      %v9282 = vld [vmem:[%s289 + $0xb2] sm:$0xff]
      %v9283 = vld [vmem:[%s289 + $0xc2] sm:$0xff]
      %v9284 = vld [vmem:[%s289 + $0xca] sm:$0xff]
      %v9285 = vld [vmem:[%s289 + $0xda] sm:$0xff]
      %v9286 = vld [vmem:[%s289 + $0xe2] sm:$0xff]
      %v9287 = vld [vmem:[%s289 + $0xf2] sm:$0xff]
      %v9288 = vld [vmem:[%s289 + $0xfa] sm:$0xff]
      %v9289 = vld [vmem:[%s289 + $0x10a] sm:$0xff]
      %v9290 = vld [vmem:[%s289 + $0x112] sm:$0xff]
      %v9291 = vld [vmem:[%s289 + $0x122] sm:$0xff]
      %v9292 = vld [vmem:[%s289 + $0x12a] sm:$0xff]
      %v9293 = vld [vmem:[%s289 + $0x13a] sm:$0xff]
      %v9294 = vld [vmem:[%s289 + $0x142] sm:$0xff]
      %v9295 = vld [vmem:[%s289 + $0x152] sm:$0xff]
      %v9296 = vld [vmem:[%s289 + $0x15a] sm:$0xff]
      %v9297 = vld [vmem:[%s289 + $0x16a] sm:$0xff]
      %v9298 = vld [vmem:[%s289 + $0x172] sm:$0xff]
      %v9299 = vld [vmem:[%s515] sm:$0xff]
      %v9300 = vld [vmem:[%s515 + $0x8] sm:$0xff]
      %v9301 = vld [vmem:[%s515 + $0x18] sm:$0xff]
      %v9302 = vld [vmem:[%s515 + $0x20] sm:$0xff]
      %v9303 = vld [vmem:[%s515 + $0x30] sm:$0xff]
      %v9304 = vld [vmem:[%s515 + $0x38] sm:$0xff]
      %v9305 = vld [vmem:[%s515 + $0x48] sm:$0xff]
      %v9306 = vld [vmem:[%s515 + $0x50] sm:$0xff]
      %v9307 = vld [vmem:[%s515 + $0x60] sm:$0xff]
      %v9308 = vld [vmem:[%s515 + $0x68] sm:$0xff]
      %v9309 = vld [vmem:[%s515 + $0x78] sm:$0xff]
      %v9310 = vld [vmem:[%s515 + $0x80] sm:$0xff]
      %v9311 = vld [vmem:[%s515 + $0x90] sm:$0xff]
      %v9312 = vld [vmem:[%s515 + $0x98] sm:$0xff]
      %v9313 = vld [vmem:[%s515 + $0xa8] sm:$0xff]
      %v9314 = vld [vmem:[%s515 + $0xb0] sm:$0xff]
      %v9315 = vld [vmem:[%s515 + $0xc0] sm:$0xff]
      %v9316 = vld [vmem:[%s515 + $0xc8] sm:$0xff]
      %v9317 = vld [vmem:[%s515 + $0xd8] sm:$0xff]
      %v9318 = vld [vmem:[%s515 + $0xe0] sm:$0xff]
      %v9319 = vld [vmem:[%s515 + $0xf0] sm:$0xff]
      %v9320 = vld [vmem:[%s515 + $0xf8] sm:$0xff]
      %v9321 = vld [vmem:[%s515 + $0x108] sm:$0xff]
      %v9322 = vld [vmem:[%s515 + $0x110] sm:$0xff]
      %v9323 = vld [vmem:[%s515 + $0x120] sm:$0xff]
      %v9324 = vld [vmem:[%s515 + $0x128] sm:$0xff]
      %v9325 = vld [vmem:[%s515 + $0x138] sm:$0xff]
      %v9326 = vld [vmem:[%s515 + $0x140] sm:$0xff]
      %v9327 = vld [vmem:[%s515 + $0x150] sm:$0xff]
      %v9328 = vld [vmem:[%s515 + $0x158] sm:$0xff]
      %v9329 = vld [vmem:[%s515 + $0x168] sm:$0xff]
      %v9330 = vld [vmem:[%s515 + $0x170] sm:$0xff]
      %v9331 = vld [vmem:[%s515 + $0x1] sm:$0xff]
      %v9332 = vld [vmem:[%s515 + $0x9] sm:$0xff]
      %v9333 = vld [vmem:[%s515 + $0x19] sm:$0xff]
      %v9334 = vld [vmem:[%s515 + $0x21] sm:$0xff]
      %v9335 = vld [vmem:[%s515 + $0x31] sm:$0xff]
      %v9336 = vld [vmem:[%s515 + $0x39] sm:$0xff]
      %v9337 = vld [vmem:[%s515 + $0x49] sm:$0xff]
      %v9338 = vld [vmem:[%s515 + $0x51] sm:$0xff]
      %v9339 = vld [vmem:[%s515 + $0x61] sm:$0xff]
      %v9340 = vld [vmem:[%s515 + $0x69] sm:$0xff]
      %v9341 = vld [vmem:[%s515 + $0x79] sm:$0xff]
      %v9342 = vld [vmem:[%s515 + $0x81] sm:$0xff]
      %v9343 = vld [vmem:[%s515 + $0x91] sm:$0xff]
      %v9344 = vld [vmem:[%s515 + $0x99] sm:$0xff]
      %v9345 = vld [vmem:[%s515 + $0xa9] sm:$0xff]
      %v9346 = vld [vmem:[%s515 + $0xb1] sm:$0xff]
      %v9347 = vld [vmem:[%s515 + $0xc1] sm:$0xff]
      %v9348 = vld [vmem:[%s515 + $0xc9] sm:$0xff]
      %v9349 = vld [vmem:[%s515 + $0xd9] sm:$0xff]
      %v9350 = vld [vmem:[%s515 + $0xe1] sm:$0xff]
      %v9351 = vld [vmem:[%s515 + $0xf1] sm:$0xff]
      %v9352 = vld [vmem:[%s515 + $0xf9] sm:$0xff]
      %v9353 = vld [vmem:[%s515 + $0x109] sm:$0xff]
      %v9354 = vld [vmem:[%s515 + $0x111] sm:$0xff]
      %v9355 = vld [vmem:[%s515 + $0x121] sm:$0xff]
      %v9356 = vld [vmem:[%s515 + $0x129] sm:$0xff]
      %v9357 = vld [vmem:[%s515 + $0x139] sm:$0xff]
      %v9358 = vld [vmem:[%s515 + $0x141] sm:$0xff]
      %v9359 = vld [vmem:[%s515 + $0x151] sm:$0xff]
      %v9360 = vld [vmem:[%s515 + $0x159] sm:$0xff]
      %v9361 = vld [vmem:[%s515 + $0x169] sm:$0xff]
      %v9362 = vld [vmem:[%s515 + $0x171] sm:$0xff]
      %v9363 = vld [vmem:[%s515 + $0x2] sm:$0xff]
      %v9364 = vld [vmem:[%s515 + $0xa] sm:$0xff]
      %v9365 = vld [vmem:[%s515 + $0x1a] sm:$0xff]
      %v9366 = vld [vmem:[%s515 + $0x22] sm:$0xff]
      %v9367 = vld [vmem:[%s515 + $0x32] sm:$0xff]
      %v9368 = vld [vmem:[%s515 + $0x3a] sm:$0xff]
      %v9369 = vld [vmem:[%s515 + $0x4a] sm:$0xff]
      %v9370 = vld [vmem:[%s515 + $0x52] sm:$0xff]
      %v9371 = vld [vmem:[%s515 + $0x62] sm:$0xff]
      %v9372 = vld [vmem:[%s515 + $0x6a] sm:$0xff]
      %v9373 = vld [vmem:[%s515 + $0x7a] sm:$0xff]
      %v9374 = vld [vmem:[%s515 + $0x82] sm:$0xff]
      %v9375 = vld [vmem:[%s515 + $0x92] sm:$0xff]
      %v9376 = vld [vmem:[%s515 + $0x9a] sm:$0xff]
      %v9377 = vld [vmem:[%s515 + $0xaa] sm:$0xff]
      %v9378 = vld [vmem:[%s515 + $0xb2] sm:$0xff]
      %v9379 = vld [vmem:[%s515 + $0xc2] sm:$0xff]
      %v9380 = vld [vmem:[%s515 + $0xca] sm:$0xff]
      %v9381 = vld [vmem:[%s515 + $0xda] sm:$0xff]
      %v9382 = vld [vmem:[%s515 + $0xe2] sm:$0xff]
      %v9383 = vld [vmem:[%s515 + $0xf2] sm:$0xff]
      %v9384 = vld [vmem:[%s515 + $0xfa] sm:$0xff]
      %v9385 = vld [vmem:[%s515 + $0x10a] sm:$0xff]
      %v9386 = vld [vmem:[%s515 + $0x112] sm:$0xff]
      %v9387 = vld [vmem:[%s515 + $0x122] sm:$0xff]
      %v9388 = vld [vmem:[%s515 + $0x12a] sm:$0xff]
      %v9389 = vld [vmem:[%s515 + $0x13a] sm:$0xff]
      %v9390 = vld [vmem:[%s515 + $0x142] sm:$0xff]
      %v9391 = vld [vmem:[%s515 + $0x152] sm:$0xff]
      %v9392 = vld [vmem:[%s515 + $0x15a] sm:$0xff]
      %v9393 = vld [vmem:[%s515 + $0x16a] sm:$0xff]
      %v9394 = vld [vmem:[%s515 + $0x172] sm:$0xff]
      %9427 = vrot.lane.b32.xlu0 %v9139, 64
      %v9428 = vpop.permute.xlu0 %9427
      %9429 = vrot.lane.b32.xlu0 %v9140, 64
      %v9430 = vpop.permute.xlu0 %9429
      %9431 = vrot.lane.b32.xlu0 %v9141, 64
      %v9432 = vpop.permute.xlu0 %9431
      %9433 = vrot.lane.b32.xlu0 %v9142, 64
      %v9434 = vpop.permute.xlu0 %9433
      %9435 = vrot.lane.b32.xlu0 %v9143, 64
      %v9436 = vpop.permute.xlu0 %9435
      %9437 = vrot.lane.b32.xlu0 %v9144, 64
      %v9438 = vpop.permute.xlu0 %9437
      %9439 = vrot.lane.b32.xlu0 %v9145, 64
      %v9440 = vpop.permute.xlu0 %9439
      %9441 = vrot.lane.b32.xlu0 %v9146, 64
      %v9442 = vpop.permute.xlu0 %9441
      %9443 = vrot.lane.b32.xlu0 %v9147, 64
      %v9444 = vpop.permute.xlu0 %9443
      %9445 = vrot.lane.b32.xlu0 %v9148, 64
      %v9446 = vpop.permute.xlu0 %9445
      %9447 = vrot.lane.b32.xlu0 %v9149, 64
      %v9448 = vpop.permute.xlu0 %9447
      %9449 = vrot.lane.b32.xlu0 %v9150, 64
      %v9450 = vpop.permute.xlu0 %9449
      %9451 = vrot.lane.b32.xlu0 %v9151, 64
      %v9452 = vpop.permute.xlu0 %9451
      %9453 = vrot.lane.b32.xlu0 %v9152, 64
      %v9454 = vpop.permute.xlu0 %9453
      %9455 = vrot.lane.b32.xlu0 %v9153, 64
      %v9456 = vpop.permute.xlu0 %9455
      %9457 = vrot.lane.b32.xlu0 %v9154, 64
      %v9458 = vpop.permute.xlu0 %9457
      %9459 = vrot.lane.b32.xlu0 %v9155, 64
      %v9460 = vpop.permute.xlu0 %9459
      %9461 = vrot.lane.b32.xlu0 %v9156, 64
      %v9462 = vpop.permute.xlu0 %9461
      %9463 = vrot.lane.b32.xlu0 %v9157, 64
      %v9464 = vpop.permute.xlu0 %9463
      %9465 = vrot.lane.b32.xlu0 %v9158, 64
      %v9466 = vpop.permute.xlu0 %9465
      %9467 = vrot.lane.b32.xlu0 %v9159, 64
      %v9468 = vpop.permute.xlu0 %9467
      %9469 = vrot.lane.b32.xlu0 %v9160, 64
      %v9470 = vpop.permute.xlu0 %9469
      %9471 = vrot.lane.b32.xlu0 %v9161, 64
      %v9472 = vpop.permute.xlu0 %9471
      %9473 = vrot.lane.b32.xlu0 %v9162, 64
      %v9474 = vpop.permute.xlu0 %9473
      %9475 = vrot.lane.b32.xlu0 %v9163, 64
      %v9476 = vpop.permute.xlu0 %9475
      %9477 = vrot.lane.b32.xlu0 %v9164, 64
      %v9478 = vpop.permute.xlu0 %9477
      %9479 = vrot.lane.b32.xlu0 %v9165, 64
      %v9480 = vpop.permute.xlu0 %9479
      %9481 = vrot.lane.b32.xlu0 %v9166, 64
      %v9482 = vpop.permute.xlu0 %9481
      %9483 = vrot.lane.b32.xlu0 %v9167, 64
      %v9484 = vpop.permute.xlu0 %9483
      %9485 = vrot.lane.b32.xlu0 %v9168, 64
      %v9486 = vpop.permute.xlu0 %9485
      %9487 = vrot.lane.b32.xlu0 %v9169, 64
      %v9488 = vpop.permute.xlu0 %9487
      %9489 = vrot.lane.b32.xlu0 %v9170, 64
      %v9490 = vpop.permute.xlu0 %9489
      %9555 = vrot.lane.b32.xlu0 %v9203, 64
      %v9556 = vpop.permute.xlu0 %9555
      %9557 = vrot.lane.b32.xlu0 %v9204, 64
      %v9558 = vpop.permute.xlu0 %9557
      %9559 = vrot.lane.b32.xlu0 %v9205, 64
      %v9560 = vpop.permute.xlu0 %9559
      %9561 = vrot.lane.b32.xlu0 %v9206, 64
      %v9562 = vpop.permute.xlu0 %9561
      %9563 = vrot.lane.b32.xlu0 %v9207, 64
      %v9564 = vpop.permute.xlu0 %9563
      %9565 = vrot.lane.b32.xlu0 %v9208, 64
      %v9566 = vpop.permute.xlu0 %9565
      %9567 = vrot.lane.b32.xlu0 %v9209, 64
      %v9568 = vpop.permute.xlu0 %9567
      %9569 = vrot.lane.b32.xlu0 %v9210, 64
      %v9570 = vpop.permute.xlu0 %9569
      %9571 = vrot.lane.b32.xlu0 %v9211, 64
      %v9572 = vpop.permute.xlu0 %9571
      %9573 = vrot.lane.b32.xlu0 %v9212, 64
      %v9574 = vpop.permute.xlu0 %9573
      %9575 = vrot.lane.b32.xlu0 %v9213, 64
      %v9576 = vpop.permute.xlu0 %9575
      %9577 = vrot.lane.b32.xlu0 %v9214, 64
      %v9578 = vpop.permute.xlu0 %9577
      %9579 = vrot.lane.b32.xlu0 %v9215, 64
      %v9580 = vpop.permute.xlu0 %9579
      %9581 = vrot.lane.b32.xlu0 %v9216, 64
      %v9582 = vpop.permute.xlu0 %9581
      %9583 = vrot.lane.b32.xlu0 %v9217, 64
      %v9584 = vpop.permute.xlu0 %9583
      %9585 = vrot.lane.b32.xlu0 %v9218, 64
      %v9586 = vpop.permute.xlu0 %9585
      %9587 = vrot.lane.b32.xlu0 %v9219, 64
      %v9588 = vpop.permute.xlu0 %9587
      %9589 = vrot.lane.b32.xlu0 %v9220, 64
      %v9590 = vpop.permute.xlu0 %9589
      %9591 = vrot.lane.b32.xlu0 %v9221, 64
      %v9592 = vpop.permute.xlu0 %9591
      %9593 = vrot.lane.b32.xlu0 %v9222, 64
      %v9594 = vpop.permute.xlu0 %9593
      %9595 = vrot.lane.b32.xlu0 %v9223, 64
      %v9596 = vpop.permute.xlu0 %9595
      %9597 = vrot.lane.b32.xlu0 %v9224, 64
      %v9598 = vpop.permute.xlu0 %9597
      %9599 = vrot.lane.b32.xlu0 %v9225, 64
      %v9600 = vpop.permute.xlu0 %9599
      %9601 = vrot.lane.b32.xlu0 %v9226, 64
      %v9602 = vpop.permute.xlu0 %9601
      %9603 = vrot.lane.b32.xlu0 %v9227, 64
      %v9604 = vpop.permute.xlu0 %9603
      %9605 = vrot.lane.b32.xlu0 %v9228, 64
      %v9606 = vpop.permute.xlu0 %9605
      %9607 = vrot.lane.b32.xlu0 %v9229, 64
      %v9608 = vpop.permute.xlu0 %9607
      %9609 = vrot.lane.b32.xlu0 %v9230, 64
      %v9610 = vpop.permute.xlu0 %9609
      %9611 = vrot.lane.b32.xlu0 %v9231, 64
      %v9612 = vpop.permute.xlu0 %9611
      %9613 = vrot.lane.b32.xlu0 %v9232, 64
      %v9614 = vpop.permute.xlu0 %9613
      %9615 = vrot.lane.b32.xlu0 %v9233, 64
      %v9616 = vpop.permute.xlu0 %9615
      %9617 = vrot.lane.b32.xlu0 %v9234, 64
      %v9618 = vpop.permute.xlu0 %9617
      %9683 = vrot.lane.b32.xlu0 %v9267, 64
      %v9684 = vpop.permute.xlu0 %9683
      %9685 = vrot.lane.b32.xlu0 %v9268, 64
      %v9686 = vpop.permute.xlu0 %9685
      %9687 = vrot.lane.b32.xlu0 %v9269, 64
      %v9688 = vpop.permute.xlu0 %9687
      %9689 = vrot.lane.b32.xlu0 %v9270, 64
      %v9690 = vpop.permute.xlu0 %9689
      %9691 = vrot.lane.b32.xlu0 %v9271, 64
      %v9692 = vpop.permute.xlu0 %9691
      %9693 = vrot.lane.b32.xlu0 %v9272, 64
      %v9694 = vpop.permute.xlu0 %9693
      %9695 = vrot.lane.b32.xlu0 %v9273, 64
      %v9696 = vpop.permute.xlu0 %9695
      %9697 = vrot.lane.b32.xlu0 %v9274, 64
      %v9698 = vpop.permute.xlu0 %9697
      %9699 = vrot.lane.b32.xlu0 %v9275, 64
      %v9700 = vpop.permute.xlu0 %9699
      %9701 = vrot.lane.b32.xlu0 %v9276, 64
      %v9702 = vpop.permute.xlu0 %9701
      %9703 = vrot.lane.b32.xlu0 %v9277, 64
      %v9704 = vpop.permute.xlu0 %9703
      %9705 = vrot.lane.b32.xlu0 %v9278, 64
      %v9706 = vpop.permute.xlu0 %9705
      %9707 = vrot.lane.b32.xlu0 %v9279, 64
      %v9708 = vpop.permute.xlu0 %9707
      %9709 = vrot.lane.b32.xlu0 %v9280, 64
      %v9710 = vpop.permute.xlu0 %9709
      %9711 = vrot.lane.b32.xlu0 %v9281, 64
      %v9712 = vpop.permute.xlu0 %9711
      %9713 = vrot.lane.b32.xlu0 %v9282, 64
      %v9714 = vpop.permute.xlu0 %9713
      %9715 = vrot.lane.b32.xlu0 %v9283, 64
      %v9716 = vpop.permute.xlu0 %9715
      %9717 = vrot.lane.b32.xlu0 %v9284, 64
      %v9718 = vpop.permute.xlu0 %9717
      %9719 = vrot.lane.b32.xlu0 %v9285, 64
      %v9720 = vpop.permute.xlu0 %9719
      %9721 = vrot.lane.b32.xlu0 %v9286, 64
      %v9722 = vpop.permute.xlu0 %9721
      %9723 = vrot.lane.b32.xlu0 %v9287, 64
      %v9724 = vpop.permute.xlu0 %9723
      %9725 = vrot.lane.b32.xlu0 %v9288, 64
      %v9726 = vpop.permute.xlu0 %9725
      %9727 = vrot.lane.b32.xlu0 %v9289, 64
      %v9728 = vpop.permute.xlu0 %9727
      %9729 = vrot.lane.b32.xlu0 %v9290, 64
      %v9730 = vpop.permute.xlu0 %9729
      %9731 = vrot.lane.b32.xlu0 %v9291, 64
      %v9732 = vpop.permute.xlu0 %9731
      %9733 = vrot.lane.b32.xlu0 %v9292, 64
      %v9734 = vpop.permute.xlu0 %9733
      %9735 = vrot.lane.b32.xlu0 %v9293, 64
      %v9736 = vpop.permute.xlu0 %9735
      %9737 = vrot.lane.b32.xlu0 %v9294, 64
      %v9738 = vpop.permute.xlu0 %9737
      %9739 = vrot.lane.b32.xlu0 %v9295, 64
      %v9740 = vpop.permute.xlu0 %9739
      %9741 = vrot.lane.b32.xlu0 %v9296, 64
      %v9742 = vpop.permute.xlu0 %9741
      %9743 = vrot.lane.b32.xlu0 %v9297, 64
      %v9744 = vpop.permute.xlu0 %9743
      %9745 = vrot.lane.b32.xlu0 %v9298, 64
      %v9746 = vpop.permute.xlu0 %9745
      %9811 = vrot.lane.b32.xlu0 %v9331, 64
      %v9812 = vpop.permute.xlu0 %9811
      %9813 = vrot.lane.b32.xlu0 %v9332, 64
      %v9814 = vpop.permute.xlu0 %9813
      %9815 = vrot.lane.b32.xlu0 %v9333, 64
      %v9816 = vpop.permute.xlu0 %9815
      %9817 = vrot.lane.b32.xlu0 %v9334, 64
      %v9818 = vpop.permute.xlu0 %9817
      %9819 = vrot.lane.b32.xlu0 %v9335, 64
      %v9820 = vpop.permute.xlu0 %9819
      %9821 = vrot.lane.b32.xlu0 %v9336, 64
      %v9822 = vpop.permute.xlu0 %9821
      %9823 = vrot.lane.b32.xlu0 %v9337, 64
      %v9824 = vpop.permute.xlu0 %9823
      %9825 = vrot.lane.b32.xlu0 %v9338, 64
      %v9826 = vpop.permute.xlu0 %9825
      %9827 = vrot.lane.b32.xlu0 %v9339, 64
      %v9828 = vpop.permute.xlu0 %9827
      %9829 = vrot.lane.b32.xlu0 %v9340, 64
      %v9830 = vpop.permute.xlu0 %9829
      %9831 = vrot.lane.b32.xlu0 %v9341, 64
      %v9832 = vpop.permute.xlu0 %9831
      %9833 = vrot.lane.b32.xlu0 %v9342, 64
      %v9834 = vpop.permute.xlu0 %9833
      %9835 = vrot.lane.b32.xlu0 %v9343, 64
      %v9836 = vpop.permute.xlu0 %9835
      %9837 = vrot.lane.b32.xlu0 %v9344, 64
      %v9838 = vpop.permute.xlu0 %9837
      %9839 = vrot.lane.b32.xlu0 %v9345, 64
      %v9840 = vpop.permute.xlu0 %9839
      %9841 = vrot.lane.b32.xlu0 %v9346, 64
      %v9842 = vpop.permute.xlu0 %9841
      %9843 = vrot.lane.b32.xlu0 %v9347, 64
      %v9844 = vpop.permute.xlu0 %9843
      %9845 = vrot.lane.b32.xlu0 %v9348, 64
      %v9846 = vpop.permute.xlu0 %9845
      %9847 = vrot.lane.b32.xlu0 %v9349, 64
      %v9848 = vpop.permute.xlu0 %9847
      %9849 = vrot.lane.b32.xlu0 %v9350, 64
      %v9850 = vpop.permute.xlu0 %9849
      %9851 = vrot.lane.b32.xlu0 %v9351, 64
      %v9852 = vpop.permute.xlu0 %9851
      %9853 = vrot.lane.b32.xlu0 %v9352, 64
      %v9854 = vpop.permute.xlu0 %9853
      %9855 = vrot.lane.b32.xlu0 %v9353, 64
      %v9856 = vpop.permute.xlu0 %9855
      %9857 = vrot.lane.b32.xlu0 %v9354, 64
      %v9858 = vpop.permute.xlu0 %9857
      %9859 = vrot.lane.b32.xlu0 %v9355, 64
      %v9860 = vpop.permute.xlu0 %9859
      %9861 = vrot.lane.b32.xlu0 %v9356, 64
      %v9862 = vpop.permute.xlu0 %9861
      %9863 = vrot.lane.b32.xlu0 %v9357, 64
      %v9864 = vpop.permute.xlu0 %9863
      %9865 = vrot.lane.b32.xlu0 %v9358, 64
      %v9866 = vpop.permute.xlu0 %9865
      %9867 = vrot.lane.b32.xlu0 %v9359, 64
      %v9868 = vpop.permute.xlu0 %9867
      %9869 = vrot.lane.b32.xlu0 %v9360, 64
      %v9870 = vpop.permute.xlu0 %9869
      %9871 = vrot.lane.b32.xlu0 %v9361, 64
      %v9872 = vpop.permute.xlu0 %9871
      %9873 = vrot.lane.b32.xlu0 %v9362, 64
      %v9874 = vpop.permute.xlu0 %9873
      %v9907 = vsel %vm201, %v9107, %v9428
      %v9908 = vsel %vm201, %v9108, %v9430
      %v9909 = vsel %vm201, %v9109, %v9432
      %v9910 = vsel %vm201, %v9110, %v9434
      %v9911 = vsel %vm201, %v9111, %v9436
      %v9912 = vsel %vm201, %v9112, %v9438
      %v9913 = vsel %vm201, %v9113, %v9440
      %v9914 = vsel %vm201, %v9114, %v9442
      %v9915 = vsel %vm201, %v9115, %v9444
      %v9916 = vsel %vm201, %v9116, %v9446
      %v9917 = vsel %vm201, %v9117, %v9448
      %v9918 = vsel %vm201, %v9118, %v9450
      %v9919 = vsel %vm201, %v9119, %v9452
      %v9920 = vsel %vm201, %v9120, %v9454
      %v9921 = vsel %vm201, %v9121, %v9456
      %v9922 = vsel %vm201, %v9122, %v9458
      %v9923 = vsel %vm201, %v9123, %v9460
      %v9924 = vsel %vm201, %v9124, %v9462
      %v9925 = vsel %vm201, %v9125, %v9464
      %v9926 = vsel %vm201, %v9126, %v9466
      %v9927 = vsel %vm201, %v9127, %v9468
      %v9928 = vsel %vm201, %v9128, %v9470
      %v9929 = vsel %vm201, %v9129, %v9472
      %v9930 = vsel %vm201, %v9130, %v9474
      %v9931 = vsel %vm201, %v9131, %v9476
      %v9932 = vsel %vm201, %v9132, %v9478
      %v9933 = vsel %vm201, %v9133, %v9480
      %v9934 = vsel %vm201, %v9134, %v9482
      %v9935 = vsel %vm201, %v9135, %v9484
      %v9936 = vsel %vm201, %v9136, %v9486
      %v9937 = vsel %vm201, %v9137, %v9488
      %v9938 = vsel %vm201, %v9138, %v9490
      %v9939 = vsel %vm201, %v9171, %v9556
      %v9940 = vsel %vm201, %v9172, %v9558
      %v9941 = vsel %vm201, %v9173, %v9560
      %v9942 = vsel %vm201, %v9174, %v9562
      %v9943 = vsel %vm201, %v9175, %v9564
      %v9944 = vsel %vm201, %v9176, %v9566
      %v9945 = vsel %vm201, %v9177, %v9568
      %v9946 = vsel %vm201, %v9178, %v9570
      %v9947 = vsel %vm201, %v9179, %v9572
      %v9948 = vsel %vm201, %v9180, %v9574
      %v9949 = vsel %vm201, %v9181, %v9576
      %v9950 = vsel %vm201, %v9182, %v9578
      %v9951 = vsel %vm201, %v9183, %v9580
      %v9952 = vsel %vm201, %v9184, %v9582
      %v9953 = vsel %vm201, %v9185, %v9584
      %v9954 = vsel %vm201, %v9186, %v9586
      %v9955 = vsel %vm201, %v9187, %v9588
      %v9956 = vsel %vm201, %v9188, %v9590
      %v9957 = vsel %vm201, %v9189, %v9592
      %v9958 = vsel %vm201, %v9190, %v9594
      %v9959 = vsel %vm201, %v9191, %v9596
      %v9960 = vsel %vm201, %v9192, %v9598
      %v9961 = vsel %vm201, %v9193, %v9600
      %v9962 = vsel %vm201, %v9194, %v9602
      %v9963 = vsel %vm201, %v9195, %v9604
      %v9964 = vsel %vm201, %v9196, %v9606
      %v9965 = vsel %vm201, %v9197, %v9608
      %v9966 = vsel %vm201, %v9198, %v9610
      %v9967 = vsel %vm201, %v9199, %v9612
      %v9968 = vsel %vm201, %v9200, %v9614
      %v9969 = vsel %vm201, %v9201, %v9616
      %v9970 = vsel %vm201, %v9202, %v9618
      %v9971 = vsel %vm201, %v9235, %v9684
      %v9972 = vsel %vm201, %v9236, %v9686
      %v9973 = vsel %vm201, %v9237, %v9688
      %v9974 = vsel %vm201, %v9238, %v9690
      %v9975 = vsel %vm201, %v9239, %v9692
      %v9976 = vsel %vm201, %v9240, %v9694
      %v9977 = vsel %vm201, %v9241, %v9696
      %v9978 = vsel %vm201, %v9242, %v9698
      %v9979 = vsel %vm201, %v9243, %v9700
      %v9980 = vsel %vm201, %v9244, %v9702
      %v9981 = vsel %vm201, %v9245, %v9704
      %v9982 = vsel %vm201, %v9246, %v9706
      %v9983 = vsel %vm201, %v9247, %v9708
      %v9984 = vsel %vm201, %v9248, %v9710
      %v9985 = vsel %vm201, %v9249, %v9712
      %v9986 = vsel %vm201, %v9250, %v9714
      %v9987 = vsel %vm201, %v9251, %v9716
      %v9988 = vsel %vm201, %v9252, %v9718
      %v9989 = vsel %vm201, %v9253, %v9720
      %v9990 = vsel %vm201, %v9254, %v9722
      %v9991 = vsel %vm201, %v9255, %v9724
      %v9992 = vsel %vm201, %v9256, %v9726
      %v9993 = vsel %vm201, %v9257, %v9728
      %v9994 = vsel %vm201, %v9258, %v9730
      %v9995 = vsel %vm201, %v9259, %v9732
      %v9996 = vsel %vm201, %v9260, %v9734
      %v9997 = vsel %vm201, %v9261, %v9736
      %v9998 = vsel %vm201, %v9262, %v9738
      %v9999 = vsel %vm201, %v9263, %v9740
      %v10000 = vsel %vm201, %v9264, %v9742
      %v10001 = vsel %vm201, %v9265, %v9744
      %v10002 = vsel %vm201, %v9266, %v9746
      %v10003 = vsel %vm201, %v9299, %v9812
      %v10004 = vsel %vm201, %v9300, %v9814
      %v10005 = vsel %vm201, %v9301, %v9816
      %v10006 = vsel %vm201, %v9302, %v9818
      %v10007 = vsel %vm201, %v9303, %v9820
      %v10008 = vsel %vm201, %v9304, %v9822
      %v10009 = vsel %vm201, %v9305, %v9824
      %v10010 = vsel %vm201, %v9306, %v9826
      %v10011 = vsel %vm201, %v9307, %v9828
      %v10012 = vsel %vm201, %v9308, %v9830
      %v10013 = vsel %vm201, %v9309, %v9832
      %v10014 = vsel %vm201, %v9310, %v9834
      %v10015 = vsel %vm201, %v9311, %v9836
      %v10016 = vsel %vm201, %v9312, %v9838
      %v10017 = vsel %vm201, %v9313, %v9840
      %v10018 = vsel %vm201, %v9314, %v9842
      %v10019 = vsel %vm201, %v9315, %v9844
      %v10020 = vsel %vm201, %v9316, %v9846
      %v10021 = vsel %vm201, %v9317, %v9848
      %v10022 = vsel %vm201, %v9318, %v9850
      %v10023 = vsel %vm201, %v9319, %v9852
      %v10024 = vsel %vm201, %v9320, %v9854
      %v10025 = vsel %vm201, %v9321, %v9856
      %v10026 = vsel %vm201, %v9322, %v9858
      %v10027 = vsel %vm201, %v9323, %v9860
      %v10028 = vsel %vm201, %v9324, %v9862
      %v10029 = vsel %vm201, %v9325, %v9864
      %v10030 = vsel %vm201, %v9326, %v9866
      %v10031 = vsel %vm201, %v9327, %v9868
      %v10032 = vsel %vm201, %v9328, %v9870
      %v10033 = vsel %vm201, %v9329, %v9872
      %v10034 = vsel %vm201, %v9330, %v9874
      %v10035 = vld [vmem:[%s2] sm:$0x1f]
      %v10036 = vunpack.c.l.bf16 %v10035
      %v10037 = vunpack.c.h.bf16 %v10035
      %v10040 = vlaneseq
      %v10041 = vshrl.u32 %v10040, 7
      %v10042 = vsub.s32 0, %v10041
      %v10043 = vrot.slane %v10036, %v10042
      %v10044 = vlaneseq
      %v10045 = vshrl.u32 %v10044, 7
      %v10046 = vsub.s32 2, %v10045
      %v10047 = vrot.slane %v10036, %v10046
      %v10048 = vlaneseq
      %v10049 = vshrl.u32 %v10048, 7
      %v10050 = vsub.s32 4, %v10049
      %v10051 = vrot.slane %v10036, %v10050
      %v10052 = vlaneseq
      %v10053 = vshrl.u32 %v10052, 7
      %v10054 = vsub.s32 6, %v10053
      %v10055 = vrot.slane %v10036, %v10054
      %v10056 = vlaneseq
      %v10057 = vshrl.u32 %v10056, 7
      %v10058 = vsub.s32 0, %v10057
      %v10059 = vrot.slane %v10037, %v10058
      %v10065 = vlaneseq
      %v10066 = vshrl.u32 %v10065, 7
      %v10067 = vsub.s32 0, %v10066
      %v10068 = vrot.slane %v10043, %v10067
      %v10069 = vlaneseq
      %v10070 = vshrl.u32 %v10069, 7
      %v10071 = vsub.s32 0, %v10070
      %v10072 = vrot.slane %v10047, %v10071
      %v10073 = vlaneseq
      %v10074 = vshrl.u32 %v10073, 7
      %v10075 = vsub.s32 0, %v10074
      %v10076 = vrot.slane %v10051, %v10075
      %v10077 = vlaneseq
      %v10078 = vshrl.u32 %v10077, 7
      %v10079 = vsub.s32 0, %v10078
      %v10080 = vrot.slane %v10055, %v10079
      %v10081 = vlaneseq
      %v10082 = vshrl.u32 %v10081, 7
      %v10083 = vsub.s32 0, %v10082
      %v10084 = vrot.slane %v10059, %v10083
      %v10085 = vmul.f32 %v9907, %v10068
      %v10086 = vmul.f32 %v9939, %v10072
      %v10087 = vmul.f32 %v9971, %v10076
      %v10088 = vmul.f32 %v10003, %v10080
      %v10089 = vmul.f32 %v9363, %v10084
      %v10090 = vmul.f32 %v9908, %v10068
      %v10091 = vmul.f32 %v9940, %v10072
      %v10092 = vmul.f32 %v9972, %v10076
      %v10093 = vmul.f32 %v10004, %v10080
      %v10094 = vmul.f32 %v9364, %v10084
      %v10095 = vmul.f32 %v9909, %v10068
      %v10096 = vmul.f32 %v9941, %v10072
      %v10097 = vmul.f32 %v9973, %v10076
      %v10098 = vmul.f32 %v10005, %v10080
      %v10099 = vmul.f32 %v9365, %v10084
      %v10100 = vmul.f32 %v9910, %v10068
      %v10101 = vmul.f32 %v9942, %v10072
      %v10102 = vmul.f32 %v9974, %v10076
      %v10103 = vmul.f32 %v10006, %v10080
      %v10104 = vmul.f32 %v9366, %v10084
      %v10105 = vmul.f32 %v9911, %v10068
      %v10106 = vmul.f32 %v9943, %v10072
      %v10107 = vmul.f32 %v9975, %v10076
      %v10108 = vmul.f32 %v10007, %v10080
      %v10109 = vmul.f32 %v9367, %v10084
      %v10110 = vmul.f32 %v9912, %v10068
      %v10111 = vmul.f32 %v9944, %v10072
      %v10112 = vmul.f32 %v9976, %v10076
      %v10113 = vmul.f32 %v10008, %v10080
      %v10114 = vmul.f32 %v9368, %v10084
      %v10115 = vmul.f32 %v9913, %v10068
      %v10116 = vmul.f32 %v9945, %v10072
      %v10117 = vmul.f32 %v9977, %v10076
      %v10118 = vmul.f32 %v10009, %v10080
      %v10119 = vmul.f32 %v9369, %v10084
      %v10120 = vmul.f32 %v9914, %v10068
      %v10121 = vmul.f32 %v9946, %v10072
      %v10122 = vmul.f32 %v9978, %v10076
      %v10123 = vmul.f32 %v10010, %v10080
      %v10124 = vmul.f32 %v9370, %v10084
      %v10125 = vmul.f32 %v9915, %v10068
      %v10126 = vmul.f32 %v9947, %v10072
      %v10127 = vmul.f32 %v9979, %v10076
      %v10128 = vmul.f32 %v10011, %v10080
      %v10129 = vmul.f32 %v9371, %v10084
      %v10130 = vmul.f32 %v9916, %v10068
      %v10131 = vmul.f32 %v9948, %v10072
      %v10132 = vmul.f32 %v9980, %v10076
      %v10133 = vmul.f32 %v10012, %v10080
      %v10134 = vmul.f32 %v9372, %v10084
      %v10135 = vmul.f32 %v9917, %v10068
      %v10136 = vmul.f32 %v9949, %v10072
      %v10137 = vmul.f32 %v9981, %v10076
      %v10138 = vmul.f32 %v10013, %v10080
      %v10139 = vmul.f32 %v9373, %v10084
      %v10140 = vmul.f32 %v9918, %v10068
      %v10141 = vmul.f32 %v9950, %v10072
      %v10142 = vmul.f32 %v9982, %v10076
      %v10143 = vmul.f32 %v10014, %v10080
      %v10144 = vmul.f32 %v9374, %v10084
      %v10145 = vmul.f32 %v9919, %v10068
      %v10146 = vmul.f32 %v9951, %v10072
      %v10147 = vmul.f32 %v9983, %v10076
      %v10148 = vmul.f32 %v10015, %v10080
      %v10149 = vmul.f32 %v9375, %v10084
      %v10150 = vmul.f32 %v9920, %v10068
      %v10151 = vmul.f32 %v9952, %v10072
      %v10152 = vmul.f32 %v9984, %v10076
      %v10153 = vmul.f32 %v10016, %v10080
      %v10154 = vmul.f32 %v9376, %v10084
      %v10155 = vmul.f32 %v9921, %v10068
      %v10156 = vmul.f32 %v9953, %v10072
      %v10157 = vmul.f32 %v9985, %v10076
      %v10158 = vmul.f32 %v10017, %v10080
      %v10159 = vmul.f32 %v9377, %v10084
      %v10160 = vmul.f32 %v9922, %v10068
      %v10161 = vmul.f32 %v9954, %v10072
      %v10162 = vmul.f32 %v9986, %v10076
      %v10163 = vmul.f32 %v10018, %v10080
      %v10164 = vmul.f32 %v9378, %v10084
      %v10165 = vmul.f32 %v9923, %v10068
      %v10166 = vmul.f32 %v9955, %v10072
      %v10167 = vmul.f32 %v9987, %v10076
      %v10168 = vmul.f32 %v10019, %v10080
      %v10169 = vmul.f32 %v9379, %v10084
      %v10170 = vmul.f32 %v9924, %v10068
      %v10171 = vmul.f32 %v9956, %v10072
      %v10172 = vmul.f32 %v9988, %v10076
      %v10173 = vmul.f32 %v10020, %v10080
      %v10174 = vmul.f32 %v9380, %v10084
      %v10175 = vmul.f32 %v9925, %v10068
      %v10176 = vmul.f32 %v9957, %v10072
      %v10177 = vmul.f32 %v9989, %v10076
      %v10178 = vmul.f32 %v10021, %v10080
      %v10179 = vmul.f32 %v9381, %v10084
      %v10180 = vmul.f32 %v9926, %v10068
      %v10181 = vmul.f32 %v9958, %v10072
      %v10182 = vmul.f32 %v9990, %v10076
      %v10183 = vmul.f32 %v10022, %v10080
      %v10184 = vmul.f32 %v9382, %v10084
      %v10185 = vmul.f32 %v9927, %v10068
      %v10186 = vmul.f32 %v9959, %v10072
      %v10187 = vmul.f32 %v9991, %v10076
      %v10188 = vmul.f32 %v10023, %v10080
      %v10189 = vmul.f32 %v9383, %v10084
      %v10190 = vmul.f32 %v9928, %v10068
      %v10191 = vmul.f32 %v9960, %v10072
      %v10192 = vmul.f32 %v9992, %v10076
      %v10193 = vmul.f32 %v10024, %v10080
      %v10194 = vmul.f32 %v9384, %v10084
      %v10195 = vmul.f32 %v9929, %v10068
      %v10196 = vmul.f32 %v9961, %v10072
      %v10197 = vmul.f32 %v9993, %v10076
      %v10198 = vmul.f32 %v10025, %v10080
      %v10199 = vmul.f32 %v9385, %v10084
      %v10200 = vmul.f32 %v9930, %v10068
      %v10201 = vmul.f32 %v9962, %v10072
      %v10202 = vmul.f32 %v9994, %v10076
      %v10203 = vmul.f32 %v10026, %v10080
      %v10204 = vmul.f32 %v9386, %v10084
      %v10205 = vmul.f32 %v9931, %v10068
      %v10206 = vmul.f32 %v9963, %v10072
      %v10207 = vmul.f32 %v9995, %v10076
      %v10208 = vmul.f32 %v10027, %v10080
      %v10209 = vmul.f32 %v9387, %v10084
      %v10210 = vmul.f32 %v9932, %v10068
      %v10211 = vmul.f32 %v9964, %v10072
      %v10212 = vmul.f32 %v9996, %v10076
      %v10213 = vmul.f32 %v10028, %v10080
      %v10214 = vmul.f32 %v9388, %v10084
      %v10215 = vmul.f32 %v9933, %v10068
      %v10216 = vmul.f32 %v9965, %v10072
      %v10217 = vmul.f32 %v9997, %v10076
      %v10218 = vmul.f32 %v10029, %v10080
      %v10219 = vmul.f32 %v9389, %v10084
      %v10220 = vmul.f32 %v9934, %v10068
      %v10221 = vmul.f32 %v9966, %v10072
      %v10222 = vmul.f32 %v9998, %v10076
      %v10223 = vmul.f32 %v10030, %v10080
      %v10224 = vmul.f32 %v9390, %v10084
      %v10225 = vmul.f32 %v9935, %v10068
      %v10226 = vmul.f32 %v9967, %v10072
      %v10227 = vmul.f32 %v9999, %v10076
      %v10228 = vmul.f32 %v10031, %v10080
      %v10229 = vmul.f32 %v9391, %v10084
      %v10230 = vmul.f32 %v9936, %v10068
      %v10231 = vmul.f32 %v9968, %v10072
      %v10232 = vmul.f32 %v10000, %v10076
      %v10233 = vmul.f32 %v10032, %v10080
      %v10234 = vmul.f32 %v9392, %v10084
      %v10235 = vmul.f32 %v9937, %v10068
      %v10236 = vmul.f32 %v9969, %v10072
      %v10237 = vmul.f32 %v10001, %v10076
      %v10238 = vmul.f32 %v10033, %v10080
      %v10239 = vmul.f32 %v9393, %v10084
      %v10240 = vmul.f32 %v9938, %v10068
      %v10241 = vmul.f32 %v9970, %v10072
      %v10242 = vmul.f32 %v10002, %v10076
      %v10243 = vmul.f32 %v10034, %v10080
      %v10244 = vmul.f32 %v9394, %v10084
      %v10245 = vadd.f32 %v10085, %v10086
      %v10246 = vadd.f32 %v10245, %v10087
      %v10247 = vadd.f32 %v10246, %v10088
      %v10248 = vsel %vm201, %v10089, 0.0
      %v10249 = vadd.f32 %v10247, %v10248
      %10250 = vadd.xlane.f32.xlu0 %v10249
      %v10251 = vpop.xlane.xlu0 %10250
      %v10252 = vadd.f32 %v10090, %v10091
      %v10253 = vadd.f32 %v10252, %v10092
      %v10254 = vadd.f32 %v10253, %v10093
      %v10255 = vsel %vm201, %v10094, 0.0
      %v10256 = vadd.f32 %v10254, %v10255
      %10257 = vadd.xlane.f32.xlu0 %v10256
      %v10258 = vpop.xlane.xlu0 %10257
      %v10259 = vadd.f32 %v10095, %v10096
      %v10260 = vadd.f32 %v10259, %v10097
      %v10261 = vadd.f32 %v10260, %v10098
      %v10262 = vsel %vm201, %v10099, 0.0
      %v10263 = vadd.f32 %v10261, %v10262
      %10264 = vadd.xlane.f32.xlu0 %v10263
      %v10265 = vpop.xlane.xlu0 %10264
      %v10266 = vadd.f32 %v10100, %v10101
      %v10267 = vadd.f32 %v10266, %v10102
      %v10268 = vadd.f32 %v10267, %v10103
      %v10269 = vsel %vm201, %v10104, 0.0
      %v10270 = vadd.f32 %v10268, %v10269
      %10271 = vadd.xlane.f32.xlu0 %v10270
      %v10272 = vpop.xlane.xlu0 %10271
      %v10273 = vadd.f32 %v10105, %v10106
      %v10274 = vadd.f32 %v10273, %v10107
      %v10275 = vadd.f32 %v10274, %v10108
      %v10276 = vsel %vm201, %v10109, 0.0
      %v10277 = vadd.f32 %v10275, %v10276
      %10278 = vadd.xlane.f32.xlu0 %v10277
      %v10279 = vpop.xlane.xlu0 %10278
      %v10280 = vadd.f32 %v10110, %v10111
      %v10281 = vadd.f32 %v10280, %v10112
      %v10282 = vadd.f32 %v10281, %v10113
      %v10283 = vsel %vm201, %v10114, 0.0
      %v10284 = vadd.f32 %v10282, %v10283
      %10285 = vadd.xlane.f32.xlu0 %v10284
      %v10286 = vpop.xlane.xlu0 %10285
      %v10287 = vadd.f32 %v10115, %v10116
      %v10288 = vadd.f32 %v10287, %v10117
      %v10289 = vadd.f32 %v10288, %v10118
      %v10290 = vsel %vm201, %v10119, 0.0
      %v10291 = vadd.f32 %v10289, %v10290
      %10292 = vadd.xlane.f32.xlu0 %v10291
      %v10293 = vpop.xlane.xlu0 %10292
      %v10294 = vadd.f32 %v10120, %v10121
      %v10295 = vadd.f32 %v10294, %v10122
      %v10296 = vadd.f32 %v10295, %v10123
      %v10297 = vsel %vm201, %v10124, 0.0
      %v10298 = vadd.f32 %v10296, %v10297
      %10299 = vadd.xlane.f32.xlu0 %v10298
      %v10300 = vpop.xlane.xlu0 %10299
      %v10301 = vadd.f32 %v10125, %v10126
      %v10302 = vadd.f32 %v10301, %v10127
      %v10303 = vadd.f32 %v10302, %v10128
      %v10304 = vsel %vm201, %v10129, 0.0
      %v10305 = vadd.f32 %v10303, %v10304
      %10306 = vadd.xlane.f32.xlu0 %v10305
      %v10307 = vpop.xlane.xlu0 %10306
      %v10308 = vadd.f32 %v10130, %v10131
      %v10309 = vadd.f32 %v10308, %v10132
      %v10310 = vadd.f32 %v10309, %v10133
      %v10311 = vsel %vm201, %v10134, 0.0
      %v10312 = vadd.f32 %v10310, %v10311
      %10313 = vadd.xlane.f32.xlu0 %v10312
      %v10314 = vpop.xlane.xlu0 %10313
      %v10315 = vadd.f32 %v10135, %v10136
      %v10316 = vadd.f32 %v10315, %v10137
      %v10317 = vadd.f32 %v10316, %v10138
      %v10318 = vsel %vm201, %v10139, 0.0
      %v10319 = vadd.f32 %v10317, %v10318
      %10320 = vadd.xlane.f32.xlu0 %v10319
      %v10321 = vpop.xlane.xlu0 %10320
      %v10322 = vadd.f32 %v10140, %v10141
      %v10323 = vadd.f32 %v10322, %v10142
      %v10324 = vadd.f32 %v10323, %v10143
      %v10325 = vsel %vm201, %v10144, 0.0
      %v10326 = vadd.f32 %v10324, %v10325
      %10327 = vadd.xlane.f32.xlu0 %v10326
      %v10328 = vpop.xlane.xlu0 %10327
      %v10329 = vadd.f32 %v10145, %v10146
      %v10330 = vadd.f32 %v10329, %v10147
      %v10331 = vadd.f32 %v10330, %v10148
      %v10332 = vsel %vm201, %v10149, 0.0
      %v10333 = vadd.f32 %v10331, %v10332
      %10334 = vadd.xlane.f32.xlu0 %v10333
      %v10335 = vpop.xlane.xlu0 %10334
      %v10336 = vadd.f32 %v10150, %v10151
      %v10337 = vadd.f32 %v10336, %v10152
      %v10338 = vadd.f32 %v10337, %v10153
      %v10339 = vsel %vm201, %v10154, 0.0
      %v10340 = vadd.f32 %v10338, %v10339
      %10341 = vadd.xlane.f32.xlu0 %v10340
      %v10342 = vpop.xlane.xlu0 %10341
      %v10343 = vadd.f32 %v10155, %v10156
      %v10344 = vadd.f32 %v10343, %v10157
      %v10345 = vadd.f32 %v10344, %v10158
      %v10346 = vsel %vm201, %v10159, 0.0
      %v10347 = vadd.f32 %v10345, %v10346
      %10348 = vadd.xlane.f32.xlu0 %v10347
      %v10349 = vpop.xlane.xlu0 %10348
      %v10350 = vadd.f32 %v10160, %v10161
      %v10351 = vadd.f32 %v10350, %v10162
      %v10352 = vadd.f32 %v10351, %v10163
      %v10353 = vsel %vm201, %v10164, 0.0
      %v10354 = vadd.f32 %v10352, %v10353
      %10355 = vadd.xlane.f32.xlu0 %v10354
      %v10356 = vpop.xlane.xlu0 %10355
      %v10357 = vadd.f32 %v10165, %v10166
      %v10358 = vadd.f32 %v10357, %v10167
      %v10359 = vadd.f32 %v10358, %v10168
      %v10360 = vsel %vm201, %v10169, 0.0
      %v10361 = vadd.f32 %v10359, %v10360
      %10362 = vadd.xlane.f32.xlu0 %v10361
      %v10363 = vpop.xlane.xlu0 %10362
      %v10364 = vadd.f32 %v10170, %v10171
      %v10365 = vadd.f32 %v10364, %v10172
      %v10366 = vadd.f32 %v10365, %v10173
      %v10367 = vsel %vm201, %v10174, 0.0
      %v10368 = vadd.f32 %v10366, %v10367
      %10369 = vadd.xlane.f32.xlu0 %v10368
      %v10370 = vpop.xlane.xlu0 %10369
      %v10371 = vadd.f32 %v10175, %v10176
      %v10372 = vadd.f32 %v10371, %v10177
      %v10373 = vadd.f32 %v10372, %v10178
      %v10374 = vsel %vm201, %v10179, 0.0
      %v10375 = vadd.f32 %v10373, %v10374
      %10376 = vadd.xlane.f32.xlu0 %v10375
      %v10377 = vpop.xlane.xlu0 %10376
      %v10378 = vadd.f32 %v10180, %v10181
      %v10379 = vadd.f32 %v10378, %v10182
      %v10380 = vadd.f32 %v10379, %v10183
      %v10381 = vsel %vm201, %v10184, 0.0
      %v10382 = vadd.f32 %v10380, %v10381
      %10383 = vadd.xlane.f32.xlu0 %v10382
      %v10384 = vpop.xlane.xlu0 %10383
      %v10385 = vadd.f32 %v10185, %v10186
      %v10386 = vadd.f32 %v10385, %v10187
      %v10387 = vadd.f32 %v10386, %v10188
      %v10388 = vsel %vm201, %v10189, 0.0
      %v10389 = vadd.f32 %v10387, %v10388
      %10390 = vadd.xlane.f32.xlu0 %v10389
      %v10391 = vpop.xlane.xlu0 %10390
      %v10392 = vadd.f32 %v10190, %v10191
      %v10393 = vadd.f32 %v10392, %v10192
      %v10394 = vadd.f32 %v10393, %v10193
      %v10395 = vsel %vm201, %v10194, 0.0
      %v10396 = vadd.f32 %v10394, %v10395
      %10397 = vadd.xlane.f32.xlu0 %v10396
      %v10398 = vpop.xlane.xlu0 %10397
      %v10399 = vadd.f32 %v10195, %v10196
      %v10400 = vadd.f32 %v10399, %v10197
      %v10401 = vadd.f32 %v10400, %v10198
      %v10402 = vsel %vm201, %v10199, 0.0
      %v10403 = vadd.f32 %v10401, %v10402
      %10404 = vadd.xlane.f32.xlu0 %v10403
      %v10405 = vpop.xlane.xlu0 %10404
      %v10406 = vadd.f32 %v10200, %v10201
      %v10407 = vadd.f32 %v10406, %v10202
      %v10408 = vadd.f32 %v10407, %v10203
      %v10409 = vsel %vm201, %v10204, 0.0
      %v10410 = vadd.f32 %v10408, %v10409
      %10411 = vadd.xlane.f32.xlu0 %v10410
      %v10412 = vpop.xlane.xlu0 %10411
      %v10413 = vadd.f32 %v10205, %v10206
      %v10414 = vadd.f32 %v10413, %v10207
      %v10415 = vadd.f32 %v10414, %v10208
      %v10416 = vsel %vm201, %v10209, 0.0
      %v10417 = vadd.f32 %v10415, %v10416
      %10418 = vadd.xlane.f32.xlu0 %v10417
      %v10419 = vpop.xlane.xlu0 %10418
      %v10420 = vadd.f32 %v10210, %v10211
      %v10421 = vadd.f32 %v10420, %v10212
      %v10422 = vadd.f32 %v10421, %v10213
      %v10423 = vsel %vm201, %v10214, 0.0
      %v10424 = vadd.f32 %v10422, %v10423
      %10425 = vadd.xlane.f32.xlu0 %v10424
      %v10426 = vpop.xlane.xlu0 %10425
      %v10427 = vadd.f32 %v10215, %v10216
      %v10428 = vadd.f32 %v10427, %v10217
      %v10429 = vadd.f32 %v10428, %v10218
      %v10430 = vsel %vm201, %v10219, 0.0
      %v10431 = vadd.f32 %v10429, %v10430
      %10432 = vadd.xlane.f32.xlu0 %v10431
      %v10433 = vpop.xlane.xlu0 %10432
      %v10434 = vadd.f32 %v10220, %v10221
      %v10435 = vadd.f32 %v10434, %v10222
      %v10436 = vadd.f32 %v10435, %v10223
      %v10437 = vsel %vm201, %v10224, 0.0
      %v10438 = vadd.f32 %v10436, %v10437
      %10439 = vadd.xlane.f32.xlu0 %v10438
      %v10440 = vpop.xlane.xlu0 %10439
      %v10441 = vadd.f32 %v10225, %v10226
      %v10442 = vadd.f32 %v10441, %v10227
      %v10443 = vadd.f32 %v10442, %v10228
      %v10444 = vsel %vm201, %v10229, 0.0
      %v10445 = vadd.f32 %v10443, %v10444
      %10446 = vadd.xlane.f32.xlu0 %v10445
      %v10447 = vpop.xlane.xlu0 %10446
      %v10448 = vadd.f32 %v10230, %v10231
      %v10449 = vadd.f32 %v10448, %v10232
      %v10450 = vadd.f32 %v10449, %v10233
      %v10451 = vsel %vm201, %v10234, 0.0
      %v10452 = vadd.f32 %v10450, %v10451
      %10453 = vadd.xlane.f32.xlu0 %v10452
      %v10454 = vpop.xlane.xlu0 %10453
      %v10455 = vadd.f32 %v10235, %v10236
      %v10456 = vadd.f32 %v10455, %v10237
      %v10457 = vadd.f32 %v10456, %v10238
      %v10458 = vsel %vm201, %v10239, 0.0
      %v10459 = vadd.f32 %v10457, %v10458
      %10460 = vadd.xlane.f32.xlu0 %v10459
      %v10461 = vpop.xlane.xlu0 %10460
      %v10462 = vadd.f32 %v10240, %v10241
      %v10463 = vadd.f32 %v10462, %v10242
      %v10464 = vadd.f32 %v10463, %v10243
      %v10465 = vsel %vm201, %v10244, 0.0
      %v10466 = vadd.f32 %v10464, %v10465
      %10467 = vadd.xlane.f32.xlu0 %v10466
      %v10468 = vpop.xlane.xlu0 %10467
      %v10469 = vld [vmem:[#allocation3] sm:$0x1]
      %v10471 = vlaneseq
      %v10472 = vshrl.u32 %v10471, 7
      %v10473 = vsub.s32 0, %v10472
      %v10474 = vrot.slane %v10469, %v10473
      %v10476 = vadd.f32 %v10251, %v10474
      %v10477 = vadd.f32 %v10258, %v10474
      %v10478 = vadd.f32 %v10265, %v10474
      %v10479 = vadd.f32 %v10272, %v10474
      %v10480 = vadd.f32 %v10279, %v10474
      %v10481 = vadd.f32 %v10286, %v10474
      %v10482 = vadd.f32 %v10293, %v10474
      %v10483 = vadd.f32 %v10300, %v10474
      %v10484 = vadd.f32 %v10307, %v10474
      %v10485 = vadd.f32 %v10314, %v10474
      %v10486 = vadd.f32 %v10321, %v10474
      %v10487 = vadd.f32 %v10328, %v10474
      %v10488 = vadd.f32 %v10335, %v10474
      %v10489 = vadd.f32 %v10342, %v10474
      %v10490 = vadd.f32 %v10349, %v10474
      %v10491 = vadd.f32 %v10356, %v10474
      %v10492 = vadd.f32 %v10363, %v10474
      %v10493 = vadd.f32 %v10370, %v10474
      %v10494 = vadd.f32 %v10377, %v10474
      %v10495 = vadd.f32 %v10384, %v10474
      %v10496 = vadd.f32 %v10391, %v10474
      %v10497 = vadd.f32 %v10398, %v10474
      %v10498 = vadd.f32 %v10405, %v10474
      %v10499 = vadd.f32 %v10412, %v10474
      %v10500 = vadd.f32 %v10419, %v10474
      %v10501 = vadd.f32 %v10426, %v10474
      %v10502 = vadd.f32 %v10433, %v10474
      %v10503 = vadd.f32 %v10440, %v10474
      %v10504 = vadd.f32 %v10447, %v10474
      %v10505 = vadd.f32 %v10454, %v10474
      %v10506 = vadd.f32 %v10461, %v10474
      %v10507 = vadd.f32 %v10468, %v10474
      %vm10508 = vcmask 7168
      %10509 = vst.msk [vmem:[%s199] sm:$0xff] %vm10508, %v10476
      %10510 = vst.msk [vmem:[%s199 + $0x8] sm:$0xff] %vm10508, %v10477
      %10511 = vst.msk [vmem:[%s199 + $0x10] sm:$0xff] %vm10508, %v10478
      %10512 = vst.msk [vmem:[%s199 + $0x18] sm:$0xff] %vm10508, %v10479
      %10513 = vst.msk [vmem:[%s199 + $0x20] sm:$0xff] %vm10508, %v10480
      %10514 = vst.msk [vmem:[%s199 + $0x28] sm:$0xff] %vm10508, %v10481
      %10515 = vst.msk [vmem:[%s199 + $0x30] sm:$0xff] %vm10508, %v10482
      %10516 = vst.msk [vmem:[%s199 + $0x38] sm:$0xff] %vm10508, %v10483
      %10517 = vst.msk [vmem:[%s199 + $0x40] sm:$0xff] %vm10508, %v10484
      %10518 = vst.msk [vmem:[%s199 + $0x48] sm:$0xff] %vm10508, %v10485
      %10519 = vst.msk [vmem:[%s199 + $0x50] sm:$0xff] %vm10508, %v10486
      %10520 = vst.msk [vmem:[%s199 + $0x58] sm:$0xff] %vm10508, %v10487
      %10521 = vst.msk [vmem:[%s199 + $0x60] sm:$0xff] %vm10508, %v10488
      %10522 = vst.msk [vmem:[%s199 + $0x68] sm:$0xff] %vm10508, %v10489
      %10523 = vst.msk [vmem:[%s199 + $0x70] sm:$0xff] %vm10508, %v10490
      %10524 = vst.msk [vmem:[%s199 + $0x78] sm:$0xff] %vm10508, %v10491
      %10525 = vst.msk [vmem:[%s199 + $0x80] sm:$0xff] %vm10508, %v10492
      %10526 = vst.msk [vmem:[%s199 + $0x88] sm:$0xff] %vm10508, %v10493
      %10527 = vst.msk [vmem:[%s199 + $0x90] sm:$0xff] %vm10508, %v10494
      %10528 = vst.msk [vmem:[%s199 + $0x98] sm:$0xff] %vm10508, %v10495
      %10529 = vst.msk [vmem:[%s199 + $0xa0] sm:$0xff] %vm10508, %v10496
      %10530 = vst.msk [vmem:[%s199 + $0xa8] sm:$0xff] %vm10508, %v10497
      %10531 = vst.msk [vmem:[%s199 + $0xb0] sm:$0xff] %vm10508, %v10498
      %10532 = vst.msk [vmem:[%s199 + $0xb8] sm:$0xff] %vm10508, %v10499
      %10533 = vst.msk [vmem:[%s199 + $0xc0] sm:$0xff] %vm10508, %v10500
      %10534 = vst.msk [vmem:[%s199 + $0xc8] sm:$0xff] %vm10508, %v10501
      %10535 = vst.msk [vmem:[%s199 + $0xd0] sm:$0xff] %vm10508, %v10502
      %10536 = vst.msk [vmem:[%s199 + $0xd8] sm:$0xff] %vm10508, %v10503
      %10537 = vst.msk [vmem:[%s199 + $0xe0] sm:$0xff] %vm10508, %v10504
      %10538 = vst.msk [vmem:[%s199 + $0xe8] sm:$0xff] %vm10508, %v10505
      %10539 = vst.msk [vmem:[%s199 + $0xf0] sm:$0xff] %vm10508, %v10506
      %10540 = vst.msk [vmem:[%s199 + $0xf8] sm:$0xff] %vm10508, %v10507
      %p10541 = scmp.lt.s32.totalorder %s17, 1
      %s10542 = scalar_select %p10541, %s17, 1
      %s10543 = smul.addr %s10542, 32
      %s10544 = smul.addr %s10543, 8
      %s10545 = scalar_lea.vmem %s4, %s10544
      // Predicated region
      $region37: #{texture_discriminator_forward.1} parent=35 // pred_check
        %p10546 = pneg %p124
      $region38: #{texture_discriminator_forward.1} parent=35 // pred_check_branch
        %10548 = sbr.rel (%p10546) target = $region40
      $region39: #{texture_discriminator_forward.1} parent=35 // pred_region
        _
      $region40: #{texture_discriminator_forward.1} parent=35 // pred_fallthru
        _
    $region36: #{texture_discriminator_forward.1} parent=5 // pred_fallthru
      _
    %p10549 = scmp.le.s32.totalorder 2, %s12
    // Predicated region
    $region41: #{texture_discriminator_forward.1} parent=5 // pred_check
      %p10550 = pneg %p10549
    $region42: #{texture_discriminator_forward.1} parent=5 // pred_check_branch
      %10552 = sbr.rel (%p10550) target = $region44
    $region43: #{texture_discriminator_forward.1} parent=5 // pred_region
      %s10553 = ssub.s32 %s12, 2
      // Predicated region
      $region45: #{texture_discriminator_forward.1} parent=43 // pred_check
        %p10554 = pneg %p130
      $region46: #{texture_discriminator_forward.1} parent=43 // pred_check_branch
        %10556 = sbr.rel (%p10554) target = $region48
      $region47: #{texture_discriminator_forward.1} parent=43 // pred_region
        %p10557 = scmp.lt.s32.totalorder %s18, 1
        %s10558 = scalar_select %p10557, %s18, 1
        %s10559 = smul.addr %s10558, 32
        %s10560 = smul.addr %s10559, 8
        %s10561 = scalar_lea.vmem %s4, %s10560
      $region48: #{texture_discriminator_forward.1} parent=43 // pred_fallthru
        _
    $region44: #{texture_discriminator_forward.1} parent=5 // pred_fallthru
      _
  $region6: #{texture_discriminator_forward.1} parent=0 // loop_footer
    %s16 = sadd.s32 1, %s12
  $region7: #{texture_discriminator_forward.1} parent=0 // loop_footer_branch
    %11 = sbr.rel target = $region3
  $region8: #{texture_discriminator_forward.1} parent=0 // loop_exit
    _

</llo_original>
